<compile_context>
chip_gen: v5e
topology: v5e:2x2
jax: 0.10.0
libtpu: 0.0.40
codegen_flags: <defaults>
</compile_context>

<pallas_src>
import jax
import jax.numpy as jnp
from jax.experimental import pallas as pl
from jax.experimental.pallas import tpu as pltpu


LANES = 128
_VMEM = pl.BlockSpec(memory_space=pltpu.MemorySpace.VMEM)


# ----------------------------------------------------------------------------
# Fused Pallas kernel (whole forward pass)
# ----------------------------------------------------------------------------
def _make_kernel(n, n_classes, block_dims):
    """block_dims: list of (Ho, Wo) per conv block, e.g. [(16,16),(8,8),(4,4),(2,2)]."""

    def kernel(img_ref, w1_ref, ep1_ref, w2_ref, ep2_ref, w3_ref, ep3_ref,
               w4_ref, ep4_ref, wh_ref, bh_ref, out_ref,
               xp1_ref, xp2_ref, xp3_ref, xp4_ref):
        w_refs = (w1_ref, w2_ref, w3_ref, w4_ref)
        ep_refs = (ep1_ref, ep2_ref, ep3_ref, ep4_ref)
        xp_refs = (xp1_ref, xp2_ref, xp3_ref, xp4_ref)

        def conv_block(x, xp_ref, w_ref, ep_ref, ho, wo):
            # x: (n, 2*ho, 2*wo, 128) activation, channels padded to 128 lanes.
            # Zero-padded (pad=1 each side) copy kept in VMEM scratch.
            xp_ref[...] = jnp.zeros(xp_ref.shape, jnp.float32)
            xp_ref[:, 1:1 + 2 * ho, 1:1 + 2 * wo, :] = x

            # Even / odd padded-column views: strided VMEM reads, lanes intact.
            cols_e = xp_ref[:, :, pl.ds(0, wo + 1, 2), :]   # (n, 2ho+2, wo+1, 128)
            cols_o = xp_ref[:, :, pl.ds(1, wo + 1, 2), :]

            # Even / odd padded-row views: leading-dim regroup (layout no-op).
            def split_rows(v):
                v5 = v.reshape(n, ho + 1, 2, wo + 1, LANES)
                return v5[:, :, 0, :, :], v5[:, :, 1, :, :]

            ee, oe = split_rows(cols_e)   # (even rows, even cols), (odd rows, even cols)
            eo, oo = split_rows(cols_o)   # (even rows, odd cols),  (odd rows, odd cols)
            parity = {(0, 0): ee, (1, 0): oe, (0, 1): eo, (1, 1): oo}
            # conv tap offset -> (parity, start index) along that spatial axis
            tap = {0: (0, 0), 1: (1, 0), 2: (0, 1)}

            # 3x3 / stride-2 conv == 9 accumulated matmuls over (Cin->Cout) taps.
            acc = jnp.zeros((n * ho * wo, LANES), jnp.float32)
            for kh in range(3):
                rp, rs = tap[kh]
                for kw in range(3):
                    cp, cs = tap[kw]
                    slab = parity[(rp, cp)][:, rs:rs + ho, cs:cs + wo, :]
                    lhs = slab.reshape(n * ho * wo, LANES)
                    acc = acc + jnp.dot(lhs, w_ref[kh * 3 + kw],
                                        preferred_element_type=jnp.float32)

            bias = ep_ref[0:1, :]
            scale = ep_ref[1:2, :]
            shift = ep_ref[2:3, :]
            y = acc + bias
            y = jnp.where(y >= 0.0, y, 0.2 * y)   # LeakyReLU(0.2)
            # Dropout2d(0.25): identity in eval mode.
            return y * scale + shift               # folded eval-mode BatchNorm

        x = img_ref[...]
        for b, (ho, wo) in enumerate(block_dims):
            y = conv_block(x, xp_refs[b], w_refs[b], ep_refs[b], ho, wo)
            if b + 1 < len(block_dims):
                x = y.reshape(n, ho, wo, LANES)

        # y: (n*4, 128), rows ordered (sample, h, w); 128 lanes = channels.
        # Heads: merged lane-padded weight regrouped by spatial slot s = h*2+w,
        # so the NCHW flatten (c*4 + h*2 + w) becomes 4 row-sliced matmuls.
        hs = []
        for smp in range(n):
            h = jnp.zeros((1, LANES), jnp.float32)
            for s in range(4):
                row = y[smp * 4 + s:smp * 4 + s + 1, :]            # (1, 128)
                h = h + jnp.dot(row, wh_ref[s],
                                preferred_element_type=jnp.float32)
            hs.append(h)
        h = jnp.concatenate(hs, axis=0) + bh_ref[...]              # (n, 128)

        col = jax.lax.broadcasted_iota(jnp.int32, (1, LANES), 1)
        is_adv = col == 0
        is_cls = (col >= 1) & (col <= n_classes)
        clsf = is_cls.astype(jnp.float32)

        sig = pl.reciprocal(1.0 + jnp.exp(-h), approx=True)        # Sigmoid
        logits = jnp.where(is_cls, h, -1e30)
        mx = jnp.max(logits, axis=1, keepdims=True)
        e = jnp.exp(logits - mx) * clsf
        denom = jnp.sum(e, axis=1, keepdims=True)
        probs = e * pl.reciprocal(denom, approx=True)              # Softmax(dim=1)

        # Lane-dense packed output: col 0 = validity, cols 1..n_classes = label.
        out_ref[...] = jnp.where(is_adv, sig, probs)

    return kernel


# ----------------------------------------------------------------------------
# Parameter folding (PyTorch layout -> lane-padded kernel operands)
# ----------------------------------------------------------------------------
def _prep_params(params, channels, n_classes):
    cins = [channels, 16, 32, 64]
    block_ops = []
    for blk, cin in zip(params["blocks"], cins):
        w = blk["w"]                                           # (cout, cin, 3, 3)
        cout = w.shape[0]
        # (kh, kw, ci, co) -> (9, ci, co), padded to (9, 128, 128)
        wk = jnp.transpose(w, (2, 3, 1, 0)).reshape(9, cin, cout)
        wk = jnp.pad(wk, ((0, 0), (0, LANES - cin), (0, LANES - cout)))
        ep = jnp.stack([
            jnp.pad(blk["b"], (0, LANES - cout)),
            jnp.pad(blk["scale"], (0, LANES - cout)),
            jnp.pad(blk["shift"], (0, LANES - cout)),
        ]).astype(jnp.float32)                                  # (3, 128)
        block_ops += [wk.astype(jnp.float32), ep]

    # Merged heads: col 0 = adv, cols 1..n_classes = aux, rest zero padding.
    wcomb = jnp.concatenate(
        [params["adv_w"], params["aux_w"],
         jnp.zeros((512, LANES - 1 - n_classes), jnp.float32)], axis=1)   # (512, 128)
    # Flat row index of `out.view(N,-1)` is c*4 + s with s = h*2 + w.
    wh = wcomb.reshape(LANES, 4, LANES).transpose(1, 0, 2)                # (4, 128, 128)
    bh = jnp.concatenate(
        [params["adv_b"], params["aux_b"],
         jnp.zeros((1, LANES - 1 - n_classes), jnp.float32)], axis=1)     # (1, 128)
    return block_ops, wh.astype(jnp.float32), bh.astype(jnp.float32)


# ----------------------------------------------------------------------------
# Forward wrapper
# ----------------------------------------------------------------------------
def discriminator_forward(img_nchw, params):
    """Returns (validity, label) like the PyTorch module (eval mode)."""
    n, channels, hh, ww = img_nchw.shape
    assert hh == 32 and ww == 32, "Linear(512, 1) in the reference implies img_size=32"
    n_classes = params["aux_w"].shape[1]

    x = jnp.transpose(img_nchw, (0, 2, 3, 1)).astype(jnp.float32)          # NCHW -> NHWC
    x = jnp.pad(x, ((0, 0), (0, 0), (0, 0), (0, LANES - channels)))        # lane-dense

    block_ops, wh, bh = _prep_params(params, channels, n_classes)
    block_dims = [(16, 16), (8, 8), (4, 4), (2, 2)]

    kernel = _make_kernel(n, n_classes, block_dims)
    scratch = [pltpu.VMEM((n, 2 * ho + 2, 2 * wo + 2, LANES), jnp.float32)
               for (ho, wo) in block_dims]

    # TODO(synk): at larger batch/img_size this should grow a grid over the
    # M = N*Ho*Wo dimension (BlockSpec tiling, dimension_semantics=("parallel",))
    # instead of whole-array VMEM residency; unnecessary at these shapes.
    packed = pl.pallas_call(
        kernel,
        out_shape=jax.ShapeDtypeStruct((n, LANES), jnp.float32),
        in_specs=[_VMEM] * (1 + len(block_ops) + 2),
        out_specs=_VMEM,
        scratch_shapes=scratch,
        compiler_params=pltpu.CompilerParams(vmem_limit_bytes=32 * 1024 * 1024),
    )(x, *block_ops, wh, bh)

    validity = packed[:, 0:1]
    label = packed[:, 1:1 + n_classes]
    return validity, label


# ----------------------------------------------------------------------------
# Deterministic parameter init (synthetic; shapes follow the nn.Module)
# ----------------------------------------------------------------------------
def init_params(key, channels=1, n_classes=10):
    keys = jax.random.split(key, 32)
    ki = iter(keys)

    def nrm(shape, s=0.05):
        return s * jax.random.normal(next(ki), shape, jnp.float32)

    cins = [channels, 16, 32, 64]
    couts = [16, 32, 64, 128]
    bns = [False, True, True, True]
    # nn.BatchNorm2d(out_filters, 0.8): second positional arg is eps -> eps=0.8
    # (unusual but faithful to the reference module; do not "fix").
    eps = 0.8

    blocks = []
    for cin, cout, bn in zip(cins, couts, bns):
        w = nrm((cout, cin, 3, 3))
        b = nrm((cout,))
        if bn:
            gamma = 1.0 + nrm((cout,), 0.1)
            beta = nrm((cout,), 0.1)
            rmean = nrm((cout,), 0.1)
            rvar = 1.0 + jnp.abs(nrm((cout,), 0.1))
            scale = gamma / jnp.sqrt(rvar + eps)
            shift = beta - rmean * scale
        else:
            scale = jnp.ones((cout,), jnp.float32)
            shift = jnp.zeros((cout,), jnp.float32)
        blocks.append(dict(w=w, b=b, scale=scale, shift=shift))

    # PyTorch Linear weight is (out, in); stored transposed (in, out) for x @ W.
    adv_w = nrm((512, 1))
    adv_b = nrm((1, 1))
    aux_w = nrm((512, n_classes))
    aux_b = nrm((1, n_classes))
    return dict(blocks=blocks, adv_w=adv_w, adv_b=adv_b, aux_w=aux_w, aux_b=aux_b)


# TODO(synk): Dropout2d is stochastic and BatchNorm training-mode batch stats are
# not reproduced; eval-mode semantics (identity dropout, folded running stats) used.

if __name__ == "__main__":
    key = jax.random.PRNGKey(0)
    kx, kp = jax.random.split(key)

    batch, channels, img_size, n_classes = 2, 1, 32, 10
    x = jax.random.normal(kx, (batch, channels, img_size, img_size), jnp.float32)
    params = init_params(kp, channels=channels, n_classes=n_classes)

    fwd = jax.jit(discriminator_forward)
    validity, label = fwd(x, params)
    jax.block_until_ready((validity, label))

    assert validity.shape == (batch, 1)
    assert label.shape == (batch, n_classes)
    assert bool(jnp.all(jnp.isfinite(validity))) and bool(jnp.all(jnp.isfinite(label)))
    assert bool(jnp.allclose(jnp.sum(label, axis=1), 1.0, atol=5e-3))
    print("KERNEL_OK")
</pallas_src>

<mosaic_0001>
module attributes {stable_mosaic.version = 11 : i64} {
  func.func @kernel(%arg0: memref<2x32x32x128xf32, #tpu.memory_space<vmem>>, %arg1: memref<9x128x128xf32, #tpu.memory_space<vmem>>, %arg2: memref<3x128xf32, #tpu.memory_space<vmem>>, %arg3: memref<9x128x128xf32, #tpu.memory_space<vmem>>, %arg4: memref<3x128xf32, #tpu.memory_space<vmem>>, %arg5: memref<9x128x128xf32, #tpu.memory_space<vmem>>, %arg6: memref<3x128xf32, #tpu.memory_space<vmem>>, %arg7: memref<9x128x128xf32, #tpu.memory_space<vmem>>, %arg8: memref<3x128xf32, #tpu.memory_space<vmem>>, %arg9: memref<4x128x128xf32, #tpu.memory_space<vmem>>, %arg10: memref<1x128xf32, #tpu.memory_space<vmem>>, %arg11: memref<2x128xf32, #tpu.memory_space<vmem>>, %arg12: memref<2x34x34x128xf32, #tpu.memory_space<vmem>>, %arg13: memref<2x18x18x128xf32, #tpu.memory_space<vmem>>, %arg14: memref<2x10x10x128xf32, #tpu.memory_space<vmem>>, %arg15: memref<2x6x6x128xf32, #tpu.memory_space<vmem>>) attributes {dimension_semantics = [], scalar_prefetch = 0 : i64, scratch_operands = 4 : i64, tpu.core_type = #tpu.core_type<tc>} {
    %c0 = arith.constant 0 : index
    %c0_0 = arith.constant 0 : index
    %c0_1 = arith.constant 0 : index
    %c0_2 = arith.constant 0 : index
    %0 = vector.load %arg0[%c0, %c0_0, %c0_1, %c0_2] : memref<2x32x32x128xf32, #tpu.memory_space<vmem>>, vector<2x32x32x128xf32>
    %cst = arith.constant 0.000000e+00 : f32
    %1 = vector.broadcast %cst : f32 to vector<2x34x34x128xf32>
    %c0_3 = arith.constant 0 : index
    %c0_4 = arith.constant 0 : index
    %c0_5 = arith.constant 0 : index
    %c0_6 = arith.constant 0 : index
    %2 = vector.load %arg12[%c0_3, %c0_4, %c0_5, %c0_6] : memref<2x34x34x128xf32, #tpu.memory_space<vmem>>, vector<2x34x34x128xf32>
    tpu.vector_store %arg12[%c0_3, %c0_4, %c0_5, %c0_6], %1 {strides = array<i32>} : memref<2x34x34x128xf32, #tpu.memory_space<vmem>>, vector<2x34x34x128xf32>,
    %c0_7 = arith.constant 0 : index
    %c1 = arith.constant 1 : index
    %c1_8 = arith.constant 1 : index
    %c0_9 = arith.constant 0 : index
    %3 = vector.load %arg12[%c0_7, %c1, %c1_8, %c0_9] : memref<2x34x34x128xf32, #tpu.memory_space<vmem>>, vector<2x32x32x128xf32>
    tpu.vector_store %arg12[%c0_7, %c1, %c1_8, %c0_9], %0 {strides = array<i32>} : memref<2x34x34x128xf32, #tpu.memory_space<vmem>>, vector<2x32x32x128xf32>,
    %c0_10 = arith.constant 0 : index
    %c0_11 = arith.constant 0 : index
    %c0_12 = arith.constant 0 : index
    %c0_13 = arith.constant 0 : index
    %4 = tpu.strided_load %arg12[%c0_10, %c0_11, %c0_12, %c0_13] {strides = array<i32: 1, 1, 2, 1>} : memref<2x34x34x128xf32, #tpu.memory_space<vmem>>, vector<2x34x17x128xf32>
    %c0_14 = arith.constant 0 : index
    %c0_15 = arith.constant 0 : index
    %c1_16 = arith.constant 1 : index
    %c0_17 = arith.constant 0 : index
    %5 = tpu.strided_load %arg12[%c0_14, %c0_15, %c1_16, %c0_17] {strides = array<i32: 1, 1, 2, 1>} : memref<2x34x34x128xf32, #tpu.memory_space<vmem>>, vector<2x34x17x128xf32>
    %6 = vector.shape_cast %4 : vector<2x34x17x128xf32> to vector<2x17x2x17x128xf32>
    %7 = vector.extract_strided_slice %6 {offsets = [0, 0, 0, 0, 0], sizes = [2, 17, 1, 17, 128], strides = [1, 1, 1, 1, 1]} : vector<2x17x2x17x128xf32> to vector<2x17x1x17x128xf32>
    %8 = vector.shape_cast %7 : vector<2x17x1x17x128xf32> to vector<2x17x17x128xf32>
    %9 = vector.extract_strided_slice %6 {offsets = [0, 0, 1, 0, 0], sizes = [2, 17, 1, 17, 128], strides = [1, 1, 1, 1, 1]} : vector<2x17x2x17x128xf32> to vector<2x17x1x17x128xf32>
    %10 = vector.shape_cast %9 : vector<2x17x1x17x128xf32> to vector<2x17x17x128xf32>
    %11 = vector.shape_cast %5 : vector<2x34x17x128xf32> to vector<2x17x2x17x128xf32>
    %12 = vector.extract_strided_slice %11 {offsets = [0, 0, 0, 0, 0], sizes = [2, 17, 1, 17, 128], strides = [1, 1, 1, 1, 1]} : vector<2x17x2x17x128xf32> to vector<2x17x1x17x128xf32>
    %13 = vector.shape_cast %12 : vector<2x17x1x17x128xf32> to vector<2x17x17x128xf32>
    %14 = vector.extract_strided_slice %11 {offsets = [0, 0, 1, 0, 0], sizes = [2, 17, 1, 17, 128], strides = [1, 1, 1, 1, 1]} : vector<2x17x2x17x128xf32> to vector<2x17x1x17x128xf32>
    %15 = vector.shape_cast %14 : vector<2x17x1x17x128xf32> to vector<2x17x17x128xf32>
    %cst_18 = arith.constant 0.000000e+00 : f32
    %16 = vector.broadcast %cst_18 : f32 to vector<512x128xf32>
    %17 = vector.extract_strided_slice %8 {offsets = [0, 0, 0, 0], sizes = [2, 16, 16, 128], strides = [1, 1, 1, 1]} : vector<2x17x17x128xf32> to vector<2x16x16x128xf32>
    %18 = vector.shape_cast %17 : vector<2x16x16x128xf32> to vector<512x128xf32>
    %c0_19 = arith.constant 0 : index
    %c0_20 = arith.constant 0 : index
    %c0_21 = arith.constant 0 : index
    %19 = vector.load %arg1[%c0_19, %c0_20, %c0_21] : memref<9x128x128xf32, #tpu.memory_space<vmem>>, vector<1x128x128xf32>
    %20 = vector.shape_cast %19 : vector<1x128x128xf32> to vector<128x128xf32>
    %cst_22 = arith.constant dense<0.000000e+00> : vector<512x128xf32>
    %21 = tpu.matmul %18, %20, %cst_22 {dimension_numbers = #tpu.dot_dimension_numbers<[1], [0], [0], [1], [0, 0, 1, 1], [], []>} : vector<512x128xf32>, vector<128x128xf32>, vector<512x128xf32> -> vector<512x128xf32>
    %22 = arith.addf %16, %21 : vector<512x128xf32>
    %23 = vector.extract_strided_slice %13 {offsets = [0, 0, 0, 0], sizes = [2, 16, 16, 128], strides = [1, 1, 1, 1]} : vector<2x17x17x128xf32> to vector<2x16x16x128xf32>
    %24 = vector.shape_cast %23 : vector<2x16x16x128xf32> to vector<512x128xf32>
    %c1_23 = arith.constant 1 : index
    %c0_24 = arith.constant 0 : index
    %c0_25 = arith.constant 0 : index
    %25 = vector.load %arg1[%c1_23, %c0_24, %c0_25] : memref<9x128x128xf32, #tpu.memory_space<vmem>>, vector<1x128x128xf32>
    %26 = vector.shape_cast %25 : vector<1x128x128xf32> to vector<128x128xf32>
    %cst_26 = arith.constant dense<0.000000e+00> : vector<512x128xf32>
    %27 = tpu.matmul %24, %26, %cst_26 {dimension_numbers = #tpu.dot_dimension_numbers<[1], [0], [0], [1], [0, 0, 1, 1], [], []>} : vector<512x128xf32>, vector<128x128xf32>, vector<512x128xf32> -> vector<512x128xf32>
    %28 = arith.addf %22, %27 : vector<512x128xf32>
    %29 = vector.extract_strided_slice %8 {offsets = [0, 0, 1, 0], sizes = [2, 16, 16, 128], strides = [1, 1, 1, 1]} : vector<2x17x17x128xf32> to vector<2x16x16x128xf32>
    %30 = vector.shape_cast %29 : vector<2x16x16x128xf32> to vector<512x128xf32>
    %c2 = arith.constant 2 : index
    %c0_27 = arith.constant 0 : index
    %c0_28 = arith.constant 0 : index
    %31 = vector.load %arg1[%c2, %c0_27, %c0_28] : memref<9x128x128xf32, #tpu.memory_space<vmem>>, vector<1x128x128xf32>
    %32 = vector.shape_cast %31 : vector<1x128x128xf32> to vector<128x128xf32>
    %cst_29 = arith.constant dense<0.000000e+00> : vector<512x128xf32>
    %33 = tpu.matmul %30, %32, %cst_29 {dimension_numbers = #tpu.dot_dimension_numbers<[1], [0], [0], [1], [0, 0, 1, 1], [], []>} : vector<512x128xf32>, vector<128x128xf32>, vector<512x128xf32> -> vector<512x128xf32>
    %34 = arith.addf %28, %33 : vector<512x128xf32>
    %35 = vector.extract_strided_slice %10 {offsets = [0, 0, 0, 0], sizes = [2, 16, 16, 128], strides = [1, 1, 1, 1]} : vector<2x17x17x128xf32> to vector<2x16x16x128xf32>
    %36 = vector.shape_cast %35 : vector<2x16x16x128xf32> to vector<512x128xf32>
    %c3 = arith.constant 3 : index
    %c0_30 = arith.constant 0 : index
    %c0_31 = arith.constant 0 : index
    %37 = vector.load %arg1[%c3, %c0_30, %c0_31] : memref<9x128x128xf32, #tpu.memory_space<vmem>>, vector<1x128x128xf32>
    %38 = vector.shape_cast %37 : vector<1x128x128xf32> to vector<128x128xf32>
    %cst_32 = arith.constant dense<0.000000e+00> : vector<512x128xf32>
    %39 = tpu.matmul %36, %38, %cst_32 {dimension_numbers = #tpu.dot_dimension_numbers<[1], [0], [0], [1], [0, 0, 1, 1], [], []>} : vector<512x128xf32>, vector<128x128xf32>, vector<512x128xf32> -> vector<512x128xf32>
    %40 = arith.addf %34, %39 : vector<512x128xf32>
    %41 = vector.extract_strided_slice %15 {offsets = [0, 0, 0, 0], sizes = [2, 16, 16, 128], strides = [1, 1, 1, 1]} : vector<2x17x17x128xf32> to vector<2x16x16x128xf32>
    %42 = vector.shape_cast %41 : vector<2x16x16x128xf32> to vector<512x128xf32>
    %c4 = arith.constant 4 : index
    %c0_33 = arith.constant 0 : index
    %c0_34 = arith.constant 0 : index
    %43 = vector.load %arg1[%c4, %c0_33, %c0_34] : memref<9x128x128xf32, #tpu.memory_space<vmem>>, vector<1x128x128xf32>
    %44 = vector.shape_cast %43 : vector<1x128x128xf32> to vector<128x128xf32>
    %cst_35 = arith.constant dense<0.000000e+00> : vector<512x128xf32>
    %45 = tpu.matmul %42, %44, %cst_35 {dimension_numbers = #tpu.dot_dimension_numbers<[1], [0], [0], [1], [0, 0, 1, 1], [], []>} : vector<512x128xf32>, vector<128x128xf32>, vector<512x128xf32> -> vector<512x128xf32>
    %46 = arith.addf %40, %45 : vector<512x128xf32>
    %47 = vector.extract_strided_slice %10 {offsets = [0, 0, 1, 0], sizes = [2, 16, 16, 128], strides = [1, 1, 1, 1]} : vector<2x17x17x128xf32> to vector<2x16x16x128xf32>
    %48 = vector.shape_cast %47 : vector<2x16x16x128xf32> to vector<512x128xf32>
    %c5 = arith.constant 5 : index
    %c0_36 = arith.constant 0 : index
    %c0_37 = arith.constant 0 : index
    %49 = vector.load %arg1[%c5, %c0_36, %c0_37] : memref<9x128x128xf32, #tpu.memory_space<vmem>>, vector<1x128x128xf32>
    %50 = vector.shape_cast %49 : vector<1x128x128xf32> to vector<128x128xf32>
    %cst_38 = arith.constant dense<0.000000e+00> : vector<512x128xf32>
    %51 = tpu.matmul %48, %50, %cst_38 {dimension_numbers = #tpu.dot_dimension_numbers<[1], [0], [0], [1], [0, 0, 1, 1], [], []>} : vector<512x128xf32>, vector<128x128xf32>, vector<512x128xf32> -> vector<512x128xf32>
    %52 = arith.addf %46, %51 : vector<512x128xf32>
    %53 = vector.extract_strided_slice %8 {offsets = [0, 1, 0, 0], sizes = [2, 16, 16, 128], strides = [1, 1, 1, 1]} : vector<2x17x17x128xf32> to vector<2x16x16x128xf32>
    %54 = vector.shape_cast %53 : vector<2x16x16x128xf32> to vector<512x128xf32>
    %c6 = arith.constant 6 : index
    %c0_39 = arith.constant 0 : index
    %c0_40 = arith.constant 0 : index
    %55 = vector.load %arg1[%c6, %c0_39, %c0_40] : memref<9x128x128xf32, #tpu.memory_space<vmem>>, vector<1x128x128xf32>
    %56 = vector.shape_cast %55 : vector<1x128x128xf32> to vector<128x128xf32>
    %cst_41 = arith.constant dense<0.000000e+00> : vector<512x128xf32>
    %57 = tpu.matmul %54, %56, %cst_41 {dimension_numbers = #tpu.dot_dimension_numbers<[1], [0], [0], [1], [0, 0, 1, 1], [], []>} : vector<512x128xf32>, vector<128x128xf32>, vector<512x128xf32> -> vector<512x128xf32>
    %58 = arith.addf %52, %57 : vector<512x128xf32>
    %59 = vector.extract_strided_slice %13 {offsets = [0, 1, 0, 0], sizes = [2, 16, 16, 128], strides = [1, 1, 1, 1]} : vector<2x17x17x128xf32> to vector<2x16x16x128xf32>
    %60 = vector.shape_cast %59 : vector<2x16x16x128xf32> to vector<512x128xf32>
    %c7 = arith.constant 7 : index
    %c0_42 = arith.constant 0 : index
    %c0_43 = arith.constant 0 : index
    %61 = vector.load %arg1[%c7, %c0_42, %c0_43] : memref<9x128x128xf32, #tpu.memory_space<vmem>>, vector<1x128x128xf32>
    %62 = vector.shape_cast %61 : vector<1x128x128xf32> to vector<128x128xf32>
    %cst_44 = arith.constant dense<0.000000e+00> : vector<512x128xf32>
    %63 = tpu.matmul %60, %62, %cst_44 {dimension_numbers = #tpu.dot_dimension_numbers<[1], [0], [0], [1], [0, 0, 1, 1], [], []>} : vector<512x128xf32>, vector<128x128xf32>, vector<512x128xf32> -> vector<512x128xf32>
    %64 = arith.addf %58, %63 : vector<512x128xf32>
    %65 = vector.extract_strided_slice %8 {offsets = [0, 1, 1, 0], sizes = [2, 16, 16, 128], strides = [1, 1, 1, 1]} : vector<2x17x17x128xf32> to vector<2x16x16x128xf32>
    %66 = vector.shape_cast %65 : vector<2x16x16x128xf32> to vector<512x128xf32>
    %c8 = arith.constant 8 : index
    %c0_45 = arith.constant 0 : index
    %c0_46 = arith.constant 0 : index
    %67 = vector.load %arg1[%c8, %c0_45, %c0_46] : memref<9x128x128xf32, #tpu.memory_space<vmem>>, vector<1x128x128xf32>
    %68 = vector.shape_cast %67 : vector<1x128x128xf32> to vector<128x128xf32>
    %cst_47 = arith.constant dense<0.000000e+00> : vector<512x128xf32>
    %69 = tpu.matmul %66, %68, %cst_47 {dimension_numbers = #tpu.dot_dimension_numbers<[1], [0], [0], [1], [0, 0, 1, 1], [], []>} : vector<512x128xf32>, vector<128x128xf32>, vector<512x128xf32> -> vector<512x128xf32>
    %70 = arith.addf %64, %69 : vector<512x128xf32>
    %c0_48 = arith.constant 0 : index
    %c0_49 = arith.constant 0 : index
    %71 = vector.load %arg2[%c0_48, %c0_49] : memref<3x128xf32, #tpu.memory_space<vmem>>, vector<1x128xf32>
    %c1_50 = arith.constant 1 : index
    %c0_51 = arith.constant 0 : index
    %72 = vector.load %arg2[%c1_50, %c0_51] : memref<3x128xf32, #tpu.memory_space<vmem>>, vector<1x128xf32>
    %c2_52 = arith.constant 2 : index
    %c0_53 = arith.constant 0 : index
    %73 = vector.load %arg2[%c2_52, %c0_53] : memref<3x128xf32, #tpu.memory_space<vmem>>, vector<1x128xf32>
    %74 = vector.broadcast %71 : vector<1x128xf32> to vector<512x128xf32>
    %75 = arith.addf %70, %74 : vector<512x128xf32>
    %cst_54 = arith.constant 0.000000e+00 : f32
    %76 = vector.broadcast %cst_54 : f32 to vector<512x128xf32>
    %77 = arith.cmpf oge, %75, %76 : vector<512x128xf32>
    %cst_55 = arith.constant 2.000000e-01 : f32
    %78 = vector.broadcast %cst_55 : f32 to vector<512x128xf32>
    %79 = arith.mulf %78, %75 : vector<512x128xf32>
    %80 = arith.select %77, %75, %79 : vector<512x128xi1>, vector<512x128xf32>
    %81 = vector.broadcast %72 : vector<1x128xf32> to vector<512x128xf32>
    %82 = arith.mulf %80, %81 : vector<512x128xf32>
    %83 = vector.broadcast %73 : vector<1x128xf32> to vector<512x128xf32>
    %84 = arith.addf %82, %83 : vector<512x128xf32>
    %85 = vector.shape_cast %84 : vector<512x128xf32> to vector<2x16x16x128xf32>
    %cst_56 = arith.constant 0.000000e+00 : f32
    %86 = vector.broadcast %cst_56 : f32 to vector<2x18x18x128xf32>
    %c0_57 = arith.constant 0 : index
    %c0_58 = arith.constant 0 : index
    %c0_59 = arith.constant 0 : index
    %c0_60 = arith.constant 0 : index
    %87 = vector.load %arg13[%c0_57, %c0_58, %c0_59, %c0_60] : memref<2x18x18x128xf32, #tpu.memory_space<vmem>>, vector<2x18x18x128xf32>
    tpu.vector_store %arg13[%c0_57, %c0_58, %c0_59, %c0_60], %86 {strides = array<i32>} : memref<2x18x18x128xf32, #tpu.memory_space<vmem>>, vector<2x18x18x128xf32>,
    %c0_61 = arith.constant 0 : index
    %c1_62 = arith.constant 1 : index
    %c1_63 = arith.constant 1 : index
    %c0_64 = arith.constant 0 : index
    %88 = vector.load %arg13[%c0_61, %c1_62, %c1_63, %c0_64] : memref<2x18x18x128xf32, #tpu.memory_space<vmem>>, vector<2x16x16x128xf32>
    tpu.vector_store %arg13[%c0_61, %c1_62, %c1_63, %c0_64], %85 {strides = array<i32>} : memref<2x18x18x128xf32, #tpu.memory_space<vmem>>, vector<2x16x16x128xf32>,
    %c0_65 = arith.constant 0 : index
    %c0_66 = arith.constant 0 : index
    %c0_67 = arith.constant 0 : index
    %c0_68 = arith.constant 0 : index
    %89 = tpu.strided_load %arg13[%c0_65, %c0_66, %c0_67, %c0_68] {strides = array<i32: 1, 1, 2, 1>} : memref<2x18x18x128xf32, #tpu.memory_space<vmem>>, vector<2x18x9x128xf32>
    %c0_69 = arith.constant 0 : index
    %c0_70 = arith.constant 0 : index
    %c1_71 = arith.constant 1 : index
    %c0_72 = arith.constant 0 : index
    %90 = tpu.strided_load %arg13[%c0_69, %c0_70, %c1_71, %c0_72] {strides = array<i32: 1, 1, 2, 1>} : memref<2x18x18x128xf32, #tpu.memory_space<vmem>>, vector<2x18x9x128xf32>
    %91 = vector.shape_cast %89 : vector<2x18x9x128xf32> to vector<2x9x2x9x128xf32>
    %92 = vector.extract_strided_slice %91 {offsets = [0, 0, 0, 0, 0], sizes = [2, 9, 1, 9, 128], strides = [1, 1, 1, 1, 1]} : vector<2x9x2x9x128xf32> to vector<2x9x1x9x128xf32>
    %93 = vector.shape_cast %92 : vector<2x9x1x9x128xf32> to vector<2x9x9x128xf32>
    %94 = vector.extract_strided_slice %91 {offsets = [0, 0, 1, 0, 0], sizes = [2, 9, 1, 9, 128], strides = [1, 1, 1, 1, 1]} : vector<2x9x2x9x128xf32> to vector<2x9x1x9x128xf32>
    %95 = vector.shape_cast %94 : vector<2x9x1x9x128xf32> to vector<2x9x9x128xf32>
    %96 = vector.shape_cast %90 : vector<2x18x9x128xf32> to vector<2x9x2x9x128xf32>
    %97 = vector.extract_strided_slice %96 {offsets = [0, 0, 0, 0, 0], sizes = [2, 9, 1, 9, 128], strides = [1, 1, 1, 1, 1]} : vector<2x9x2x9x128xf32> to vector<2x9x1x9x128xf32>
    %98 = vector.shape_cast %97 : vector<2x9x1x9x128xf32> to vector<2x9x9x128xf32>
    %99 = vector.extract_strided_slice %96 {offsets = [0, 0, 1, 0, 0], sizes = [2, 9, 1, 9, 128], strides = [1, 1, 1, 1, 1]} : vector<2x9x2x9x128xf32> to vector<2x9x1x9x128xf32>
    %100 = vector.shape_cast %99 : vector<2x9x1x9x128xf32> to vector<2x9x9x128xf32>
    %cst_73 = arith.constant 0.000000e+00 : f32
    %101 = vector.broadcast %cst_73 : f32 to vector<128x128xf32>
    %102 = vector.extract_strided_slice %93 {offsets = [0, 0, 0, 0], sizes = [2, 8, 8, 128], strides = [1, 1, 1, 1]} : vector<2x9x9x128xf32> to vector<2x8x8x128xf32>
    %103 = vector.shape_cast %102 : vector<2x8x8x128xf32> to vector<128x128xf32>
    %c0_74 = arith.constant 0 : index
    %c0_75 = arith.constant 0 : index
    %c0_76 = arith.constant 0 : index
    %104 = vector.load %arg3[%c0_74, %c0_75, %c0_76] : memref<9x128x128xf32, #tpu.memory_space<vmem>>, vector<1x128x128xf32>
    %105 = vector.shape_cast %104 : vector<1x128x128xf32> to vector<128x128xf32>
    %cst_77 = arith.constant dense<0.000000e+00> : vector<128x128xf32>
    %106 = tpu.matmul %103, %105, %cst_77 {dimension_numbers = #tpu.dot_dimension_numbers<[1], [0], [0], [1], [0, 0, 1, 1], [], []>} : vector<128x128xf32>, vector<128x128xf32>, vector<128x128xf32> -> vector<128x128xf32>
    %107 = arith.addf %101, %106 : vector<128x128xf32>
    %108 = vector.extract_strided_slice %98 {offsets = [0, 0, 0, 0], sizes = [2, 8, 8, 128], strides = [1, 1, 1, 1]} : vector<2x9x9x128xf32> to vector<2x8x8x128xf32>
    %109 = vector.shape_cast %108 : vector<2x8x8x128xf32> to vector<128x128xf32>
    %c1_78 = arith.constant 1 : index
    %c0_79 = arith.constant 0 : index
    %c0_80 = arith.constant 0 : index
    %110 = vector.load %arg3[%c1_78, %c0_79, %c0_80] : memref<9x128x128xf32, #tpu.memory_space<vmem>>, vector<1x128x128xf32>
    %111 = vector.shape_cast %110 : vector<1x128x128xf32> to vector<128x128xf32>
    %cst_81 = arith.constant dense<0.000000e+00> : vector<128x128xf32>
    %112 = tpu.matmul %109, %111, %cst_81 {dimension_numbers = #tpu.dot_dimension_numbers<[1], [0], [0], [1], [0, 0, 1, 1], [], []>} : vector<128x128xf32>, vector<128x128xf32>, vector<128x128xf32> -> vector<128x128xf32>
    %113 = arith.addf %107, %112 : vector<128x128xf32>
    %114 = vector.extract_strided_slice %93 {offsets = [0, 0, 1, 0], sizes = [2, 8, 8, 128], strides = [1, 1, 1, 1]} : vector<2x9x9x128xf32> to vector<2x8x8x128xf32>
    %115 = vector.shape_cast %114 : vector<2x8x8x128xf32> to vector<128x128xf32>
    %c2_82 = arith.constant 2 : index
    %c0_83 = arith.constant 0 : index
    %c0_84 = arith.constant 0 : index
    %116 = vector.load %arg3[%c2_82, %c0_83, %c0_84] : memref<9x128x128xf32, #tpu.memory_space<vmem>>, vector<1x128x128xf32>
    %117 = vector.shape_cast %116 : vector<1x128x128xf32> to vector<128x128xf32>
    %cst_85 = arith.constant dense<0.000000e+00> : vector<128x128xf32>
    %118 = tpu.matmul %115, %117, %cst_85 {dimension_numbers = #tpu.dot_dimension_numbers<[1], [0], [0], [1], [0, 0, 1, 1], [], []>} : vector<128x128xf32>, vector<128x128xf32>, vector<128x128xf32> -> vector<128x128xf32>
    %119 = arith.addf %113, %118 : vector<128x128xf32>
    %120 = vector.extract_strided_slice %95 {offsets = [0, 0, 0, 0], sizes = [2, 8, 8, 128], strides = [1, 1, 1, 1]} : vector<2x9x9x128xf32> to vector<2x8x8x128xf32>
    %121 = vector.shape_cast %120 : vector<2x8x8x128xf32> to vector<128x128xf32>
    %c3_86 = arith.constant 3 : index
    %c0_87 = arith.constant 0 : index
    %c0_88 = arith.constant 0 : index
    %122 = vector.load %arg3[%c3_86, %c0_87, %c0_88] : memref<9x128x128xf32, #tpu.memory_space<vmem>>, vector<1x128x128xf32>
    %123 = vector.shape_cast %122 : vector<1x128x128xf32> to vector<128x128xf32>
    %cst_89 = arith.constant dense<0.000000e+00> : vector<128x128xf32>
    %124 = tpu.matmul %121, %123, %cst_89 {dimension_numbers = #tpu.dot_dimension_numbers<[1], [0], [0], [1], [0, 0, 1, 1], [], []>} : vector<128x128xf32>, vector<128x128xf32>, vector<128x128xf32> -> vector<128x128xf32>
    %125 = arith.addf %119, %124 : vector<128x128xf32>
    %126 = vector.extract_strided_slice %100 {offsets = [0, 0, 0, 0], sizes = [2, 8, 8, 128], strides = [1, 1, 1, 1]} : vector<2x9x9x128xf32> to vector<2x8x8x128xf32>
    %127 = vector.shape_cast %126 : vector<2x8x8x128xf32> to vector<128x128xf32>
    %c4_90 = arith.constant 4 : index
    %c0_91 = arith.constant 0 : index
    %c0_92 = arith.constant 0 : index
    %128 = vector.load %arg3[%c4_90, %c0_91, %c0_92] : memref<9x128x128xf32, #tpu.memory_space<vmem>>, vector<1x128x128xf32>
    %129 = vector.shape_cast %128 : vector<1x128x128xf32> to vector<128x128xf32>
    %cst_93 = arith.constant dense<0.000000e+00> : vector<128x128xf32>
    %130 = tpu.matmul %127, %129, %cst_93 {dimension_numbers = #tpu.dot_dimension_numbers<[1], [0], [0], [1], [0, 0, 1, 1], [], []>} : vector<128x128xf32>, vector<128x128xf32>, vector<128x128xf32> -> vector<128x128xf32>
    %131 = arith.addf %125, %130 : vector<128x128xf32>
    %132 = vector.extract_strided_slice %95 {offsets = [0, 0, 1, 0], sizes = [2, 8, 8, 128], strides = [1, 1, 1, 1]} : vector<2x9x9x128xf32> to vector<2x8x8x128xf32>
    %133 = vector.shape_cast %132 : vector<2x8x8x128xf32> to vector<128x128xf32>
    %c5_94 = arith.constant 5 : index
    %c0_95 = arith.constant 0 : index
    %c0_96 = arith.constant 0 : index
    %134 = vector.load %arg3[%c5_94, %c0_95, %c0_96] : memref<9x128x128xf32, #tpu.memory_space<vmem>>, vector<1x128x128xf32>
    %135 = vector.shape_cast %134 : vector<1x128x128xf32> to vector<128x128xf32>
    %cst_97 = arith.constant dense<0.000000e+00> : vector<128x128xf32>
    %136 = tpu.matmul %133, %135, %cst_97 {dimension_numbers = #tpu.dot_dimension_numbers<[1], [0], [0], [1], [0, 0, 1, 1], [], []>} : vector<128x128xf32>, vector<128x128xf32>, vector<128x128xf32> -> vector<128x128xf32>
    %137 = arith.addf %131, %136 : vector<128x128xf32>
    %138 = vector.extract_strided_slice %93 {offsets = [0, 1, 0, 0], sizes = [2, 8, 8, 128], strides = [1, 1, 1, 1]} : vector<2x9x9x128xf32> to vector<2x8x8x128xf32>
    %139 = vector.shape_cast %138 : vector<2x8x8x128xf32> to vector<128x128xf32>
    %c6_98 = arith.constant 6 : index
    %c0_99 = arith.constant 0 : index
    %c0_100 = arith.constant 0 : index
    %140 = vector.load %arg3[%c6_98, %c0_99, %c0_100] : memref<9x128x128xf32, #tpu.memory_space<vmem>>, vector<1x128x128xf32>
    %141 = vector.shape_cast %140 : vector<1x128x128xf32> to vector<128x128xf32>
    %cst_101 = arith.constant dense<0.000000e+00> : vector<128x128xf32>
    %142 = tpu.matmul %139, %141, %cst_101 {dimension_numbers = #tpu.dot_dimension_numbers<[1], [0], [0], [1], [0, 0, 1, 1], [], []>} : vector<128x128xf32>, vector<128x128xf32>, vector<128x128xf32> -> vector<128x128xf32>
    %143 = arith.addf %137, %142 : vector<128x128xf32>
    %144 = vector.extract_strided_slice %98 {offsets = [0, 1, 0, 0], sizes = [2, 8, 8, 128], strides = [1, 1, 1, 1]} : vector<2x9x9x128xf32> to vector<2x8x8x128xf32>
    %145 = vector.shape_cast %144 : vector<2x8x8x128xf32> to vector<128x128xf32>
    %c7_102 = arith.constant 7 : index
    %c0_103 = arith.constant 0 : index
    %c0_104 = arith.constant 0 : index
    %146 = vector.load %arg3[%c7_102, %c0_103, %c0_104] : memref<9x128x128xf32, #tpu.memory_space<vmem>>, vector<1x128x128xf32>
    %147 = vector.shape_cast %146 : vector<1x128x128xf32> to vector<128x128xf32>
    %cst_105 = arith.constant dense<0.000000e+00> : vector<128x128xf32>
    %148 = tpu.matmul %145, %147, %cst_105 {dimension_numbers = #tpu.dot_dimension_numbers<[1], [0], [0], [1], [0, 0, 1, 1], [], []>} : vector<128x128xf32>, vector<128x128xf32>, vector<128x128xf32> -> vector<128x128xf32>
    %149 = arith.addf %143, %148 : vector<128x128xf32>
    %150 = vector.extract_strided_slice %93 {offsets = [0, 1, 1, 0], sizes = [2, 8, 8, 128], strides = [1, 1, 1, 1]} : vector<2x9x9x128xf32> to vector<2x8x8x128xf32>
    %151 = vector.shape_cast %150 : vector<2x8x8x128xf32> to vector<128x128xf32>
    %c8_106 = arith.constant 8 : index
    %c0_107 = arith.constant 0 : index
    %c0_108 = arith.constant 0 : index
    %152 = vector.load %arg3[%c8_106, %c0_107, %c0_108] : memref<9x128x128xf32, #tpu.memory_space<vmem>>, vector<1x128x128xf32>
    %153 = vector.shape_cast %152 : vector<1x128x128xf32> to vector<128x128xf32>
    %cst_109 = arith.constant dense<0.000000e+00> : vector<128x128xf32>
    %154 = tpu.matmul %151, %153, %cst_109 {dimension_numbers = #tpu.dot_dimension_numbers<[1], [0], [0], [1], [0, 0, 1, 1], [], []>} : vector<128x128xf32>, vector<128x128xf32>, vector<128x128xf32> -> vector<128x128xf32>
    %155 = arith.addf %149, %154 : vector<128x128xf32>
    %c0_110 = arith.constant 0 : index
    %c0_111 = arith.constant 0 : index
    %156 = vector.load %arg4[%c0_110, %c0_111] : memref<3x128xf32, #tpu.memory_space<vmem>>, vector<1x128xf32>
    %c1_112 = arith.constant 1 : index
    %c0_113 = arith.constant 0 : index
    %157 = vector.load %arg4[%c1_112, %c0_113] : memref<3x128xf32, #tpu.memory_space<vmem>>, vector<1x128xf32>
    %c2_114 = arith.constant 2 : index
    %c0_115 = arith.constant 0 : index
    %158 = vector.load %arg4[%c2_114, %c0_115] : memref<3x128xf32, #tpu.memory_space<vmem>>, vector<1x128xf32>
    %159 = vector.broadcast %156 : vector<1x128xf32> to vector<128x128xf32>
    %160 = arith.addf %155, %159 : vector<128x128xf32>
    %cst_116 = arith.constant 0.000000e+00 : f32
    %161 = vector.broadcast %cst_116 : f32 to vector<128x128xf32>
    %162 = arith.cmpf oge, %160, %161 : vector<128x128xf32>
    %cst_117 = arith.constant 2.000000e-01 : f32
    %163 = vector.broadcast %cst_117 : f32 to vector<128x128xf32>
    %164 = arith.mulf %163, %160 : vector<128x128xf32>
    %165 = arith.select %162, %160, %164 : vector<128x128xi1>, vector<128x128xf32>
    %166 = vector.broadcast %157 : vector<1x128xf32> to vector<128x128xf32>
    %167 = arith.mulf %165, %166 : vector<128x128xf32>
    %168 = vector.broadcast %158 : vector<1x128xf32> to vector<128x128xf32>
    %169 = arith.addf %167, %168 : vector<128x128xf32>
    %170 = vector.shape_cast %169 : vector<128x128xf32> to vector<2x8x8x128xf32>
    %cst_118 = arith.constant 0.000000e+00 : f32
    %171 = vector.broadcast %cst_118 : f32 to vector<2x10x10x128xf32>
    %c0_119 = arith.constant 0 : index
    %c0_120 = arith.constant 0 : index
    %c0_121 = arith.constant 0 : index
    %c0_122 = arith.constant 0 : index
    %172 = vector.load %arg14[%c0_119, %c0_120, %c0_121, %c0_122] : memref<2x10x10x128xf32, #tpu.memory_space<vmem>>, vector<2x10x10x128xf32>
    tpu.vector_store %arg14[%c0_119, %c0_120, %c0_121, %c0_122], %171 {strides = array<i32>} : memref<2x10x10x128xf32, #tpu.memory_space<vmem>>, vector<2x10x10x128xf32>,
    %c0_123 = arith.constant 0 : index
    %c1_124 = arith.constant 1 : index
    %c1_125 = arith.constant 1 : index
    %c0_126 = arith.constant 0 : index
    %173 = vector.load %arg14[%c0_123, %c1_124, %c1_125, %c0_126] : memref<2x10x10x128xf32, #tpu.memory_space<vmem>>, vector<2x8x8x128xf32>
    tpu.vector_store %arg14[%c0_123, %c1_124, %c1_125, %c0_126], %170 {strides = array<i32>} : memref<2x10x10x128xf32, #tpu.memory_space<vmem>>, vector<2x8x8x128xf32>,
    %c0_127 = arith.constant 0 : index
    %c0_128 = arith.constant 0 : index
    %c0_129 = arith.constant 0 : index
    %c0_130 = arith.constant 0 : index
    %174 = tpu.strided_load %arg14[%c0_127, %c0_128, %c0_129, %c0_130] {strides = array<i32: 1, 1, 2, 1>} : memref<2x10x10x128xf32, #tpu.memory_space<vmem>>, vector<2x10x5x128xf32>
    %c0_131 = arith.constant 0 : index
    %c0_132 = arith.constant 0 : index
    %c1_133 = arith.constant 1 : index
    %c0_134 = arith.constant 0 : index
    %175 = tpu.strided_load %arg14[%c0_131, %c0_132, %c1_133, %c0_134] {strides = array<i32: 1, 1, 2, 1>} : memref<2x10x10x128xf32, #tpu.memory_space<vmem>>, vector<2x10x5x128xf32>
    %176 = vector.shape_cast %174 : vector<2x10x5x128xf32> to vector<2x5x2x5x128xf32>
    %177 = vector.extract_strided_slice %176 {offsets = [0, 0, 0, 0, 0], sizes = [2, 5, 1, 5, 128], strides = [1, 1, 1, 1, 1]} : vector<2x5x2x5x128xf32> to vector<2x5x1x5x128xf32>
    %178 = vector.shape_cast %177 : vector<2x5x1x5x128xf32> to vector<2x5x5x128xf32>
    %179 = vector.extract_strided_slice %176 {offsets = [0, 0, 1, 0, 0], sizes = [2, 5, 1, 5, 128], strides = [1, 1, 1, 1, 1]} : vector<2x5x2x5x128xf32> to vector<2x5x1x5x128xf32>
    %180 = vector.shape_cast %179 : vector<2x5x1x5x128xf32> to vector<2x5x5x128xf32>
    %181 = vector.shape_cast %175 : vector<2x10x5x128xf32> to vector<2x5x2x5x128xf32>
    %182 = vector.extract_strided_slice %181 {offsets = [0, 0, 0, 0, 0], sizes = [2, 5, 1, 5, 128], strides = [1, 1, 1, 1, 1]} : vector<2x5x2x5x128xf32> to vector<2x5x1x5x128xf32>
    %183 = vector.shape_cast %182 : vector<2x5x1x5x128xf32> to vector<2x5x5x128xf32>
    %184 = vector.extract_strided_slice %181 {offsets = [0, 0, 1, 0, 0], sizes = [2, 5, 1, 5, 128], strides = [1, 1, 1, 1, 1]} : vector<2x5x2x5x128xf32> to vector<2x5x1x5x128xf32>
    %185 = vector.shape_cast %184 : vector<2x5x1x5x128xf32> to vector<2x5x5x128xf32>
    %cst_135 = arith.constant 0.000000e+00 : f32
    %186 = vector.broadcast %cst_135 : f32 to vector<32x128xf32>
    %187 = vector.extract_strided_slice %178 {offsets = [0, 0, 0, 0], sizes = [2, 4, 4, 128], strides = [1, 1, 1, 1]} : vector<2x5x5x128xf32> to vector<2x4x4x128xf32>
    %188 = vector.shape_cast %187 : vector<2x4x4x128xf32> to vector<32x128xf32>
    %c0_136 = arith.constant 0 : index
    %c0_137 = arith.constant 0 : index
    %c0_138 = arith.constant 0 : index
    %189 = vector.load %arg5[%c0_136, %c0_137, %c0_138] : memref<9x128x128xf32, #tpu.memory_space<vmem>>, vector<1x128x128xf32>
    %190 = vector.shape_cast %189 : vector<1x128x128xf32> to vector<128x128xf32>
    %cst_139 = arith.constant dense<0.000000e+00> : vector<32x128xf32>
    %191 = tpu.matmul %188, %190, %cst_139 {dimension_numbers = #tpu.dot_dimension_numbers<[1], [0], [0], [1], [0, 0, 1, 1], [], []>} : vector<32x128xf32>, vector<128x128xf32>, vector<32x128xf32> -> vector<32x128xf32>
    %192 = arith.addf %186, %191 : vector<32x128xf32>
    %193 = vector.extract_strided_slice %183 {offsets = [0, 0, 0, 0], sizes = [2, 4, 4, 128], strides = [1, 1, 1, 1]} : vector<2x5x5x128xf32> to vector<2x4x4x128xf32>
    %194 = vector.shape_cast %193 : vector<2x4x4x128xf32> to vector<32x128xf32>
    %c1_140 = arith.constant 1 : index
    %c0_141 = arith.constant 0 : index
    %c0_142 = arith.constant 0 : index
    %195 = vector.load %arg5[%c1_140, %c0_141, %c0_142] : memref<9x128x128xf32, #tpu.memory_space<vmem>>, vector<1x128x128xf32>
    %196 = vector.shape_cast %195 : vector<1x128x128xf32> to vector<128x128xf32>
    %cst_143 = arith.constant dense<0.000000e+00> : vector<32x128xf32>
    %197 = tpu.matmul %194, %196, %cst_143 {dimension_numbers = #tpu.dot_dimension_numbers<[1], [0], [0], [1], [0, 0, 1, 1], [], []>} : vector<32x128xf32>, vector<128x128xf32>, vector<32x128xf32> -> vector<32x128xf32>
    %198 = arith.addf %192, %197 : vector<32x128xf32>
    %199 = vector.extract_strided_slice %178 {offsets = [0, 0, 1, 0], sizes = [2, 4, 4, 128], strides = [1, 1, 1, 1]} : vector<2x5x5x128xf32> to vector<2x4x4x128xf32>
    %200 = vector.shape_cast %199 : vector<2x4x4x128xf32> to vector<32x128xf32>
    %c2_144 = arith.constant 2 : index
    %c0_145 = arith.constant 0 : index
    %c0_146 = arith.constant 0 : index
    %201 = vector.load %arg5[%c2_144, %c0_145, %c0_146] : memref<9x128x128xf32, #tpu.memory_space<vmem>>, vector<1x128x128xf32>
    %202 = vector.shape_cast %201 : vector<1x128x128xf32> to vector<128x128xf32>
    %cst_147 = arith.constant dense<0.000000e+00> : vector<32x128xf32>
    %203 = tpu.matmul %200, %202, %cst_147 {dimension_numbers = #tpu.dot_dimension_numbers<[1], [0], [0], [1], [0, 0, 1, 1], [], []>} : vector<32x128xf32>, vector<128x128xf32>, vector<32x128xf32> -> vector<32x128xf32>
    %204 = arith.addf %198, %203 : vector<32x128xf32>
    %205 = vector.extract_strided_slice %180 {offsets = [0, 0, 0, 0], sizes = [2, 4, 4, 128], strides = [1, 1, 1, 1]} : vector<2x5x5x128xf32> to vector<2x4x4x128xf32>
    %206 = vector.shape_cast %205 : vector<2x4x4x128xf32> to vector<32x128xf32>
    %c3_148 = arith.constant 3 : index
    %c0_149 = arith.constant 0 : index
    %c0_150 = arith.constant 0 : index
    %207 = vector.load %arg5[%c3_148, %c0_149, %c0_150] : memref<9x128x128xf32, #tpu.memory_space<vmem>>, vector<1x128x128xf32>
    %208 = vector.shape_cast %207 : vector<1x128x128xf32> to vector<128x128xf32>
    %cst_151 = arith.constant dense<0.000000e+00> : vector<32x128xf32>
    %209 = tpu.matmul %206, %208, %cst_151 {dimension_numbers = #tpu.dot_dimension_numbers<[1], [0], [0], [1], [0, 0, 1, 1], [], []>} : vector<32x128xf32>, vector<128x128xf32>, vector<32x128xf32> -> vector<32x128xf32>
    %210 = arith.addf %204, %209 : vector<32x128xf32>
    %211 = vector.extract_strided_slice %185 {offsets = [0, 0, 0, 0], sizes = [2, 4, 4, 128], strides = [1, 1, 1, 1]} : vector<2x5x5x128xf32> to vector<2x4x4x128xf32>
    %212 = vector.shape_cast %211 : vector<2x4x4x128xf32> to vector<32x128xf32>
    %c4_152 = arith.constant 4 : index
    %c0_153 = arith.constant 0 : index
    %c0_154 = arith.constant 0 : index
    %213 = vector.load %arg5[%c4_152, %c0_153, %c0_154] : memref<9x128x128xf32, #tpu.memory_space<vmem>>, vector<1x128x128xf32>
    %214 = vector.shape_cast %213 : vector<1x128x128xf32> to vector<128x128xf32>
    %cst_155 = arith.constant dense<0.000000e+00> : vector<32x128xf32>
    %215 = tpu.matmul %212, %214, %cst_155 {dimension_numbers = #tpu.dot_dimension_numbers<[1], [0], [0], [1], [0, 0, 1, 1], [], []>} : vector<32x128xf32>, vector<128x128xf32>, vector<32x128xf32> -> vector<32x128xf32>
    %216 = arith.addf %210, %215 : vector<32x128xf32>
    %217 = vector.extract_strided_slice %180 {offsets = [0, 0, 1, 0], sizes = [2, 4, 4, 128], strides = [1, 1, 1, 1]} : vector<2x5x5x128xf32> to vector<2x4x4x128xf32>
    %218 = vector.shape_cast %217 : vector<2x4x4x128xf32> to vector<32x128xf32>
    %c5_156 = arith.constant 5 : index
    %c0_157 = arith.constant 0 : index
    %c0_158 = arith.constant 0 : index
    %219 = vector.load %arg5[%c5_156, %c0_157, %c0_158] : memref<9x128x128xf32, #tpu.memory_space<vmem>>, vector<1x128x128xf32>
    %220 = vector.shape_cast %219 : vector<1x128x128xf32> to vector<128x128xf32>
    %cst_159 = arith.constant dense<0.000000e+00> : vector<32x128xf32>
    %221 = tpu.matmul %218, %220, %cst_159 {dimension_numbers = #tpu.dot_dimension_numbers<[1], [0], [0], [1], [0, 0, 1, 1], [], []>} : vector<32x128xf32>, vector<128x128xf32>, vector<32x128xf32> -> vector<32x128xf32>
    %222 = arith.addf %216, %221 : vector<32x128xf32>
    %223 = vector.extract_strided_slice %178 {offsets = [0, 1, 0, 0], sizes = [2, 4, 4, 128], strides = [1, 1, 1, 1]} : vector<2x5x5x128xf32> to vector<2x4x4x128xf32>
    %224 = vector.shape_cast %223 : vector<2x4x4x128xf32> to vector<32x128xf32>
    %c6_160 = arith.constant 6 : index
    %c0_161 = arith.constant 0 : index
    %c0_162 = arith.constant 0 : index
    %225 = vector.load %arg5[%c6_160, %c0_161, %c0_162] : memref<9x128x128xf32, #tpu.memory_space<vmem>>, vector<1x128x128xf32>
    %226 = vector.shape_cast %225 : vector<1x128x128xf32> to vector<128x128xf32>
    %cst_163 = arith.constant dense<0.000000e+00> : vector<32x128xf32>
    %227 = tpu.matmul %224, %226, %cst_163 {dimension_numbers = #tpu.dot_dimension_numbers<[1], [0], [0], [1], [0, 0, 1, 1], [], []>} : vector<32x128xf32>, vector<128x128xf32>, vector<32x128xf32> -> vector<32x128xf32>
    %228 = arith.addf %222, %227 : vector<32x128xf32>
    %229 = vector.extract_strided_slice %183 {offsets = [0, 1, 0, 0], sizes = [2, 4, 4, 128], strides = [1, 1, 1, 1]} : vector<2x5x5x128xf32> to vector<2x4x4x128xf32>
    %230 = vector.shape_cast %229 : vector<2x4x4x128xf32> to vector<32x128xf32>
    %c7_164 = arith.constant 7 : index
    %c0_165 = arith.constant 0 : index
    %c0_166 = arith.constant 0 : index
    %231 = vector.load %arg5[%c7_164, %c0_165, %c0_166] : memref<9x128x128xf32, #tpu.memory_space<vmem>>, vector<1x128x128xf32>
    %232 = vector.shape_cast %231 : vector<1x128x128xf32> to vector<128x128xf32>
    %cst_167 = arith.constant dense<0.000000e+00> : vector<32x128xf32>
    %233 = tpu.matmul %230, %232, %cst_167 {dimension_numbers = #tpu.dot_dimension_numbers<[1], [0], [0], [1], [0, 0, 1, 1], [], []>} : vector<32x128xf32>, vector<128x128xf32>, vector<32x128xf32> -> vector<32x128xf32>
    %234 = arith.addf %228, %233 : vector<32x128xf32>
    %235 = vector.extract_strided_slice %178 {offsets = [0, 1, 1, 0], sizes = [2, 4, 4, 128], strides = [1, 1, 1, 1]} : vector<2x5x5x128xf32> to vector<2x4x4x128xf32>
    %236 = vector.shape_cast %235 : vector<2x4x4x128xf32> to vector<32x128xf32>
    %c8_168 = arith.constant 8 : index
    %c0_169 = arith.constant 0 : index
    %c0_170 = arith.constant 0 : index
    %237 = vector.load %arg5[%c8_168, %c0_169, %c0_170] : memref<9x128x128xf32, #tpu.memory_space<vmem>>, vector<1x128x128xf32>
    %238 = vector.shape_cast %237 : vector<1x128x128xf32> to vector<128x128xf32>
    %cst_171 = arith.constant dense<0.000000e+00> : vector<32x128xf32>
    %239 = tpu.matmul %236, %238, %cst_171 {dimension_numbers = #tpu.dot_dimension_numbers<[1], [0], [0], [1], [0, 0, 1, 1], [], []>} : vector<32x128xf32>, vector<128x128xf32>, vector<32x128xf32> -> vector<32x128xf32>
    %240 = arith.addf %234, %239 : vector<32x128xf32>
    %c0_172 = arith.constant 0 : index
    %c0_173 = arith.constant 0 : index
    %241 = vector.load %arg6[%c0_172, %c0_173] : memref<3x128xf32, #tpu.memory_space<vmem>>, vector<1x128xf32>
    %c1_174 = arith.constant 1 : index
    %c0_175 = arith.constant 0 : index
    %242 = vector.load %arg6[%c1_174, %c0_175] : memref<3x128xf32, #tpu.memory_space<vmem>>, vector<1x128xf32>
    %c2_176 = arith.constant 2 : index
    %c0_177 = arith.constant 0 : index
    %243 = vector.load %arg6[%c2_176, %c0_177] : memref<3x128xf32, #tpu.memory_space<vmem>>, vector<1x128xf32>
    %244 = vector.broadcast %241 : vector<1x128xf32> to vector<32x128xf32>
    %245 = arith.addf %240, %244 : vector<32x128xf32>
    %cst_178 = arith.constant 0.000000e+00 : f32
    %246 = vector.broadcast %cst_178 : f32 to vector<32x128xf32>
    %247 = arith.cmpf oge, %245, %246 : vector<32x128xf32>
    %cst_179 = arith.constant 2.000000e-01 : f32
    %248 = vector.broadcast %cst_179 : f32 to vector<32x128xf32>
    %249 = arith.mulf %248, %245 : vector<32x128xf32>
    %250 = arith.select %247, %245, %249 : vector<32x128xi1>, vector<32x128xf32>
    %251 = vector.broadcast %242 : vector<1x128xf32> to vector<32x128xf32>
    %252 = arith.mulf %250, %251 : vector<32x128xf32>
    %253 = vector.broadcast %243 : vector<1x128xf32> to vector<32x128xf32>
    %254 = arith.addf %252, %253 : vector<32x128xf32>
    %255 = vector.shape_cast %254 : vector<32x128xf32> to vector<2x4x4x128xf32>
    %cst_180 = arith.constant 0.000000e+00 : f32
    %256 = vector.broadcast %cst_180 : f32 to vector<2x6x6x128xf32>
    %c0_181 = arith.constant 0 : index
    %c0_182 = arith.constant 0 : index
    %c0_183 = arith.constant 0 : index
    %c0_184 = arith.constant 0 : index
    %257 = vector.load %arg15[%c0_181, %c0_182, %c0_183, %c0_184] : memref<2x6x6x128xf32, #tpu.memory_space<vmem>>, vector<2x6x6x128xf32>
    tpu.vector_store %arg15[%c0_181, %c0_182, %c0_183, %c0_184], %256 {strides = array<i32>} : memref<2x6x6x128xf32, #tpu.memory_space<vmem>>, vector<2x6x6x128xf32>,
    %c0_185 = arith.constant 0 : index
    %c1_186 = arith.constant 1 : index
    %c1_187 = arith.constant 1 : index
    %c0_188 = arith.constant 0 : index
    %258 = vector.load %arg15[%c0_185, %c1_186, %c1_187, %c0_188] : memref<2x6x6x128xf32, #tpu.memory_space<vmem>>, vector<2x4x4x128xf32>
    tpu.vector_store %arg15[%c0_185, %c1_186, %c1_187, %c0_188], %255 {strides = array<i32>} : memref<2x6x6x128xf32, #tpu.memory_space<vmem>>, vector<2x4x4x128xf32>,
    %c0_189 = arith.constant 0 : index
    %c0_190 = arith.constant 0 : index
    %c0_191 = arith.constant 0 : index
    %c0_192 = arith.constant 0 : index
    %259 = tpu.strided_load %arg15[%c0_189, %c0_190, %c0_191, %c0_192] {strides = array<i32: 1, 1, 2, 1>} : memref<2x6x6x128xf32, #tpu.memory_space<vmem>>, vector<2x6x3x128xf32>
    %c0_193 = arith.constant 0 : index
    %c0_194 = arith.constant 0 : index
    %c1_195 = arith.constant 1 : index
    %c0_196 = arith.constant 0 : index
    %260 = tpu.strided_load %arg15[%c0_193, %c0_194, %c1_195, %c0_196] {strides = array<i32: 1, 1, 2, 1>} : memref<2x6x6x128xf32, #tpu.memory_space<vmem>>, vector<2x6x3x128xf32>
    %261 = vector.shape_cast %259 : vector<2x6x3x128xf32> to vector<2x3x2x3x128xf32>
    %262 = vector.extract_strided_slice %261 {offsets = [0, 0, 0, 0, 0], sizes = [2, 3, 1, 3, 128], strides = [1, 1, 1, 1, 1]} : vector<2x3x2x3x128xf32> to vector<2x3x1x3x128xf32>
    %263 = vector.shape_cast %262 : vector<2x3x1x3x128xf32> to vector<2x3x3x128xf32>
    %264 = vector.extract_strided_slice %261 {offsets = [0, 0, 1, 0, 0], sizes = [2, 3, 1, 3, 128], strides = [1, 1, 1, 1, 1]} : vector<2x3x2x3x128xf32> to vector<2x3x1x3x128xf32>
    %265 = vector.shape_cast %264 : vector<2x3x1x3x128xf32> to vector<2x3x3x128xf32>
    %266 = vector.shape_cast %260 : vector<2x6x3x128xf32> to vector<2x3x2x3x128xf32>
    %267 = vector.extract_strided_slice %266 {offsets = [0, 0, 0, 0, 0], sizes = [2, 3, 1, 3, 128], strides = [1, 1, 1, 1, 1]} : vector<2x3x2x3x128xf32> to vector<2x3x1x3x128xf32>
    %268 = vector.shape_cast %267 : vector<2x3x1x3x128xf32> to vector<2x3x3x128xf32>
    %269 = vector.extract_strided_slice %266 {offsets = [0, 0, 1, 0, 0], sizes = [2, 3, 1, 3, 128], strides = [1, 1, 1, 1, 1]} : vector<2x3x2x3x128xf32> to vector<2x3x1x3x128xf32>
    %270 = vector.shape_cast %269 : vector<2x3x1x3x128xf32> to vector<2x3x3x128xf32>
    %cst_197 = arith.constant 0.000000e+00 : f32
    %271 = vector.broadcast %cst_197 : f32 to vector<8x128xf32>
    %272 = vector.extract_strided_slice %263 {offsets = [0, 0, 0, 0], sizes = [2, 2, 2, 128], strides = [1, 1, 1, 1]} : vector<2x3x3x128xf32> to vector<2x2x2x128xf32>
    %273 = vector.shape_cast %272 : vector<2x2x2x128xf32> to vector<8x128xf32>
    %c0_198 = arith.constant 0 : index
    %c0_199 = arith.constant 0 : index
    %c0_200 = arith.constant 0 : index
    %274 = vector.load %arg7[%c0_198, %c0_199, %c0_200] : memref<9x128x128xf32, #tpu.memory_space<vmem>>, vector<1x128x128xf32>
    %275 = vector.shape_cast %274 : vector<1x128x128xf32> to vector<128x128xf32>
    %cst_201 = arith.constant dense<0.000000e+00> : vector<8x128xf32>
    %276 = tpu.matmul %273, %275, %cst_201 {dimension_numbers = #tpu.dot_dimension_numbers<[1], [0], [0], [1], [0, 0, 1, 1], [], []>} : vector<8x128xf32>, vector<128x128xf32>, vector<8x128xf32> -> vector<8x128xf32>
    %277 = arith.addf %271, %276 : vector<8x128xf32>
    %278 = vector.extract_strided_slice %268 {offsets = [0, 0, 0, 0], sizes = [2, 2, 2, 128], strides = [1, 1, 1, 1]} : vector<2x3x3x128xf32> to vector<2x2x2x128xf32>
    %279 = vector.shape_cast %278 : vector<2x2x2x128xf32> to vector<8x128xf32>
    %c1_202 = arith.constant 1 : index
    %c0_203 = arith.constant 0 : index
    %c0_204 = arith.constant 0 : index
    %280 = vector.load %arg7[%c1_202, %c0_203, %c0_204] : memref<9x128x128xf32, #tpu.memory_space<vmem>>, vector<1x128x128xf32>
    %281 = vector.shape_cast %280 : vector<1x128x128xf32> to vector<128x128xf32>
    %cst_205 = arith.constant dense<0.000000e+00> : vector<8x128xf32>
    %282 = tpu.matmul %279, %281, %cst_205 {dimension_numbers = #tpu.dot_dimension_numbers<[1], [0], [0], [1], [0, 0, 1, 1], [], []>} : vector<8x128xf32>, vector<128x128xf32>, vector<8x128xf32> -> vector<8x128xf32>
    %283 = arith.addf %277, %282 : vector<8x128xf32>
    %284 = vector.extract_strided_slice %263 {offsets = [0, 0, 1, 0], sizes = [2, 2, 2, 128], strides = [1, 1, 1, 1]} : vector<2x3x3x128xf32> to vector<2x2x2x128xf32>
    %285 = vector.shape_cast %284 : vector<2x2x2x128xf32> to vector<8x128xf32>
    %c2_206 = arith.constant 2 : index
    %c0_207 = arith.constant 0 : index
    %c0_208 = arith.constant 0 : index
    %286 = vector.load %arg7[%c2_206, %c0_207, %c0_208] : memref<9x128x128xf32, #tpu.memory_space<vmem>>, vector<1x128x128xf32>
    %287 = vector.shape_cast %286 : vector<1x128x128xf32> to vector<128x128xf32>
    %cst_209 = arith.constant dense<0.000000e+00> : vector<8x128xf32>
    %288 = tpu.matmul %285, %287, %cst_209 {dimension_numbers = #tpu.dot_dimension_numbers<[1], [0], [0], [1], [0, 0, 1, 1], [], []>} : vector<8x128xf32>, vector<128x128xf32>, vector<8x128xf32> -> vector<8x128xf32>
    %289 = arith.addf %283, %288 : vector<8x128xf32>
    %290 = vector.extract_strided_slice %265 {offsets = [0, 0, 0, 0], sizes = [2, 2, 2, 128], strides = [1, 1, 1, 1]} : vector<2x3x3x128xf32> to vector<2x2x2x128xf32>
    %291 = vector.shape_cast %290 : vector<2x2x2x128xf32> to vector<8x128xf32>
    %c3_210 = arith.constant 3 : index
    %c0_211 = arith.constant 0 : index
    %c0_212 = arith.constant 0 : index
    %292 = vector.load %arg7[%c3_210, %c0_211, %c0_212] : memref<9x128x128xf32, #tpu.memory_space<vmem>>, vector<1x128x128xf32>
    %293 = vector.shape_cast %292 : vector<1x128x128xf32> to vector<128x128xf32>
    %cst_213 = arith.constant dense<0.000000e+00> : vector<8x128xf32>
    %294 = tpu.matmul %291, %293, %cst_213 {dimension_numbers = #tpu.dot_dimension_numbers<[1], [0], [0], [1], [0, 0, 1, 1], [], []>} : vector<8x128xf32>, vector<128x128xf32>, vector<8x128xf32> -> vector<8x128xf32>
    %295 = arith.addf %289, %294 : vector<8x128xf32>
    %296 = vector.extract_strided_slice %270 {offsets = [0, 0, 0, 0], sizes = [2, 2, 2, 128], strides = [1, 1, 1, 1]} : vector<2x3x3x128xf32> to vector<2x2x2x128xf32>
    %297 = vector.shape_cast %296 : vector<2x2x2x128xf32> to vector<8x128xf32>
    %c4_214 = arith.constant 4 : index
    %c0_215 = arith.constant 0 : index
    %c0_216 = arith.constant 0 : index
    %298 = vector.load %arg7[%c4_214, %c0_215, %c0_216] : memref<9x128x128xf32, #tpu.memory_space<vmem>>, vector<1x128x128xf32>
    %299 = vector.shape_cast %298 : vector<1x128x128xf32> to vector<128x128xf32>
    %cst_217 = arith.constant dense<0.000000e+00> : vector<8x128xf32>
    %300 = tpu.matmul %297, %299, %cst_217 {dimension_numbers = #tpu.dot_dimension_numbers<[1], [0], [0], [1], [0, 0, 1, 1], [], []>} : vector<8x128xf32>, vector<128x128xf32>, vector<8x128xf32> -> vector<8x128xf32>
    %301 = arith.addf %295, %300 : vector<8x128xf32>
    %302 = vector.extract_strided_slice %265 {offsets = [0, 0, 1, 0], sizes = [2, 2, 2, 128], strides = [1, 1, 1, 1]} : vector<2x3x3x128xf32> to vector<2x2x2x128xf32>
    %303 = vector.shape_cast %302 : vector<2x2x2x128xf32> to vector<8x128xf32>
    %c5_218 = arith.constant 5 : index
    %c0_219 = arith.constant 0 : index
    %c0_220 = arith.constant 0 : index
    %304 = vector.load %arg7[%c5_218, %c0_219, %c0_220] : memref<9x128x128xf32, #tpu.memory_space<vmem>>, vector<1x128x128xf32>
    %305 = vector.shape_cast %304 : vector<1x128x128xf32> to vector<128x128xf32>
    %cst_221 = arith.constant dense<0.000000e+00> : vector<8x128xf32>
    %306 = tpu.matmul %303, %305, %cst_221 {dimension_numbers = #tpu.dot_dimension_numbers<[1], [0], [0], [1], [0, 0, 1, 1], [], []>} : vector<8x128xf32>, vector<128x128xf32>, vector<8x128xf32> -> vector<8x128xf32>
    %307 = arith.addf %301, %306 : vector<8x128xf32>
    %308 = vector.extract_strided_slice %263 {offsets = [0, 1, 0, 0], sizes = [2, 2, 2, 128], strides = [1, 1, 1, 1]} : vector<2x3x3x128xf32> to vector<2x2x2x128xf32>
    %309 = vector.shape_cast %308 : vector<2x2x2x128xf32> to vector<8x128xf32>
    %c6_222 = arith.constant 6 : index
    %c0_223 = arith.constant 0 : index
    %c0_224 = arith.constant 0 : index
    %310 = vector.load %arg7[%c6_222, %c0_223, %c0_224] : memref<9x128x128xf32, #tpu.memory_space<vmem>>, vector<1x128x128xf32>
    %311 = vector.shape_cast %310 : vector<1x128x128xf32> to vector<128x128xf32>
    %cst_225 = arith.constant dense<0.000000e+00> : vector<8x128xf32>
    %312 = tpu.matmul %309, %311, %cst_225 {dimension_numbers = #tpu.dot_dimension_numbers<[1], [0], [0], [1], [0, 0, 1, 1], [], []>} : vector<8x128xf32>, vector<128x128xf32>, vector<8x128xf32> -> vector<8x128xf32>
    %313 = arith.addf %307, %312 : vector<8x128xf32>
    %314 = vector.extract_strided_slice %268 {offsets = [0, 1, 0, 0], sizes = [2, 2, 2, 128], strides = [1, 1, 1, 1]} : vector<2x3x3x128xf32> to vector<2x2x2x128xf32>
    %315 = vector.shape_cast %314 : vector<2x2x2x128xf32> to vector<8x128xf32>
    %c7_226 = arith.constant 7 : index
    %c0_227 = arith.constant 0 : index
    %c0_228 = arith.constant 0 : index
    %316 = vector.load %arg7[%c7_226, %c0_227, %c0_228] : memref<9x128x128xf32, #tpu.memory_space<vmem>>, vector<1x128x128xf32>
    %317 = vector.shape_cast %316 : vector<1x128x128xf32> to vector<128x128xf32>
    %cst_229 = arith.constant dense<0.000000e+00> : vector<8x128xf32>
    %318 = tpu.matmul %315, %317, %cst_229 {dimension_numbers = #tpu.dot_dimension_numbers<[1], [0], [0], [1], [0, 0, 1, 1], [], []>} : vector<8x128xf32>, vector<128x128xf32>, vector<8x128xf32> -> vector<8x128xf32>
    %319 = arith.addf %313, %318 : vector<8x128xf32>
    %320 = vector.extract_strided_slice %263 {offsets = [0, 1, 1, 0], sizes = [2, 2, 2, 128], strides = [1, 1, 1, 1]} : vector<2x3x3x128xf32> to vector<2x2x2x128xf32>
    %321 = vector.shape_cast %320 : vector<2x2x2x128xf32> to vector<8x128xf32>
    %c8_230 = arith.constant 8 : index
    %c0_231 = arith.constant 0 : index
    %c0_232 = arith.constant 0 : index
    %322 = vector.load %arg7[%c8_230, %c0_231, %c0_232] : memref<9x128x128xf32, #tpu.memory_space<vmem>>, vector<1x128x128xf32>
    %323 = vector.shape_cast %322 : vector<1x128x128xf32> to vector<128x128xf32>
    %cst_233 = arith.constant dense<0.000000e+00> : vector<8x128xf32>
    %324 = tpu.matmul %321, %323, %cst_233 {dimension_numbers = #tpu.dot_dimension_numbers<[1], [0], [0], [1], [0, 0, 1, 1], [], []>} : vector<8x128xf32>, vector<128x128xf32>, vector<8x128xf32> -> vector<8x128xf32>
    %325 = arith.addf %319, %324 : vector<8x128xf32>
    %c0_234 = arith.constant 0 : index
    %c0_235 = arith.constant 0 : index
    %326 = vector.load %arg8[%c0_234, %c0_235] : memref<3x128xf32, #tpu.memory_space<vmem>>, vector<1x128xf32>
    %c1_236 = arith.constant 1 : index
    %c0_237 = arith.constant 0 : index
    %327 = vector.load %arg8[%c1_236, %c0_237] : memref<3x128xf32, #tpu.memory_space<vmem>>, vector<1x128xf32>
    %c2_238 = arith.constant 2 : index
    %c0_239 = arith.constant 0 : index
    %328 = vector.load %arg8[%c2_238, %c0_239] : memref<3x128xf32, #tpu.memory_space<vmem>>, vector<1x128xf32>
    %329 = vector.broadcast %326 : vector<1x128xf32> to vector<8x128xf32>
    %330 = arith.addf %325, %329 : vector<8x128xf32>
    %cst_240 = arith.constant 0.000000e+00 : f32
    %331 = vector.broadcast %cst_240 : f32 to vector<8x128xf32>
    %332 = arith.cmpf oge, %330, %331 : vector<8x128xf32>
    %cst_241 = arith.constant 2.000000e-01 : f32
    %333 = vector.broadcast %cst_241 : f32 to vector<8x128xf32>
    %334 = arith.mulf %333, %330 : vector<8x128xf32>
    %335 = arith.select %332, %330, %334 : vector<8x128xi1>, vector<8x128xf32>
    %336 = vector.broadcast %327 : vector<1x128xf32> to vector<8x128xf32>
    %337 = arith.mulf %335, %336 : vector<8x128xf32>
    %338 = vector.broadcast %328 : vector<1x128xf32> to vector<8x128xf32>
    %339 = arith.addf %337, %338 : vector<8x128xf32>
    %cst_242 = arith.constant 0.000000e+00 : f32
    %340 = vector.broadcast %cst_242 : f32 to vector<1x128xf32>
    %341 = vector.extract_strided_slice %339 {offsets = [0, 0], sizes = [1, 128], strides = [1, 1]} : vector<8x128xf32> to vector<1x128xf32>
    %c0_243 = arith.constant 0 : index
    %c0_244 = arith.constant 0 : index
    %c0_245 = arith.constant 0 : index
    %342 = vector.load %arg9[%c0_243, %c0_244, %c0_245] : memref<4x128x128xf32, #tpu.memory_space<vmem>>, vector<1x128x128xf32>
    %343 = vector.shape_cast %342 : vector<1x128x128xf32> to vector<128x128xf32>
    %cst_246 = arith.constant dense<0.000000e+00> : vector<1x128xf32>
    %344 = tpu.matmul %341, %343, %cst_246 {dimension_numbers = #tpu.dot_dimension_numbers<[1], [0], [0], [1], [0, 0, 1, 1], [], []>} : vector<1x128xf32>, vector<128x128xf32>, vector<1x128xf32> -> vector<1x128xf32>
    %345 = arith.addf %340, %344 : vector<1x128xf32>
    %346 = vector.extract_strided_slice %339 {offsets = [1, 0], sizes = [1, 128], strides = [1, 1]} : vector<8x128xf32> to vector<1x128xf32>
    %c1_247 = arith.constant 1 : index
    %c0_248 = arith.constant 0 : index
    %c0_249 = arith.constant 0 : index
    %347 = vector.load %arg9[%c1_247, %c0_248, %c0_249] : memref<4x128x128xf32, #tpu.memory_space<vmem>>, vector<1x128x128xf32>
    %348 = vector.shape_cast %347 : vector<1x128x128xf32> to vector<128x128xf32>
    %cst_250 = arith.constant dense<0.000000e+00> : vector<1x128xf32>
    %349 = tpu.matmul %346, %348, %cst_250 {dimension_numbers = #tpu.dot_dimension_numbers<[1], [0], [0], [1], [0, 0, 1, 1], [], []>} : vector<1x128xf32>, vector<128x128xf32>, vector<1x128xf32> -> vector<1x128xf32>
    %350 = arith.addf %345, %349 : vector<1x128xf32>
    %351 = vector.extract_strided_slice %339 {offsets = [2, 0], sizes = [1, 128], strides = [1, 1]} : vector<8x128xf32> to vector<1x128xf32>
    %c2_251 = arith.constant 2 : index
    %c0_252 = arith.constant 0 : index
    %c0_253 = arith.constant 0 : index
    %352 = vector.load %arg9[%c2_251, %c0_252, %c0_253] : memref<4x128x128xf32, #tpu.memory_space<vmem>>, vector<1x128x128xf32>
    %353 = vector.shape_cast %352 : vector<1x128x128xf32> to vector<128x128xf32>
    %cst_254 = arith.constant dense<0.000000e+00> : vector<1x128xf32>
    %354 = tpu.matmul %351, %353, %cst_254 {dimension_numbers = #tpu.dot_dimension_numbers<[1], [0], [0], [1], [0, 0, 1, 1], [], []>} : vector<1x128xf32>, vector<128x128xf32>, vector<1x128xf32> -> vector<1x128xf32>
    %355 = arith.addf %350, %354 : vector<1x128xf32>
    %356 = vector.extract_strided_slice %339 {offsets = [3, 0], sizes = [1, 128], strides = [1, 1]} : vector<8x128xf32> to vector<1x128xf32>
    %c3_255 = arith.constant 3 : index
    %c0_256 = arith.constant 0 : index
    %c0_257 = arith.constant 0 : index
    %357 = vector.load %arg9[%c3_255, %c0_256, %c0_257] : memref<4x128x128xf32, #tpu.memory_space<vmem>>, vector<1x128x128xf32>
    %358 = vector.shape_cast %357 : vector<1x128x128xf32> to vector<128x128xf32>
    %cst_258 = arith.constant dense<0.000000e+00> : vector<1x128xf32>
    %359 = tpu.matmul %356, %358, %cst_258 {dimension_numbers = #tpu.dot_dimension_numbers<[1], [0], [0], [1], [0, 0, 1, 1], [], []>} : vector<1x128xf32>, vector<128x128xf32>, vector<1x128xf32> -> vector<1x128xf32>
    %360 = arith.addf %355, %359 : vector<1x128xf32>
    %cst_259 = arith.constant 0.000000e+00 : f32
    %361 = vector.broadcast %cst_259 : f32 to vector<1x128xf32>
    %362 = vector.extract_strided_slice %339 {offsets = [4, 0], sizes = [1, 128], strides = [1, 1]} : vector<8x128xf32> to vector<1x128xf32>
    %c0_260 = arith.constant 0 : index
    %c0_261 = arith.constant 0 : index
    %c0_262 = arith.constant 0 : index
    %363 = vector.load %arg9[%c0_260, %c0_261, %c0_262] : memref<4x128x128xf32, #tpu.memory_space<vmem>>, vector<1x128x128xf32>
    %364 = vector.shape_cast %363 : vector<1x128x128xf32> to vector<128x128xf32>
    %cst_263 = arith.constant dense<0.000000e+00> : vector<1x128xf32>
    %365 = tpu.matmul %362, %364, %cst_263 {dimension_numbers = #tpu.dot_dimension_numbers<[1], [0], [0], [1], [0, 0, 1, 1], [], []>} : vector<1x128xf32>, vector<128x128xf32>, vector<1x128xf32> -> vector<1x128xf32>
    %366 = arith.addf %361, %365 : vector<1x128xf32>
    %367 = vector.extract_strided_slice %339 {offsets = [5, 0], sizes = [1, 128], strides = [1, 1]} : vector<8x128xf32> to vector<1x128xf32>
    %c1_264 = arith.constant 1 : index
    %c0_265 = arith.constant 0 : index
    %c0_266 = arith.constant 0 : index
    %368 = vector.load %arg9[%c1_264, %c0_265, %c0_266] : memref<4x128x128xf32, #tpu.memory_space<vmem>>, vector<1x128x128xf32>
    %369 = vector.shape_cast %368 : vector<1x128x128xf32> to vector<128x128xf32>
    %cst_267 = arith.constant dense<0.000000e+00> : vector<1x128xf32>
    %370 = tpu.matmul %367, %369, %cst_267 {dimension_numbers = #tpu.dot_dimension_numbers<[1], [0], [0], [1], [0, 0, 1, 1], [], []>} : vector<1x128xf32>, vector<128x128xf32>, vector<1x128xf32> -> vector<1x128xf32>
    %371 = arith.addf %366, %370 : vector<1x128xf32>
    %372 = vector.extract_strided_slice %339 {offsets = [6, 0], sizes = [1, 128], strides = [1, 1]} : vector<8x128xf32> to vector<1x128xf32>
    %c2_268 = arith.constant 2 : index
    %c0_269 = arith.constant 0 : index
    %c0_270 = arith.constant 0 : index
    %373 = vector.load %arg9[%c2_268, %c0_269, %c0_270] : memref<4x128x128xf32, #tpu.memory_space<vmem>>, vector<1x128x128xf32>
    %374 = vector.shape_cast %373 : vector<1x128x128xf32> to vector<128x128xf32>
    %cst_271 = arith.constant dense<0.000000e+00> : vector<1x128xf32>
    %375 = tpu.matmul %372, %374, %cst_271 {dimension_numbers = #tpu.dot_dimension_numbers<[1], [0], [0], [1], [0, 0, 1, 1], [], []>} : vector<1x128xf32>, vector<128x128xf32>, vector<1x128xf32> -> vector<1x128xf32>
    %376 = arith.addf %371, %375 : vector<1x128xf32>
    %377 = vector.extract_strided_slice %339 {offsets = [7, 0], sizes = [1, 128], strides = [1, 1]} : vector<8x128xf32> to vector<1x128xf32>
    %c3_272 = arith.constant 3 : index
    %c0_273 = arith.constant 0 : index
    %c0_274 = arith.constant 0 : index
    %378 = vector.load %arg9[%c3_272, %c0_273, %c0_274] : memref<4x128x128xf32, #tpu.memory_space<vmem>>, vector<1x128x128xf32>
    %379 = vector.shape_cast %378 : vector<1x128x128xf32> to vector<128x128xf32>
    %cst_275 = arith.constant dense<0.000000e+00> : vector<1x128xf32>
    %380 = tpu.matmul %377, %379, %cst_275 {dimension_numbers = #tpu.dot_dimension_numbers<[1], [0], [0], [1], [0, 0, 1, 1], [], []>} : vector<1x128xf32>, vector<128x128xf32>, vector<1x128xf32> -> vector<1x128xf32>
    %381 = arith.addf %376, %380 : vector<1x128xf32>
    %382 = tpu.concatenate %360, %381 in 0 : vector<1x128xf32>, vector<1x128xf32> -> vector<2x128xf32>
    %c0_276 = arith.constant 0 : index
    %c0_277 = arith.constant 0 : index
    %383 = vector.load %arg10[%c0_276, %c0_277] : memref<1x128xf32, #tpu.memory_space<vmem>>, vector<1x128xf32>
    %384 = vector.broadcast %383 : vector<1x128xf32> to vector<2x128xf32>
    %385 = arith.addf %382, %384 : vector<2x128xf32>
    %386 = tpu.iota {dimensions = array<i32: 1>} : vector<1x128xi32>
    %c0_i32 = arith.constant 0 : i32
    %387 = vector.broadcast %c0_i32 : i32 to vector<1x128xi32>
    %388 = arith.cmpi eq, %386, %387 : vector<1x128xi32>
    %c1_i32 = arith.constant 1 : i32
    %389 = vector.broadcast %c1_i32 : i32 to vector<1x128xi32>
    %390 = arith.cmpi sge, %386, %389 : vector<1x128xi32>
    %c10_i32 = arith.constant 10 : i32
    %391 = vector.broadcast %c10_i32 : i32 to vector<1x128xi32>
    %392 = arith.cmpi sle, %386, %391 : vector<1x128xi32>
    %393 = arith.andi %390, %392 : vector<1x128xi1>
    %394 = arith.extui %393 : vector<1x128xi1> to vector<1x128xi32>
    %395 = arith.sitofp %394 : vector<1x128xi32> to vector<1x128xf32>
    %cst_278 = arith.constant 0.000000e+00 : f32
    %396 = vector.broadcast %cst_278 : f32 to vector<2x128xf32>
    %397 = arith.subf %396, %385 : vector<2x128xf32>
    %398 = math.exp %397 : vector<2x128xf32>
    %cst_279 = arith.constant 1.000000e+00 : f32
    %399 = vector.broadcast %cst_279 : f32 to vector<2x128xf32>
    %400 = arith.addf %399, %398 : vector<2x128xf32>
    %401 = tpu.reciprocal %400 {approx = true} : vector<2x128xf32> -> vector<2x128xf32>
    %cst_280 = arith.constant -1.000000e+30 : f32
    %402 = vector.shape_cast %393 : vector<1x128xi1> to vector<1x128xi1>
    %403 = vector.broadcast %402 : vector<1x128xi1> to vector<2x128xi1>
    %404 = vector.broadcast %cst_280 : f32 to vector<2x128xf32>
    %405 = arith.select %403, %385, %404 : vector<2x128xi1>, vector<2x128xf32>
    %cst_281 = arith.constant dense<0xFF800000> : vector<2xf32>
    %406 = vector.multi_reduction <maximumf>, %405, %cst_281 [1] : vector<2x128xf32> to vector<2xf32>
    %407 = vector.shape_cast %406 : vector<2xf32> to vector<2x1xf32>
    %408 = vector.broadcast %407 : vector<2x1xf32> to vector<2x128xf32>
    %409 = arith.subf %405, %408 : vector<2x128xf32>
    %410 = math.exp %409 : vector<2x128xf32>
    %411 = vector.broadcast %395 : vector<1x128xf32> to vector<2x128xf32>
    %412 = arith.mulf %410, %411 : vector<2x128xf32>
    %cst_282 = arith.constant dense<0.000000e+00> : vector<2xf32>
    %413 = vector.multi_reduction <add>, %412, %cst_282 [1] : vector<2x128xf32> to vector<2xf32>
    %414 = vector.shape_cast %413 : vector<2xf32> to vector<2x1xf32>
    %415 = tpu.reciprocal %414 {approx = true} : vector<2x1xf32> -> vector<2x1xf32>
    %416 = vector.broadcast %415 : vector<2x1xf32> to vector<2x128xf32>
    %417 = arith.mulf %412, %416 : vector<2x128xf32>
    %418 = vector.shape_cast %388 : vector<1x128xi1> to vector<1x128xi1>
    %419 = vector.broadcast %418 : vector<1x128xi1> to vector<2x128xi1>
    %420 = arith.select %419, %401, %417 : vector<2x128xi1>, vector<2x128xf32>
    %c0_283 = arith.constant 0 : index
    %c0_284 = arith.constant 0 : index
    %421 = vector.load %arg11[%c0_283, %c0_284] : memref<2x128xf32, #tpu.memory_space<vmem>>, vector<2x128xf32>
    tpu.vector_store %arg11[%c0_283, %c0_284], %420 {strides = array<i32>} : memref<2x128xf32, #tpu.memory_space<vmem>>, vector<2x128xf32>,
    return
  }
}

</mosaic_0001>

<llo_original>
// kernel: discriminator_forward.1
$region0: #{discriminator_forward.1}
  #allocation0 [shape = 'u32[]', space=smem, size = 0x4, offset = 0x4, fixed_abs, tag = 'smem constant byte address 0x4 - core index']
  #allocation1 [shape = 'u32[72,128]{1,0:T(1,128)}', space=vmem, size = 0x9000, scoped, tag = 'internal scratch']
  #allocation2 [shape = 'f32[2,34,34,128]{3,2,1,0:T(8,128)}', space=vmem, size = 0x154000, scoped, tag = 'scratch operand']
  #allocation3 [shape = 'f32[2,18,18,128]{3,2,1,0:T(8,128)}', space=vmem, size = 0x6c000, scoped, tag = 'scratch operand']
  #allocation4 [shape = 'f32[2,10,10,128]{3,2,1,0:T(8,128)}', space=vmem, size = 0x28000, scoped, tag = 'scratch operand']
  #allocation5 [shape = 'f32[2,6,6,128]{3,2,1,0:T(8,128)}', space=vmem, size = 0xc000, scoped, tag = 'scratch operand']
  %s0 = inlined_call_operand.vmem [shape: f32[2,32,32,128], index: 0, kind: input, shape index: {}]
  %s1 = inlined_call_operand.vmem [shape: f32[9,128,128], index: 1, kind: input, shape index: {}]
  %s2 = inlined_call_operand.vmem [shape: f32[3,128], index: 2, kind: input, shape index: {}]
  %s3 = inlined_call_operand.vmem [shape: f32[9,128,128], index: 3, kind: input, shape index: {}]
  %s4 = inlined_call_operand.vmem [shape: f32[3,128], index: 4, kind: input, shape index: {}]
  %s5 = inlined_call_operand.vmem [shape: f32[9,128,128], index: 5, kind: input, shape index: {}]
  %s6 = inlined_call_operand.vmem [shape: f32[3,128], index: 6, kind: input, shape index: {}]
  %s7 = inlined_call_operand.vmem [shape: f32[9,128,128], index: 7, kind: input, shape index: {}]
  %s8 = inlined_call_operand.vmem [shape: f32[3,128], index: 8, kind: input, shape index: {}]
  %s9 = inlined_call_operand.vmem [shape: f32[4,128,128], index: 9, kind: input, shape index: {}]
  %s10 = inlined_call_operand.vmem [shape: f32[1,128], index: 10, kind: input, shape index: {}]
  %s11 = inlined_call_operand.vmem [shape: f32[2,128], index: 11, kind: output, shape index: {}]
  %s12 = sld [smem:[#allocation0]]
  $region54: #{discriminator_forward.1} parent=0
    _
  %s14 = ssub.s32 1, %s12
  %s15 = scalar_select 0, %s14, %s12
  // Predicated region
  $region2: #{discriminator_forward.1} parent=0 // pred_check
    _
  $region3: #{discriminator_forward.1} parent=0 // pred_check_branch
    %17 = sbr.rel (0) target = $region5
  $region4: #{discriminator_forward.1} parent=0 // pred_region
    _
  $region5: #{discriminator_forward.1} parent=0 // pred_fallthru
    _
  // Predicated region
  $region6: #{discriminator_forward.1} parent=0 // pred_check
    _
  $region7: #{discriminator_forward.1} parent=0 // pred_check_branch
    %19 = sbr.rel (0) target = $region9
  $region8: #{discriminator_forward.1} parent=0 // pred_region
    _
  $region9: #{discriminator_forward.1} parent=0 // pred_fallthru
    _
  // Predicated region
  $region10: #{discriminator_forward.1} parent=0 // pred_check
    _
  $region11: #{discriminator_forward.1} parent=0 // pred_check_branch
    %21 = sbr.rel (0) target = $region13
  $region12: #{discriminator_forward.1} parent=0 // pred_region
    _
  $region13: #{discriminator_forward.1} parent=0 // pred_fallthru
    _
  // Predicated region
  $region14: #{discriminator_forward.1} parent=0 // pred_check
    _
  $region15: #{discriminator_forward.1} parent=0 // pred_check_branch
    %23 = sbr.rel (0) target = $region17
  $region16: #{discriminator_forward.1} parent=0 // pred_region
    _
  $region17: #{discriminator_forward.1} parent=0 // pred_fallthru
    _
  // Predicated region
  $region18: #{discriminator_forward.1} parent=0 // pred_check
    _
  $region19: #{discriminator_forward.1} parent=0 // pred_check_branch
    %25 = sbr.rel (0) target = $region21
  $region20: #{discriminator_forward.1} parent=0 // pred_region
    _
  $region21: #{discriminator_forward.1} parent=0 // pred_fallthru
    _
  // Predicated region
  $region22: #{discriminator_forward.1} parent=0 // pred_check
    _
  $region23: #{discriminator_forward.1} parent=0 // pred_check_branch
    %27 = sbr.rel (0) target = $region25
  $region24: #{discriminator_forward.1} parent=0 // pred_region
    _
  $region25: #{discriminator_forward.1} parent=0 // pred_fallthru
    _
  // Predicated region
  $region26: #{discriminator_forward.1} parent=0 // pred_check
    _
  $region27: #{discriminator_forward.1} parent=0 // pred_check_branch
    %29 = sbr.rel (0) target = $region29
  $region28: #{discriminator_forward.1} parent=0 // pred_region
    _
  $region29: #{discriminator_forward.1} parent=0 // pred_fallthru
    _
  // Predicated region
  $region30: #{discriminator_forward.1} parent=0 // pred_check
    _
  $region31: #{discriminator_forward.1} parent=0 // pred_check_branch
    %31 = sbr.rel (0) target = $region33
  $region32: #{discriminator_forward.1} parent=0 // pred_region
    _
  $region33: #{discriminator_forward.1} parent=0 // pred_fallthru
    _
  // Predicated region
  $region34: #{discriminator_forward.1} parent=0 // pred_check
    _
  $region35: #{discriminator_forward.1} parent=0 // pred_check_branch
    %33 = sbr.rel (0) target = $region37
  $region36: #{discriminator_forward.1} parent=0 // pred_region
    _
  $region37: #{discriminator_forward.1} parent=0 // pred_fallthru
    _
  // Predicated region
  $region38: #{discriminator_forward.1} parent=0 // pred_check
    _
  $region39: #{discriminator_forward.1} parent=0 // pred_check_branch
    %35 = sbr.rel (0) target = $region41
  $region40: #{discriminator_forward.1} parent=0 // pred_region
    _
  $region41: #{discriminator_forward.1} parent=0 // pred_fallthru
    _
  // Predicated region
  $region42: #{discriminator_forward.1} parent=0 // pred_check
    _
  $region43: #{discriminator_forward.1} parent=0 // pred_check_branch
    %37 = sbr.rel (0) target = $region45
  $region44: #{discriminator_forward.1} parent=0 // pred_region
    _
  $region45: #{discriminator_forward.1} parent=0 // pred_fallthru
    _
  %v38 = vld [vmem:[%s0] sm:$0xff]
  %v39 = vld [vmem:[%s0 + $0x8] sm:$0xff]
  %v40 = vld [vmem:[%s0 + $0x10] sm:$0xff]
  %v41 = vld [vmem:[%s0 + $0x18] sm:$0xff]
  %v42 = vld [vmem:[%s0 + $0x20] sm:$0xff]
  %v43 = vld [vmem:[%s0 + $0x28] sm:$0xff]
  %v44 = vld [vmem:[%s0 + $0x30] sm:$0xff]
  %v45 = vld [vmem:[%s0 + $0x38] sm:$0xff]
  %v46 = vld [vmem:[%s0 + $0x40] sm:$0xff]
  %v47 = vld [vmem:[%s0 + $0x48] sm:$0xff]
  %v48 = vld [vmem:[%s0 + $0x50] sm:$0xff]
  %v49 = vld [vmem:[%s0 + $0x58] sm:$0xff]
  %v50 = vld [vmem:[%s0 + $0x60] sm:$0xff]
  %v51 = vld [vmem:[%s0 + $0x68] sm:$0xff]
  %v52 = vld [vmem:[%s0 + $0x70] sm:$0xff]
  %v53 = vld [vmem:[%s0 + $0x78] sm:$0xff]
  %v54 = vld [vmem:[%s0 + $0x80] sm:$0xff]
  %v55 = vld [vmem:[%s0 + $0x88] sm:$0xff]
  %v56 = vld [vmem:[%s0 + $0x90] sm:$0xff]
  %v57 = vld [vmem:[%s0 + $0x98] sm:$0xff]
  %v58 = vld [vmem:[%s0 + $0xa0] sm:$0xff]
  %v59 = vld [vmem:[%s0 + $0xa8] sm:$0xff]
  %v60 = vld [vmem:[%s0 + $0xb0] sm:$0xff]
  %v61 = vld [vmem:[%s0 + $0xb8] sm:$0xff]
  %v62 = vld [vmem:[%s0 + $0xc0] sm:$0xff]
  %v63 = vld [vmem:[%s0 + $0xc8] sm:$0xff]
  %v64 = vld [vmem:[%s0 + $0xd0] sm:$0xff]
  %v65 = vld [vmem:[%s0 + $0xd8] sm:$0xff]
  %v66 = vld [vmem:[%s0 + $0xe0] sm:$0xff]
  %v67 = vld [vmem:[%s0 + $0xe8] sm:$0xff]
  %v68 = vld [vmem:[%s0 + $0xf0] sm:$0xff]
  %v69 = vld [vmem:[%s0 + $0xf8] sm:$0xff]
  %v70 = vld [vmem:[%s0 + $0x100] sm:$0xff]
  %v71 = vld [vmem:[%s0 + $0x108] sm:$0xff]
  %v72 = vld [vmem:[%s0 + $0x110] sm:$0xff]
  %v73 = vld [vmem:[%s0 + $0x118] sm:$0xff]
  %v74 = vld [vmem:[%s0 + $0x120] sm:$0xff]
  %v75 = vld [vmem:[%s0 + $0x128] sm:$0xff]
  %v76 = vld [vmem:[%s0 + $0x130] sm:$0xff]
  %v77 = vld [vmem:[%s0 + $0x138] sm:$0xff]
  %v78 = vld [vmem:[%s0 + $0x140] sm:$0xff]
  %v79 = vld [vmem:[%s0 + $0x148] sm:$0xff]
  %v80 = vld [vmem:[%s0 + $0x150] sm:$0xff]
  %v81 = vld [vmem:[%s0 + $0x158] sm:$0xff]
  %v82 = vld [vmem:[%s0 + $0x160] sm:$0xff]
  %v83 = vld [vmem:[%s0 + $0x168] sm:$0xff]
  %v84 = vld [vmem:[%s0 + $0x170] sm:$0xff]
  %v85 = vld [vmem:[%s0 + $0x178] sm:$0xff]
  %v86 = vld [vmem:[%s0 + $0x180] sm:$0xff]
  %v87 = vld [vmem:[%s0 + $0x188] sm:$0xff]
  %v88 = vld [vmem:[%s0 + $0x190] sm:$0xff]
  %v89 = vld [vmem:[%s0 + $0x198] sm:$0xff]
  %v90 = vld [vmem:[%s0 + $0x1a0] sm:$0xff]
  %v91 = vld [vmem:[%s0 + $0x1a8] sm:$0xff]
  %v92 = vld [vmem:[%s0 + $0x1b0] sm:$0xff]
  %v93 = vld [vmem:[%s0 + $0x1b8] sm:$0xff]
  %v94 = vld [vmem:[%s0 + $0x1c0] sm:$0xff]
  %v95 = vld [vmem:[%s0 + $0x1c8] sm:$0xff]
  %v96 = vld [vmem:[%s0 + $0x1d0] sm:$0xff]
  %v97 = vld [vmem:[%s0 + $0x1d8] sm:$0xff]
  %v98 = vld [vmem:[%s0 + $0x1e0] sm:$0xff]
  %v99 = vld [vmem:[%s0 + $0x1e8] sm:$0xff]
  %v100 = vld [vmem:[%s0 + $0x1f0] sm:$0xff]
  %v101 = vld [vmem:[%s0 + $0x1f8] sm:$0xff]
  %v102 = vld [vmem:[%s0 + $0x200] sm:$0xff]
  %v103 = vld [vmem:[%s0 + $0x208] sm:$0xff]
  %v104 = vld [vmem:[%s0 + $0x210] sm:$0xff]
  %v105 = vld [vmem:[%s0 + $0x218] sm:$0xff]
  %v106 = vld [vmem:[%s0 + $0x220] sm:$0xff]
  %v107 = vld [vmem:[%s0 + $0x228] sm:$0xff]
  %v108 = vld [vmem:[%s0 + $0x230] sm:$0xff]
  %v109 = vld [vmem:[%s0 + $0x238] sm:$0xff]
  %v110 = vld [vmem:[%s0 + $0x240] sm:$0xff]
  %v111 = vld [vmem:[%s0 + $0x248] sm:$0xff]
  %v112 = vld [vmem:[%s0 + $0x250] sm:$0xff]
  %v113 = vld [vmem:[%s0 + $0x258] sm:$0xff]
  %v114 = vld [vmem:[%s0 + $0x260] sm:$0xff]
  %v115 = vld [vmem:[%s0 + $0x268] sm:$0xff]
  %v116 = vld [vmem:[%s0 + $0x270] sm:$0xff]
  %v117 = vld [vmem:[%s0 + $0x278] sm:$0xff]
  %v118 = vld [vmem:[%s0 + $0x280] sm:$0xff]
  %v119 = vld [vmem:[%s0 + $0x288] sm:$0xff]
  %v120 = vld [vmem:[%s0 + $0x290] sm:$0xff]
  %v121 = vld [vmem:[%s0 + $0x298] sm:$0xff]
  %v122 = vld [vmem:[%s0 + $0x2a0] sm:$0xff]
  %v123 = vld [vmem:[%s0 + $0x2a8] sm:$0xff]
  %v124 = vld [vmem:[%s0 + $0x2b0] sm:$0xff]
  %v125 = vld [vmem:[%s0 + $0x2b8] sm:$0xff]
  %v126 = vld [vmem:[%s0 + $0x2c0] sm:$0xff]
  %v127 = vld [vmem:[%s0 + $0x2c8] sm:$0xff]
  %v128 = vld [vmem:[%s0 + $0x2d0] sm:$0xff]
  %v129 = vld [vmem:[%s0 + $0x2d8] sm:$0xff]
  %v130 = vld [vmem:[%s0 + $0x2e0] sm:$0xff]
  %v131 = vld [vmem:[%s0 + $0x2e8] sm:$0xff]
  %v132 = vld [vmem:[%s0 + $0x2f0] sm:$0xff]
  %v133 = vld [vmem:[%s0 + $0x2f8] sm:$0xff]
  %v134 = vld [vmem:[%s0 + $0x300] sm:$0xff]
  %v135 = vld [vmem:[%s0 + $0x308] sm:$0xff]
  %v136 = vld [vmem:[%s0 + $0x310] sm:$0xff]
  %v137 = vld [vmem:[%s0 + $0x318] sm:$0xff]
  %v138 = vld [vmem:[%s0 + $0x320] sm:$0xff]
  %v139 = vld [vmem:[%s0 + $0x328] sm:$0xff]
  %v140 = vld [vmem:[%s0 + $0x330] sm:$0xff]
  %v141 = vld [vmem:[%s0 + $0x338] sm:$0xff]
  %v142 = vld [vmem:[%s0 + $0x340] sm:$0xff]
  %v143 = vld [vmem:[%s0 + $0x348] sm:$0xff]
  %v144 = vld [vmem:[%s0 + $0x350] sm:$0xff]
  %v145 = vld [vmem:[%s0 + $0x358] sm:$0xff]
  %v146 = vld [vmem:[%s0 + $0x360] sm:$0xff]
  %v147 = vld [vmem:[%s0 + $0x368] sm:$0xff]
  %v148 = vld [vmem:[%s0 + $0x370] sm:$0xff]
  %v149 = vld [vmem:[%s0 + $0x378] sm:$0xff]
  %v150 = vld [vmem:[%s0 + $0x380] sm:$0xff]
  %v151 = vld [vmem:[%s0 + $0x388] sm:$0xff]
  %v152 = vld [vmem:[%s0 + $0x390] sm:$0xff]
  %v153 = vld [vmem:[%s0 + $0x398] sm:$0xff]
  %v154 = vld [vmem:[%s0 + $0x3a0] sm:$0xff]
  %v155 = vld [vmem:[%s0 + $0x3a8] sm:$0xff]
  %v156 = vld [vmem:[%s0 + $0x3b0] sm:$0xff]
  %v157 = vld [vmem:[%s0 + $0x3b8] sm:$0xff]
  %v158 = vld [vmem:[%s0 + $0x3c0] sm:$0xff]
  %v159 = vld [vmem:[%s0 + $0x3c8] sm:$0xff]
  %v160 = vld [vmem:[%s0 + $0x3d0] sm:$0xff]
  %v161 = vld [vmem:[%s0 + $0x3d8] sm:$0xff]
  %v162 = vld [vmem:[%s0 + $0x3e0] sm:$0xff]
  %v163 = vld [vmem:[%s0 + $0x3e8] sm:$0xff]
  %v164 = vld [vmem:[%s0 + $0x3f0] sm:$0xff]
  %v165 = vld [vmem:[%s0 + $0x3f8] sm:$0xff]
  %v166 = vld [vmem:[%s0 + $0x400] sm:$0xff]
  %v167 = vld [vmem:[%s0 + $0x408] sm:$0xff]
  %v168 = vld [vmem:[%s0 + $0x410] sm:$0xff]
  %v169 = vld [vmem:[%s0 + $0x418] sm:$0xff]
  %v170 = vld [vmem:[%s0 + $0x420] sm:$0xff]
  %v171 = vld [vmem:[%s0 + $0x428] sm:$0xff]
  %v172 = vld [vmem:[%s0 + $0x430] sm:$0xff]
  %v173 = vld [vmem:[%s0 + $0x438] sm:$0xff]
  %v174 = vld [vmem:[%s0 + $0x440] sm:$0xff]
  %v175 = vld [vmem:[%s0 + $0x448] sm:$0xff]
  %v176 = vld [vmem:[%s0 + $0x450] sm:$0xff]
  %v177 = vld [vmem:[%s0 + $0x458] sm:$0xff]
  %v178 = vld [vmem:[%s0 + $0x460] sm:$0xff]
  %v179 = vld [vmem:[%s0 + $0x468] sm:$0xff]
  %v180 = vld [vmem:[%s0 + $0x470] sm:$0xff]
  %v181 = vld [vmem:[%s0 + $0x478] sm:$0xff]
  %v182 = vld [vmem:[%s0 + $0x480] sm:$0xff]
  %v183 = vld [vmem:[%s0 + $0x488] sm:$0xff]
  %v184 = vld [vmem:[%s0 + $0x490] sm:$0xff]
  %v185 = vld [vmem:[%s0 + $0x498] sm:$0xff]
  %v186 = vld [vmem:[%s0 + $0x4a0] sm:$0xff]
  %v187 = vld [vmem:[%s0 + $0x4a8] sm:$0xff]
  %v188 = vld [vmem:[%s0 + $0x4b0] sm:$0xff]
  %v189 = vld [vmem:[%s0 + $0x4b8] sm:$0xff]
  %v190 = vld [vmem:[%s0 + $0x4c0] sm:$0xff]
  %v191 = vld [vmem:[%s0 + $0x4c8] sm:$0xff]
  %v192 = vld [vmem:[%s0 + $0x4d0] sm:$0xff]
  %v193 = vld [vmem:[%s0 + $0x4d8] sm:$0xff]
  %v194 = vld [vmem:[%s0 + $0x4e0] sm:$0xff]
  %v195 = vld [vmem:[%s0 + $0x4e8] sm:$0xff]
  %v196 = vld [vmem:[%s0 + $0x4f0] sm:$0xff]
  %v197 = vld [vmem:[%s0 + $0x4f8] sm:$0xff]
  %v198 = vld [vmem:[%s0 + $0x500] sm:$0xff]
  %v199 = vld [vmem:[%s0 + $0x508] sm:$0xff]
  %v200 = vld [vmem:[%s0 + $0x510] sm:$0xff]
  %v201 = vld [vmem:[%s0 + $0x518] sm:$0xff]
  %v202 = vld [vmem:[%s0 + $0x520] sm:$0xff]
  %v203 = vld [vmem:[%s0 + $0x528] sm:$0xff]
  %v204 = vld [vmem:[%s0 + $0x530] sm:$0xff]
  %v205 = vld [vmem:[%s0 + $0x538] sm:$0xff]
  %v206 = vld [vmem:[%s0 + $0x540] sm:$0xff]
  %v207 = vld [vmem:[%s0 + $0x548] sm:$0xff]
  %v208 = vld [vmem:[%s0 + $0x550] sm:$0xff]
  %v209 = vld [vmem:[%s0 + $0x558] sm:$0xff]
  %v210 = vld [vmem:[%s0 + $0x560] sm:$0xff]
  %v211 = vld [vmem:[%s0 + $0x568] sm:$0xff]
  %v212 = vld [vmem:[%s0 + $0x570] sm:$0xff]
  %v213 = vld [vmem:[%s0 + $0x578] sm:$0xff]
  %v214 = vld [vmem:[%s0 + $0x580] sm:$0xff]
  %v215 = vld [vmem:[%s0 + $0x588] sm:$0xff]
  %v216 = vld [vmem:[%s0 + $0x590] sm:$0xff]
  %v217 = vld [vmem:[%s0 + $0x598] sm:$0xff]
  %v218 = vld [vmem:[%s0 + $0x5a0] sm:$0xff]
  %v219 = vld [vmem:[%s0 + $0x5a8] sm:$0xff]
  %v220 = vld [vmem:[%s0 + $0x5b0] sm:$0xff]
  %v221 = vld [vmem:[%s0 + $0x5b8] sm:$0xff]
  %v222 = vld [vmem:[%s0 + $0x5c0] sm:$0xff]
  %v223 = vld [vmem:[%s0 + $0x5c8] sm:$0xff]
  %v224 = vld [vmem:[%s0 + $0x5d0] sm:$0xff]
  %v225 = vld [vmem:[%s0 + $0x5d8] sm:$0xff]
  %v226 = vld [vmem:[%s0 + $0x5e0] sm:$0xff]
  %v227 = vld [vmem:[%s0 + $0x5e8] sm:$0xff]
  %v228 = vld [vmem:[%s0 + $0x5f0] sm:$0xff]
  %v229 = vld [vmem:[%s0 + $0x5f8] sm:$0xff]
  %v230 = vld [vmem:[%s0 + $0x600] sm:$0xff]
  %v231 = vld [vmem:[%s0 + $0x608] sm:$0xff]
  %v232 = vld [vmem:[%s0 + $0x610] sm:$0xff]
  %v233 = vld [vmem:[%s0 + $0x618] sm:$0xff]
  %v234 = vld [vmem:[%s0 + $0x620] sm:$0xff]
  %v235 = vld [vmem:[%s0 + $0x628] sm:$0xff]
  %v236 = vld [vmem:[%s0 + $0x630] sm:$0xff]
  %v237 = vld [vmem:[%s0 + $0x638] sm:$0xff]
  %v238 = vld [vmem:[%s0 + $0x640] sm:$0xff]
  %v239 = vld [vmem:[%s0 + $0x648] sm:$0xff]
  %v240 = vld [vmem:[%s0 + $0x650] sm:$0xff]
  %v241 = vld [vmem:[%s0 + $0x658] sm:$0xff]
  %v242 = vld [vmem:[%s0 + $0x660] sm:$0xff]
  %v243 = vld [vmem:[%s0 + $0x668] sm:$0xff]
  %v244 = vld [vmem:[%s0 + $0x670] sm:$0xff]
  %v245 = vld [vmem:[%s0 + $0x678] sm:$0xff]
  %v246 = vld [vmem:[%s0 + $0x680] sm:$0xff]
  %v247 = vld [vmem:[%s0 + $0x688] sm:$0xff]
  %v248 = vld [vmem:[%s0 + $0x690] sm:$0xff]
  %v249 = vld [vmem:[%s0 + $0x698] sm:$0xff]
  %v250 = vld [vmem:[%s0 + $0x6a0] sm:$0xff]
  %v251 = vld [vmem:[%s0 + $0x6a8] sm:$0xff]
  %v252 = vld [vmem:[%s0 + $0x6b0] sm:$0xff]
  %v253 = vld [vmem:[%s0 + $0x6b8] sm:$0xff]
  %v254 = vld [vmem:[%s0 + $0x6c0] sm:$0xff]
  %v255 = vld [vmem:[%s0 + $0x6c8] sm:$0xff]
  %v256 = vld [vmem:[%s0 + $0x6d0] sm:$0xff]
  %v257 = vld [vmem:[%s0 + $0x6d8] sm:$0xff]
  %v258 = vld [vmem:[%s0 + $0x6e0] sm:$0xff]
  %v259 = vld [vmem:[%s0 + $0x6e8] sm:$0xff]
  %v260 = vld [vmem:[%s0 + $0x6f0] sm:$0xff]
  %v261 = vld [vmem:[%s0 + $0x6f8] sm:$0xff]
  %v262 = vld [vmem:[%s0 + $0x700] sm:$0xff]
  %v263 = vld [vmem:[%s0 + $0x708] sm:$0xff]
  %v264 = vld [vmem:[%s0 + $0x710] sm:$0xff]
  %v265 = vld [vmem:[%s0 + $0x718] sm:$0xff]
  %v266 = vld [vmem:[%s0 + $0x720] sm:$0xff]
  %v267 = vld [vmem:[%s0 + $0x728] sm:$0xff]
  %v268 = vld [vmem:[%s0 + $0x730] sm:$0xff]
  %v269 = vld [vmem:[%s0 + $0x738] sm:$0xff]
  %v270 = vld [vmem:[%s0 + $0x740] sm:$0xff]
  %v271 = vld [vmem:[%s0 + $0x748] sm:$0xff]
  %v272 = vld [vmem:[%s0 + $0x750] sm:$0xff]
  %v273 = vld [vmem:[%s0 + $0x758] sm:$0xff]
  %v274 = vld [vmem:[%s0 + $0x760] sm:$0xff]
  %v275 = vld [vmem:[%s0 + $0x768] sm:$0xff]
  %v276 = vld [vmem:[%s0 + $0x770] sm:$0xff]
  %v277 = vld [vmem:[%s0 + $0x778] sm:$0xff]
  %v278 = vld [vmem:[%s0 + $0x780] sm:$0xff]
  %v279 = vld [vmem:[%s0 + $0x788] sm:$0xff]
  %v280 = vld [vmem:[%s0 + $0x790] sm:$0xff]
  %v281 = vld [vmem:[%s0 + $0x798] sm:$0xff]
  %v282 = vld [vmem:[%s0 + $0x7a0] sm:$0xff]
  %v283 = vld [vmem:[%s0 + $0x7a8] sm:$0xff]
  %v284 = vld [vmem:[%s0 + $0x7b0] sm:$0xff]
  %v285 = vld [vmem:[%s0 + $0x7b8] sm:$0xff]
  %v286 = vld [vmem:[%s0 + $0x7c0] sm:$0xff]
  %v287 = vld [vmem:[%s0 + $0x7c8] sm:$0xff]
  %v288 = vld [vmem:[%s0 + $0x7d0] sm:$0xff]
  %v289 = vld [vmem:[%s0 + $0x7d8] sm:$0xff]
  %v290 = vld [vmem:[%s0 + $0x7e0] sm:$0xff]
  %v291 = vld [vmem:[%s0 + $0x7e8] sm:$0xff]
  %v292 = vld [vmem:[%s0 + $0x7f0] sm:$0xff]
  %v293 = vld [vmem:[%s0 + $0x7f8] sm:$0xff]
  %294 = vst [vmem:[#allocation2] sm:$0xff] 0.0
  %295 = vst [vmem:[#allocation2 + $0x8] sm:$0xff] 0.0
  %296 = vst [vmem:[#allocation2 + $0x10] sm:$0xff] 0.0
  %297 = vst [vmem:[#allocation2 + $0x18] sm:$0xff] 0.0
  %298 = vst [vmem:[#allocation2 + $0x20] sm:$0x3] 0.0
  %299 = vst [vmem:[#allocation2 + $0x28] sm:$0xff] 0.0
  %300 = vst [vmem:[#allocation2 + $0x30] sm:$0xff] 0.0
  %301 = vst [vmem:[#allocation2 + $0x38] sm:$0xff] 0.0
  %302 = vst [vmem:[#allocation2 + $0x40] sm:$0xff] 0.0
  %303 = vst [vmem:[#allocation2 + $0x48] sm:$0x3] 0.0
  %304 = vst [vmem:[#allocation2 + $0x50] sm:$0xff] 0.0
  %305 = vst [vmem:[#allocation2 + $0x58] sm:$0xff] 0.0
  %306 = vst [vmem:[#allocation2 + $0x60] sm:$0xff] 0.0
  %307 = vst [vmem:[#allocation2 + $0x68] sm:$0xff] 0.0
  %308 = vst [vmem:[#allocation2 + $0x70] sm:$0x3] 0.0
  %309 = vst [vmem:[#allocation2 + $0x78] sm:$0xff] 0.0
  %310 = vst [vmem:[#allocation2 + $0x80] sm:$0xff] 0.0
  %311 = vst [vmem:[#allocation2 + $0x88] sm:$0xff] 0.0
  %312 = vst [vmem:[#allocation2 + $0x90] sm:$0xff] 0.0
  %313 = vst [vmem:[#allocation2 + $0x98] sm:$0x3] 0.0
  %314 = vst [vmem:[#allocation2 + $0xa0] sm:$0xff] 0.0
  %315 = vst [vmem:[#allocation2 + $0xa8] sm:$0xff] 0.0
  %316 = vst [vmem:[#allocation2 + $0xb0] sm:$0xff] 0.0
  %317 = vst [vmem:[#allocation2 + $0xb8] sm:$0xff] 0.0
  %318 = vst [vmem:[#allocation2 + $0xc0] sm:$0x3] 0.0
  %319 = vst [vmem:[#allocation2 + $0xc8] sm:$0xff] 0.0
  %320 = vst [vmem:[#allocation2 + $0xd0] sm:$0xff] 0.0
  %321 = vst [vmem:[#allocation2 + $0xd8] sm:$0xff] 0.0
  %322 = vst [vmem:[#allocation2 + $0xe0] sm:$0xff] 0.0
  %323 = vst [vmem:[#allocation2 + $0xe8] sm:$0x3] 0.0
  %324 = vst [vmem:[#allocation2 + $0xf0] sm:$0xff] 0.0
  %325 = vst [vmem:[#allocation2 + $0xf8] sm:$0xff] 0.0
  %326 = vst [vmem:[#allocation2 + $0x100] sm:$0xff] 0.0
  %327 = vst [vmem:[#allocation2 + $0x108] sm:$0xff] 0.0
  %328 = vst [vmem:[#allocation2 + $0x110] sm:$0x3] 0.0
  %329 = vst [vmem:[#allocation2 + $0x118] sm:$0xff] 0.0
  %330 = vst [vmem:[#allocation2 + $0x120] sm:$0xff] 0.0
  %331 = vst [vmem:[#allocation2 + $0x128] sm:$0xff] 0.0
  %332 = vst [vmem:[#allocation2 + $0x130] sm:$0xff] 0.0
  %333 = vst [vmem:[#allocation2 + $0x138] sm:$0x3] 0.0
  %334 = vst [vmem:[#allocation2 + $0x140] sm:$0xff] 0.0
  %335 = vst [vmem:[#allocation2 + $0x148] sm:$0xff] 0.0
  %336 = vst [vmem:[#allocation2 + $0x150] sm:$0xff] 0.0
  %337 = vst [vmem:[#allocation2 + $0x158] sm:$0xff] 0.0
  %338 = vst [vmem:[#allocation2 + $0x160] sm:$0x3] 0.0
  %339 = vst [vmem:[#allocation2 + $0x168] sm:$0xff] 0.0
  %340 = vst [vmem:[#allocation2 + $0x170] sm:$0xff] 0.0
  %341 = vst [vmem:[#allocation2 + $0x178] sm:$0xff] 0.0
  %342 = vst [vmem:[#allocation2 + $0x180] sm:$0xff] 0.0
  %343 = vst [vmem:[#allocation2 + $0x188] sm:$0x3] 0.0
  %344 = vst [vmem:[#allocation2 + $0x190] sm:$0xff] 0.0
  %345 = vst [vmem:[#allocation2 + $0x198] sm:$0xff] 0.0
  %346 = vst [vmem:[#allocation2 + $0x1a0] sm:$0xff] 0.0
  %347 = vst [vmem:[#allocation2 + $0x1a8] sm:$0xff] 0.0
  %348 = vst [vmem:[#allocation2 + $0x1b0] sm:$0x3] 0.0
  %349 = vst [vmem:[#allocation2 + $0x1b8] sm:$0xff] 0.0
  %350 = vst [vmem:[#allocation2 + $0x1c0] sm:$0xff] 0.0
  %351 = vst [vmem:[#allocation2 + $0x1c8] sm:$0xff] 0.0
  %352 = vst [vmem:[#allocation2 + $0x1d0] sm:$0xff] 0.0
  %353 = vst [vmem:[#allocation2 + $0x1d8] sm:$0x3] 0.0
  %354 = vst [vmem:[#allocation2 + $0x1e0] sm:$0xff] 0.0
  %355 = vst [vmem:[#allocation2 + $0x1e8] sm:$0xff] 0.0
  %356 = vst [vmem:[#allocation2 + $0x1f0] sm:$0xff] 0.0
  %357 = vst [vmem:[#allocation2 + $0x1f8] sm:$0xff] 0.0
  %358 = vst [vmem:[#allocation2 + $0x200] sm:$0x3] 0.0
  %359 = vst [vmem:[#allocation2 + $0x208] sm:$0xff] 0.0
  %360 = vst [vmem:[#allocation2 + $0x210] sm:$0xff] 0.0
  %361 = vst [vmem:[#allocation2 + $0x218] sm:$0xff] 0.0
  %362 = vst [vmem:[#allocation2 + $0x220] sm:$0xff] 0.0
  %363 = vst [vmem:[#allocation2 + $0x228] sm:$0x3] 0.0
  %364 = vst [vmem:[#allocation2 + $0x230] sm:$0xff] 0.0
  %365 = vst [vmem:[#allocation2 + $0x238] sm:$0xff] 0.0
  %366 = vst [vmem:[#allocation2 + $0x240] sm:$0xff] 0.0
  %367 = vst [vmem:[#allocation2 + $0x248] sm:$0xff] 0.0
  %368 = vst [vmem:[#allocation2 + $0x250] sm:$0x3] 0.0
  %369 = vst [vmem:[#allocation2 + $0x258] sm:$0xff] 0.0
  %370 = vst [vmem:[#allocation2 + $0x260] sm:$0xff] 0.0
  %371 = vst [vmem:[#allocation2 + $0x268] sm:$0xff] 0.0
  %372 = vst [vmem:[#allocation2 + $0x270] sm:$0xff] 0.0
  %373 = vst [vmem:[#allocation2 + $0x278] sm:$0x3] 0.0
  %374 = vst [vmem:[#allocation2 + $0x280] sm:$0xff] 0.0
  %375 = vst [vmem:[#allocation2 + $0x288] sm:$0xff] 0.0
  %376 = vst [vmem:[#allocation2 + $0x290] sm:$0xff] 0.0
  %377 = vst [vmem:[#allocation2 + $0x298] sm:$0xff] 0.0
  %378 = vst [vmem:[#allocation2 + $0x2a0] sm:$0x3] 0.0
  %379 = vst [vmem:[#allocation2 + $0x2a8] sm:$0xff] 0.0
  %380 = vst [vmem:[#allocation2 + $0x2b0] sm:$0xff] 0.0
  %381 = vst [vmem:[#allocation2 + $0x2b8] sm:$0xff] 0.0
  %382 = vst [vmem:[#allocation2 + $0x2c0] sm:$0xff] 0.0
  %383 = vst [vmem:[#allocation2 + $0x2c8] sm:$0x3] 0.0
  %384 = vst [vmem:[#allocation2 + $0x2d0] sm:$0xff] 0.0
  %385 = vst [vmem:[#allocation2 + $0x2d8] sm:$0xff] 0.0
  %386 = vst [vmem:[#allocation2 + $0x2e0] sm:$0xff] 0.0
  %387 = vst [vmem:[#allocation2 + $0x2e8] sm:$0xff] 0.0
  %388 = vst [vmem:[#allocation2 + $0x2f0] sm:$0x3] 0.0
  %389 = vst [vmem:[#allocation2 + $0x2f8] sm:$0xff] 0.0
  %390 = vst [vmem:[#allocation2 + $0x300] sm:$0xff] 0.0
  %391 = vst [vmem:[#allocation2 + $0x308] sm:$0xff] 0.0
  %392 = vst [vmem:[#allocation2 + $0x310] sm:$0xff] 0.0
  %393 = vst [vmem:[#allocation2 + $0x318] sm:$0x3] 0.0
  %394 = vst [vmem:[#allocation2 + $0x320] sm:$0xff] 0.0
  %395 = vst [vmem:[#allocation2 + $0x328] sm:$0xff] 0.0
  %396 = vst [vmem:[#allocation2 + $0x330] sm:$0xff] 0.0
  %397 = vst [vmem:[#allocation2 + $0x338] sm:$0xff] 0.0
  %398 = vst [vmem:[#allocation2 + $0x340] sm:$0x3] 0.0
  %399 = vst [vmem:[#allocation2 + $0x348] sm:$0xff] 0.0
  %400 = vst [vmem:[#allocation2 + $0x350] sm:$0xff] 0.0
  %401 = vst [vmem:[#allocation2 + $0x358] sm:$0xff] 0.0
  %402 = vst [vmem:[#allocation2 + $0x360] sm:$0xff] 0.0
  %403 = vst [vmem:[#allocation2 + $0x368] sm:$0x3] 0.0
  %404 = vst [vmem:[#allocation2 + $0x370] sm:$0xff] 0.0
  %405 = vst [vmem:[#allocation2 + $0x378] sm:$0xff] 0.0
  %406 = vst [vmem:[#allocation2 + $0x380] sm:$0xff] 0.0
  %407 = vst [vmem:[#allocation2 + $0x388] sm:$0xff] 0.0
  %408 = vst [vmem:[#allocation2 + $0x390] sm:$0x3] 0.0
  %409 = vst [vmem:[#allocation2 + $0x398] sm:$0xff] 0.0
  %410 = vst [vmem:[#allocation2 + $0x3a0] sm:$0xff] 0.0
  %411 = vst [vmem:[#allocation2 + $0x3a8] sm:$0xff] 0.0
  %412 = vst [vmem:[#allocation2 + $0x3b0] sm:$0xff] 0.0
  %413 = vst [vmem:[#allocation2 + $0x3b8] sm:$0x3] 0.0
  %414 = vst [vmem:[#allocation2 + $0x3c0] sm:$0xff] 0.0
  %415 = vst [vmem:[#allocation2 + $0x3c8] sm:$0xff] 0.0
  %416 = vst [vmem:[#allocation2 + $0x3d0] sm:$0xff] 0.0
  %417 = vst [vmem:[#allocation2 + $0x3d8] sm:$0xff] 0.0
  %418 = vst [vmem:[#allocation2 + $0x3e0] sm:$0x3] 0.0
  %419 = vst [vmem:[#allocation2 + $0x3e8] sm:$0xff] 0.0
  %420 = vst [vmem:[#allocation2 + $0x3f0] sm:$0xff] 0.0
  %421 = vst [vmem:[#allocation2 + $0x3f8] sm:$0xff] 0.0
  %422 = vst [vmem:[#allocation2 + $0x400] sm:$0xff] 0.0
  %423 = vst [vmem:[#allocation2 + $0x408] sm:$0x3] 0.0
  %424 = vst [vmem:[#allocation2 + $0x410] sm:$0xff] 0.0
  %425 = vst [vmem:[#allocation2 + $0x418] sm:$0xff] 0.0
  %426 = vst [vmem:[#allocation2 + $0x420] sm:$0xff] 0.0
  %427 = vst [vmem:[#allocation2 + $0x428] sm:$0xff] 0.0
  %428 = vst [vmem:[#allocation2 + $0x430] sm:$0x3] 0.0
  %429 = vst [vmem:[#allocation2 + $0x438] sm:$0xff] 0.0
  %430 = vst [vmem:[#allocation2 + $0x440] sm:$0xff] 0.0
  %431 = vst [vmem:[#allocation2 + $0x448] sm:$0xff] 0.0
  %432 = vst [vmem:[#allocation2 + $0x450] sm:$0xff] 0.0
  %433 = vst [vmem:[#allocation2 + $0x458] sm:$0x3] 0.0
  %434 = vst [vmem:[#allocation2 + $0x460] sm:$0xff] 0.0
  %435 = vst [vmem:[#allocation2 + $0x468] sm:$0xff] 0.0
  %436 = vst [vmem:[#allocation2 + $0x470] sm:$0xff] 0.0
  %437 = vst [vmem:[#allocation2 + $0x478] sm:$0xff] 0.0
  %438 = vst [vmem:[#allocation2 + $0x480] sm:$0x3] 0.0
  %439 = vst [vmem:[#allocation2 + $0x488] sm:$0xff] 0.0
  %440 = vst [vmem:[#allocation2 + $0x490] sm:$0xff] 0.0
  %441 = vst [vmem:[#allocation2 + $0x498] sm:$0xff] 0.0
  %442 = vst [vmem:[#allocation2 + $0x4a0] sm:$0xff] 0.0
  %443 = vst [vmem:[#allocation2 + $0x4a8] sm:$0x3] 0.0
  %444 = vst [vmem:[#allocation2 + $0x4b0] sm:$0xff] 0.0
  %445 = vst [vmem:[#allocation2 + $0x4b8] sm:$0xff] 0.0
  %446 = vst [vmem:[#allocation2 + $0x4c0] sm:$0xff] 0.0
  %447 = vst [vmem:[#allocation2 + $0x4c8] sm:$0xff] 0.0
  %448 = vst [vmem:[#allocation2 + $0x4d0] sm:$0x3] 0.0
  %449 = vst [vmem:[#allocation2 + $0x4d8] sm:$0xff] 0.0
  %450 = vst [vmem:[#allocation2 + $0x4e0] sm:$0xff] 0.0
  %451 = vst [vmem:[#allocation2 + $0x4e8] sm:$0xff] 0.0
  %452 = vst [vmem:[#allocation2 + $0x4f0] sm:$0xff] 0.0
  %453 = vst [vmem:[#allocation2 + $0x4f8] sm:$0x3] 0.0
  %454 = vst [vmem:[#allocation2 + $0x500] sm:$0xff] 0.0
  %455 = vst [vmem:[#allocation2 + $0x508] sm:$0xff] 0.0
  %456 = vst [vmem:[#allocation2 + $0x510] sm:$0xff] 0.0
  %457 = vst [vmem:[#allocation2 + $0x518] sm:$0xff] 0.0
  %458 = vst [vmem:[#allocation2 + $0x520] sm:$0x3] 0.0
  %459 = vst [vmem:[#allocation2 + $0x528] sm:$0xff] 0.0
  %460 = vst [vmem:[#allocation2 + $0x530] sm:$0xff] 0.0
  %461 = vst [vmem:[#allocation2 + $0x538] sm:$0xff] 0.0
  %462 = vst [vmem:[#allocation2 + $0x540] sm:$0xff] 0.0
  %463 = vst [vmem:[#allocation2 + $0x548] sm:$0x3] 0.0
  %464 = vst [vmem:[#allocation2 + $0x550] sm:$0xff] 0.0
  %465 = vst [vmem:[#allocation2 + $0x558] sm:$0xff] 0.0
  %466 = vst [vmem:[#allocation2 + $0x560] sm:$0xff] 0.0
  %467 = vst [vmem:[#allocation2 + $0x568] sm:$0xff] 0.0
  %468 = vst [vmem:[#allocation2 + $0x570] sm:$0x3] 0.0
  %469 = vst [vmem:[#allocation2 + $0x578] sm:$0xff] 0.0
  %470 = vst [vmem:[#allocation2 + $0x580] sm:$0xff] 0.0
  %471 = vst [vmem:[#allocation2 + $0x588] sm:$0xff] 0.0
  %472 = vst [vmem:[#allocation2 + $0x590] sm:$0xff] 0.0
  %473 = vst [vmem:[#allocation2 + $0x598] sm:$0x3] 0.0
  %474 = vst [vmem:[#allocation2 + $0x5a0] sm:$0xff] 0.0
  %475 = vst [vmem:[#allocation2 + $0x5a8] sm:$0xff] 0.0
  %476 = vst [vmem:[#allocation2 + $0x5b0] sm:$0xff] 0.0
  %477 = vst [vmem:[#allocation2 + $0x5b8] sm:$0xff] 0.0
  %478 = vst [vmem:[#allocation2 + $0x5c0] sm:$0x3] 0.0
  %479 = vst [vmem:[#allocation2 + $0x5c8] sm:$0xff] 0.0
  %480 = vst [vmem:[#allocation2 + $0x5d0] sm:$0xff] 0.0
  %481 = vst [vmem:[#allocation2 + $0x5d8] sm:$0xff] 0.0
  %482 = vst [vmem:[#allocation2 + $0x5e0] sm:$0xff] 0.0
  %483 = vst [vmem:[#allocation2 + $0x5e8] sm:$0x3] 0.0
  %484 = vst [vmem:[#allocation2 + $0x5f0] sm:$0xff] 0.0
  %485 = vst [vmem:[#allocation2 + $0x5f8] sm:$0xff] 0.0
  %486 = vst [vmem:[#allocation2 + $0x600] sm:$0xff] 0.0
  %487 = vst [vmem:[#allocation2 + $0x608] sm:$0xff] 0.0
  %488 = vst [vmem:[#allocation2 + $0x610] sm:$0x3] 0.0
  %489 = vst [vmem:[#allocation2 + $0x618] sm:$0xff] 0.0
  %490 = vst [vmem:[#allocation2 + $0x620] sm:$0xff] 0.0
  %491 = vst [vmem:[#allocation2 + $0x628] sm:$0xff] 0.0
  %492 = vst [vmem:[#allocation2 + $0x630] sm:$0xff] 0.0
  %493 = vst [vmem:[#allocation2 + $0x638] sm:$0x3] 0.0
  %494 = vst [vmem:[#allocation2 + $0x640] sm:$0xff] 0.0
  %495 = vst [vmem:[#allocation2 + $0x648] sm:$0xff] 0.0
  %496 = vst [vmem:[#allocation2 + $0x650] sm:$0xff] 0.0
  %497 = vst [vmem:[#allocation2 + $0x658] sm:$0xff] 0.0
  %498 = vst [vmem:[#allocation2 + $0x660] sm:$0x3] 0.0
  %499 = vst [vmem:[#allocation2 + $0x668] sm:$0xff] 0.0
  %500 = vst [vmem:[#allocation2 + $0x670] sm:$0xff] 0.0
  %501 = vst [vmem:[#allocation2 + $0x678] sm:$0xff] 0.0
  %502 = vst [vmem:[#allocation2 + $0x680] sm:$0xff] 0.0
  %503 = vst [vmem:[#allocation2 + $0x688] sm:$0x3] 0.0
  %504 = vst [vmem:[#allocation2 + $0x690] sm:$0xff] 0.0
  %505 = vst [vmem:[#allocation2 + $0x698] sm:$0xff] 0.0
  %506 = vst [vmem:[#allocation2 + $0x6a0] sm:$0xff] 0.0
  %507 = vst [vmem:[#allocation2 + $0x6a8] sm:$0xff] 0.0
  %508 = vst [vmem:[#allocation2 + $0x6b0] sm:$0x3] 0.0
  %509 = vst [vmem:[#allocation2 + $0x6b8] sm:$0xff] 0.0
  %510 = vst [vmem:[#allocation2 + $0x6c0] sm:$0xff] 0.0
  %511 = vst [vmem:[#allocation2 + $0x6c8] sm:$0xff] 0.0
  %512 = vst [vmem:[#allocation2 + $0x6d0] sm:$0xff] 0.0
  %513 = vst [vmem:[#allocation2 + $0x6d8] sm:$0x3] 0.0
  %514 = vst [vmem:[#allocation2 + $0x6e0] sm:$0xff] 0.0
  %515 = vst [vmem:[#allocation2 + $0x6e8] sm:$0xff] 0.0
  %516 = vst [vmem:[#allocation2 + $0x6f0] sm:$0xff] 0.0
  %517 = vst [vmem:[#allocation2 + $0x6f8] sm:$0xff] 0.0
  %518 = vst [vmem:[#allocation2 + $0x700] sm:$0x3] 0.0
  %519 = vst [vmem:[#allocation2 + $0x708] sm:$0xff] 0.0
  %520 = vst [vmem:[#allocation2 + $0x710] sm:$0xff] 0.0
  %521 = vst [vmem:[#allocation2 + $0x718] sm:$0xff] 0.0
  %522 = vst [vmem:[#allocation2 + $0x720] sm:$0xff] 0.0
  %523 = vst [vmem:[#allocation2 + $0x728] sm:$0x3] 0.0
  %524 = vst [vmem:[#allocation2 + $0x730] sm:$0xff] 0.0
  %525 = vst [vmem:[#allocation2 + $0x738] sm:$0xff] 0.0
  %526 = vst [vmem:[#allocation2 + $0x740] sm:$0xff] 0.0
  %527 = vst [vmem:[#allocation2 + $0x748] sm:$0xff] 0.0
  %528 = vst [vmem:[#allocation2 + $0x750] sm:$0x3] 0.0
  %529 = vst [vmem:[#allocation2 + $0x758] sm:$0xff] 0.0
  %530 = vst [vmem:[#allocation2 + $0x760] sm:$0xff] 0.0
  %531 = vst [vmem:[#allocation2 + $0x768] sm:$0xff] 0.0
  %532 = vst [vmem:[#allocation2 + $0x770] sm:$0xff] 0.0
  %533 = vst [vmem:[#allocation2 + $0x778] sm:$0x3] 0.0
  %534 = vst [vmem:[#allocation2 + $0x780] sm:$0xff] 0.0
  %535 = vst [vmem:[#allocation2 + $0x788] sm:$0xff] 0.0
  %536 = vst [vmem:[#allocation2 + $0x790] sm:$0xff] 0.0
  %537 = vst [vmem:[#allocation2 + $0x798] sm:$0xff] 0.0
  %538 = vst [vmem:[#allocation2 + $0x7a0] sm:$0x3] 0.0
  %539 = vst [vmem:[#allocation2 + $0x7a8] sm:$0xff] 0.0
  %540 = vst [vmem:[#allocation2 + $0x7b0] sm:$0xff] 0.0
  %541 = vst [vmem:[#allocation2 + $0x7b8] sm:$0xff] 0.0
  %542 = vst [vmem:[#allocation2 + $0x7c0] sm:$0xff] 0.0
  %543 = vst [vmem:[#allocation2 + $0x7c8] sm:$0x3] 0.0
  %544 = vst [vmem:[#allocation2 + $0x7d0] sm:$0xff] 0.0
  %545 = vst [vmem:[#allocation2 + $0x7d8] sm:$0xff] 0.0
  %546 = vst [vmem:[#allocation2 + $0x7e0] sm:$0xff] 0.0
  %547 = vst [vmem:[#allocation2 + $0x7e8] sm:$0xff] 0.0
  %548 = vst [vmem:[#allocation2 + $0x7f0] sm:$0x3] 0.0
  %549 = vst [vmem:[#allocation2 + $0x7f8] sm:$0xff] 0.0
  %550 = vst [vmem:[#allocation2 + $0x800] sm:$0xff] 0.0
  %551 = vst [vmem:[#allocation2 + $0x808] sm:$0xff] 0.0
  %552 = vst [vmem:[#allocation2 + $0x810] sm:$0xff] 0.0
  %553 = vst [vmem:[#allocation2 + $0x818] sm:$0x3] 0.0
  %554 = vst [vmem:[#allocation2 + $0x820] sm:$0xff] 0.0
  %555 = vst [vmem:[#allocation2 + $0x828] sm:$0xff] 0.0
  %556 = vst [vmem:[#allocation2 + $0x830] sm:$0xff] 0.0
  %557 = vst [vmem:[#allocation2 + $0x838] sm:$0xff] 0.0
  %558 = vst [vmem:[#allocation2 + $0x840] sm:$0x3] 0.0
  %559 = vst [vmem:[#allocation2 + $0x848] sm:$0xff] 0.0
  %560 = vst [vmem:[#allocation2 + $0x850] sm:$0xff] 0.0
  %561 = vst [vmem:[#allocation2 + $0x858] sm:$0xff] 0.0
  %562 = vst [vmem:[#allocation2 + $0x860] sm:$0xff] 0.0
  %563 = vst [vmem:[#allocation2 + $0x868] sm:$0x3] 0.0
  %564 = vst [vmem:[#allocation2 + $0x870] sm:$0xff] 0.0
  %565 = vst [vmem:[#allocation2 + $0x878] sm:$0xff] 0.0
  %566 = vst [vmem:[#allocation2 + $0x880] sm:$0xff] 0.0
  %567 = vst [vmem:[#allocation2 + $0x888] sm:$0xff] 0.0
  %568 = vst [vmem:[#allocation2 + $0x890] sm:$0x3] 0.0
  %569 = vst [vmem:[#allocation2 + $0x898] sm:$0xff] 0.0
  %570 = vst [vmem:[#allocation2 + $0x8a0] sm:$0xff] 0.0
  %571 = vst [vmem:[#allocation2 + $0x8a8] sm:$0xff] 0.0
  %572 = vst [vmem:[#allocation2 + $0x8b0] sm:$0xff] 0.0
  %573 = vst [vmem:[#allocation2 + $0x8b8] sm:$0x3] 0.0
  %574 = vst [vmem:[#allocation2 + $0x8c0] sm:$0xff] 0.0
  %575 = vst [vmem:[#allocation2 + $0x8c8] sm:$0xff] 0.0
  %576 = vst [vmem:[#allocation2 + $0x8d0] sm:$0xff] 0.0
  %577 = vst [vmem:[#allocation2 + $0x8d8] sm:$0xff] 0.0
  %578 = vst [vmem:[#allocation2 + $0x8e0] sm:$0x3] 0.0
  %579 = vst [vmem:[#allocation2 + $0x8e8] sm:$0xff] 0.0
  %580 = vst [vmem:[#allocation2 + $0x8f0] sm:$0xff] 0.0
  %581 = vst [vmem:[#allocation2 + $0x8f8] sm:$0xff] 0.0
  %582 = vst [vmem:[#allocation2 + $0x900] sm:$0xff] 0.0
  %583 = vst [vmem:[#allocation2 + $0x908] sm:$0x3] 0.0
  %584 = vst [vmem:[#allocation2 + $0x910] sm:$0xff] 0.0
  %585 = vst [vmem:[#allocation2 + $0x918] sm:$0xff] 0.0
  %586 = vst [vmem:[#allocation2 + $0x920] sm:$0xff] 0.0
  %587 = vst [vmem:[#allocation2 + $0x928] sm:$0xff] 0.0
  %588 = vst [vmem:[#allocation2 + $0x930] sm:$0x3] 0.0
  %589 = vst [vmem:[#allocation2 + $0x938] sm:$0xff] 0.0
  %590 = vst [vmem:[#allocation2 + $0x940] sm:$0xff] 0.0
  %591 = vst [vmem:[#allocation2 + $0x948] sm:$0xff] 0.0
  %592 = vst [vmem:[#allocation2 + $0x950] sm:$0xff] 0.0
  %593 = vst [vmem:[#allocation2 + $0x958] sm:$0x3] 0.0
  %594 = vst [vmem:[#allocation2 + $0x960] sm:$0xff] 0.0
  %595 = vst [vmem:[#allocation2 + $0x968] sm:$0xff] 0.0
  %596 = vst [vmem:[#allocation2 + $0x970] sm:$0xff] 0.0
  %597 = vst [vmem:[#allocation2 + $0x978] sm:$0xff] 0.0
  %598 = vst [vmem:[#allocation2 + $0x980] sm:$0x3] 0.0
  %599 = vst [vmem:[#allocation2 + $0x988] sm:$0xff] 0.0
  %600 = vst [vmem:[#allocation2 + $0x990] sm:$0xff] 0.0
  %601 = vst [vmem:[#allocation2 + $0x998] sm:$0xff] 0.0
  %602 = vst [vmem:[#allocation2 + $0x9a0] sm:$0xff] 0.0
  %603 = vst [vmem:[#allocation2 + $0x9a8] sm:$0x3] 0.0
  %604 = vst [vmem:[#allocation2 + $0x9b0] sm:$0xff] 0.0
  %605 = vst [vmem:[#allocation2 + $0x9b8] sm:$0xff] 0.0
  %606 = vst [vmem:[#allocation2 + $0x9c0] sm:$0xff] 0.0
  %607 = vst [vmem:[#allocation2 + $0x9c8] sm:$0xff] 0.0
  %608 = vst [vmem:[#allocation2 + $0x9d0] sm:$0x3] 0.0
  %609 = vst [vmem:[#allocation2 + $0x9d8] sm:$0xff] 0.0
  %610 = vst [vmem:[#allocation2 + $0x9e0] sm:$0xff] 0.0
  %611 = vst [vmem:[#allocation2 + $0x9e8] sm:$0xff] 0.0
  %612 = vst [vmem:[#allocation2 + $0x9f0] sm:$0xff] 0.0
  %613 = vst [vmem:[#allocation2 + $0x9f8] sm:$0x3] 0.0
  %614 = vst [vmem:[#allocation2 + $0xa00] sm:$0xff] 0.0
  %615 = vst [vmem:[#allocation2 + $0xa08] sm:$0xff] 0.0
  %616 = vst [vmem:[#allocation2 + $0xa10] sm:$0xff] 0.0
  %617 = vst [vmem:[#allocation2 + $0xa18] sm:$0xff] 0.0
  %618 = vst [vmem:[#allocation2 + $0xa20] sm:$0x3] 0.0
  %619 = vst [vmem:[#allocation2 + $0xa28] sm:$0xff] 0.0
  %620 = vst [vmem:[#allocation2 + $0xa30] sm:$0xff] 0.0
  %621 = vst [vmem:[#allocation2 + $0xa38] sm:$0xff] 0.0
  %622 = vst [vmem:[#allocation2 + $0xa40] sm:$0xff] 0.0
  %623 = vst [vmem:[#allocation2 + $0xa48] sm:$0x3] 0.0
  %624 = vst [vmem:[#allocation2 + $0xa50] sm:$0xff] 0.0
  %625 = vst [vmem:[#allocation2 + $0xa58] sm:$0xff] 0.0
  %626 = vst [vmem:[#allocation2 + $0xa60] sm:$0xff] 0.0
  %627 = vst [vmem:[#allocation2 + $0xa68] sm:$0xff] 0.0
  %628 = vst [vmem:[#allocation2 + $0xa70] sm:$0x3] 0.0
  %629 = vst [vmem:[#allocation2 + $0xa78] sm:$0xff] 0.0
  %630 = vst [vmem:[#allocation2 + $0xa80] sm:$0xff] 0.0
  %631 = vst [vmem:[#allocation2 + $0xa88] sm:$0xff] 0.0
  %632 = vst [vmem:[#allocation2 + $0xa90] sm:$0xff] 0.0
  %633 = vst [vmem:[#allocation2 + $0xa98] sm:$0x3] 0.0
  %s634 = scalar_lea.vmem [#allocation2], 40
  %635 = vst [vmem:[%s634 + $0x1] sm:$0xff] %v38
  %636 = vst [vmem:[%s634 + $0x9] sm:$0xff] %v39
  %637 = vst [vmem:[%s634 + $0x11] sm:$0xff] %v40
  %638 = vst [vmem:[%s634 + $0x19] sm:$0xff] %v41
  %639 = vst [vmem:[%s634 + $0x29] sm:$0xff] %v42
  %640 = vst [vmem:[%s634 + $0x31] sm:$0xff] %v43
  %641 = vst [vmem:[%s634 + $0x39] sm:$0xff] %v44
  %642 = vst [vmem:[%s634 + $0x41] sm:$0xff] %v45
  %643 = vst [vmem:[%s634 + $0x51] sm:$0xff] %v46
  %644 = vst [vmem:[%s634 + $0x59] sm:$0xff] %v47
  %645 = vst [vmem:[%s634 + $0x61] sm:$0xff] %v48
  %646 = vst [vmem:[%s634 + $0x69] sm:$0xff] %v49
  %647 = vst [vmem:[%s634 + $0x79] sm:$0xff] %v50
  %648 = vst [vmem:[%s634 + $0x81] sm:$0xff] %v51
  %649 = vst [vmem:[%s634 + $0x89] sm:$0xff] %v52
  %650 = vst [vmem:[%s634 + $0x91] sm:$0xff] %v53
  %651 = vst [vmem:[%s634 + $0xa1] sm:$0xff] %v54
  %652 = vst [vmem:[%s634 + $0xa9] sm:$0xff] %v55
  %653 = vst [vmem:[%s634 + $0xb1] sm:$0xff] %v56
  %654 = vst [vmem:[%s634 + $0xb9] sm:$0xff] %v57
  %655 = vst [vmem:[%s634 + $0xc9] sm:$0xff] %v58
  %656 = vst [vmem:[%s634 + $0xd1] sm:$0xff] %v59
  %657 = vst [vmem:[%s634 + $0xd9] sm:$0xff] %v60
  %658 = vst [vmem:[%s634 + $0xe1] sm:$0xff] %v61
  %659 = vst [vmem:[%s634 + $0xf1] sm:$0xff] %v62
  %660 = vst [vmem:[%s634 + $0xf9] sm:$0xff] %v63
  %661 = vst [vmem:[%s634 + $0x101] sm:$0xff] %v64
  %662 = vst [vmem:[%s634 + $0x109] sm:$0xff] %v65
  %663 = vst [vmem:[%s634 + $0x119] sm:$0xff] %v66
  %664 = vst [vmem:[%s634 + $0x121] sm:$0xff] %v67
  %665 = vst [vmem:[%s634 + $0x129] sm:$0xff] %v68
  %666 = vst [vmem:[%s634 + $0x131] sm:$0xff] %v69
  %667 = vst [vmem:[%s634 + $0x141] sm:$0xff] %v70
  %668 = vst [vmem:[%s634 + $0x149] sm:$0xff] %v71
  %669 = vst [vmem:[%s634 + $0x151] sm:$0xff] %v72
  %670 = vst [vmem:[%s634 + $0x159] sm:$0xff] %v73
  %671 = vst [vmem:[%s634 + $0x169] sm:$0xff] %v74
  %672 = vst [vmem:[%s634 + $0x171] sm:$0xff] %v75
  %673 = vst [vmem:[%s634 + $0x179] sm:$0xff] %v76
  %674 = vst [vmem:[%s634 + $0x181] sm:$0xff] %v77
  %675 = vst [vmem:[%s634 + $0x191] sm:$0xff] %v78
  %676 = vst [vmem:[%s634 + $0x199] sm:$0xff] %v79
  %677 = vst [vmem:[%s634 + $0x1a1] sm:$0xff] %v80
  %678 = vst [vmem:[%s634 + $0x1a9] sm:$0xff] %v81
  %679 = vst [vmem:[%s634 + $0x1b9] sm:$0xff] %v82
  %680 = vst [vmem:[%s634 + $0x1c1] sm:$0xff] %v83
  %681 = vst [vmem:[%s634 + $0x1c9] sm:$0xff] %v84
  %682 = vst [vmem:[%s634 + $0x1d1] sm:$0xff] %v85
  %683 = vst [vmem:[%s634 + $0x1e1] sm:$0xff] %v86
  %684 = vst [vmem:[%s634 + $0x1e9] sm:$0xff] %v87
  %685 = vst [vmem:[%s634 + $0x1f1] sm:$0xff] %v88
  %686 = vst [vmem:[%s634 + $0x1f9] sm:$0xff] %v89
  %687 = vst [vmem:[%s634 + $0x209] sm:$0xff] %v90
  %688 = vst [vmem:[%s634 + $0x211] sm:$0xff] %v91
  %689 = vst [vmem:[%s634 + $0x219] sm:$0xff] %v92
  %690 = vst [vmem:[%s634 + $0x221] sm:$0xff] %v93
  %691 = vst [vmem:[%s634 + $0x231] sm:$0xff] %v94
  %692 = vst [vmem:[%s634 + $0x239] sm:$0xff] %v95
  %693 = vst [vmem:[%s634 + $0x241] sm:$0xff] %v96
  %694 = vst [vmem:[%s634 + $0x249] sm:$0xff] %v97
  %695 = vst [vmem:[%s634 + $0x259] sm:$0xff] %v98
  %696 = vst [vmem:[%s634 + $0x261] sm:$0xff] %v99
  %697 = vst [vmem:[%s634 + $0x269] sm:$0xff] %v100
  %698 = vst [vmem:[%s634 + $0x271] sm:$0xff] %v101
  %699 = vst [vmem:[%s634 + $0x281] sm:$0xff] %v102
  %700 = vst [vmem:[%s634 + $0x289] sm:$0xff] %v103
  %701 = vst [vmem:[%s634 + $0x291] sm:$0xff] %v104
  %702 = vst [vmem:[%s634 + $0x299] sm:$0xff] %v105
  %703 = vst [vmem:[%s634 + $0x2a9] sm:$0xff] %v106
  %704 = vst [vmem:[%s634 + $0x2b1] sm:$0xff] %v107
  %705 = vst [vmem:[%s634 + $0x2b9] sm:$0xff] %v108
  %706 = vst [vmem:[%s634 + $0x2c1] sm:$0xff] %v109
  %707 = vst [vmem:[%s634 + $0x2d1] sm:$0xff] %v110
  %708 = vst [vmem:[%s634 + $0x2d9] sm:$0xff] %v111
  %709 = vst [vmem:[%s634 + $0x2e1] sm:$0xff] %v112
  %710 = vst [vmem:[%s634 + $0x2e9] sm:$0xff] %v113
  %711 = vst [vmem:[%s634 + $0x2f9] sm:$0xff] %v114
  %712 = vst [vmem:[%s634 + $0x301] sm:$0xff] %v115
  %713 = vst [vmem:[%s634 + $0x309] sm:$0xff] %v116
  %714 = vst [vmem:[%s634 + $0x311] sm:$0xff] %v117
  %715 = vst [vmem:[%s634 + $0x321] sm:$0xff] %v118
  %716 = vst [vmem:[%s634 + $0x329] sm:$0xff] %v119
  %717 = vst [vmem:[%s634 + $0x331] sm:$0xff] %v120
  %718 = vst [vmem:[%s634 + $0x339] sm:$0xff] %v121
  %719 = vst [vmem:[%s634 + $0x349] sm:$0xff] %v122
  %720 = vst [vmem:[%s634 + $0x351] sm:$0xff] %v123
  %721 = vst [vmem:[%s634 + $0x359] sm:$0xff] %v124
  %722 = vst [vmem:[%s634 + $0x361] sm:$0xff] %v125
  %723 = vst [vmem:[%s634 + $0x371] sm:$0xff] %v126
  %724 = vst [vmem:[%s634 + $0x379] sm:$0xff] %v127
  %725 = vst [vmem:[%s634 + $0x381] sm:$0xff] %v128
  %726 = vst [vmem:[%s634 + $0x389] sm:$0xff] %v129
  %727 = vst [vmem:[%s634 + $0x399] sm:$0xff] %v130
  %728 = vst [vmem:[%s634 + $0x3a1] sm:$0xff] %v131
  %729 = vst [vmem:[%s634 + $0x3a9] sm:$0xff] %v132
  %730 = vst [vmem:[%s634 + $0x3b1] sm:$0xff] %v133
  %731 = vst [vmem:[%s634 + $0x3c1] sm:$0xff] %v134
  %732 = vst [vmem:[%s634 + $0x3c9] sm:$0xff] %v135
  %733 = vst [vmem:[%s634 + $0x3d1] sm:$0xff] %v136
  %734 = vst [vmem:[%s634 + $0x3d9] sm:$0xff] %v137
  %735 = vst [vmem:[%s634 + $0x3e9] sm:$0xff] %v138
  %736 = vst [vmem:[%s634 + $0x3f1] sm:$0xff] %v139
  %737 = vst [vmem:[%s634 + $0x3f9] sm:$0xff] %v140
  %738 = vst [vmem:[%s634 + $0x401] sm:$0xff] %v141
  %739 = vst [vmem:[%s634 + $0x411] sm:$0xff] %v142
  %740 = vst [vmem:[%s634 + $0x419] sm:$0xff] %v143
  %741 = vst [vmem:[%s634 + $0x421] sm:$0xff] %v144
  %742 = vst [vmem:[%s634 + $0x429] sm:$0xff] %v145
  %743 = vst [vmem:[%s634 + $0x439] sm:$0xff] %v146
  %744 = vst [vmem:[%s634 + $0x441] sm:$0xff] %v147
  %745 = vst [vmem:[%s634 + $0x449] sm:$0xff] %v148
  %746 = vst [vmem:[%s634 + $0x451] sm:$0xff] %v149
  %747 = vst [vmem:[%s634 + $0x461] sm:$0xff] %v150
  %748 = vst [vmem:[%s634 + $0x469] sm:$0xff] %v151
  %749 = vst [vmem:[%s634 + $0x471] sm:$0xff] %v152
  %750 = vst [vmem:[%s634 + $0x479] sm:$0xff] %v153
  %751 = vst [vmem:[%s634 + $0x489] sm:$0xff] %v154
  %752 = vst [vmem:[%s634 + $0x491] sm:$0xff] %v155
  %753 = vst [vmem:[%s634 + $0x499] sm:$0xff] %v156
  %754 = vst [vmem:[%s634 + $0x4a1] sm:$0xff] %v157
  %755 = vst [vmem:[%s634 + $0x4b1] sm:$0xff] %v158
  %756 = vst [vmem:[%s634 + $0x4b9] sm:$0xff] %v159
  %757 = vst [vmem:[%s634 + $0x4c1] sm:$0xff] %v160
  %758 = vst [vmem:[%s634 + $0x4c9] sm:$0xff] %v161
  %759 = vst [vmem:[%s634 + $0x4d9] sm:$0xff] %v162
  %760 = vst [vmem:[%s634 + $0x4e1] sm:$0xff] %v163
  %761 = vst [vmem:[%s634 + $0x4e9] sm:$0xff] %v164
  %762 = vst [vmem:[%s634 + $0x4f1] sm:$0xff] %v165
  %763 = vst [vmem:[%s634 + $0x551] sm:$0xff] %v166
  %764 = vst [vmem:[%s634 + $0x559] sm:$0xff] %v167
  %765 = vst [vmem:[%s634 + $0x561] sm:$0xff] %v168
  %766 = vst [vmem:[%s634 + $0x569] sm:$0xff] %v169
  %767 = vst [vmem:[%s634 + $0x579] sm:$0xff] %v170
  %768 = vst [vmem:[%s634 + $0x581] sm:$0xff] %v171
  %769 = vst [vmem:[%s634 + $0x589] sm:$0xff] %v172
  %770 = vst [vmem:[%s634 + $0x591] sm:$0xff] %v173
  %771 = vst [vmem:[%s634 + $0x5a1] sm:$0xff] %v174
  %772 = vst [vmem:[%s634 + $0x5a9] sm:$0xff] %v175
  %773 = vst [vmem:[%s634 + $0x5b1] sm:$0xff] %v176
  %774 = vst [vmem:[%s634 + $0x5b9] sm:$0xff] %v177
  %775 = vst [vmem:[%s634 + $0x5c9] sm:$0xff] %v178
  %776 = vst [vmem:[%s634 + $0x5d1] sm:$0xff] %v179
  %777 = vst [vmem:[%s634 + $0x5d9] sm:$0xff] %v180
  %778 = vst [vmem:[%s634 + $0x5e1] sm:$0xff] %v181
  %779 = vst [vmem:[%s634 + $0x5f1] sm:$0xff] %v182
  %780 = vst [vmem:[%s634 + $0x5f9] sm:$0xff] %v183
  %781 = vst [vmem:[%s634 + $0x601] sm:$0xff] %v184
  %782 = vst [vmem:[%s634 + $0x609] sm:$0xff] %v185
  %783 = vst [vmem:[%s634 + $0x619] sm:$0xff] %v186
  %784 = vst [vmem:[%s634 + $0x621] sm:$0xff] %v187
  %785 = vst [vmem:[%s634 + $0x629] sm:$0xff] %v188
  %786 = vst [vmem:[%s634 + $0x631] sm:$0xff] %v189
  %787 = vst [vmem:[%s634 + $0x641] sm:$0xff] %v190
  %788 = vst [vmem:[%s634 + $0x649] sm:$0xff] %v191
  %789 = vst [vmem:[%s634 + $0x651] sm:$0xff] %v192
  %790 = vst [vmem:[%s634 + $0x659] sm:$0xff] %v193
  %791 = vst [vmem:[%s634 + $0x669] sm:$0xff] %v194
  %792 = vst [vmem:[%s634 + $0x671] sm:$0xff] %v195
  %793 = vst [vmem:[%s634 + $0x679] sm:$0xff] %v196
  %794 = vst [vmem:[%s634 + $0x681] sm:$0xff] %v197
  %795 = vst [vmem:[%s634 + $0x691] sm:$0xff] %v198
  %796 = vst [vmem:[%s634 + $0x699] sm:$0xff] %v199
  %797 = vst [vmem:[%s634 + $0x6a1] sm:$0xff] %v200
  %798 = vst [vmem:[%s634 + $0x6a9] sm:$0xff] %v201
  %799 = vst [vmem:[%s634 + $0x6b9] sm:$0xff] %v202
  %800 = vst [vmem:[%s634 + $0x6c1] sm:$0xff] %v203
  %801 = vst [vmem:[%s634 + $0x6c9] sm:$0xff] %v204
  %802 = vst [vmem:[%s634 + $0x6d1] sm:$0xff] %v205
  %803 = vst [vmem:[%s634 + $0x6e1] sm:$0xff] %v206
  %804 = vst [vmem:[%s634 + $0x6e9] sm:$0xff] %v207
  %805 = vst [vmem:[%s634 + $0x6f1] sm:$0xff] %v208
  %806 = vst [vmem:[%s634 + $0x6f9] sm:$0xff] %v209
  %807 = vst [vmem:[%s634 + $0x709] sm:$0xff] %v210
  %808 = vst [vmem:[%s634 + $0x711] sm:$0xff] %v211
  %809 = vst [vmem:[%s634 + $0x719] sm:$0xff] %v212
  %810 = vst [vmem:[%s634 + $0x721] sm:$0xff] %v213
  %811 = vst [vmem:[%s634 + $0x731] sm:$0xff] %v214
  %812 = vst [vmem:[%s634 + $0x739] sm:$0xff] %v215
  %813 = vst [vmem:[%s634 + $0x741] sm:$0xff] %v216
  %814 = vst [vmem:[%s634 + $0x749] sm:$0xff] %v217
  %815 = vst [vmem:[%s634 + $0x759] sm:$0xff] %v218
  %816 = vst [vmem:[%s634 + $0x761] sm:$0xff] %v219
  %817 = vst [vmem:[%s634 + $0x769] sm:$0xff] %v220
  %818 = vst [vmem:[%s634 + $0x771] sm:$0xff] %v221
  %819 = vst [vmem:[%s634 + $0x781] sm:$0xff] %v222
  %820 = vst [vmem:[%s634 + $0x789] sm:$0xff] %v223
  %821 = vst [vmem:[%s634 + $0x791] sm:$0xff] %v224
  %822 = vst [vmem:[%s634 + $0x799] sm:$0xff] %v225
  %823 = vst [vmem:[%s634 + $0x7a9] sm:$0xff] %v226
  %824 = vst [vmem:[%s634 + $0x7b1] sm:$0xff] %v227
  %825 = vst [vmem:[%s634 + $0x7b9] sm:$0xff] %v228
  %826 = vst [vmem:[%s634 + $0x7c1] sm:$0xff] %v229
  %827 = vst [vmem:[%s634 + $0x7d1] sm:$0xff] %v230
  %828 = vst [vmem:[%s634 + $0x7d9] sm:$0xff] %v231
  %829 = vst [vmem:[%s634 + $0x7e1] sm:$0xff] %v232
  %830 = vst [vmem:[%s634 + $0x7e9] sm:$0xff] %v233
  %831 = vst [vmem:[%s634 + $0x7f9] sm:$0xff] %v234
  %832 = vst [vmem:[%s634 + $0x801] sm:$0xff] %v235
  %833 = vst [vmem:[%s634 + $0x809] sm:$0xff] %v236
  %834 = vst [vmem:[%s634 + $0x811] sm:$0xff] %v237
  %835 = vst [vmem:[%s634 + $0x821] sm:$0xff] %v238
  %836 = vst [vmem:[%s634 + $0x829] sm:$0xff] %v239
  %837 = vst [vmem:[%s634 + $0x831] sm:$0xff] %v240
  %838 = vst [vmem:[%s634 + $0x839] sm:$0xff] %v241
  %839 = vst [vmem:[%s634 + $0x849] sm:$0xff] %v242
  %840 = vst [vmem:[%s634 + $0x851] sm:$0xff] %v243
  %841 = vst [vmem:[%s634 + $0x859] sm:$0xff] %v244
  %842 = vst [vmem:[%s634 + $0x861] sm:$0xff] %v245
  %843 = vst [vmem:[%s634 + $0x871] sm:$0xff] %v246
  %844 = vst [vmem:[%s634 + $0x879] sm:$0xff] %v247
  %845 = vst [vmem:[%s634 + $0x881] sm:$0xff] %v248
  %846 = vst [vmem:[%s634 + $0x889] sm:$0xff] %v249
  %847 = vst [vmem:[%s634 + $0x899] sm:$0xff] %v250
  %848 = vst [vmem:[%s634 + $0x8a1] sm:$0xff] %v251
  %849 = vst [vmem:[%s634 + $0x8a9] sm:$0xff] %v252
  %850 = vst [vmem:[%s634 + $0x8b1] sm:$0xff] %v253
  %851 = vst [vmem:[%s634 + $0x8c1] sm:$0xff] %v254
  %852 = vst [vmem:[%s634 + $0x8c9] sm:$0xff] %v255
  %853 = vst [vmem:[%s634 + $0x8d1] sm:$0xff] %v256
  %854 = vst [vmem:[%s634 + $0x8d9] sm:$0xff] %v257
  %855 = vst [vmem:[%s634 + $0x8e9] sm:$0xff] %v258
  %856 = vst [vmem:[%s634 + $0x8f1] sm:$0xff] %v259
  %857 = vst [vmem:[%s634 + $0x8f9] sm:$0xff] %v260
  %858 = vst [vmem:[%s634 + $0x901] sm:$0xff] %v261
  %859 = vst [vmem:[%s634 + $0x911] sm:$0xff] %v262
  %860 = vst [vmem:[%s634 + $0x919] sm:$0xff] %v263
  %861 = vst [vmem:[%s634 + $0x921] sm:$0xff] %v264
  %862 = vst [vmem:[%s634 + $0x929] sm:$0xff] %v265
  %863 = vst [vmem:[%s634 + $0x939] sm:$0xff] %v266
  %864 = vst [vmem:[%s634 + $0x941] sm:$0xff] %v267
  %865 = vst [vmem:[%s634 + $0x949] sm:$0xff] %v268
  %866 = vst [vmem:[%s634 + $0x951] sm:$0xff] %v269
  %867 = vst [vmem:[%s634 + $0x961] sm:$0xff] %v270
  %868 = vst [vmem:[%s634 + $0x969] sm:$0xff] %v271
  %869 = vst [vmem:[%s634 + $0x971] sm:$0xff] %v272
  %870 = vst [vmem:[%s634 + $0x979] sm:$0xff] %v273
  %871 = vst [vmem:[%s634 + $0x989] sm:$0xff] %v274
  %872 = vst [vmem:[%s634 + $0x991] sm:$0xff] %v275
  %873 = vst [vmem:[%s634 + $0x999] sm:$0xff] %v276
  %874 = vst [vmem:[%s634 + $0x9a1] sm:$0xff] %v277
  %875 = vst [vmem:[%s634 + $0x9b1] sm:$0xff] %v278
  %876 = vst [vmem:[%s634 + $0x9b9] sm:$0xff] %v279
  %877 = vst [vmem:[%s634 + $0x9c1] sm:$0xff] %v280
  %878 = vst [vmem:[%s634 + $0x9c9] sm:$0xff] %v281
  %879 = vst [vmem:[%s634 + $0x9d9] sm:$0xff] %v282
  %880 = vst [vmem:[%s634 + $0x9e1] sm:$0xff] %v283
  %881 = vst [vmem:[%s634 + $0x9e9] sm:$0xff] %v284
  %882 = vst [vmem:[%s634 + $0x9f1] sm:$0xff] %v285
  %883 = vst [vmem:[%s634 + $0xa01] sm:$0xff] %v286
  %884 = vst [vmem:[%s634 + $0xa09] sm:$0xff] %v287
  %885 = vst [vmem:[%s634 + $0xa11] sm:$0xff] %v288
  %886 = vst [vmem:[%s634 + $0xa19] sm:$0xff] %v289
  %887 = vst [vmem:[%s634 + $0xa29] sm:$0xff] %v290
  %888 = vst [vmem:[%s634 + $0xa31] sm:$0xff] %v291
  %889 = vst [vmem:[%s634 + $0xa39] sm:$0xff] %v292
  %890 = vst [vmem:[%s634 + $0xa41] sm:$0xff] %v293
  %v891 = vld [vmem:[#allocation2] ss:$2 sm:$0xff]
  %s892 = scalar_lea.vmem [#allocation2], 16
  %v893 = vld [vmem:[%s892] ss:$2 sm:$0xff]
  %s894 = scalar_lea.vmem [#allocation2], 32
  %v895 = vld [vmem:[%s894] ss:$2 sm:$0x1]
  %s896 = scalar_lea.vmem [#allocation2], 40
  %v897 = vld [vmem:[%s896] ss:$2 sm:$0xff]
  %s898 = scalar_lea.vmem [#allocation2], 56
  %v899 = vld [vmem:[%s898] ss:$2 sm:$0xff]
  %s900 = scalar_lea.vmem [#allocation2], 72
  %v901 = vld [vmem:[%s900] ss:$2 sm:$0x1]
  %s902 = scalar_lea.vmem [#allocation2], 80
  %v903 = vld [vmem:[%s902] ss:$2 sm:$0xff]
  %s904 = scalar_lea.vmem [#allocation2], 96
  %v905 = vld [vmem:[%s904] ss:$2 sm:$0xff]
  %s906 = scalar_lea.vmem [#allocation2], 112
  %v907 = vld [vmem:[%s906] ss:$2 sm:$0x1]
  %s908 = scalar_lea.vmem [#allocation2], 120
  %v909 = vld [vmem:[%s908] ss:$2 sm:$0xff]
  %s910 = scalar_lea.vmem [#allocation2], 136
  %v911 = vld [vmem:[%s910] ss:$2 sm:$0xff]
  %s912 = scalar_lea.vmem [#allocation2], 152
  %v913 = vld [vmem:[%s912] ss:$2 sm:$0x1]
  %s914 = scalar_lea.vmem [#allocation2], 160
  %v915 = vld [vmem:[%s914] ss:$2 sm:$0xff]
  %s916 = scalar_lea.vmem [#allocation2], 176
  %v917 = vld [vmem:[%s916] ss:$2 sm:$0xff]
  %s918 = scalar_lea.vmem [#allocation2], 192
  %v919 = vld [vmem:[%s918] ss:$2 sm:$0x1]
  %s920 = scalar_lea.vmem [#allocation2], 200
  %v921 = vld [vmem:[%s920] ss:$2 sm:$0xff]
  %s922 = scalar_lea.vmem [#allocation2], 216
  %v923 = vld [vmem:[%s922] ss:$2 sm:$0xff]
  %s924 = scalar_lea.vmem [#allocation2], 232
  %v925 = vld [vmem:[%s924] ss:$2 sm:$0x1]
  %s926 = scalar_lea.vmem [#allocation2], 240
  %v927 = vld [vmem:[%s926] ss:$2 sm:$0xff]
  %s928 = scalar_lea.vmem [#allocation2], 256
  %v929 = vld [vmem:[%s928] ss:$2 sm:$0xff]
  %s930 = scalar_lea.vmem [#allocation2], 272
  %v931 = vld [vmem:[%s930] ss:$2 sm:$0x1]
  %s932 = scalar_lea.vmem [#allocation2], 280
  %v933 = vld [vmem:[%s932] ss:$2 sm:$0xff]
  %s934 = scalar_lea.vmem [#allocation2], 296
  %v935 = vld [vmem:[%s934] ss:$2 sm:$0xff]
  %s936 = scalar_lea.vmem [#allocation2], 312
  %v937 = vld [vmem:[%s936] ss:$2 sm:$0x1]
  %s938 = scalar_lea.vmem [#allocation2], 320
  %v939 = vld [vmem:[%s938] ss:$2 sm:$0xff]
  %s940 = scalar_lea.vmem [#allocation2], 336
  %v941 = vld [vmem:[%s940] ss:$2 sm:$0xff]
  %s942 = scalar_lea.vmem [#allocation2], 352
  %v943 = vld [vmem:[%s942] ss:$2 sm:$0x1]
  %s944 = scalar_lea.vmem [#allocation2], 360
  %v945 = vld [vmem:[%s944] ss:$2 sm:$0xff]
  %s946 = scalar_lea.vmem [#allocation2], 376
  %v947 = vld [vmem:[%s946] ss:$2 sm:$0xff]
  %s948 = scalar_lea.vmem [#allocation2], 392
  %v949 = vld [vmem:[%s948] ss:$2 sm:$0x1]
  %s950 = scalar_lea.vmem [#allocation2], 400
  %v951 = vld [vmem:[%s950] ss:$2 sm:$0xff]
  %s952 = scalar_lea.vmem [#allocation2], 416
  %v953 = vld [vmem:[%s952] ss:$2 sm:$0xff]
  %s954 = scalar_lea.vmem [#allocation2], 432
  %v955 = vld [vmem:[%s954] ss:$2 sm:$0x1]
  %s956 = scalar_lea.vmem [#allocation2], 440
  %v957 = vld [vmem:[%s956] ss:$2 sm:$0xff]
  %s958 = scalar_lea.vmem [#allocation2], 456
  %v959 = vld [vmem:[%s958] ss:$2 sm:$0xff]
  %s960 = scalar_lea.vmem [#allocation2], 472
  %v961 = vld [vmem:[%s960] ss:$2 sm:$0x1]
  %s962 = scalar_lea.vmem [#allocation2], 480
  %v963 = vld [vmem:[%s962] ss:$2 sm:$0xff]
  %s964 = scalar_lea.vmem [#allocation2], 496
  %v965 = vld [vmem:[%s964] ss:$2 sm:$0xff]
  %s966 = scalar_lea.vmem [#allocation2], 512
  %v967 = vld [vmem:[%s966] ss:$2 sm:$0x1]
  %s968 = scalar_lea.vmem [#allocation2], 520
  %v969 = vld [vmem:[%s968] ss:$2 sm:$0xff]
  %s970 = scalar_lea.vmem [#allocation2], 536
  %v971 = vld [vmem:[%s970] ss:$2 sm:$0xff]
  %s972 = scalar_lea.vmem [#allocation2], 552
  %v973 = vld [vmem:[%s972] ss:$2 sm:$0x1]
  %s974 = scalar_lea.vmem [#allocation2], 560
  %v975 = vld [vmem:[%s974] ss:$2 sm:$0xff]
  %s976 = scalar_lea.vmem [#allocation2], 576
  %v977 = vld [vmem:[%s976] ss:$2 sm:$0xff]
  %s978 = scalar_lea.vmem [#allocation2], 592
  %v979 = vld [vmem:[%s978] ss:$2 sm:$0x1]
  %s980 = scalar_lea.vmem [#allocation2], 600
  %v981 = vld [vmem:[%s980] ss:$2 sm:$0xff]
  %s982 = scalar_lea.vmem [#allocation2], 616
  %v983 = vld [vmem:[%s982] ss:$2 sm:$0xff]
  %s984 = scalar_lea.vmem [#allocation2], 632
  %v985 = vld [vmem:[%s984] ss:$2 sm:$0x1]
  %s986 = scalar_lea.vmem [#allocation2], 640
  %v987 = vld [vmem:[%s986] ss:$2 sm:$0xff]
  %s988 = scalar_lea.vmem [#allocation2], 656
  %v989 = vld [vmem:[%s988] ss:$2 sm:$0xff]
  %s990 = scalar_lea.vmem [#allocation2], 672
  %v991 = vld [vmem:[%s990] ss:$2 sm:$0x1]
  %s992 = scalar_lea.vmem [#allocation2], 680
  %v993 = vld [vmem:[%s992] ss:$2 sm:$0xff]
  %s994 = scalar_lea.vmem [#allocation2], 696
  %v995 = vld [vmem:[%s994] ss:$2 sm:$0xff]
  %s996 = scalar_lea.vmem [#allocation2], 712
  %v997 = vld [vmem:[%s996] ss:$2 sm:$0x1]
  %s998 = scalar_lea.vmem [#allocation2], 720
  %v999 = vld [vmem:[%s998] ss:$2 sm:$0xff]
  %s1000 = scalar_lea.vmem [#allocation2], 736
  %v1001 = vld [vmem:[%s1000] ss:$2 sm:$0xff]
  %s1002 = scalar_lea.vmem [#allocation2], 752
  %v1003 = vld [vmem:[%s1002] ss:$2 sm:$0x1]
  %s1004 = scalar_lea.vmem [#allocation2], 760
  %v1005 = vld [vmem:[%s1004] ss:$2 sm:$0xff]
  %s1006 = scalar_lea.vmem [#allocation2], 776
  %v1007 = vld [vmem:[%s1006] ss:$2 sm:$0xff]
  %s1008 = scalar_lea.vmem [#allocation2], 792
  %v1009 = vld [vmem:[%s1008] ss:$2 sm:$0x1]
  %s1010 = scalar_lea.vmem [#allocation2], 800
  %v1011 = vld [vmem:[%s1010] ss:$2 sm:$0xff]
  %s1012 = scalar_lea.vmem [#allocation2], 816
  %v1013 = vld [vmem:[%s1012] ss:$2 sm:$0xff]
  %s1014 = scalar_lea.vmem [#allocation2], 832
  %v1015 = vld [vmem:[%s1014] ss:$2 sm:$0x1]
  %s1016 = scalar_lea.vmem [#allocation2], 840
  %v1017 = vld [vmem:[%s1016] ss:$2 sm:$0xff]
  %s1018 = scalar_lea.vmem [#allocation2], 856
  %v1019 = vld [vmem:[%s1018] ss:$2 sm:$0xff]
  %s1020 = scalar_lea.vmem [#allocation2], 872
  %v1021 = vld [vmem:[%s1020] ss:$2 sm:$0x1]
  %s1022 = scalar_lea.vmem [#allocation2], 880
  %v1023 = vld [vmem:[%s1022] ss:$2 sm:$0xff]
  %s1024 = scalar_lea.vmem [#allocation2], 896
  %v1025 = vld [vmem:[%s1024] ss:$2 sm:$0xff]
  %s1026 = scalar_lea.vmem [#allocation2], 912
  %v1027 = vld [vmem:[%s1026] ss:$2 sm:$0x1]
  %s1028 = scalar_lea.vmem [#allocation2], 920
  %v1029 = vld [vmem:[%s1028] ss:$2 sm:$0xff]
  %s1030 = scalar_lea.vmem [#allocation2], 936
  %v1031 = vld [vmem:[%s1030] ss:$2 sm:$0xff]
  %s1032 = scalar_lea.vmem [#allocation2], 952
  %v1033 = vld [vmem:[%s1032] ss:$2 sm:$0x1]
  %s1034 = scalar_lea.vmem [#allocation2], 960
  %v1035 = vld [vmem:[%s1034] ss:$2 sm:$0xff]
  %s1036 = scalar_lea.vmem [#allocation2], 976
  %v1037 = vld [vmem:[%s1036] ss:$2 sm:$0xff]
  %s1038 = scalar_lea.vmem [#allocation2], 992
  %v1039 = vld [vmem:[%s1038] ss:$2 sm:$0x1]
  %s1040 = scalar_lea.vmem [#allocation2], 1000
  %v1041 = vld [vmem:[%s1040] ss:$2 sm:$0xff]
  %s1042 = scalar_lea.vmem [#allocation2], 1016
  %v1043 = vld [vmem:[%s1042] ss:$2 sm:$0xff]
  %s1044 = scalar_lea.vmem [#allocation2], 1032
  %v1045 = vld [vmem:[%s1044] ss:$2 sm:$0x1]
  %s1046 = scalar_lea.vmem [#allocation2], 1040
  %v1047 = vld [vmem:[%s1046] ss:$2 sm:$0xff]
  %s1048 = scalar_lea.vmem [#allocation2], 1056
  %v1049 = vld [vmem:[%s1048] ss:$2 sm:$0xff]
  %s1050 = scalar_lea.vmem [#allocation2], 1072
  %v1051 = vld [vmem:[%s1050] ss:$2 sm:$0x1]
  %s1052 = scalar_lea.vmem [#allocation2], 1080
  %v1053 = vld [vmem:[%s1052] ss:$2 sm:$0xff]
  %s1054 = scalar_lea.vmem [#allocation2], 1096
  %v1055 = vld [vmem:[%s1054] ss:$2 sm:$0xff]
  %s1056 = scalar_lea.vmem [#allocation2], 1112
  %v1057 = vld [vmem:[%s1056] ss:$2 sm:$0x1]
  %s1058 = scalar_lea.vmem [#allocation2], 1120
  %v1059 = vld [vmem:[%s1058] ss:$2 sm:$0xff]
  %s1060 = scalar_lea.vmem [#allocation2], 1136
  %v1061 = vld [vmem:[%s1060] ss:$2 sm:$0xff]
  %s1062 = scalar_lea.vmem [#allocation2], 1152
  %v1063 = vld [vmem:[%s1062] ss:$2 sm:$0x1]
  %s1064 = scalar_lea.vmem [#allocation2], 1160
  %v1065 = vld [vmem:[%s1064] ss:$2 sm:$0xff]
  %s1066 = scalar_lea.vmem [#allocation2], 1176
  %v1067 = vld [vmem:[%s1066] ss:$2 sm:$0xff]
  %s1068 = scalar_lea.vmem [#allocation2], 1192
  %v1069 = vld [vmem:[%s1068] ss:$2 sm:$0x1]
  %s1070 = scalar_lea.vmem [#allocation2], 1200
  %v1071 = vld [vmem:[%s1070] ss:$2 sm:$0xff]
  %s1072 = scalar_lea.vmem [#allocation2], 1216
  %v1073 = vld [vmem:[%s1072] ss:$2 sm:$0xff]
  %s1074 = scalar_lea.vmem [#allocation2], 1232
  %v1075 = vld [vmem:[%s1074] ss:$2 sm:$0x1]
  %s1076 = scalar_lea.vmem [#allocation2], 1240
  %v1077 = vld [vmem:[%s1076] ss:$2 sm:$0xff]
  %s1078 = scalar_lea.vmem [#allocation2], 1256
  %v1079 = vld [vmem:[%s1078] ss:$2 sm:$0xff]
  %s1080 = scalar_lea.vmem [#allocation2], 1272
  %v1081 = vld [vmem:[%s1080] ss:$2 sm:$0x1]
  %s1082 = scalar_lea.vmem [#allocation2], 1280
  %v1083 = vld [vmem:[%s1082] ss:$2 sm:$0xff]
  %s1084 = scalar_lea.vmem [#allocation2], 1296
  %v1085 = vld [vmem:[%s1084] ss:$2 sm:$0xff]
  %s1086 = scalar_lea.vmem [#allocation2], 1312
  %v1087 = vld [vmem:[%s1086] ss:$2 sm:$0x1]
  %s1088 = scalar_lea.vmem [#allocation2], 1360
  %v1089 = vld [vmem:[%s1088] ss:$2 sm:$0xff]
  %s1090 = scalar_lea.vmem [#allocation2], 1376
  %v1091 = vld [vmem:[%s1090] ss:$2 sm:$0xff]
  %s1092 = scalar_lea.vmem [#allocation2], 1392
  %v1093 = vld [vmem:[%s1092] ss:$2 sm:$0x1]
  %s1094 = scalar_lea.vmem [#allocation2], 1400
  %v1095 = vld [vmem:[%s1094] ss:$2 sm:$0xff]
  %s1096 = scalar_lea.vmem [#allocation2], 1416
  %v1097 = vld [vmem:[%s1096] ss:$2 sm:$0xff]
  %s1098 = scalar_lea.vmem [#allocation2], 1432
  %v1099 = vld [vmem:[%s1098] ss:$2 sm:$0x1]
  %s1100 = scalar_lea.vmem [#allocation2], 1440
  %v1101 = vld [vmem:[%s1100] ss:$2 sm:$0xff]
  %s1102 = scalar_lea.vmem [#allocation2], 1456
  %v1103 = vld [vmem:[%s1102] ss:$2 sm:$0xff]
  %s1104 = scalar_lea.vmem [#allocation2], 1472
  %v1105 = vld [vmem:[%s1104] ss:$2 sm:$0x1]
  %s1106 = scalar_lea.vmem [#allocation2], 1480
  %v1107 = vld [vmem:[%s1106] ss:$2 sm:$0xff]
  %s1108 = scalar_lea.vmem [#allocation2], 1496
  %v1109 = vld [vmem:[%s1108] ss:$2 sm:$0xff]
  %s1110 = scalar_lea.vmem [#allocation2], 1512
  %v1111 = vld [vmem:[%s1110] ss:$2 sm:$0x1]
  %s1112 = scalar_lea.vmem [#allocation2], 1520
  %v1113 = vld [vmem:[%s1112] ss:$2 sm:$0xff]
  %s1114 = scalar_lea.vmem [#allocation2], 1536
  %v1115 = vld [vmem:[%s1114] ss:$2 sm:$0xff]
  %s1116 = scalar_lea.vmem [#allocation2], 1552
  %v1117 = vld [vmem:[%s1116] ss:$2 sm:$0x1]
  %s1118 = scalar_lea.vmem [#allocation2], 1560
  %v1119 = vld [vmem:[%s1118] ss:$2 sm:$0xff]
  %s1120 = scalar_lea.vmem [#allocation2], 1576
  %v1121 = vld [vmem:[%s1120] ss:$2 sm:$0xff]
  %s1122 = scalar_lea.vmem [#allocation2], 1592
  %v1123 = vld [vmem:[%s1122] ss:$2 sm:$0x1]
  %s1124 = scalar_lea.vmem [#allocation2], 1600
  %v1125 = vld [vmem:[%s1124] ss:$2 sm:$0xff]
  %s1126 = scalar_lea.vmem [#allocation2], 1616
  %v1127 = vld [vmem:[%s1126] ss:$2 sm:$0xff]
  %s1128 = scalar_lea.vmem [#allocation2], 1632
  %v1129 = vld [vmem:[%s1128] ss:$2 sm:$0x1]
  %s1130 = scalar_lea.vmem [#allocation2], 1640
  %v1131 = vld [vmem:[%s1130] ss:$2 sm:$0xff]
  %s1132 = scalar_lea.vmem [#allocation2], 1656
  %v1133 = vld [vmem:[%s1132] ss:$2 sm:$0xff]
  %s1134 = scalar_lea.vmem [#allocation2], 1672
  %v1135 = vld [vmem:[%s1134] ss:$2 sm:$0x1]
  %s1136 = scalar_lea.vmem [#allocation2], 1680
  %v1137 = vld [vmem:[%s1136] ss:$2 sm:$0xff]
  %s1138 = scalar_lea.vmem [#allocation2], 1696
  %v1139 = vld [vmem:[%s1138] ss:$2 sm:$0xff]
  %s1140 = scalar_lea.vmem [#allocation2], 1712
  %v1141 = vld [vmem:[%s1140] ss:$2 sm:$0x1]
  %s1142 = scalar_lea.vmem [#allocation2], 1720
  %v1143 = vld [vmem:[%s1142] ss:$2 sm:$0xff]
  %s1144 = scalar_lea.vmem [#allocation2], 1736
  %v1145 = vld [vmem:[%s1144] ss:$2 sm:$0xff]
  %s1146 = scalar_lea.vmem [#allocation2], 1752
  %v1147 = vld [vmem:[%s1146] ss:$2 sm:$0x1]
  %s1148 = scalar_lea.vmem [#allocation2], 1760
  %v1149 = vld [vmem:[%s1148] ss:$2 sm:$0xff]
  %s1150 = scalar_lea.vmem [#allocation2], 1776
  %v1151 = vld [vmem:[%s1150] ss:$2 sm:$0xff]
  %s1152 = scalar_lea.vmem [#allocation2], 1792
  %v1153 = vld [vmem:[%s1152] ss:$2 sm:$0x1]
  %s1154 = scalar_lea.vmem [#allocation2], 1800
  %v1155 = vld [vmem:[%s1154] ss:$2 sm:$0xff]
  %s1156 = scalar_lea.vmem [#allocation2], 1816
  %v1157 = vld [vmem:[%s1156] ss:$2 sm:$0xff]
  %s1158 = scalar_lea.vmem [#allocation2], 1832
  %v1159 = vld [vmem:[%s1158] ss:$2 sm:$0x1]
  %s1160 = scalar_lea.vmem [#allocation2], 1840
  %v1161 = vld [vmem:[%s1160] ss:$2 sm:$0xff]
  %s1162 = scalar_lea.vmem [#allocation2], 1856
  %v1163 = vld [vmem:[%s1162] ss:$2 sm:$0xff]
  %s1164 = scalar_lea.vmem [#allocation2], 1872
  %v1165 = vld [vmem:[%s1164] ss:$2 sm:$0x1]
  %s1166 = scalar_lea.vmem [#allocation2], 1880
  %v1167 = vld [vmem:[%s1166] ss:$2 sm:$0xff]
  %s1168 = scalar_lea.vmem [#allocation2], 1896
  %v1169 = vld [vmem:[%s1168] ss:$2 sm:$0xff]
  %s1170 = scalar_lea.vmem [#allocation2], 1912
  %v1171 = vld [vmem:[%s1170] ss:$2 sm:$0x1]
  %s1172 = scalar_lea.vmem [#allocation2], 1920
  %v1173 = vld [vmem:[%s1172] ss:$2 sm:$0xff]
  %s1174 = scalar_lea.vmem [#allocation2], 1936
  %v1175 = vld [vmem:[%s1174] ss:$2 sm:$0xff]
  %s1176 = scalar_lea.vmem [#allocation2], 1952
  %v1177 = vld [vmem:[%s1176] ss:$2 sm:$0x1]
  %s1178 = scalar_lea.vmem [#allocation2], 1960
  %v1179 = vld [vmem:[%s1178] ss:$2 sm:$0xff]
  %s1180 = scalar_lea.vmem [#allocation2], 1976
  %v1181 = vld [vmem:[%s1180] ss:$2 sm:$0xff]
  %s1182 = scalar_lea.vmem [#allocation2], 1992
  %v1183 = vld [vmem:[%s1182] ss:$2 sm:$0x1]
  %s1184 = scalar_lea.vmem [#allocation2], 2000
  %v1185 = vld [vmem:[%s1184] ss:$2 sm:$0xff]
  %s1186 = scalar_lea.vmem [#allocation2], 2016
  %v1187 = vld [vmem:[%s1186] ss:$2 sm:$0xff]
  %s1188 = scalar_lea.vmem [#allocation2], 2032
  %v1189 = vld [vmem:[%s1188] ss:$2 sm:$0x1]
  %s1190 = scalar_lea.vmem [#allocation2], 2040
  %v1191 = vld [vmem:[%s1190] ss:$2 sm:$0xff]
  %s1192 = scalar_lea.vmem [#allocation2], 2056
  %v1193 = vld [vmem:[%s1192] ss:$2 sm:$0xff]
  %s1194 = scalar_lea.vmem [#allocation2], 2072
  %v1195 = vld [vmem:[%s1194] ss:$2 sm:$0x1]
  %s1196 = scalar_lea.vmem [#allocation2], 2080
  %v1197 = vld [vmem:[%s1196] ss:$2 sm:$0xff]
  %s1198 = scalar_lea.vmem [#allocation2], 2096
  %v1199 = vld [vmem:[%s1198] ss:$2 sm:$0xff]
  %s1200 = scalar_lea.vmem [#allocation2], 2112
  %v1201 = vld [vmem:[%s1200] ss:$2 sm:$0x1]
  %s1202 = scalar_lea.vmem [#allocation2], 2120
  %v1203 = vld [vmem:[%s1202] ss:$2 sm:$0xff]
  %s1204 = scalar_lea.vmem [#allocation2], 2136
  %v1205 = vld [vmem:[%s1204] ss:$2 sm:$0xff]
  %s1206 = scalar_lea.vmem [#allocation2], 2152
  %v1207 = vld [vmem:[%s1206] ss:$2 sm:$0x1]
  %s1208 = scalar_lea.vmem [#allocation2], 2160
  %v1209 = vld [vmem:[%s1208] ss:$2 sm:$0xff]
  %s1210 = scalar_lea.vmem [#allocation2], 2176
  %v1211 = vld [vmem:[%s1210] ss:$2 sm:$0xff]
  %s1212 = scalar_lea.vmem [#allocation2], 2192
  %v1213 = vld [vmem:[%s1212] ss:$2 sm:$0x1]
  %s1214 = scalar_lea.vmem [#allocation2], 2200
  %v1215 = vld [vmem:[%s1214] ss:$2 sm:$0xff]
  %s1216 = scalar_lea.vmem [#allocation2], 2216
  %v1217 = vld [vmem:[%s1216] ss:$2 sm:$0xff]
  %s1218 = scalar_lea.vmem [#allocation2], 2232
  %v1219 = vld [vmem:[%s1218] ss:$2 sm:$0x1]
  %s1220 = scalar_lea.vmem [#allocation2], 2240
  %v1221 = vld [vmem:[%s1220] ss:$2 sm:$0xff]
  %s1222 = scalar_lea.vmem [#allocation2], 2256
  %v1223 = vld [vmem:[%s1222] ss:$2 sm:$0xff]
  %s1224 = scalar_lea.vmem [#allocation2], 2272
  %v1225 = vld [vmem:[%s1224] ss:$2 sm:$0x1]
  %s1226 = scalar_lea.vmem [#allocation2], 2280
  %v1227 = vld [vmem:[%s1226] ss:$2 sm:$0xff]
  %s1228 = scalar_lea.vmem [#allocation2], 2296
  %v1229 = vld [vmem:[%s1228] ss:$2 sm:$0xff]
  %s1230 = scalar_lea.vmem [#allocation2], 2312
  %v1231 = vld [vmem:[%s1230] ss:$2 sm:$0x1]
  %s1232 = scalar_lea.vmem [#allocation2], 2320
  %v1233 = vld [vmem:[%s1232] ss:$2 sm:$0xff]
  %s1234 = scalar_lea.vmem [#allocation2], 2336
  %v1235 = vld [vmem:[%s1234] ss:$2 sm:$0xff]
  %s1236 = scalar_lea.vmem [#allocation2], 2352
  %v1237 = vld [vmem:[%s1236] ss:$2 sm:$0x1]
  %s1238 = scalar_lea.vmem [#allocation2], 2360
  %v1239 = vld [vmem:[%s1238] ss:$2 sm:$0xff]
  %s1240 = scalar_lea.vmem [#allocation2], 2376
  %v1241 = vld [vmem:[%s1240] ss:$2 sm:$0xff]
  %s1242 = scalar_lea.vmem [#allocation2], 2392
  %v1243 = vld [vmem:[%s1242] ss:$2 sm:$0x1]
  %s1244 = scalar_lea.vmem [#allocation2], 2400
  %v1245 = vld [vmem:[%s1244] ss:$2 sm:$0xff]
  %s1246 = scalar_lea.vmem [#allocation2], 2416
  %v1247 = vld [vmem:[%s1246] ss:$2 sm:$0xff]
  %s1248 = scalar_lea.vmem [#allocation2], 2432
  %v1249 = vld [vmem:[%s1248] ss:$2 sm:$0x1]
  %s1250 = scalar_lea.vmem [#allocation2], 2440
  %v1251 = vld [vmem:[%s1250] ss:$2 sm:$0xff]
  %s1252 = scalar_lea.vmem [#allocation2], 2456
  %v1253 = vld [vmem:[%s1252] ss:$2 sm:$0xff]
  %s1254 = scalar_lea.vmem [#allocation2], 2472
  %v1255 = vld [vmem:[%s1254] ss:$2 sm:$0x1]
  %s1256 = scalar_lea.vmem [#allocation2], 2480
  %v1257 = vld [vmem:[%s1256] ss:$2 sm:$0xff]
  %s1258 = scalar_lea.vmem [#allocation2], 2496
  %v1259 = vld [vmem:[%s1258] ss:$2 sm:$0xff]
  %s1260 = scalar_lea.vmem [#allocation2], 2512
  %v1261 = vld [vmem:[%s1260] ss:$2 sm:$0x1]
  %s1262 = scalar_lea.vmem [#allocation2], 2520
  %v1263 = vld [vmem:[%s1262] ss:$2 sm:$0xff]
  %s1264 = scalar_lea.vmem [#allocation2], 2536
  %v1265 = vld [vmem:[%s1264] ss:$2 sm:$0xff]
  %s1266 = scalar_lea.vmem [#allocation2], 2552
  %v1267 = vld [vmem:[%s1266] ss:$2 sm:$0x1]
  %s1268 = scalar_lea.vmem [#allocation2], 2560
  %v1269 = vld [vmem:[%s1268] ss:$2 sm:$0xff]
  %s1270 = scalar_lea.vmem [#allocation2], 2576
  %v1271 = vld [vmem:[%s1270] ss:$2 sm:$0xff]
  %s1272 = scalar_lea.vmem [#allocation2], 2592
  %v1273 = vld [vmem:[%s1272] ss:$2 sm:$0x1]
  %s1274 = scalar_lea.vmem [#allocation2], 2600
  %v1275 = vld [vmem:[%s1274] ss:$2 sm:$0xff]
  %s1276 = scalar_lea.vmem [#allocation2], 2616
  %v1277 = vld [vmem:[%s1276] ss:$2 sm:$0xff]
  %s1278 = scalar_lea.vmem [#allocation2], 2632
  %v1279 = vld [vmem:[%s1278] ss:$2 sm:$0x1]
  %s1280 = scalar_lea.vmem [#allocation2], 2640
  %v1281 = vld [vmem:[%s1280] ss:$2 sm:$0xff]
  %s1282 = scalar_lea.vmem [#allocation2], 2656
  %v1283 = vld [vmem:[%s1282] ss:$2 sm:$0xff]
  %s1284 = scalar_lea.vmem [#allocation2], 2672
  %v1285 = vld [vmem:[%s1284] ss:$2 sm:$0x1]
  %s1286 = scalar_lea.vmem [#allocation2], 1
  %v1287 = vld [vmem:[%s1286] ss:$2 sm:$0xff]
  %s1288 = scalar_lea.vmem [#allocation2], 17
  %v1289 = vld [vmem:[%s1288] ss:$2 sm:$0xff]
  %s1290 = scalar_lea.vmem [#allocation2], 41
  %v1291 = vld [vmem:[%s1290] ss:$2 sm:$0xff]
  %s1292 = scalar_lea.vmem [#allocation2], 57
  %v1293 = vld [vmem:[%s1292] ss:$2 sm:$0xff]
  %s1294 = scalar_lea.vmem [#allocation2], 81
  %v1295 = vld [vmem:[%s1294] ss:$2 sm:$0xff]
  %s1296 = scalar_lea.vmem [#allocation2], 97
  %v1297 = vld [vmem:[%s1296] ss:$2 sm:$0xff]
  %s1298 = scalar_lea.vmem [#allocation2], 121
  %v1299 = vld [vmem:[%s1298] ss:$2 sm:$0xff]
  %s1300 = scalar_lea.vmem [#allocation2], 137
  %v1301 = vld [vmem:[%s1300] ss:$2 sm:$0xff]
  %s1302 = scalar_lea.vmem [#allocation2], 161
  %v1303 = vld [vmem:[%s1302] ss:$2 sm:$0xff]
  %s1304 = scalar_lea.vmem [#allocation2], 177
  %v1305 = vld [vmem:[%s1304] ss:$2 sm:$0xff]
  %s1306 = scalar_lea.vmem [#allocation2], 201
  %v1307 = vld [vmem:[%s1306] ss:$2 sm:$0xff]
  %s1308 = scalar_lea.vmem [#allocation2], 217
  %v1309 = vld [vmem:[%s1308] ss:$2 sm:$0xff]
  %s1310 = scalar_lea.vmem [#allocation2], 241
  %v1311 = vld [vmem:[%s1310] ss:$2 sm:$0xff]
  %s1312 = scalar_lea.vmem [#allocation2], 257
  %v1313 = vld [vmem:[%s1312] ss:$2 sm:$0xff]
  %s1314 = scalar_lea.vmem [#allocation2], 281
  %v1315 = vld [vmem:[%s1314] ss:$2 sm:$0xff]
  %s1316 = scalar_lea.vmem [#allocation2], 297
  %v1317 = vld [vmem:[%s1316] ss:$2 sm:$0xff]
  %s1318 = scalar_lea.vmem [#allocation2], 321
  %v1319 = vld [vmem:[%s1318] ss:$2 sm:$0xff]
  %s1320 = scalar_lea.vmem [#allocation2], 337
  %v1321 = vld [vmem:[%s1320] ss:$2 sm:$0xff]
  %s1322 = scalar_lea.vmem [#allocation2], 361
  %v1323 = vld [vmem:[%s1322] ss:$2 sm:$0xff]
  %s1324 = scalar_lea.vmem [#allocation2], 377
  %v1325 = vld [vmem:[%s1324] ss:$2 sm:$0xff]
  %s1326 = scalar_lea.vmem [#allocation2], 401
  %v1327 = vld [vmem:[%s1326] ss:$2 sm:$0xff]
  %s1328 = scalar_lea.vmem [#allocation2], 417
  %v1329 = vld [vmem:[%s1328] ss:$2 sm:$0xff]
  %s1330 = scalar_lea.vmem [#allocation2], 441
  %v1331 = vld [vmem:[%s1330] ss:$2 sm:$0xff]
  %s1332 = scalar_lea.vmem [#allocation2], 457
  %v1333 = vld [vmem:[%s1332] ss:$2 sm:$0xff]
  %s1334 = scalar_lea.vmem [#allocation2], 481
  %v1335 = vld [vmem:[%s1334] ss:$2 sm:$0xff]
  %s1336 = scalar_lea.vmem [#allocation2], 497
  %v1337 = vld [vmem:[%s1336] ss:$2 sm:$0xff]
  %s1338 = scalar_lea.vmem [#allocation2], 521
  %v1339 = vld [vmem:[%s1338] ss:$2 sm:$0xff]
  %s1340 = scalar_lea.vmem [#allocation2], 537
  %v1341 = vld [vmem:[%s1340] ss:$2 sm:$0xff]
  %s1342 = scalar_lea.vmem [#allocation2], 561
  %v1343 = vld [vmem:[%s1342] ss:$2 sm:$0xff]
  %s1344 = scalar_lea.vmem [#allocation2], 577
  %v1345 = vld [vmem:[%s1344] ss:$2 sm:$0xff]
  %s1346 = scalar_lea.vmem [#allocation2], 601
  %v1347 = vld [vmem:[%s1346] ss:$2 sm:$0xff]
  %s1348 = scalar_lea.vmem [#allocation2], 617
  %v1349 = vld [vmem:[%s1348] ss:$2 sm:$0xff]
  %s1350 = scalar_lea.vmem [#allocation2], 641
  %v1351 = vld [vmem:[%s1350] ss:$2 sm:$0xff]
  %s1352 = scalar_lea.vmem [#allocation2], 657
  %v1353 = vld [vmem:[%s1352] ss:$2 sm:$0xff]
  %s1354 = scalar_lea.vmem [#allocation2], 681
  %v1355 = vld [vmem:[%s1354] ss:$2 sm:$0xff]
  %s1356 = scalar_lea.vmem [#allocation2], 697
  %v1357 = vld [vmem:[%s1356] ss:$2 sm:$0xff]
  %s1358 = scalar_lea.vmem [#allocation2], 721
  %v1359 = vld [vmem:[%s1358] ss:$2 sm:$0xff]
  %s1360 = scalar_lea.vmem [#allocation2], 737
  %v1361 = vld [vmem:[%s1360] ss:$2 sm:$0xff]
  %s1362 = scalar_lea.vmem [#allocation2], 761
  %v1363 = vld [vmem:[%s1362] ss:$2 sm:$0xff]
  %s1364 = scalar_lea.vmem [#allocation2], 777
  %v1365 = vld [vmem:[%s1364] ss:$2 sm:$0xff]
  %s1366 = scalar_lea.vmem [#allocation2], 801
  %v1367 = vld [vmem:[%s1366] ss:$2 sm:$0xff]
  %s1368 = scalar_lea.vmem [#allocation2], 817
  %v1369 = vld [vmem:[%s1368] ss:$2 sm:$0xff]
  %s1370 = scalar_lea.vmem [#allocation2], 841
  %v1371 = vld [vmem:[%s1370] ss:$2 sm:$0xff]
  %s1372 = scalar_lea.vmem [#allocation2], 857
  %v1373 = vld [vmem:[%s1372] ss:$2 sm:$0xff]
  %s1374 = scalar_lea.vmem [#allocation2], 881
  %v1375 = vld [vmem:[%s1374] ss:$2 sm:$0xff]
  %s1376 = scalar_lea.vmem [#allocation2], 897
  %v1377 = vld [vmem:[%s1376] ss:$2 sm:$0xff]
  %s1378 = scalar_lea.vmem [#allocation2], 921
  %v1379 = vld [vmem:[%s1378] ss:$2 sm:$0xff]
  %s1380 = scalar_lea.vmem [#allocation2], 937
  %v1381 = vld [vmem:[%s1380] ss:$2 sm:$0xff]
  %s1382 = scalar_lea.vmem [#allocation2], 961
  %v1383 = vld [vmem:[%s1382] ss:$2 sm:$0xff]
  %s1384 = scalar_lea.vmem [#allocation2], 977
  %v1385 = vld [vmem:[%s1384] ss:$2 sm:$0xff]
  %s1386 = scalar_lea.vmem [#allocation2], 1001
  %v1387 = vld [vmem:[%s1386] ss:$2 sm:$0xff]
  %s1388 = scalar_lea.vmem [#allocation2], 1017
  %v1389 = vld [vmem:[%s1388] ss:$2 sm:$0xff]
  %s1390 = scalar_lea.vmem [#allocation2], 1041
  %v1391 = vld [vmem:[%s1390] ss:$2 sm:$0xff]
  %s1392 = scalar_lea.vmem [#allocation2], 1057
  %v1393 = vld [vmem:[%s1392] ss:$2 sm:$0xff]
  %s1394 = scalar_lea.vmem [#allocation2], 1081
  %v1395 = vld [vmem:[%s1394] ss:$2 sm:$0xff]
  %s1396 = scalar_lea.vmem [#allocation2], 1097
  %v1397 = vld [vmem:[%s1396] ss:$2 sm:$0xff]
  %s1398 = scalar_lea.vmem [#allocation2], 1121
  %v1399 = vld [vmem:[%s1398] ss:$2 sm:$0xff]
  %s1400 = scalar_lea.vmem [#allocation2], 1137
  %v1401 = vld [vmem:[%s1400] ss:$2 sm:$0xff]
  %s1402 = scalar_lea.vmem [#allocation2], 1161
  %v1403 = vld [vmem:[%s1402] ss:$2 sm:$0xff]
  %s1404 = scalar_lea.vmem [#allocation2], 1177
  %v1405 = vld [vmem:[%s1404] ss:$2 sm:$0xff]
  %s1406 = scalar_lea.vmem [#allocation2], 1201
  %v1407 = vld [vmem:[%s1406] ss:$2 sm:$0xff]
  %s1408 = scalar_lea.vmem [#allocation2], 1217
  %v1409 = vld [vmem:[%s1408] ss:$2 sm:$0xff]
  %s1410 = scalar_lea.vmem [#allocation2], 1241
  %v1411 = vld [vmem:[%s1410] ss:$2 sm:$0xff]
  %s1412 = scalar_lea.vmem [#allocation2], 1257
  %v1413 = vld [vmem:[%s1412] ss:$2 sm:$0xff]
  %s1414 = scalar_lea.vmem [#allocation2], 1281
  %v1415 = vld [vmem:[%s1414] ss:$2 sm:$0xff]
  %s1416 = scalar_lea.vmem [#allocation2], 1297
  %v1417 = vld [vmem:[%s1416] ss:$2 sm:$0xff]
  %s1418 = scalar_lea.vmem [#allocation2], 1361
  %v1419 = vld [vmem:[%s1418] ss:$2 sm:$0xff]
  %s1420 = scalar_lea.vmem [#allocation2], 1377
  %v1421 = vld [vmem:[%s1420] ss:$2 sm:$0xff]
  %s1422 = scalar_lea.vmem [#allocation2], 1401
  %v1423 = vld [vmem:[%s1422] ss:$2 sm:$0xff]
  %s1424 = scalar_lea.vmem [#allocation2], 1417
  %v1425 = vld [vmem:[%s1424] ss:$2 sm:$0xff]
  %s1426 = scalar_lea.vmem [#allocation2], 1441
  %v1427 = vld [vmem:[%s1426] ss:$2 sm:$0xff]
  %s1428 = scalar_lea.vmem [#allocation2], 1457
  %v1429 = vld [vmem:[%s1428] ss:$2 sm:$0xff]
  %s1430 = scalar_lea.vmem [#allocation2], 1481
  %v1431 = vld [vmem:[%s1430] ss:$2 sm:$0xff]
  %s1432 = scalar_lea.vmem [#allocation2], 1497
  %v1433 = vld [vmem:[%s1432] ss:$2 sm:$0xff]
  %s1434 = scalar_lea.vmem [#allocation2], 1521
  %v1435 = vld [vmem:[%s1434] ss:$2 sm:$0xff]
  %s1436 = scalar_lea.vmem [#allocation2], 1537
  %v1437 = vld [vmem:[%s1436] ss:$2 sm:$0xff]
  %s1438 = scalar_lea.vmem [#allocation2], 1561
  %v1439 = vld [vmem:[%s1438] ss:$2 sm:$0xff]
  %s1440 = scalar_lea.vmem [#allocation2], 1577
  %v1441 = vld [vmem:[%s1440] ss:$2 sm:$0xff]
  %s1442 = scalar_lea.vmem [#allocation2], 1601
  %v1443 = vld [vmem:[%s1442] ss:$2 sm:$0xff]
  %s1444 = scalar_lea.vmem [#allocation2], 1617
  %v1445 = vld [vmem:[%s1444] ss:$2 sm:$0xff]
  %s1446 = scalar_lea.vmem [#allocation2], 1641
  %v1447 = vld [vmem:[%s1446] ss:$2 sm:$0xff]
  %s1448 = scalar_lea.vmem [#allocation2], 1657
  %v1449 = vld [vmem:[%s1448] ss:$2 sm:$0xff]
  %s1450 = scalar_lea.vmem [#allocation2], 1681
  %v1451 = vld [vmem:[%s1450] ss:$2 sm:$0xff]
  %s1452 = scalar_lea.vmem [#allocation2], 1697
  %v1453 = vld [vmem:[%s1452] ss:$2 sm:$0xff]
  %s1454 = scalar_lea.vmem [#allocation2], 1721
  %v1455 = vld [vmem:[%s1454] ss:$2 sm:$0xff]
  %s1456 = scalar_lea.vmem [#allocation2], 1737
  %v1457 = vld [vmem:[%s1456] ss:$2 sm:$0xff]
  %s1458 = scalar_lea.vmem [#allocation2], 1761
  %v1459 = vld [vmem:[%s1458] ss:$2 sm:$0xff]
  %s1460 = scalar_lea.vmem [#allocation2], 1777
  %v1461 = vld [vmem:[%s1460] ss:$2 sm:$0xff]
  %s1462 = scalar_lea.vmem [#allocation2], 1801
  %v1463 = vld [vmem:[%s1462] ss:$2 sm:$0xff]
  %s1464 = scalar_lea.vmem [#allocation2], 1817
  %v1465 = vld [vmem:[%s1464] ss:$2 sm:$0xff]
  %s1466 = scalar_lea.vmem [#allocation2], 1841
  %v1467 = vld [vmem:[%s1466] ss:$2 sm:$0xff]
  %s1468 = scalar_lea.vmem [#allocation2], 1857
  %v1469 = vld [vmem:[%s1468] ss:$2 sm:$0xff]
  %s1470 = scalar_lea.vmem [#allocation2], 1881
  %v1471 = vld [vmem:[%s1470] ss:$2 sm:$0xff]
  %s1472 = scalar_lea.vmem [#allocation2], 1897
  %v1473 = vld [vmem:[%s1472] ss:$2 sm:$0xff]
  %s1474 = scalar_lea.vmem [#allocation2], 1921
  %v1475 = vld [vmem:[%s1474] ss:$2 sm:$0xff]
  %s1476 = scalar_lea.vmem [#allocation2], 1937
  %v1477 = vld [vmem:[%s1476] ss:$2 sm:$0xff]
  %s1478 = scalar_lea.vmem [#allocation2], 1961
  %v1479 = vld [vmem:[%s1478] ss:$2 sm:$0xff]
  %s1480 = scalar_lea.vmem [#allocation2], 1977
  %v1481 = vld [vmem:[%s1480] ss:$2 sm:$0xff]
  %s1482 = scalar_lea.vmem [#allocation2], 2001
  %v1483 = vld [vmem:[%s1482] ss:$2 sm:$0xff]
  %s1484 = scalar_lea.vmem [#allocation2], 2017
  %v1485 = vld [vmem:[%s1484] ss:$2 sm:$0xff]
  %s1486 = scalar_lea.vmem [#allocation2], 2041
  %v1487 = vld [vmem:[%s1486] ss:$2 sm:$0xff]
  %s1488 = scalar_lea.vmem [#allocation2], 2057
  %v1489 = vld [vmem:[%s1488] ss:$2 sm:$0xff]
  %s1490 = scalar_lea.vmem [#allocation2], 2081
  %v1491 = vld [vmem:[%s1490] ss:$2 sm:$0xff]
  %s1492 = scalar_lea.vmem [#allocation2], 2097
  %v1493 = vld [vmem:[%s1492] ss:$2 sm:$0xff]
  %s1494 = scalar_lea.vmem [#allocation2], 2121
  %v1495 = vld [vmem:[%s1494] ss:$2 sm:$0xff]
  %s1496 = scalar_lea.vmem [#allocation2], 2137
  %v1497 = vld [vmem:[%s1496] ss:$2 sm:$0xff]
  %s1498 = scalar_lea.vmem [#allocation2], 2161
  %v1499 = vld [vmem:[%s1498] ss:$2 sm:$0xff]
  %s1500 = scalar_lea.vmem [#allocation2], 2177
  %v1501 = vld [vmem:[%s1500] ss:$2 sm:$0xff]
  %s1502 = scalar_lea.vmem [#allocation2], 2201
  %v1503 = vld [vmem:[%s1502] ss:$2 sm:$0xff]
  %s1504 = scalar_lea.vmem [#allocation2], 2217
  %v1505 = vld [vmem:[%s1504] ss:$2 sm:$0xff]
  %s1506 = scalar_lea.vmem [#allocation2], 2241
  %v1507 = vld [vmem:[%s1506] ss:$2 sm:$0xff]
  %s1508 = scalar_lea.vmem [#allocation2], 2257
  %v1509 = vld [vmem:[%s1508] ss:$2 sm:$0xff]
  %s1510 = scalar_lea.vmem [#allocation2], 2281
  %v1511 = vld [vmem:[%s1510] ss:$2 sm:$0xff]
  %s1512 = scalar_lea.vmem [#allocation2], 2297
  %v1513 = vld [vmem:[%s1512] ss:$2 sm:$0xff]
  %s1514 = scalar_lea.vmem [#allocation2], 2321
  %v1515 = vld [vmem:[%s1514] ss:$2 sm:$0xff]
  %s1516 = scalar_lea.vmem [#allocation2], 2337
  %v1517 = vld [vmem:[%s1516] ss:$2 sm:$0xff]
  %s1518 = scalar_lea.vmem [#allocation2], 2361
  %v1519 = vld [vmem:[%s1518] ss:$2 sm:$0xff]
  %s1520 = scalar_lea.vmem [#allocation2], 2377
  %v1521 = vld [vmem:[%s1520] ss:$2 sm:$0xff]
  %s1522 = scalar_lea.vmem [#allocation2], 2401
  %v1523 = vld [vmem:[%s1522] ss:$2 sm:$0xff]
  %s1524 = scalar_lea.vmem [#allocation2], 2417
  %v1525 = vld [vmem:[%s1524] ss:$2 sm:$0xff]
  %s1526 = scalar_lea.vmem [#allocation2], 2441
  %v1527 = vld [vmem:[%s1526] ss:$2 sm:$0xff]
  %s1528 = scalar_lea.vmem [#allocation2], 2457
  %v1529 = vld [vmem:[%s1528] ss:$2 sm:$0xff]
  %s1530 = scalar_lea.vmem [#allocation2], 2481
  %v1531 = vld [vmem:[%s1530] ss:$2 sm:$0xff]
  %s1532 = scalar_lea.vmem [#allocation2], 2497
  %v1533 = vld [vmem:[%s1532] ss:$2 sm:$0xff]
  %s1534 = scalar_lea.vmem [#allocation2], 2521
  %v1535 = vld [vmem:[%s1534] ss:$2 sm:$0xff]
  %s1536 = scalar_lea.vmem [#allocation2], 2537
  %v1537 = vld [vmem:[%s1536] ss:$2 sm:$0xff]
  %s1538 = scalar_lea.vmem [#allocation2], 2561
  %v1539 = vld [vmem:[%s1538] ss:$2 sm:$0xff]
  %s1540 = scalar_lea.vmem [#allocation2], 2577
  %v1541 = vld [vmem:[%s1540] ss:$2 sm:$0xff]
  %s1542 = scalar_lea.vmem [#allocation2], 2601
  %v1543 = vld [vmem:[%s1542] ss:$2 sm:$0xff]
  %s1544 = scalar_lea.vmem [#allocation2], 2617
  %v1545 = vld [vmem:[%s1544] ss:$2 sm:$0xff]
  %s1546 = scalar_lea.vmem [#allocation2], 2641
  %v1547 = vld [vmem:[%s1546] ss:$2 sm:$0xff]
  %s1548 = scalar_lea.vmem [#allocation2], 2657
  %v1549 = vld [vmem:[%s1548] ss:$2 sm:$0xff]
  %v1550 = vld [vmem:[%s1] sm:$0xff]
  %v1551 = vld [vmem:[%s1 + $0x8] sm:$0xff]
  %v1552 = vld [vmem:[%s1 + $0x10] sm:$0xff]
  %v1553 = vld [vmem:[%s1 + $0x18] sm:$0xff]
  %v1554 = vld [vmem:[%s1 + $0x20] sm:$0xff]
  %v1555 = vld [vmem:[%s1 + $0x28] sm:$0xff]
  %v1556 = vld [vmem:[%s1 + $0x30] sm:$0xff]
  %v1557 = vld [vmem:[%s1 + $0x38] sm:$0xff]
  %v1558 = vld [vmem:[%s1 + $0x40] sm:$0xff]
  %v1559 = vld [vmem:[%s1 + $0x48] sm:$0xff]
  %v1560 = vld [vmem:[%s1 + $0x50] sm:$0xff]
  %v1561 = vld [vmem:[%s1 + $0x58] sm:$0xff]
  %v1562 = vld [vmem:[%s1 + $0x60] sm:$0xff]
  %v1563 = vld [vmem:[%s1 + $0x68] sm:$0xff]
  %v1564 = vld [vmem:[%s1 + $0x70] sm:$0xff]
  %v1565 = vld [vmem:[%s1 + $0x78] sm:$0xff]
  %s1566 = scalar_lea.vmem %s1, 128
  %v1567 = vld [vmem:[%s1566] sm:$0xff]
  %v1568 = vld [vmem:[%s1566 + $0x8] sm:$0xff]
  %v1569 = vld [vmem:[%s1566 + $0x10] sm:$0xff]
  %v1570 = vld [vmem:[%s1566 + $0x18] sm:$0xff]
  %v1571 = vld [vmem:[%s1566 + $0x20] sm:$0xff]
  %v1572 = vld [vmem:[%s1566 + $0x28] sm:$0xff]
  %v1573 = vld [vmem:[%s1566 + $0x30] sm:$0xff]
  %v1574 = vld [vmem:[%s1566 + $0x38] sm:$0xff]
  %v1575 = vld [vmem:[%s1566 + $0x40] sm:$0xff]
  %v1576 = vld [vmem:[%s1566 + $0x48] sm:$0xff]
  %v1577 = vld [vmem:[%s1566 + $0x50] sm:$0xff]
  %v1578 = vld [vmem:[%s1566 + $0x58] sm:$0xff]
  %v1579 = vld [vmem:[%s1566 + $0x60] sm:$0xff]
  %v1580 = vld [vmem:[%s1566 + $0x68] sm:$0xff]
  %v1581 = vld [vmem:[%s1566 + $0x70] sm:$0xff]
  %v1582 = vld [vmem:[%s1566 + $0x78] sm:$0xff]
  %1583 = vmatpush.msra.mxu0 %v1582
  %1584 = vmatpush.msra.mxu0 %v1581
  %1585 = vmatpush.msra.mxu0 %v1580
  %1586 = vmatpush.msra.mxu0 %v1579
  %1587 = vmatpush.msra.mxu0 %v1578
  %1588 = vmatpush.msra.mxu0 %v1577
  %1589 = vmatpush.msra.mxu0 %v1576
  %1590 = vmatpush.msra.mxu0 %v1575
  %1591 = vmatpush.msra.mxu0 %v1574
  %1592 = vmatpush.msra.mxu0 %v1573
  %1593 = vmatpush.msra.mxu0 %v1572
  %1594 = vmatpush.msra.mxu0 %v1571
  %1595 = vmatpush.msra.mxu0 %v1570
  %1596 = vmatpush.msra.mxu0 %v1569
  %1597 = vmatpush.msra.mxu0 %v1568
  %1598 = vmatpush.msra.mxu0 %v1567
  %1599 = vmatmul.f32.gmra.mxu0 %v1287
  %v1600 = vpop.f32.mrf.mxu0
  %v1601 = vadd.f32 0.0, %v1600
  %1602 = vmatmul.f32.gmra.mxu0 %v1289
  %v1603 = vpop.f32.mrf.mxu0
  %v1604 = vadd.f32 0.0, %v1603
  %1605 = vmatmul.f32.gmra.mxu0 %v1295
  %v1606 = vpop.f32.mrf.mxu0
  %v1607 = vadd.f32 0.0, %v1606
  %1608 = vmatmul.f32.gmra.mxu0 %v1297
  %v1609 = vpop.f32.mrf.mxu0
  %v1610 = vadd.f32 0.0, %v1609
  %1611 = vmatmul.f32.gmra.mxu0 %v1303
  %v1612 = vpop.f32.mrf.mxu0
  %v1613 = vadd.f32 0.0, %v1612
  %1614 = vmatmul.f32.gmra.mxu0 %v1305
  %v1615 = vpop.f32.mrf.mxu0
  %v1616 = vadd.f32 0.0, %v1615
  %1617 = vmatmul.f32.gmra.mxu0 %v1311
  %v1618 = vpop.f32.mrf.mxu0
  %v1619 = vadd.f32 0.0, %v1618
  %1620 = vmatmul.f32.gmra.mxu0 %v1313
  %v1621 = vpop.f32.mrf.mxu0
  %v1622 = vadd.f32 0.0, %v1621
  %1623 = vmatmul.f32.gmra.mxu0 %v1319
  %v1624 = vpop.f32.mrf.mxu0
  %v1625 = vadd.f32 0.0, %v1624
  %1626 = vmatmul.f32.gmra.mxu0 %v1321
  %v1627 = vpop.f32.mrf.mxu0
  %v1628 = vadd.f32 0.0, %v1627
  %1629 = vmatmul.f32.gmra.mxu0 %v1327
  %v1630 = vpop.f32.mrf.mxu0
  %v1631 = vadd.f32 0.0, %v1630
  %1632 = vmatmul.f32.gmra.mxu0 %v1329
  %v1633 = vpop.f32.mrf.mxu0
  %v1634 = vadd.f32 0.0, %v1633
  %1635 = vmatmul.f32.gmra.mxu0 %v1335
  %v1636 = vpop.f32.mrf.mxu0
  %v1637 = vadd.f32 0.0, %v1636
  %1638 = vmatmul.f32.gmra.mxu0 %v1337
  %v1639 = vpop.f32.mrf.mxu0
  %v1640 = vadd.f32 0.0, %v1639
  %1641 = vmatmul.f32.gmra.mxu0 %v1343
  %v1642 = vpop.f32.mrf.mxu0
  %v1643 = vadd.f32 0.0, %v1642
  %1644 = vmatmul.f32.gmra.mxu0 %v1345
  %v1645 = vpop.f32.mrf.mxu0
  %v1646 = vadd.f32 0.0, %v1645
  %1647 = vmatmul.f32.gmra.mxu0 %v1351
  %v1648 = vpop.f32.mrf.mxu0
  %v1649 = vadd.f32 0.0, %v1648
  %1650 = vmatmul.f32.gmra.mxu0 %v1353
  %v1651 = vpop.f32.mrf.mxu0
  %v1652 = vadd.f32 0.0, %v1651
  %1653 = vmatmul.f32.gmra.mxu0 %v1359
  %v1654 = vpop.f32.mrf.mxu0
  %v1655 = vadd.f32 0.0, %v1654
  %1656 = vmatmul.f32.gmra.mxu0 %v1361
  %v1657 = vpop.f32.mrf.mxu0
  %v1658 = vadd.f32 0.0, %v1657
  %1659 = vmatmul.f32.gmra.mxu0 %v1367
  %v1660 = vpop.f32.mrf.mxu0
  %v1661 = vadd.f32 0.0, %v1660
  %1662 = vmatmul.f32.gmra.mxu0 %v1369
  %v1663 = vpop.f32.mrf.mxu0
  %v1664 = vadd.f32 0.0, %v1663
  %1665 = vmatmul.f32.gmra.mxu0 %v1375
  %v1666 = vpop.f32.mrf.mxu0
  %v1667 = vadd.f32 0.0, %v1666
  %1668 = vmatmul.f32.gmra.mxu0 %v1377
  %v1669 = vpop.f32.mrf.mxu0
  %v1670 = vadd.f32 0.0, %v1669
  %1671 = vmatmul.f32.gmra.mxu0 %v1383
  %v1672 = vpop.f32.mrf.mxu0
  %v1673 = vadd.f32 0.0, %v1672
  %1674 = vmatmul.f32.gmra.mxu0 %v1385
  %v1675 = vpop.f32.mrf.mxu0
  %v1676 = vadd.f32 0.0, %v1675
  %1677 = vmatmul.f32.gmra.mxu0 %v1391
  %v1678 = vpop.f32.mrf.mxu0
  %v1679 = vadd.f32 0.0, %v1678
  %1680 = vmatmul.f32.gmra.mxu0 %v1393
  %v1681 = vpop.f32.mrf.mxu0
  %v1682 = vadd.f32 0.0, %v1681
  %1683 = vmatmul.f32.gmra.mxu0 %v1399
  %v1684 = vpop.f32.mrf.mxu0
  %v1685 = vadd.f32 0.0, %v1684
  %1686 = vmatmul.f32.gmra.mxu0 %v1401
  %v1687 = vpop.f32.mrf.mxu0
  %v1688 = vadd.f32 0.0, %v1687
  %1689 = vmatmul.f32.gmra.mxu0 %v1407
  %v1690 = vpop.f32.mrf.mxu0
  %v1691 = vadd.f32 0.0, %v1690
  %1692 = vmatmul.f32.gmra.mxu0 %v1409
  %v1693 = vpop.f32.mrf.mxu0
  %v1694 = vadd.f32 0.0, %v1693
  %1695 = vmatmul.f32.gmra.mxu0 %v1419
  %v1696 = vpop.f32.mrf.mxu0
  %v1697 = vadd.f32 0.0, %v1696
  %1698 = vmatmul.f32.gmra.mxu0 %v1421
  %v1699 = vpop.f32.mrf.mxu0
  %v1700 = vadd.f32 0.0, %v1699
  %1701 = vmatmul.f32.gmra.mxu0 %v1427
  %v1702 = vpop.f32.mrf.mxu0
  %v1703 = vadd.f32 0.0, %v1702
  %1704 = vmatmul.f32.gmra.mxu0 %v1429
  %v1705 = vpop.f32.mrf.mxu0
  %v1706 = vadd.f32 0.0, %v1705
  %1707 = vmatmul.f32.gmra.mxu0 %v1435
  %v1708 = vpop.f32.mrf.mxu0
  %v1709 = vadd.f32 0.0, %v1708
  %1710 = vmatmul.f32.gmra.mxu0 %v1437
  %v1711 = vpop.f32.mrf.mxu0
  %v1712 = vadd.f32 0.0, %v1711
  %1713 = vmatmul.f32.gmra.mxu0 %v1443
  %v1714 = vpop.f32.mrf.mxu0
  %v1715 = vadd.f32 0.0, %v1714
  %1716 = vmatmul.f32.gmra.mxu0 %v1445
  %v1717 = vpop.f32.mrf.mxu0
  %v1718 = vadd.f32 0.0, %v1717
  %1719 = vmatmul.f32.gmra.mxu0 %v1451
  %v1720 = vpop.f32.mrf.mxu0
  %v1721 = vadd.f32 0.0, %v1720
  %1722 = vmatmul.f32.gmra.mxu0 %v1453
  %v1723 = vpop.f32.mrf.mxu0
  %v1724 = vadd.f32 0.0, %v1723
  %1725 = vmatmul.f32.gmra.mxu0 %v1459
  %v1726 = vpop.f32.mrf.mxu0
  %v1727 = vadd.f32 0.0, %v1726
  %1728 = vmatmul.f32.gmra.mxu0 %v1461
  %v1729 = vpop.f32.mrf.mxu0
  %v1730 = vadd.f32 0.0, %v1729
  %1731 = vmatmul.f32.gmra.mxu0 %v1467
  %v1732 = vpop.f32.mrf.mxu0
  %v1733 = vadd.f32 0.0, %v1732
  %1734 = vmatmul.f32.gmra.mxu0 %v1469
  %v1735 = vpop.f32.mrf.mxu0
  %v1736 = vadd.f32 0.0, %v1735
  %1737 = vmatmul.f32.gmra.mxu0 %v1475
  %v1738 = vpop.f32.mrf.mxu0
  %v1739 = vadd.f32 0.0, %v1738
  %1740 = vmatmul.f32.gmra.mxu0 %v1477
  %v1741 = vpop.f32.mrf.mxu0
  %v1742 = vadd.f32 0.0, %v1741
  %1743 = vmatmul.f32.gmra.mxu0 %v1483
  %v1744 = vpop.f32.mrf.mxu0
  %v1745 = vadd.f32 0.0, %v1744
  %1746 = vmatmul.f32.gmra.mxu0 %v1485
  %v1747 = vpop.f32.mrf.mxu0
  %v1748 = vadd.f32 0.0, %v1747
  %1749 = vmatmul.f32.gmra.mxu0 %v1491
  %v1750 = vpop.f32.mrf.mxu0
  %v1751 = vadd.f32 0.0, %v1750
  %1752 = vmatmul.f32.gmra.mxu0 %v1493
  %v1753 = vpop.f32.mrf.mxu0
  %v1754 = vadd.f32 0.0, %v1753
  %1755 = vmatmul.f32.gmra.mxu0 %v1499
  %v1756 = vpop.f32.mrf.mxu0
  %v1757 = vadd.f32 0.0, %v1756
  %1758 = vmatmul.f32.gmra.mxu0 %v1501
  %v1759 = vpop.f32.mrf.mxu0
  %v1760 = vadd.f32 0.0, %v1759
  %1761 = vmatmul.f32.gmra.mxu0 %v1507
  %v1762 = vpop.f32.mrf.mxu0
  %v1763 = vadd.f32 0.0, %v1762
  %1764 = vmatmul.f32.gmra.mxu0 %v1509
  %v1765 = vpop.f32.mrf.mxu0
  %v1766 = vadd.f32 0.0, %v1765
  %1767 = vmatmul.f32.gmra.mxu0 %v1515
  %v1768 = vpop.f32.mrf.mxu0
  %v1769 = vadd.f32 0.0, %v1768
  %1770 = vmatmul.f32.gmra.mxu0 %v1517
  %v1771 = vpop.f32.mrf.mxu0
  %v1772 = vadd.f32 0.0, %v1771
  %1773 = vmatmul.f32.gmra.mxu0 %v1523
  %v1774 = vpop.f32.mrf.mxu0
  %v1775 = vadd.f32 0.0, %v1774
  %1776 = vmatmul.f32.gmra.mxu0 %v1525
  %v1777 = vpop.f32.mrf.mxu0
  %v1778 = vadd.f32 0.0, %v1777
  %1779 = vmatmul.f32.gmra.mxu0 %v1531
  %v1780 = vpop.f32.mrf.mxu0
  %v1781 = vadd.f32 0.0, %v1780
  %1782 = vmatmul.f32.gmra.mxu0 %v1533
  %v1783 = vpop.f32.mrf.mxu0
  %v1784 = vadd.f32 0.0, %v1783
  %1785 = vmatmul.f32.gmra.mxu0 %v1539
  %v1786 = vpop.f32.mrf.mxu0
  %v1787 = vadd.f32 0.0, %v1786
  %1788 = vmatmul.f32.gmra.mxu0 %v1541
  %v1789 = vpop.f32.mrf.mxu0
  %v1790 = vadd.f32 0.0, %v1789
  %1791 = vdwg.mxu0
  %1792 = vmatpush.msra.mxu0 %v1565
  %1793 = vmatpush.msra.mxu0 %v1564
  %1794 = vmatpush.msra.mxu0 %v1563
  %1795 = vmatpush.msra.mxu0 %v1562
  %1796 = vmatpush.msra.mxu0 %v1561
  %1797 = vmatpush.msra.mxu0 %v1560
  %1798 = vmatpush.msra.mxu0 %v1559
  %1799 = vmatpush.msra.mxu0 %v1558
  %1800 = vmatpush.msra.mxu0 %v1557
  %1801 = vmatpush.msra.mxu0 %v1556
  %1802 = vmatpush.msra.mxu0 %v1555
  %1803 = vmatpush.msra.mxu0 %v1554
  %1804 = vmatpush.msra.mxu0 %v1553
  %1805 = vmatpush.msra.mxu0 %v1552
  %1806 = vmatpush.msra.mxu0 %v1551
  %1807 = vmatpush.msra.mxu0 %v1550
  %1808 = vmatmul.f32.gmra.mxu0 %v891
  %v1809 = vpop.f32.mrf.mxu0
  %v1810 = vadd.f32 %v1601, %v1809
  %1811 = vmatmul.f32.gmra.mxu0 %v893
  %v1812 = vpop.f32.mrf.mxu0
  %v1813 = vadd.f32 %v1604, %v1812
  %1814 = vmatmul.f32.gmra.mxu0 %v903
  %v1815 = vpop.f32.mrf.mxu0
  %v1816 = vadd.f32 %v1607, %v1815
  %1817 = vmatmul.f32.gmra.mxu0 %v905
  %v1818 = vpop.f32.mrf.mxu0
  %v1819 = vadd.f32 %v1610, %v1818
  %1820 = vmatmul.f32.gmra.mxu0 %v915
  %v1821 = vpop.f32.mrf.mxu0
  %v1822 = vadd.f32 %v1613, %v1821
  %1823 = vmatmul.f32.gmra.mxu0 %v917
  %v1824 = vpop.f32.mrf.mxu0
  %v1825 = vadd.f32 %v1616, %v1824
  %1826 = vmatmul.f32.gmra.mxu0 %v927
  %v1827 = vpop.f32.mrf.mxu0
  %v1828 = vadd.f32 %v1619, %v1827
  %1829 = vmatmul.f32.gmra.mxu0 %v929
  %v1830 = vpop.f32.mrf.mxu0
  %v1831 = vadd.f32 %v1622, %v1830
  %1832 = vmatmul.f32.gmra.mxu0 %v939
  %v1833 = vpop.f32.mrf.mxu0
  %v1834 = vadd.f32 %v1625, %v1833
  %1835 = vmatmul.f32.gmra.mxu0 %v941
  %v1836 = vpop.f32.mrf.mxu0
  %v1837 = vadd.f32 %v1628, %v1836
  %1838 = vmatmul.f32.gmra.mxu0 %v951
  %v1839 = vpop.f32.mrf.mxu0
  %v1840 = vadd.f32 %v1631, %v1839
  %1841 = vmatmul.f32.gmra.mxu0 %v953
  %v1842 = vpop.f32.mrf.mxu0
  %v1843 = vadd.f32 %v1634, %v1842
  %1844 = vmatmul.f32.gmra.mxu0 %v963
  %v1845 = vpop.f32.mrf.mxu0
  %v1846 = vadd.f32 %v1637, %v1845
  %1847 = vmatmul.f32.gmra.mxu0 %v965
  %v1848 = vpop.f32.mrf.mxu0
  %v1849 = vadd.f32 %v1640, %v1848
  %1850 = vmatmul.f32.gmra.mxu0 %v975
  %v1851 = vpop.f32.mrf.mxu0
  %v1852 = vadd.f32 %v1643, %v1851
  %1853 = vmatmul.f32.gmra.mxu0 %v977
  %v1854 = vpop.f32.mrf.mxu0
  %v1855 = vadd.f32 %v1646, %v1854
  %1856 = vmatmul.f32.gmra.mxu0 %v987
  %v1857 = vpop.f32.mrf.mxu0
  %v1858 = vadd.f32 %v1649, %v1857
  %1859 = vmatmul.f32.gmra.mxu0 %v989
  %v1860 = vpop.f32.mrf.mxu0
  %v1861 = vadd.f32 %v1652, %v1860
  %1862 = vmatmul.f32.gmra.mxu0 %v999
  %v1863 = vpop.f32.mrf.mxu0
  %v1864 = vadd.f32 %v1655, %v1863
  %1865 = vmatmul.f32.gmra.mxu0 %v1001
  %v1866 = vpop.f32.mrf.mxu0
  %v1867 = vadd.f32 %v1658, %v1866
  %1868 = vmatmul.f32.gmra.mxu0 %v1011
  %v1869 = vpop.f32.mrf.mxu0
  %v1870 = vadd.f32 %v1661, %v1869
  %1871 = vmatmul.f32.gmra.mxu0 %v1013
  %v1872 = vpop.f32.mrf.mxu0
  %v1873 = vadd.f32 %v1664, %v1872
  %1874 = vmatmul.f32.gmra.mxu0 %v1023
  %v1875 = vpop.f32.mrf.mxu0
  %v1876 = vadd.f32 %v1667, %v1875
  %1877 = vmatmul.f32.gmra.mxu0 %v1025
  %v1878 = vpop.f32.mrf.mxu0
  %v1879 = vadd.f32 %v1670, %v1878
  %1880 = vmatmul.f32.gmra.mxu0 %v1035
  %v1881 = vpop.f32.mrf.mxu0
  %v1882 = vadd.f32 %v1673, %v1881
  %1883 = vmatmul.f32.gmra.mxu0 %v1037
  %v1884 = vpop.f32.mrf.mxu0
  %v1885 = vadd.f32 %v1676, %v1884
  %1886 = vmatmul.f32.gmra.mxu0 %v1047
  %v1887 = vpop.f32.mrf.mxu0
  %v1888 = vadd.f32 %v1679, %v1887
  %1889 = vmatmul.f32.gmra.mxu0 %v1049
  %v1890 = vpop.f32.mrf.mxu0
  %v1891 = vadd.f32 %v1682, %v1890
  %1892 = vmatmul.f32.gmra.mxu0 %v1059
  %v1893 = vpop.f32.mrf.mxu0
  %v1894 = vadd.f32 %v1685, %v1893
  %1895 = vmatmul.f32.gmra.mxu0 %v1061
  %v1896 = vpop.f32.mrf.mxu0
  %v1897 = vadd.f32 %v1688, %v1896
  %1898 = vmatmul.f32.gmra.mxu0 %v1071
  %v1899 = vpop.f32.mrf.mxu0
  %v1900 = vadd.f32 %v1691, %v1899
  %1901 = vmatmul.f32.gmra.mxu0 %v1073
  %v1902 = vpop.f32.mrf.mxu0
  %v1903 = vadd.f32 %v1694, %v1902
  %1904 = vmatmul.f32.gmra.mxu0 %v1089
  %v1905 = vpop.f32.mrf.mxu0
  %v1906 = vadd.f32 %v1697, %v1905
  %1907 = vmatmul.f32.gmra.mxu0 %v1091
  %v1908 = vpop.f32.mrf.mxu0
  %v1909 = vadd.f32 %v1700, %v1908
  %1910 = vmatmul.f32.gmra.mxu0 %v1101
  %v1911 = vpop.f32.mrf.mxu0
  %v1912 = vadd.f32 %v1703, %v1911
  %1913 = vmatmul.f32.gmra.mxu0 %v1103
  %v1914 = vpop.f32.mrf.mxu0
  %v1915 = vadd.f32 %v1706, %v1914
  %1916 = vmatmul.f32.gmra.mxu0 %v1113
  %v1917 = vpop.f32.mrf.mxu0
  %v1918 = vadd.f32 %v1709, %v1917
  %1919 = vmatmul.f32.gmra.mxu0 %v1115
  %v1920 = vpop.f32.mrf.mxu0
  %v1921 = vadd.f32 %v1712, %v1920
  %1922 = vmatmul.f32.gmra.mxu0 %v1125
  %v1923 = vpop.f32.mrf.mxu0
  %v1924 = vadd.f32 %v1715, %v1923
  %1925 = vmatmul.f32.gmra.mxu0 %v1127
  %v1926 = vpop.f32.mrf.mxu0
  %v1927 = vadd.f32 %v1718, %v1926
  %1928 = vmatmul.f32.gmra.mxu0 %v1137
  %v1929 = vpop.f32.mrf.mxu0
  %v1930 = vadd.f32 %v1721, %v1929
  %1931 = vmatmul.f32.gmra.mxu0 %v1139
  %v1932 = vpop.f32.mrf.mxu0
  %v1933 = vadd.f32 %v1724, %v1932
  %1934 = vmatmul.f32.gmra.mxu0 %v1149
  %v1935 = vpop.f32.mrf.mxu0
  %v1936 = vadd.f32 %v1727, %v1935
  %1937 = vmatmul.f32.gmra.mxu0 %v1151
  %v1938 = vpop.f32.mrf.mxu0
  %v1939 = vadd.f32 %v1730, %v1938
  %1940 = vmatmul.f32.gmra.mxu0 %v1161
  %v1941 = vpop.f32.mrf.mxu0
  %v1942 = vadd.f32 %v1733, %v1941
  %1943 = vmatmul.f32.gmra.mxu0 %v1163
  %v1944 = vpop.f32.mrf.mxu0
  %v1945 = vadd.f32 %v1736, %v1944
  %1946 = vmatmul.f32.gmra.mxu0 %v1173
  %v1947 = vpop.f32.mrf.mxu0
  %v1948 = vadd.f32 %v1739, %v1947
  %1949 = vmatmul.f32.gmra.mxu0 %v1175
  %v1950 = vpop.f32.mrf.mxu0
  %v1951 = vadd.f32 %v1742, %v1950
  %1952 = vmatmul.f32.gmra.mxu0 %v1185
  %v1953 = vpop.f32.mrf.mxu0
  %v1954 = vadd.f32 %v1745, %v1953
  %1955 = vmatmul.f32.gmra.mxu0 %v1187
  %v1956 = vpop.f32.mrf.mxu0
  %v1957 = vadd.f32 %v1748, %v1956
  %1958 = vmatmul.f32.gmra.mxu0 %v1197
  %v1959 = vpop.f32.mrf.mxu0
  %v1960 = vadd.f32 %v1751, %v1959
  %1961 = vmatmul.f32.gmra.mxu0 %v1199
  %v1962 = vpop.f32.mrf.mxu0
  %v1963 = vadd.f32 %v1754, %v1962
  %1964 = vmatmul.f32.gmra.mxu0 %v1209
  %v1965 = vpop.f32.mrf.mxu0
  %v1966 = vadd.f32 %v1757, %v1965
  %1967 = vmatmul.f32.gmra.mxu0 %v1211
  %v1968 = vpop.f32.mrf.mxu0
  %v1969 = vadd.f32 %v1760, %v1968
  %1970 = vmatmul.f32.gmra.mxu0 %v1221
  %v1971 = vpop.f32.mrf.mxu0
  %v1972 = vadd.f32 %v1763, %v1971
  %1973 = vmatmul.f32.gmra.mxu0 %v1223
  %v1974 = vpop.f32.mrf.mxu0
  %v1975 = vadd.f32 %v1766, %v1974
  %1976 = vmatmul.f32.gmra.mxu0 %v1233
  %v1977 = vpop.f32.mrf.mxu0
  %v1978 = vadd.f32 %v1769, %v1977
  %1979 = vmatmul.f32.gmra.mxu0 %v1235
  %v1980 = vpop.f32.mrf.mxu0
  %v1981 = vadd.f32 %v1772, %v1980
  %1982 = vmatmul.f32.gmra.mxu0 %v1245
  %v1983 = vpop.f32.mrf.mxu0
  %v1984 = vadd.f32 %v1775, %v1983
  %1985 = vmatmul.f32.gmra.mxu0 %v1247
  %v1986 = vpop.f32.mrf.mxu0
  %v1987 = vadd.f32 %v1778, %v1986
  %1988 = vmatmul.f32.gmra.mxu0 %v1257
  %v1989 = vpop.f32.mrf.mxu0
  %v1990 = vadd.f32 %v1781, %v1989
  %1991 = vmatmul.f32.gmra.mxu0 %v1259
  %v1992 = vpop.f32.mrf.mxu0
  %v1993 = vadd.f32 %v1784, %v1992
  %1994 = vmatmul.f32.gmra.mxu0 %v1269
  %v1995 = vpop.f32.mrf.mxu0
  %v1996 = vadd.f32 %v1787, %v1995
  %1997 = vmatmul.f32.gmra.mxu0 %v1271
  %v1998 = vpop.f32.mrf.mxu0
  %v1999 = vadd.f32 %v1790, %v1998
  %2000 = vdwg.mxu0
  %vm2097 = vcmask 1046528
  %v2098 = vrot.slane %v891, 1
  %v2099 = vrot.slane %v893, 1
  %v2100 = vsel %vm2097, %v2098, %v2099
  %v2101 = vrot.slane %v895, 1
  %v2102 = vsel %vm2097, %v2099, %v2101
  %v2103 = vrot.slane %v903, 1
  %v2104 = vrot.slane %v905, 1
  %v2105 = vsel %vm2097, %v2103, %v2104
  %v2106 = vrot.slane %v907, 1
  %v2107 = vsel %vm2097, %v2104, %v2106
  %v2108 = vrot.slane %v915, 1
  %v2109 = vrot.slane %v917, 1
  %v2110 = vsel %vm2097, %v2108, %v2109
  %v2111 = vrot.slane %v919, 1
  %v2112 = vsel %vm2097, %v2109, %v2111
  %v2113 = vrot.slane %v927, 1
  %v2114 = vrot.slane %v929, 1
  %v2115 = vsel %vm2097, %v2113, %v2114
  %v2116 = vrot.slane %v931, 1
  %v2117 = vsel %vm2097, %v2114, %v2116
  %v2118 = vrot.slane %v939, 1
  %v2119 = vrot.slane %v941, 1
  %v2120 = vsel %vm2097, %v2118, %v2119
  %v2121 = vrot.slane %v943, 1
  %v2122 = vsel %vm2097, %v2119, %v2121
  %v2123 = vrot.slane %v951, 1
  %v2124 = vrot.slane %v953, 1
  %v2125 = vsel %vm2097, %v2123, %v2124
  %v2126 = vrot.slane %v955, 1
  %v2127 = vsel %vm2097, %v2124, %v2126
  %v2128 = vrot.slane %v963, 1
  %v2129 = vrot.slane %v965, 1
  %v2130 = vsel %vm2097, %v2128, %v2129
  %v2131 = vrot.slane %v967, 1
  %v2132 = vsel %vm2097, %v2129, %v2131
  %v2133 = vrot.slane %v975, 1
  %v2134 = vrot.slane %v977, 1
  %v2135 = vsel %vm2097, %v2133, %v2134
  %v2136 = vrot.slane %v979, 1
  %v2137 = vsel %vm2097, %v2134, %v2136
  %v2138 = vrot.slane %v987, 1
  %v2139 = vrot.slane %v989, 1
  %v2140 = vsel %vm2097, %v2138, %v2139
  %v2141 = vrot.slane %v991, 1
  %v2142 = vsel %vm2097, %v2139, %v2141
  %v2143 = vrot.slane %v999, 1
  %v2144 = vrot.slane %v1001, 1
  %v2145 = vsel %vm2097, %v2143, %v2144
  %v2146 = vrot.slane %v1003, 1
  %v2147 = vsel %vm2097, %v2144, %v2146
  %v2148 = vrot.slane %v1011, 1
  %v2149 = vrot.slane %v1013, 1
  %v2150 = vsel %vm2097, %v2148, %v2149
  %v2151 = vrot.slane %v1015, 1
  %v2152 = vsel %vm2097, %v2149, %v2151
  %v2153 = vrot.slane %v1023, 1
  %v2154 = vrot.slane %v1025, 1
  %v2155 = vsel %vm2097, %v2153, %v2154
  %v2156 = vrot.slane %v1027, 1
  %v2157 = vsel %vm2097, %v2154, %v2156
  %v2158 = vrot.slane %v1035, 1
  %v2159 = vrot.slane %v1037, 1
  %v2160 = vsel %vm2097, %v2158, %v2159
  %v2161 = vrot.slane %v1039, 1
  %v2162 = vsel %vm2097, %v2159, %v2161
  %v2163 = vrot.slane %v1047, 1
  %v2164 = vrot.slane %v1049, 1
  %v2165 = vsel %vm2097, %v2163, %v2164
  %v2166 = vrot.slane %v1051, 1
  %v2167 = vsel %vm2097, %v2164, %v2166
  %v2168 = vrot.slane %v1059, 1
  %v2169 = vrot.slane %v1061, 1
  %v2170 = vsel %vm2097, %v2168, %v2169
  %v2171 = vrot.slane %v1063, 1
  %v2172 = vsel %vm2097, %v2169, %v2171
  %v2173 = vrot.slane %v1071, 1
  %v2174 = vrot.slane %v1073, 1
  %v2175 = vsel %vm2097, %v2173, %v2174
  %v2176 = vrot.slane %v1075, 1
  %v2177 = vsel %vm2097, %v2174, %v2176
  %v2178 = vrot.slane %v1089, 1
  %v2179 = vrot.slane %v1091, 1
  %v2180 = vsel %vm2097, %v2178, %v2179
  %v2181 = vrot.slane %v1093, 1
  %v2182 = vsel %vm2097, %v2179, %v2181
  %v2183 = vrot.slane %v1101, 1
  %v2184 = vrot.slane %v1103, 1
  %v2185 = vsel %vm2097, %v2183, %v2184
  %v2186 = vrot.slane %v1105, 1
  %v2187 = vsel %vm2097, %v2184, %v2186
  %v2188 = vrot.slane %v1113, 1
  %v2189 = vrot.slane %v1115, 1
  %v2190 = vsel %vm2097, %v2188, %v2189
  %v2191 = vrot.slane %v1117, 1
  %v2192 = vsel %vm2097, %v2189, %v2191
  %v2193 = vrot.slane %v1125, 1
  %v2194 = vrot.slane %v1127, 1
  %v2195 = vsel %vm2097, %v2193, %v2194
  %v2196 = vrot.slane %v1129, 1
  %v2197 = vsel %vm2097, %v2194, %v2196
  %v2198 = vrot.slane %v1137, 1
  %v2199 = vrot.slane %v1139, 1
  %v2200 = vsel %vm2097, %v2198, %v2199
  %v2201 = vrot.slane %v1141, 1
  %v2202 = vsel %vm2097, %v2199, %v2201
  %v2203 = vrot.slane %v1149, 1
  %v2204 = vrot.slane %v1151, 1
  %v2205 = vsel %vm2097, %v2203, %v2204
  %v2206 = vrot.slane %v1153, 1
  %v2207 = vsel %vm2097, %v2204, %v2206
  %v2208 = vrot.slane %v1161, 1
  %v2209 = vrot.slane %v1163, 1
  %v2210 = vsel %vm2097, %v2208, %v2209
  %v2211 = vrot.slane %v1165, 1
  %v2212 = vsel %vm2097, %v2209, %v2211
  %v2213 = vrot.slane %v1173, 1
  %v2214 = vrot.slane %v1175, 1
  %v2215 = vsel %vm2097, %v2213, %v2214
  %v2216 = vrot.slane %v1177, 1
  %v2217 = vsel %vm2097, %v2214, %v2216
  %v2218 = vrot.slane %v1185, 1
  %v2219 = vrot.slane %v1187, 1
  %v2220 = vsel %vm2097, %v2218, %v2219
  %v2221 = vrot.slane %v1189, 1
  %v2222 = vsel %vm2097, %v2219, %v2221
  %v2223 = vrot.slane %v1197, 1
  %v2224 = vrot.slane %v1199, 1
  %v2225 = vsel %vm2097, %v2223, %v2224
  %v2226 = vrot.slane %v1201, 1
  %v2227 = vsel %vm2097, %v2224, %v2226
  %v2228 = vrot.slane %v1209, 1
  %v2229 = vrot.slane %v1211, 1
  %v2230 = vsel %vm2097, %v2228, %v2229
  %v2231 = vrot.slane %v1213, 1
  %v2232 = vsel %vm2097, %v2229, %v2231
  %v2233 = vrot.slane %v1221, 1
  %v2234 = vrot.slane %v1223, 1
  %v2235 = vsel %vm2097, %v2233, %v2234
  %v2236 = vrot.slane %v1225, 1
  %v2237 = vsel %vm2097, %v2234, %v2236
  %v2238 = vrot.slane %v1233, 1
  %v2239 = vrot.slane %v1235, 1
  %v2240 = vsel %vm2097, %v2238, %v2239
  %v2241 = vrot.slane %v1237, 1
  %v2242 = vsel %vm2097, %v2239, %v2241
  %v2243 = vrot.slane %v1245, 1
  %v2244 = vrot.slane %v1247, 1
  %v2245 = vsel %vm2097, %v2243, %v2244
  %v2246 = vrot.slane %v1249, 1
  %v2247 = vsel %vm2097, %v2244, %v2246
  %v2248 = vrot.slane %v1257, 1
  %v2249 = vrot.slane %v1259, 1
  %v2250 = vsel %vm2097, %v2248, %v2249
  %v2251 = vrot.slane %v1261, 1
  %v2252 = vsel %vm2097, %v2249, %v2251
  %v2253 = vrot.slane %v1269, 1
  %v2254 = vrot.slane %v1271, 1
  %v2255 = vsel %vm2097, %v2253, %v2254
  %v2256 = vrot.slane %v1273, 1
  %v2257 = vsel %vm2097, %v2254, %v2256
  %s2322 = scalar_lea.vmem %s1, 256
  %v2323 = vld [vmem:[%s2322] sm:$0xff]
  %v2324 = vld [vmem:[%s2322 + $0x8] sm:$0xff]
  %v2325 = vld [vmem:[%s2322 + $0x10] sm:$0xff]
  %v2326 = vld [vmem:[%s2322 + $0x18] sm:$0xff]
  %v2327 = vld [vmem:[%s2322 + $0x20] sm:$0xff]
  %v2328 = vld [vmem:[%s2322 + $0x28] sm:$0xff]
  %v2329 = vld [vmem:[%s2322 + $0x30] sm:$0xff]
  %v2330 = vld [vmem:[%s2322 + $0x38] sm:$0xff]
  %v2331 = vld [vmem:[%s2322 + $0x40] sm:$0xff]
  %v2332 = vld [vmem:[%s2322 + $0x48] sm:$0xff]
  %v2333 = vld [vmem:[%s2322 + $0x50] sm:$0xff]
  %v2334 = vld [vmem:[%s2322 + $0x58] sm:$0xff]
  %v2335 = vld [vmem:[%s2322 + $0x60] sm:$0xff]
  %v2336 = vld [vmem:[%s2322 + $0x68] sm:$0xff]
  %v2337 = vld [vmem:[%s2322 + $0x70] sm:$0xff]
  %v2338 = vld [vmem:[%s2322 + $0x78] sm:$0xff]
  %2339 = vmatpush.msra.mxu0 %v2338
  %2340 = vmatpush.msra.mxu0 %v2337
  %2341 = vmatpush.msra.mxu0 %v2336
  %2342 = vmatpush.msra.mxu0 %v2335
  %2343 = vmatpush.msra.mxu0 %v2334
  %2344 = vmatpush.msra.mxu0 %v2333
  %2345 = vmatpush.msra.mxu0 %v2332
  %2346 = vmatpush.msra.mxu0 %v2331
  %2347 = vmatpush.msra.mxu0 %v2330
  %2348 = vmatpush.msra.mxu0 %v2329
  %2349 = vmatpush.msra.mxu0 %v2328
  %2350 = vmatpush.msra.mxu0 %v2327
  %2351 = vmatpush.msra.mxu0 %v2326
  %2352 = vmatpush.msra.mxu0 %v2325
  %2353 = vmatpush.msra.mxu0 %v2324
  %2354 = vmatpush.msra.mxu0 %v2323
  %2355 = vmatmul.f32.gmra.mxu0 %v2100
  %v2356 = vpop.f32.mrf.mxu0
  %v2357 = vadd.f32 0.0, %v2356
  %2358 = vmatmul.f32.gmra.mxu0 %v2102
  %v2359 = vpop.f32.mrf.mxu0
  %v2360 = vadd.f32 0.0, %v2359
  %2361 = vmatmul.f32.gmra.mxu0 %v2105
  %v2362 = vpop.f32.mrf.mxu0
  %v2363 = vadd.f32 0.0, %v2362
  %2364 = vmatmul.f32.gmra.mxu0 %v2107
  %v2365 = vpop.f32.mrf.mxu0
  %v2366 = vadd.f32 0.0, %v2365
  %2367 = vmatmul.f32.gmra.mxu0 %v2110
  %v2368 = vpop.f32.mrf.mxu0
  %v2369 = vadd.f32 0.0, %v2368
  %2370 = vmatmul.f32.gmra.mxu0 %v2112
  %v2371 = vpop.f32.mrf.mxu0
  %v2372 = vadd.f32 0.0, %v2371
  %2373 = vmatmul.f32.gmra.mxu0 %v2115
  %v2374 = vpop.f32.mrf.mxu0
  %v2375 = vadd.f32 0.0, %v2374
  %2376 = vmatmul.f32.gmra.mxu0 %v2117
  %v2377 = vpop.f32.mrf.mxu0
  %v2378 = vadd.f32 0.0, %v2377
  %2379 = vmatmul.f32.gmra.mxu0 %v2120
  %v2380 = vpop.f32.mrf.mxu0
  %v2381 = vadd.f32 0.0, %v2380
  %2382 = vmatmul.f32.gmra.mxu0 %v2122
  %v2383 = vpop.f32.mrf.mxu0
  %v2384 = vadd.f32 0.0, %v2383
  %2385 = vmatmul.f32.gmra.mxu0 %v2125
  %v2386 = vpop.f32.mrf.mxu0
  %v2387 = vadd.f32 0.0, %v2386
  %2388 = vmatmul.f32.gmra.mxu0 %v2127
  %v2389 = vpop.f32.mrf.mxu0
  %v2390 = vadd.f32 0.0, %v2389
  %2391 = vmatmul.f32.gmra.mxu0 %v2130
  %v2392 = vpop.f32.mrf.mxu0
  %v2393 = vadd.f32 0.0, %v2392
  %2394 = vmatmul.f32.gmra.mxu0 %v2132
  %v2395 = vpop.f32.mrf.mxu0
  %v2396 = vadd.f32 0.0, %v2395
  %2397 = vmatmul.f32.gmra.mxu0 %v2135
  %v2398 = vpop.f32.mrf.mxu0
  %v2399 = vadd.f32 0.0, %v2398
  %2400 = vmatmul.f32.gmra.mxu0 %v2137
  %v2401 = vpop.f32.mrf.mxu0
  %v2402 = vadd.f32 0.0, %v2401
  %2403 = vmatmul.f32.gmra.mxu0 %v2140
  %v2404 = vpop.f32.mrf.mxu0
  %v2405 = vadd.f32 0.0, %v2404
  %2406 = vmatmul.f32.gmra.mxu0 %v2142
  %v2407 = vpop.f32.mrf.mxu0
  %v2408 = vadd.f32 0.0, %v2407
  %2409 = vmatmul.f32.gmra.mxu0 %v2145
  %v2410 = vpop.f32.mrf.mxu0
  %v2411 = vadd.f32 0.0, %v2410
  %2412 = vmatmul.f32.gmra.mxu0 %v2147
  %v2413 = vpop.f32.mrf.mxu0
  %v2414 = vadd.f32 0.0, %v2413
  %2415 = vmatmul.f32.gmra.mxu0 %v2150
  %v2416 = vpop.f32.mrf.mxu0
  %v2417 = vadd.f32 0.0, %v2416
  %2418 = vmatmul.f32.gmra.mxu0 %v2152
  %v2419 = vpop.f32.mrf.mxu0
  %v2420 = vadd.f32 0.0, %v2419
  %2421 = vmatmul.f32.gmra.mxu0 %v2155
  %v2422 = vpop.f32.mrf.mxu0
  %v2423 = vadd.f32 0.0, %v2422
  %2424 = vmatmul.f32.gmra.mxu0 %v2157
  %v2425 = vpop.f32.mrf.mxu0
  %v2426 = vadd.f32 0.0, %v2425
  %2427 = vmatmul.f32.gmra.mxu0 %v2160
  %v2428 = vpop.f32.mrf.mxu0
  %v2429 = vadd.f32 0.0, %v2428
  %2430 = vmatmul.f32.gmra.mxu0 %v2162
  %v2431 = vpop.f32.mrf.mxu0
  %v2432 = vadd.f32 0.0, %v2431
  %2433 = vmatmul.f32.gmra.mxu0 %v2165
  %v2434 = vpop.f32.mrf.mxu0
  %v2435 = vadd.f32 0.0, %v2434
  %2436 = vmatmul.f32.gmra.mxu0 %v2167
  %v2437 = vpop.f32.mrf.mxu0
  %v2438 = vadd.f32 0.0, %v2437
  %2439 = vmatmul.f32.gmra.mxu0 %v2170
  %v2440 = vpop.f32.mrf.mxu0
  %v2441 = vadd.f32 0.0, %v2440
  %2442 = vmatmul.f32.gmra.mxu0 %v2172
  %v2443 = vpop.f32.mrf.mxu0
  %v2444 = vadd.f32 0.0, %v2443
  %2445 = vmatmul.f32.gmra.mxu0 %v2175
  %v2446 = vpop.f32.mrf.mxu0
  %v2447 = vadd.f32 0.0, %v2446
  %2448 = vmatmul.f32.gmra.mxu0 %v2177
  %v2449 = vpop.f32.mrf.mxu0
  %v2450 = vadd.f32 0.0, %v2449
  %2451 = vmatmul.f32.gmra.mxu0 %v2180
  %v2452 = vpop.f32.mrf.mxu0
  %v2453 = vadd.f32 0.0, %v2452
  %2454 = vmatmul.f32.gmra.mxu0 %v2182
  %v2455 = vpop.f32.mrf.mxu0
  %v2456 = vadd.f32 0.0, %v2455
  %2457 = vmatmul.f32.gmra.mxu0 %v2185
  %v2458 = vpop.f32.mrf.mxu0
  %v2459 = vadd.f32 0.0, %v2458
  %2460 = vmatmul.f32.gmra.mxu0 %v2187
  %v2461 = vpop.f32.mrf.mxu0
  %v2462 = vadd.f32 0.0, %v2461
  %2463 = vmatmul.f32.gmra.mxu0 %v2190
  %v2464 = vpop.f32.mrf.mxu0
  %v2465 = vadd.f32 0.0, %v2464
  %2466 = vmatmul.f32.gmra.mxu0 %v2192
  %v2467 = vpop.f32.mrf.mxu0
  %v2468 = vadd.f32 0.0, %v2467
  %2469 = vmatmul.f32.gmra.mxu0 %v2195
  %v2470 = vpop.f32.mrf.mxu0
  %v2471 = vadd.f32 0.0, %v2470
  %2472 = vmatmul.f32.gmra.mxu0 %v2197
  %v2473 = vpop.f32.mrf.mxu0
  %v2474 = vadd.f32 0.0, %v2473
  %2475 = vmatmul.f32.gmra.mxu0 %v2200
  %v2476 = vpop.f32.mrf.mxu0
  %v2477 = vadd.f32 0.0, %v2476
  %2478 = vmatmul.f32.gmra.mxu0 %v2202
  %v2479 = vpop.f32.mrf.mxu0
  %v2480 = vadd.f32 0.0, %v2479
  %2481 = vmatmul.f32.gmra.mxu0 %v2205
  %v2482 = vpop.f32.mrf.mxu0
  %v2483 = vadd.f32 0.0, %v2482
  %2484 = vmatmul.f32.gmra.mxu0 %v2207
  %v2485 = vpop.f32.mrf.mxu0
  %v2486 = vadd.f32 0.0, %v2485
  %2487 = vmatmul.f32.gmra.mxu0 %v2210
  %v2488 = vpop.f32.mrf.mxu0
  %v2489 = vadd.f32 0.0, %v2488
  %2490 = vmatmul.f32.gmra.mxu0 %v2212
  %v2491 = vpop.f32.mrf.mxu0
  %v2492 = vadd.f32 0.0, %v2491
  %2493 = vmatmul.f32.gmra.mxu0 %v2215
  %v2494 = vpop.f32.mrf.mxu0
  %v2495 = vadd.f32 0.0, %v2494
  %2496 = vmatmul.f32.gmra.mxu0 %v2217
  %v2497 = vpop.f32.mrf.mxu0
  %v2498 = vadd.f32 0.0, %v2497
  %2499 = vmatmul.f32.gmra.mxu0 %v2220
  %v2500 = vpop.f32.mrf.mxu0
  %v2501 = vadd.f32 0.0, %v2500
  %2502 = vmatmul.f32.gmra.mxu0 %v2222
  %v2503 = vpop.f32.mrf.mxu0
  %v2504 = vadd.f32 0.0, %v2503
  %2505 = vmatmul.f32.gmra.mxu0 %v2225
  %v2506 = vpop.f32.mrf.mxu0
  %v2507 = vadd.f32 0.0, %v2506
  %2508 = vmatmul.f32.gmra.mxu0 %v2227
  %v2509 = vpop.f32.mrf.mxu0
  %v2510 = vadd.f32 0.0, %v2509
  %2511 = vmatmul.f32.gmra.mxu0 %v2230
  %v2512 = vpop.f32.mrf.mxu0
  %v2513 = vadd.f32 0.0, %v2512
  %2514 = vmatmul.f32.gmra.mxu0 %v2232
  %v2515 = vpop.f32.mrf.mxu0
  %v2516 = vadd.f32 0.0, %v2515
  %2517 = vmatmul.f32.gmra.mxu0 %v2235
  %v2518 = vpop.f32.mrf.mxu0
  %v2519 = vadd.f32 0.0, %v2518
  %2520 = vmatmul.f32.gmra.mxu0 %v2237
  %v2521 = vpop.f32.mrf.mxu0
  %v2522 = vadd.f32 0.0, %v2521
  %2523 = vmatmul.f32.gmra.mxu0 %v2240
  %v2524 = vpop.f32.mrf.mxu0
  %v2525 = vadd.f32 0.0, %v2524
  %2526 = vmatmul.f32.gmra.mxu0 %v2242
  %v2527 = vpop.f32.mrf.mxu0
  %v2528 = vadd.f32 0.0, %v2527
  %2529 = vmatmul.f32.gmra.mxu0 %v2245
  %v2530 = vpop.f32.mrf.mxu0
  %v2531 = vadd.f32 0.0, %v2530
  %2532 = vmatmul.f32.gmra.mxu0 %v2247
  %v2533 = vpop.f32.mrf.mxu0
  %v2534 = vadd.f32 0.0, %v2533
  %2535 = vmatmul.f32.gmra.mxu0 %v2250
  %v2536 = vpop.f32.mrf.mxu0
  %v2537 = vadd.f32 0.0, %v2536
  %2538 = vmatmul.f32.gmra.mxu0 %v2252
  %v2539 = vpop.f32.mrf.mxu0
  %v2540 = vadd.f32 0.0, %v2539
  %2541 = vmatmul.f32.gmra.mxu0 %v2255
  %v2542 = vpop.f32.mrf.mxu0
  %v2543 = vadd.f32 0.0, %v2542
  %2544 = vmatmul.f32.gmra.mxu0 %v2257
  %v2545 = vpop.f32.mrf.mxu0
  %v2546 = vadd.f32 0.0, %v2545
  %2547 = vdwg.mxu0
  %v2548 = vadd.f32 %v1810, %v2357
  %v2549 = vadd.f32 %v1813, %v2360
  %v2550 = vadd.f32 %v1816, %v2363
  %v2551 = vadd.f32 %v1819, %v2366
  %v2552 = vadd.f32 %v1822, %v2369
  %v2553 = vadd.f32 %v1825, %v2372
  %v2554 = vadd.f32 %v1828, %v2375
  %v2555 = vadd.f32 %v1831, %v2378
  %v2556 = vadd.f32 %v1834, %v2381
  %v2557 = vadd.f32 %v1837, %v2384
  %v2558 = vadd.f32 %v1840, %v2387
  %v2559 = vadd.f32 %v1843, %v2390
  %v2560 = vadd.f32 %v1846, %v2393
  %v2561 = vadd.f32 %v1849, %v2396
  %v2562 = vadd.f32 %v1852, %v2399
  %v2563 = vadd.f32 %v1855, %v2402
  %v2564 = vadd.f32 %v1858, %v2405
  %v2565 = vadd.f32 %v1861, %v2408
  %v2566 = vadd.f32 %v1864, %v2411
  %v2567 = vadd.f32 %v1867, %v2414
  %v2568 = vadd.f32 %v1870, %v2417
  %v2569 = vadd.f32 %v1873, %v2420
  %v2570 = vadd.f32 %v1876, %v2423
  %v2571 = vadd.f32 %v1879, %v2426
  %v2572 = vadd.f32 %v1882, %v2429
  %v2573 = vadd.f32 %v1885, %v2432
  %v2574 = vadd.f32 %v1888, %v2435
  %v2575 = vadd.f32 %v1891, %v2438
  %v2576 = vadd.f32 %v1894, %v2441
  %v2577 = vadd.f32 %v1897, %v2444
  %v2578 = vadd.f32 %v1900, %v2447
  %v2579 = vadd.f32 %v1903, %v2450
  %v2580 = vadd.f32 %v1906, %v2453
  %v2581 = vadd.f32 %v1909, %v2456
  %v2582 = vadd.f32 %v1912, %v2459
  %v2583 = vadd.f32 %v1915, %v2462
  %v2584 = vadd.f32 %v1918, %v2465
  %v2585 = vadd.f32 %v1921, %v2468
  %v2586 = vadd.f32 %v1924, %v2471
  %v2587 = vadd.f32 %v1927, %v2474
  %v2588 = vadd.f32 %v1930, %v2477
  %v2589 = vadd.f32 %v1933, %v2480
  %v2590 = vadd.f32 %v1936, %v2483
  %v2591 = vadd.f32 %v1939, %v2486
  %v2592 = vadd.f32 %v1942, %v2489
  %v2593 = vadd.f32 %v1945, %v2492
  %v2594 = vadd.f32 %v1948, %v2495
  %v2595 = vadd.f32 %v1951, %v2498
  %v2596 = vadd.f32 %v1954, %v2501
  %v2597 = vadd.f32 %v1957, %v2504
  %v2598 = vadd.f32 %v1960, %v2507
  %v2599 = vadd.f32 %v1963, %v2510
  %v2600 = vadd.f32 %v1966, %v2513
  %v2601 = vadd.f32 %v1969, %v2516
  %v2602 = vadd.f32 %v1972, %v2519
  %v2603 = vadd.f32 %v1975, %v2522
  %v2604 = vadd.f32 %v1978, %v2525
  %v2605 = vadd.f32 %v1981, %v2528
  %v2606 = vadd.f32 %v1984, %v2531
  %v2607 = vadd.f32 %v1987, %v2534
  %v2608 = vadd.f32 %v1990, %v2537
  %v2609 = vadd.f32 %v1993, %v2540
  %v2610 = vadd.f32 %v1996, %v2543
  %v2611 = vadd.f32 %v1999, %v2546
  %s2612 = scalar_lea.vmem %s1, 384
  %v2613 = vld [vmem:[%s2612] sm:$0xff]
  %v2614 = vld [vmem:[%s2612 + $0x8] sm:$0xff]
  %v2615 = vld [vmem:[%s2612 + $0x10] sm:$0xff]
  %v2616 = vld [vmem:[%s2612 + $0x18] sm:$0xff]
  %v2617 = vld [vmem:[%s2612 + $0x20] sm:$0xff]
  %v2618 = vld [vmem:[%s2612 + $0x28] sm:$0xff]
  %v2619 = vld [vmem:[%s2612 + $0x30] sm:$0xff]
  %v2620 = vld [vmem:[%s2612 + $0x38] sm:$0xff]
  %v2621 = vld [vmem:[%s2612 + $0x40] sm:$0xff]
  %v2622 = vld [vmem:[%s2612 + $0x48] sm:$0xff]
  %v2623 = vld [vmem:[%s2612 + $0x50] sm:$0xff]
  %v2624 = vld [vmem:[%s2612 + $0x58] sm:$0xff]
  %v2625 = vld [vmem:[%s2612 + $0x60] sm:$0xff]
  %v2626 = vld [vmem:[%s2612 + $0x68] sm:$0xff]
  %v2627 = vld [vmem:[%s2612 + $0x70] sm:$0xff]
  %v2628 = vld [vmem:[%s2612 + $0x78] sm:$0xff]
  %2629 = vmatpush.msra.mxu0 %v2628
  %2630 = vmatpush.msra.mxu0 %v2627
  %2631 = vmatpush.msra.mxu0 %v2626
  %2632 = vmatpush.msra.mxu0 %v2625
  %2633 = vmatpush.msra.mxu0 %v2624
  %2634 = vmatpush.msra.mxu0 %v2623
  %2635 = vmatpush.msra.mxu0 %v2622
  %2636 = vmatpush.msra.mxu0 %v2621
  %2637 = vmatpush.msra.mxu0 %v2620
  %2638 = vmatpush.msra.mxu0 %v2619
  %2639 = vmatpush.msra.mxu0 %v2618
  %2640 = vmatpush.msra.mxu0 %v2617
  %2641 = vmatpush.msra.mxu0 %v2616
  %2642 = vmatpush.msra.mxu0 %v2615
  %2643 = vmatpush.msra.mxu0 %v2614
  %2644 = vmatpush.msra.mxu0 %v2613
  %2645 = vmatmul.f32.gmra.mxu0 %v897
  %v2646 = vpop.f32.mrf.mxu0
  %v2647 = vadd.f32 0.0, %v2646
  %2648 = vmatmul.f32.gmra.mxu0 %v899
  %v2649 = vpop.f32.mrf.mxu0
  %v2650 = vadd.f32 0.0, %v2649
  %2651 = vmatmul.f32.gmra.mxu0 %v909
  %v2652 = vpop.f32.mrf.mxu0
  %v2653 = vadd.f32 0.0, %v2652
  %2654 = vmatmul.f32.gmra.mxu0 %v911
  %v2655 = vpop.f32.mrf.mxu0
  %v2656 = vadd.f32 0.0, %v2655
  %2657 = vmatmul.f32.gmra.mxu0 %v921
  %v2658 = vpop.f32.mrf.mxu0
  %v2659 = vadd.f32 0.0, %v2658
  %2660 = vmatmul.f32.gmra.mxu0 %v923
  %v2661 = vpop.f32.mrf.mxu0
  %v2662 = vadd.f32 0.0, %v2661
  %2663 = vmatmul.f32.gmra.mxu0 %v933
  %v2664 = vpop.f32.mrf.mxu0
  %v2665 = vadd.f32 0.0, %v2664
  %2666 = vmatmul.f32.gmra.mxu0 %v935
  %v2667 = vpop.f32.mrf.mxu0
  %v2668 = vadd.f32 0.0, %v2667
  %2669 = vmatmul.f32.gmra.mxu0 %v945
  %v2670 = vpop.f32.mrf.mxu0
  %v2671 = vadd.f32 0.0, %v2670
  %2672 = vmatmul.f32.gmra.mxu0 %v947
  %v2673 = vpop.f32.mrf.mxu0
  %v2674 = vadd.f32 0.0, %v2673
  %2675 = vmatmul.f32.gmra.mxu0 %v957
  %v2676 = vpop.f32.mrf.mxu0
  %v2677 = vadd.f32 0.0, %v2676
  %2678 = vmatmul.f32.gmra.mxu0 %v959
  %v2679 = vpop.f32.mrf.mxu0
  %v2680 = vadd.f32 0.0, %v2679
  %2681 = vmatmul.f32.gmra.mxu0 %v969
  %v2682 = vpop.f32.mrf.mxu0
  %v2683 = vadd.f32 0.0, %v2682
  %2684 = vmatmul.f32.gmra.mxu0 %v971
  %v2685 = vpop.f32.mrf.mxu0
  %v2686 = vadd.f32 0.0, %v2685
  %2687 = vmatmul.f32.gmra.mxu0 %v981
  %v2688 = vpop.f32.mrf.mxu0
  %v2689 = vadd.f32 0.0, %v2688
  %2690 = vmatmul.f32.gmra.mxu0 %v983
  %v2691 = vpop.f32.mrf.mxu0
  %v2692 = vadd.f32 0.0, %v2691
  %2693 = vmatmul.f32.gmra.mxu0 %v993
  %v2694 = vpop.f32.mrf.mxu0
  %v2695 = vadd.f32 0.0, %v2694
  %2696 = vmatmul.f32.gmra.mxu0 %v995
  %v2697 = vpop.f32.mrf.mxu0
  %v2698 = vadd.f32 0.0, %v2697
  %2699 = vmatmul.f32.gmra.mxu0 %v1005
  %v2700 = vpop.f32.mrf.mxu0
  %v2701 = vadd.f32 0.0, %v2700
  %2702 = vmatmul.f32.gmra.mxu0 %v1007
  %v2703 = vpop.f32.mrf.mxu0
  %v2704 = vadd.f32 0.0, %v2703
  %2705 = vmatmul.f32.gmra.mxu0 %v1017
  %v2706 = vpop.f32.mrf.mxu0
  %v2707 = vadd.f32 0.0, %v2706
  %2708 = vmatmul.f32.gmra.mxu0 %v1019
  %v2709 = vpop.f32.mrf.mxu0
  %v2710 = vadd.f32 0.0, %v2709
  %2711 = vmatmul.f32.gmra.mxu0 %v1029
  %v2712 = vpop.f32.mrf.mxu0
  %v2713 = vadd.f32 0.0, %v2712
  %2714 = vmatmul.f32.gmra.mxu0 %v1031
  %v2715 = vpop.f32.mrf.mxu0
  %v2716 = vadd.f32 0.0, %v2715
  %2717 = vmatmul.f32.gmra.mxu0 %v1041
  %v2718 = vpop.f32.mrf.mxu0
  %v2719 = vadd.f32 0.0, %v2718
  %2720 = vmatmul.f32.gmra.mxu0 %v1043
  %v2721 = vpop.f32.mrf.mxu0
  %v2722 = vadd.f32 0.0, %v2721
  %2723 = vmatmul.f32.gmra.mxu0 %v1053
  %v2724 = vpop.f32.mrf.mxu0
  %v2725 = vadd.f32 0.0, %v2724
  %2726 = vmatmul.f32.gmra.mxu0 %v1055
  %v2727 = vpop.f32.mrf.mxu0
  %v2728 = vadd.f32 0.0, %v2727
  %2729 = vmatmul.f32.gmra.mxu0 %v1065
  %v2730 = vpop.f32.mrf.mxu0
  %v2731 = vadd.f32 0.0, %v2730
  %2732 = vmatmul.f32.gmra.mxu0 %v1067
  %v2733 = vpop.f32.mrf.mxu0
  %v2734 = vadd.f32 0.0, %v2733
  %2735 = vmatmul.f32.gmra.mxu0 %v1077
  %v2736 = vpop.f32.mrf.mxu0
  %v2737 = vadd.f32 0.0, %v2736
  %2738 = vmatmul.f32.gmra.mxu0 %v1079
  %v2739 = vpop.f32.mrf.mxu0
  %v2740 = vadd.f32 0.0, %v2739
  %2741 = vmatmul.f32.gmra.mxu0 %v1095
  %v2742 = vpop.f32.mrf.mxu0
  %v2743 = vadd.f32 0.0, %v2742
  %2744 = vmatmul.f32.gmra.mxu0 %v1097
  %v2745 = vpop.f32.mrf.mxu0
  %v2746 = vadd.f32 0.0, %v2745
  %2747 = vmatmul.f32.gmra.mxu0 %v1107
  %v2748 = vpop.f32.mrf.mxu0
  %v2749 = vadd.f32 0.0, %v2748
  %2750 = vmatmul.f32.gmra.mxu0 %v1109
  %v2751 = vpop.f32.mrf.mxu0
  %v2752 = vadd.f32 0.0, %v2751
  %2753 = vmatmul.f32.gmra.mxu0 %v1119
  %v2754 = vpop.f32.mrf.mxu0
  %v2755 = vadd.f32 0.0, %v2754
  %2756 = vmatmul.f32.gmra.mxu0 %v1121
  %v2757 = vpop.f32.mrf.mxu0
  %v2758 = vadd.f32 0.0, %v2757
  %2759 = vmatmul.f32.gmra.mxu0 %v1131
  %v2760 = vpop.f32.mrf.mxu0
  %v2761 = vadd.f32 0.0, %v2760
  %2762 = vmatmul.f32.gmra.mxu0 %v1133
  %v2763 = vpop.f32.mrf.mxu0
  %v2764 = vadd.f32 0.0, %v2763
  %2765 = vmatmul.f32.gmra.mxu0 %v1143
  %v2766 = vpop.f32.mrf.mxu0
  %v2767 = vadd.f32 0.0, %v2766
  %2768 = vmatmul.f32.gmra.mxu0 %v1145
  %v2769 = vpop.f32.mrf.mxu0
  %v2770 = vadd.f32 0.0, %v2769
  %2771 = vmatmul.f32.gmra.mxu0 %v1155
  %v2772 = vpop.f32.mrf.mxu0
  %v2773 = vadd.f32 0.0, %v2772
  %2774 = vmatmul.f32.gmra.mxu0 %v1157
  %v2775 = vpop.f32.mrf.mxu0
  %v2776 = vadd.f32 0.0, %v2775
  %2777 = vmatmul.f32.gmra.mxu0 %v1167
  %v2778 = vpop.f32.mrf.mxu0
  %v2779 = vadd.f32 0.0, %v2778
  %2780 = vmatmul.f32.gmra.mxu0 %v1169
  %v2781 = vpop.f32.mrf.mxu0
  %v2782 = vadd.f32 0.0, %v2781
  %2783 = vmatmul.f32.gmra.mxu0 %v1179
  %v2784 = vpop.f32.mrf.mxu0
  %v2785 = vadd.f32 0.0, %v2784
  %2786 = vmatmul.f32.gmra.mxu0 %v1181
  %v2787 = vpop.f32.mrf.mxu0
  %v2788 = vadd.f32 0.0, %v2787
  %2789 = vmatmul.f32.gmra.mxu0 %v1191
  %v2790 = vpop.f32.mrf.mxu0
  %v2791 = vadd.f32 0.0, %v2790
  %2792 = vmatmul.f32.gmra.mxu0 %v1193
  %v2793 = vpop.f32.mrf.mxu0
  %v2794 = vadd.f32 0.0, %v2793
  %2795 = vmatmul.f32.gmra.mxu0 %v1203
  %v2796 = vpop.f32.mrf.mxu0
  %v2797 = vadd.f32 0.0, %v2796
  %2798 = vmatmul.f32.gmra.mxu0 %v1205
  %v2799 = vpop.f32.mrf.mxu0
  %v2800 = vadd.f32 0.0, %v2799
  %2801 = vmatmul.f32.gmra.mxu0 %v1215
  %v2802 = vpop.f32.mrf.mxu0
  %v2803 = vadd.f32 0.0, %v2802
  %2804 = vmatmul.f32.gmra.mxu0 %v1217
  %v2805 = vpop.f32.mrf.mxu0
  %v2806 = vadd.f32 0.0, %v2805
  %2807 = vmatmul.f32.gmra.mxu0 %v1227
  %v2808 = vpop.f32.mrf.mxu0
  %v2809 = vadd.f32 0.0, %v2808
  %2810 = vmatmul.f32.gmra.mxu0 %v1229
  %v2811 = vpop.f32.mrf.mxu0
  %v2812 = vadd.f32 0.0, %v2811
  %2813 = vmatmul.f32.gmra.mxu0 %v1239
  %v2814 = vpop.f32.mrf.mxu0
  %v2815 = vadd.f32 0.0, %v2814
  %2816 = vmatmul.f32.gmra.mxu0 %v1241
  %v2817 = vpop.f32.mrf.mxu0
  %v2818 = vadd.f32 0.0, %v2817
  %2819 = vmatmul.f32.gmra.mxu0 %v1251
  %v2820 = vpop.f32.mrf.mxu0
  %v2821 = vadd.f32 0.0, %v2820
  %2822 = vmatmul.f32.gmra.mxu0 %v1253
  %v2823 = vpop.f32.mrf.mxu0
  %v2824 = vadd.f32 0.0, %v2823
  %2825 = vmatmul.f32.gmra.mxu0 %v1263
  %v2826 = vpop.f32.mrf.mxu0
  %v2827 = vadd.f32 0.0, %v2826
  %2828 = vmatmul.f32.gmra.mxu0 %v1265
  %v2829 = vpop.f32.mrf.mxu0
  %v2830 = vadd.f32 0.0, %v2829
  %2831 = vmatmul.f32.gmra.mxu0 %v1275
  %v2832 = vpop.f32.mrf.mxu0
  %v2833 = vadd.f32 0.0, %v2832
  %2834 = vmatmul.f32.gmra.mxu0 %v1277
  %v2835 = vpop.f32.mrf.mxu0
  %v2836 = vadd.f32 0.0, %v2835
  %2837 = vdwg.mxu0
  %v2838 = vadd.f32 %v2548, %v2647
  %v2839 = vadd.f32 %v2549, %v2650
  %v2840 = vadd.f32 %v2550, %v2653
  %v2841 = vadd.f32 %v2551, %v2656
  %v2842 = vadd.f32 %v2552, %v2659
  %v2843 = vadd.f32 %v2553, %v2662
  %v2844 = vadd.f32 %v2554, %v2665
  %v2845 = vadd.f32 %v2555, %v2668
  %v2846 = vadd.f32 %v2556, %v2671
  %v2847 = vadd.f32 %v2557, %v2674
  %v2848 = vadd.f32 %v2558, %v2677
  %v2849 = vadd.f32 %v2559, %v2680
  %v2850 = vadd.f32 %v2560, %v2683
  %v2851 = vadd.f32 %v2561, %v2686
  %v2852 = vadd.f32 %v2562, %v2689
  %v2853 = vadd.f32 %v2563, %v2692
  %v2854 = vadd.f32 %v2564, %v2695
  %v2855 = vadd.f32 %v2565, %v2698
  %v2856 = vadd.f32 %v2566, %v2701
  %v2857 = vadd.f32 %v2567, %v2704
  %v2858 = vadd.f32 %v2568, %v2707
  %v2859 = vadd.f32 %v2569, %v2710
  %v2860 = vadd.f32 %v2570, %v2713
  %v2861 = vadd.f32 %v2571, %v2716
  %v2862 = vadd.f32 %v2572, %v2719
  %v2863 = vadd.f32 %v2573, %v2722
  %v2864 = vadd.f32 %v2574, %v2725
  %v2865 = vadd.f32 %v2575, %v2728
  %v2866 = vadd.f32 %v2576, %v2731
  %v2867 = vadd.f32 %v2577, %v2734
  %v2868 = vadd.f32 %v2578, %v2737
  %v2869 = vadd.f32 %v2579, %v2740
  %v2870 = vadd.f32 %v2580, %v2743
  %v2871 = vadd.f32 %v2581, %v2746
  %v2872 = vadd.f32 %v2582, %v2749
  %v2873 = vadd.f32 %v2583, %v2752
  %v2874 = vadd.f32 %v2584, %v2755
  %v2875 = vadd.f32 %v2585, %v2758
  %v2876 = vadd.f32 %v2586, %v2761
  %v2877 = vadd.f32 %v2587, %v2764
  %v2878 = vadd.f32 %v2588, %v2767
  %v2879 = vadd.f32 %v2589, %v2770
  %v2880 = vadd.f32 %v2590, %v2773
  %v2881 = vadd.f32 %v2591, %v2776
  %v2882 = vadd.f32 %v2592, %v2779
  %v2883 = vadd.f32 %v2593, %v2782
  %v2884 = vadd.f32 %v2594, %v2785
  %v2885 = vadd.f32 %v2595, %v2788
  %v2886 = vadd.f32 %v2596, %v2791
  %v2887 = vadd.f32 %v2597, %v2794
  %v2888 = vadd.f32 %v2598, %v2797
  %v2889 = vadd.f32 %v2599, %v2800
  %v2890 = vadd.f32 %v2600, %v2803
  %v2891 = vadd.f32 %v2601, %v2806
  %v2892 = vadd.f32 %v2602, %v2809
  %v2893 = vadd.f32 %v2603, %v2812
  %v2894 = vadd.f32 %v2604, %v2815
  %v2895 = vadd.f32 %v2605, %v2818
  %v2896 = vadd.f32 %v2606, %v2821
  %v2897 = vadd.f32 %v2607, %v2824
  %v2898 = vadd.f32 %v2608, %v2827
  %v2899 = vadd.f32 %v2609, %v2830
  %v2900 = vadd.f32 %v2610, %v2833
  %v2901 = vadd.f32 %v2611, %v2836
  %s2902 = scalar_lea.vmem %s1, 512
  %v2903 = vld [vmem:[%s2902] sm:$0xff]
  %v2904 = vld [vmem:[%s2902 + $0x8] sm:$0xff]
  %v2905 = vld [vmem:[%s2902 + $0x10] sm:$0xff]
  %v2906 = vld [vmem:[%s2902 + $0x18] sm:$0xff]
  %v2907 = vld [vmem:[%s2902 + $0x20] sm:$0xff]
  %v2908 = vld [vmem:[%s2902 + $0x28] sm:$0xff]
  %v2909 = vld [vmem:[%s2902 + $0x30] sm:$0xff]
  %v2910 = vld [vmem:[%s2902 + $0x38] sm:$0xff]
  %v2911 = vld [vmem:[%s2902 + $0x40] sm:$0xff]
  %v2912 = vld [vmem:[%s2902 + $0x48] sm:$0xff]
  %v2913 = vld [vmem:[%s2902 + $0x50] sm:$0xff]
  %v2914 = vld [vmem:[%s2902 + $0x58] sm:$0xff]
  %v2915 = vld [vmem:[%s2902 + $0x60] sm:$0xff]
  %v2916 = vld [vmem:[%s2902 + $0x68] sm:$0xff]
  %v2917 = vld [vmem:[%s2902 + $0x70] sm:$0xff]
  %v2918 = vld [vmem:[%s2902 + $0x78] sm:$0xff]
  %2919 = vmatpush.msra.mxu0 %v2918
  %2920 = vmatpush.msra.mxu0 %v2917
  %2921 = vmatpush.msra.mxu0 %v2916
  %2922 = vmatpush.msra.mxu0 %v2915
  %2923 = vmatpush.msra.mxu0 %v2914
  %2924 = vmatpush.msra.mxu0 %v2913
  %2925 = vmatpush.msra.mxu0 %v2912
  %2926 = vmatpush.msra.mxu0 %v2911
  %2927 = vmatpush.msra.mxu0 %v2910
  %2928 = vmatpush.msra.mxu0 %v2909
  %2929 = vmatpush.msra.mxu0 %v2908
  %2930 = vmatpush.msra.mxu0 %v2907
  %2931 = vmatpush.msra.mxu0 %v2906
  %2932 = vmatpush.msra.mxu0 %v2905
  %2933 = vmatpush.msra.mxu0 %v2904
  %2934 = vmatpush.msra.mxu0 %v2903
  %2935 = vmatmul.f32.gmra.mxu0 %v1291
  %v2936 = vpop.f32.mrf.mxu0
  %v2937 = vadd.f32 0.0, %v2936
  %2938 = vmatmul.f32.gmra.mxu0 %v1293
  %v2939 = vpop.f32.mrf.mxu0
  %v2940 = vadd.f32 0.0, %v2939
  %2941 = vmatmul.f32.gmra.mxu0 %v1299
  %v2942 = vpop.f32.mrf.mxu0
  %v2943 = vadd.f32 0.0, %v2942
  %2944 = vmatmul.f32.gmra.mxu0 %v1301
  %v2945 = vpop.f32.mrf.mxu0
  %v2946 = vadd.f32 0.0, %v2945
  %2947 = vmatmul.f32.gmra.mxu0 %v1307
  %v2948 = vpop.f32.mrf.mxu0
  %v2949 = vadd.f32 0.0, %v2948
  %2950 = vmatmul.f32.gmra.mxu0 %v1309
  %v2951 = vpop.f32.mrf.mxu0
  %v2952 = vadd.f32 0.0, %v2951
  %2953 = vmatmul.f32.gmra.mxu0 %v1315
  %v2954 = vpop.f32.mrf.mxu0
  %v2955 = vadd.f32 0.0, %v2954
  %2956 = vmatmul.f32.gmra.mxu0 %v1317
  %v2957 = vpop.f32.mrf.mxu0
  %v2958 = vadd.f32 0.0, %v2957
  %2959 = vmatmul.f32.gmra.mxu0 %v1323
  %v2960 = vpop.f32.mrf.mxu0
  %v2961 = vadd.f32 0.0, %v2960
  %2962 = vmatmul.f32.gmra.mxu0 %v1325
  %v2963 = vpop.f32.mrf.mxu0
  %v2964 = vadd.f32 0.0, %v2963
  %2965 = vmatmul.f32.gmra.mxu0 %v1331
  %v2966 = vpop.f32.mrf.mxu0
  %v2967 = vadd.f32 0.0, %v2966
  %2968 = vmatmul.f32.gmra.mxu0 %v1333
  %v2969 = vpop.f32.mrf.mxu0
  %v2970 = vadd.f32 0.0, %v2969
  %2971 = vmatmul.f32.gmra.mxu0 %v1339
  %v2972 = vpop.f32.mrf.mxu0
  %v2973 = vadd.f32 0.0, %v2972
  %2974 = vmatmul.f32.gmra.mxu0 %v1341
  %v2975 = vpop.f32.mrf.mxu0
  %v2976 = vadd.f32 0.0, %v2975
  %2977 = vmatmul.f32.gmra.mxu0 %v1347
  %v2978 = vpop.f32.mrf.mxu0
  %v2979 = vadd.f32 0.0, %v2978
  %2980 = vmatmul.f32.gmra.mxu0 %v1349
  %v2981 = vpop.f32.mrf.mxu0
  %v2982 = vadd.f32 0.0, %v2981
  %2983 = vmatmul.f32.gmra.mxu0 %v1355
  %v2984 = vpop.f32.mrf.mxu0
  %v2985 = vadd.f32 0.0, %v2984
  %2986 = vmatmul.f32.gmra.mxu0 %v1357
  %v2987 = vpop.f32.mrf.mxu0
  %v2988 = vadd.f32 0.0, %v2987
  %2989 = vmatmul.f32.gmra.mxu0 %v1363
  %v2990 = vpop.f32.mrf.mxu0
  %v2991 = vadd.f32 0.0, %v2990
  %2992 = vmatmul.f32.gmra.mxu0 %v1365
  %v2993 = vpop.f32.mrf.mxu0
  %v2994 = vadd.f32 0.0, %v2993
  %2995 = vmatmul.f32.gmra.mxu0 %v1371
  %v2996 = vpop.f32.mrf.mxu0
  %v2997 = vadd.f32 0.0, %v2996
  %2998 = vmatmul.f32.gmra.mxu0 %v1373
  %v2999 = vpop.f32.mrf.mxu0
  %v3000 = vadd.f32 0.0, %v2999
  %3001 = vmatmul.f32.gmra.mxu0 %v1379
  %v3002 = vpop.f32.mrf.mxu0
  %v3003 = vadd.f32 0.0, %v3002
  %3004 = vmatmul.f32.gmra.mxu0 %v1381
  %v3005 = vpop.f32.mrf.mxu0
  %v3006 = vadd.f32 0.0, %v3005
  %3007 = vmatmul.f32.gmra.mxu0 %v1387
  %v3008 = vpop.f32.mrf.mxu0
  %v3009 = vadd.f32 0.0, %v3008
  %3010 = vmatmul.f32.gmra.mxu0 %v1389
  %v3011 = vpop.f32.mrf.mxu0
  %v3012 = vadd.f32 0.0, %v3011
  %3013 = vmatmul.f32.gmra.mxu0 %v1395
  %v3014 = vpop.f32.mrf.mxu0
  %v3015 = vadd.f32 0.0, %v3014
  %3016 = vmatmul.f32.gmra.mxu0 %v1397
  %v3017 = vpop.f32.mrf.mxu0
  %v3018 = vadd.f32 0.0, %v3017
  %3019 = vmatmul.f32.gmra.mxu0 %v1403
  %v3020 = vpop.f32.mrf.mxu0
  %v3021 = vadd.f32 0.0, %v3020
  %3022 = vmatmul.f32.gmra.mxu0 %v1405
  %v3023 = vpop.f32.mrf.mxu0
  %v3024 = vadd.f32 0.0, %v3023
  %3025 = vmatmul.f32.gmra.mxu0 %v1411
  %v3026 = vpop.f32.mrf.mxu0
  %v3027 = vadd.f32 0.0, %v3026
  %3028 = vmatmul.f32.gmra.mxu0 %v1413
  %v3029 = vpop.f32.mrf.mxu0
  %v3030 = vadd.f32 0.0, %v3029
  %3031 = vmatmul.f32.gmra.mxu0 %v1423
  %v3032 = vpop.f32.mrf.mxu0
  %v3033 = vadd.f32 0.0, %v3032
  %3034 = vmatmul.f32.gmra.mxu0 %v1425
  %v3035 = vpop.f32.mrf.mxu0
  %v3036 = vadd.f32 0.0, %v3035
  %3037 = vmatmul.f32.gmra.mxu0 %v1431
  %v3038 = vpop.f32.mrf.mxu0
  %v3039 = vadd.f32 0.0, %v3038
  %3040 = vmatmul.f32.gmra.mxu0 %v1433
  %v3041 = vpop.f32.mrf.mxu0
  %v3042 = vadd.f32 0.0, %v3041
  %3043 = vmatmul.f32.gmra.mxu0 %v1439
  %v3044 = vpop.f32.mrf.mxu0
  %v3045 = vadd.f32 0.0, %v3044
  %3046 = vmatmul.f32.gmra.mxu0 %v1441
  %v3047 = vpop.f32.mrf.mxu0
  %v3048 = vadd.f32 0.0, %v3047
  %3049 = vmatmul.f32.gmra.mxu0 %v1447
  %v3050 = vpop.f32.mrf.mxu0
  %v3051 = vadd.f32 0.0, %v3050
  %3052 = vmatmul.f32.gmra.mxu0 %v1449
  %v3053 = vpop.f32.mrf.mxu0
  %v3054 = vadd.f32 0.0, %v3053
  %3055 = vmatmul.f32.gmra.mxu0 %v1455
  %v3056 = vpop.f32.mrf.mxu0
  %v3057 = vadd.f32 0.0, %v3056
  %3058 = vmatmul.f32.gmra.mxu0 %v1457
  %v3059 = vpop.f32.mrf.mxu0
  %v3060 = vadd.f32 0.0, %v3059
  %3061 = vmatmul.f32.gmra.mxu0 %v1463
  %v3062 = vpop.f32.mrf.mxu0
  %v3063 = vadd.f32 0.0, %v3062
  %3064 = vmatmul.f32.gmra.mxu0 %v1465
  %v3065 = vpop.f32.mrf.mxu0
  %v3066 = vadd.f32 0.0, %v3065
  %3067 = vmatmul.f32.gmra.mxu0 %v1471
  %v3068 = vpop.f32.mrf.mxu0
  %v3069 = vadd.f32 0.0, %v3068
  %3070 = vmatmul.f32.gmra.mxu0 %v1473
  %v3071 = vpop.f32.mrf.mxu0
  %v3072 = vadd.f32 0.0, %v3071
  %3073 = vmatmul.f32.gmra.mxu0 %v1479
  %v3074 = vpop.f32.mrf.mxu0
  %v3075 = vadd.f32 0.0, %v3074
  %3076 = vmatmul.f32.gmra.mxu0 %v1481
  %v3077 = vpop.f32.mrf.mxu0
  %v3078 = vadd.f32 0.0, %v3077
  %3079 = vmatmul.f32.gmra.mxu0 %v1487
  %v3080 = vpop.f32.mrf.mxu0
  %v3081 = vadd.f32 0.0, %v3080
  %3082 = vmatmul.f32.gmra.mxu0 %v1489
  %v3083 = vpop.f32.mrf.mxu0
  %v3084 = vadd.f32 0.0, %v3083
  %3085 = vmatmul.f32.gmra.mxu0 %v1495
  %v3086 = vpop.f32.mrf.mxu0
  %v3087 = vadd.f32 0.0, %v3086
  %3088 = vmatmul.f32.gmra.mxu0 %v1497
  %v3089 = vpop.f32.mrf.mxu0
  %v3090 = vadd.f32 0.0, %v3089
  %3091 = vmatmul.f32.gmra.mxu0 %v1503
  %v3092 = vpop.f32.mrf.mxu0
  %v3093 = vadd.f32 0.0, %v3092
  %3094 = vmatmul.f32.gmra.mxu0 %v1505
  %v3095 = vpop.f32.mrf.mxu0
  %v3096 = vadd.f32 0.0, %v3095
  %3097 = vmatmul.f32.gmra.mxu0 %v1511
  %v3098 = vpop.f32.mrf.mxu0
  %v3099 = vadd.f32 0.0, %v3098
  %3100 = vmatmul.f32.gmra.mxu0 %v1513
  %v3101 = vpop.f32.mrf.mxu0
  %v3102 = vadd.f32 0.0, %v3101
  %3103 = vmatmul.f32.gmra.mxu0 %v1519
  %v3104 = vpop.f32.mrf.mxu0
  %v3105 = vadd.f32 0.0, %v3104
  %3106 = vmatmul.f32.gmra.mxu0 %v1521
  %v3107 = vpop.f32.mrf.mxu0
  %v3108 = vadd.f32 0.0, %v3107
  %3109 = vmatmul.f32.gmra.mxu0 %v1527
  %v3110 = vpop.f32.mrf.mxu0
  %v3111 = vadd.f32 0.0, %v3110
  %3112 = vmatmul.f32.gmra.mxu0 %v1529
  %v3113 = vpop.f32.mrf.mxu0
  %v3114 = vadd.f32 0.0, %v3113
  %3115 = vmatmul.f32.gmra.mxu0 %v1535
  %v3116 = vpop.f32.mrf.mxu0
  %v3117 = vadd.f32 0.0, %v3116
  %3118 = vmatmul.f32.gmra.mxu0 %v1537
  %v3119 = vpop.f32.mrf.mxu0
  %v3120 = vadd.f32 0.0, %v3119
  %3121 = vmatmul.f32.gmra.mxu0 %v1543
  %v3122 = vpop.f32.mrf.mxu0
  %v3123 = vadd.f32 0.0, %v3122
  %3124 = vmatmul.f32.gmra.mxu0 %v1545
  %v3125 = vpop.f32.mrf.mxu0
  %v3126 = vadd.f32 0.0, %v3125
  %3127 = vdwg.mxu0
  %v3128 = vadd.f32 %v2838, %v2937
  %v3129 = vadd.f32 %v2839, %v2940
  %v3130 = vadd.f32 %v2840, %v2943
  %v3131 = vadd.f32 %v2841, %v2946
  %v3132 = vadd.f32 %v2842, %v2949
  %v3133 = vadd.f32 %v2843, %v2952
  %v3134 = vadd.f32 %v2844, %v2955
  %v3135 = vadd.f32 %v2845, %v2958
  %v3136 = vadd.f32 %v2846, %v2961
  %v3137 = vadd.f32 %v2847, %v2964
  %v3138 = vadd.f32 %v2848, %v2967
  %v3139 = vadd.f32 %v2849, %v2970
  %v3140 = vadd.f32 %v2850, %v2973
  %v3141 = vadd.f32 %v2851, %v2976
  %v3142 = vadd.f32 %v2852, %v2979
  %v3143 = vadd.f32 %v2853, %v2982
  %v3144 = vadd.f32 %v2854, %v2985
  %v3145 = vadd.f32 %v2855, %v2988
  %v3146 = vadd.f32 %v2856, %v2991
  %v3147 = vadd.f32 %v2857, %v2994
  %v3148 = vadd.f32 %v2858, %v2997
  %v3149 = vadd.f32 %v2859, %v3000
  %v3150 = vadd.f32 %v2860, %v3003
  %v3151 = vadd.f32 %v2861, %v3006
  %v3152 = vadd.f32 %v2862, %v3009
  %v3153 = vadd.f32 %v2863, %v3012
  %v3154 = vadd.f32 %v2864, %v3015
  %v3155 = vadd.f32 %v2865, %v3018
  %v3156 = vadd.f32 %v2866, %v3021
  %v3157 = vadd.f32 %v2867, %v3024
  %v3158 = vadd.f32 %v2868, %v3027
  %v3159 = vadd.f32 %v2869, %v3030
  %v3160 = vadd.f32 %v2870, %v3033
  %v3161 = vadd.f32 %v2871, %v3036
  %v3162 = vadd.f32 %v2872, %v3039
  %v3163 = vadd.f32 %v2873, %v3042
  %v3164 = vadd.f32 %v2874, %v3045
  %v3165 = vadd.f32 %v2875, %v3048
  %v3166 = vadd.f32 %v2876, %v3051
  %v3167 = vadd.f32 %v2877, %v3054
  %v3168 = vadd.f32 %v2878, %v3057
  %v3169 = vadd.f32 %v2879, %v3060
  %v3170 = vadd.f32 %v2880, %v3063
  %v3171 = vadd.f32 %v2881, %v3066
  %v3172 = vadd.f32 %v2882, %v3069
  %v3173 = vadd.f32 %v2883, %v3072
  %v3174 = vadd.f32 %v2884, %v3075
  %v3175 = vadd.f32 %v2885, %v3078
  %v3176 = vadd.f32 %v2886, %v3081
  %v3177 = vadd.f32 %v2887, %v3084
  %v3178 = vadd.f32 %v2888, %v3087
  %v3179 = vadd.f32 %v2889, %v3090
  %v3180 = vadd.f32 %v2890, %v3093
  %v3181 = vadd.f32 %v2891, %v3096
  %v3182 = vadd.f32 %v2892, %v3099
  %v3183 = vadd.f32 %v2893, %v3102
  %v3184 = vadd.f32 %v2894, %v3105
  %v3185 = vadd.f32 %v2895, %v3108
  %v3186 = vadd.f32 %v2896, %v3111
  %v3187 = vadd.f32 %v2897, %v3114
  %v3188 = vadd.f32 %v2898, %v3117
  %v3189 = vadd.f32 %v2899, %v3120
  %v3190 = vadd.f32 %v2900, %v3123
  %v3191 = vadd.f32 %v2901, %v3126
  %v3288 = vrot.slane %v897, 1
  %v3289 = vrot.slane %v899, 1
  %v3290 = vsel %vm2097, %v3288, %v3289
  %v3291 = vrot.slane %v901, 1
  %v3292 = vsel %vm2097, %v3289, %v3291
  %v3293 = vrot.slane %v909, 1
  %v3294 = vrot.slane %v911, 1
  %v3295 = vsel %vm2097, %v3293, %v3294
  %v3296 = vrot.slane %v913, 1
  %v3297 = vsel %vm2097, %v3294, %v3296
  %v3298 = vrot.slane %v921, 1
  %v3299 = vrot.slane %v923, 1
  %v3300 = vsel %vm2097, %v3298, %v3299
  %v3301 = vrot.slane %v925, 1
  %v3302 = vsel %vm2097, %v3299, %v3301
  %v3303 = vrot.slane %v933, 1
  %v3304 = vrot.slane %v935, 1
  %v3305 = vsel %vm2097, %v3303, %v3304
  %v3306 = vrot.slane %v937, 1
  %v3307 = vsel %vm2097, %v3304, %v3306
  %v3308 = vrot.slane %v945, 1
  %v3309 = vrot.slane %v947, 1
  %v3310 = vsel %vm2097, %v3308, %v3309
  %v3311 = vrot.slane %v949, 1
  %v3312 = vsel %vm2097, %v3309, %v3311
  %v3313 = vrot.slane %v957, 1
  %v3314 = vrot.slane %v959, 1
  %v3315 = vsel %vm2097, %v3313, %v3314
  %v3316 = vrot.slane %v961, 1
  %v3317 = vsel %vm2097, %v3314, %v3316
  %v3318 = vrot.slane %v969, 1
  %v3319 = vrot.slane %v971, 1
  %v3320 = vsel %vm2097, %v3318, %v3319
  %v3321 = vrot.slane %v973, 1
  %v3322 = vsel %vm2097, %v3319, %v3321
  %v3323 = vrot.slane %v981, 1
  %v3324 = vrot.slane %v983, 1
  %v3325 = vsel %vm2097, %v3323, %v3324
  %v3326 = vrot.slane %v985, 1
  %v3327 = vsel %vm2097, %v3324, %v3326
  %v3328 = vrot.slane %v993, 1
  %v3329 = vrot.slane %v995, 1
  %v3330 = vsel %vm2097, %v3328, %v3329
  %v3331 = vrot.slane %v997, 1
  %v3332 = vsel %vm2097, %v3329, %v3331
  %v3333 = vrot.slane %v1005, 1
  %v3334 = vrot.slane %v1007, 1
  %v3335 = vsel %vm2097, %v3333, %v3334
  %v3336 = vrot.slane %v1009, 1
  %v3337 = vsel %vm2097, %v3334, %v3336
  %v3338 = vrot.slane %v1017, 1
  %v3339 = vrot.slane %v1019, 1
  %v3340 = vsel %vm2097, %v3338, %v3339
  %v3341 = vrot.slane %v1021, 1
  %v3342 = vsel %vm2097, %v3339, %v3341
  %v3343 = vrot.slane %v1029, 1
  %v3344 = vrot.slane %v1031, 1
  %v3345 = vsel %vm2097, %v3343, %v3344
  %v3346 = vrot.slane %v1033, 1
  %v3347 = vsel %vm2097, %v3344, %v3346
  %v3348 = vrot.slane %v1041, 1
  %v3349 = vrot.slane %v1043, 1
  %v3350 = vsel %vm2097, %v3348, %v3349
  %v3351 = vrot.slane %v1045, 1
  %v3352 = vsel %vm2097, %v3349, %v3351
  %v3353 = vrot.slane %v1053, 1
  %v3354 = vrot.slane %v1055, 1
  %v3355 = vsel %vm2097, %v3353, %v3354
  %v3356 = vrot.slane %v1057, 1
  %v3357 = vsel %vm2097, %v3354, %v3356
  %v3358 = vrot.slane %v1065, 1
  %v3359 = vrot.slane %v1067, 1
  %v3360 = vsel %vm2097, %v3358, %v3359
  %v3361 = vrot.slane %v1069, 1
  %v3362 = vsel %vm2097, %v3359, %v3361
  %v3363 = vrot.slane %v1077, 1
  %v3364 = vrot.slane %v1079, 1
  %v3365 = vsel %vm2097, %v3363, %v3364
  %v3366 = vrot.slane %v1081, 1
  %v3367 = vsel %vm2097, %v3364, %v3366
  %v3368 = vrot.slane %v1095, 1
  %v3369 = vrot.slane %v1097, 1
  %v3370 = vsel %vm2097, %v3368, %v3369
  %v3371 = vrot.slane %v1099, 1
  %v3372 = vsel %vm2097, %v3369, %v3371
  %v3373 = vrot.slane %v1107, 1
  %v3374 = vrot.slane %v1109, 1
  %v3375 = vsel %vm2097, %v3373, %v3374
  %v3376 = vrot.slane %v1111, 1
  %v3377 = vsel %vm2097, %v3374, %v3376
  %v3378 = vrot.slane %v1119, 1
  %v3379 = vrot.slane %v1121, 1
  %v3380 = vsel %vm2097, %v3378, %v3379
  %v3381 = vrot.slane %v1123, 1
  %v3382 = vsel %vm2097, %v3379, %v3381
  %v3383 = vrot.slane %v1131, 1
  %v3384 = vrot.slane %v1133, 1
  %v3385 = vsel %vm2097, %v3383, %v3384
  %v3386 = vrot.slane %v1135, 1
  %v3387 = vsel %vm2097, %v3384, %v3386
  %v3388 = vrot.slane %v1143, 1
  %v3389 = vrot.slane %v1145, 1
  %v3390 = vsel %vm2097, %v3388, %v3389
  %v3391 = vrot.slane %v1147, 1
  %v3392 = vsel %vm2097, %v3389, %v3391
  %v3393 = vrot.slane %v1155, 1
  %v3394 = vrot.slane %v1157, 1
  %v3395 = vsel %vm2097, %v3393, %v3394
  %v3396 = vrot.slane %v1159, 1
  %v3397 = vsel %vm2097, %v3394, %v3396
  %v3398 = vrot.slane %v1167, 1
  %v3399 = vrot.slane %v1169, 1
  %v3400 = vsel %vm2097, %v3398, %v3399
  %v3401 = vrot.slane %v1171, 1
  %v3402 = vsel %vm2097, %v3399, %v3401
  %v3403 = vrot.slane %v1179, 1
  %v3404 = vrot.slane %v1181, 1
  %v3405 = vsel %vm2097, %v3403, %v3404
  %v3406 = vrot.slane %v1183, 1
  %v3407 = vsel %vm2097, %v3404, %v3406
  %v3408 = vrot.slane %v1191, 1
  %v3409 = vrot.slane %v1193, 1
  %v3410 = vsel %vm2097, %v3408, %v3409
  %v3411 = vrot.slane %v1195, 1
  %v3412 = vsel %vm2097, %v3409, %v3411
  %v3413 = vrot.slane %v1203, 1
  %v3414 = vrot.slane %v1205, 1
  %v3415 = vsel %vm2097, %v3413, %v3414
  %v3416 = vrot.slane %v1207, 1
  %v3417 = vsel %vm2097, %v3414, %v3416
  %v3418 = vrot.slane %v1215, 1
  %v3419 = vrot.slane %v1217, 1
  %v3420 = vsel %vm2097, %v3418, %v3419
  %v3421 = vrot.slane %v1219, 1
  %v3422 = vsel %vm2097, %v3419, %v3421
  %v3423 = vrot.slane %v1227, 1
  %v3424 = vrot.slane %v1229, 1
  %v3425 = vsel %vm2097, %v3423, %v3424
  %v3426 = vrot.slane %v1231, 1
  %v3427 = vsel %vm2097, %v3424, %v3426
  %v3428 = vrot.slane %v1239, 1
  %v3429 = vrot.slane %v1241, 1
  %v3430 = vsel %vm2097, %v3428, %v3429
  %v3431 = vrot.slane %v1243, 1
  %v3432 = vsel %vm2097, %v3429, %v3431
  %v3433 = vrot.slane %v1251, 1
  %v3434 = vrot.slane %v1253, 1
  %v3435 = vsel %vm2097, %v3433, %v3434
  %v3436 = vrot.slane %v1255, 1
  %v3437 = vsel %vm2097, %v3434, %v3436
  %v3438 = vrot.slane %v1263, 1
  %v3439 = vrot.slane %v1265, 1
  %v3440 = vsel %vm2097, %v3438, %v3439
  %v3441 = vrot.slane %v1267, 1
  %v3442 = vsel %vm2097, %v3439, %v3441
  %v3443 = vrot.slane %v1275, 1
  %v3444 = vrot.slane %v1277, 1
  %v3445 = vsel %vm2097, %v3443, %v3444
  %v3446 = vrot.slane %v1279, 1
  %v3447 = vsel %vm2097, %v3444, %v3446
  %s3512 = scalar_lea.vmem %s1, 640
  %v3513 = vld [vmem:[%s3512] sm:$0xff]
  %v3514 = vld [vmem:[%s3512 + $0x8] sm:$0xff]
  %v3515 = vld [vmem:[%s3512 + $0x10] sm:$0xff]
  %v3516 = vld [vmem:[%s3512 + $0x18] sm:$0xff]
  %v3517 = vld [vmem:[%s3512 + $0x20] sm:$0xff]
  %v3518 = vld [vmem:[%s3512 + $0x28] sm:$0xff]
  %v3519 = vld [vmem:[%s3512 + $0x30] sm:$0xff]
  %v3520 = vld [vmem:[%s3512 + $0x38] sm:$0xff]
  %v3521 = vld [vmem:[%s3512 + $0x40] sm:$0xff]
  %v3522 = vld [vmem:[%s3512 + $0x48] sm:$0xff]
  %v3523 = vld [vmem:[%s3512 + $0x50] sm:$0xff]
  %v3524 = vld [vmem:[%s3512 + $0x58] sm:$0xff]
  %v3525 = vld [vmem:[%s3512 + $0x60] sm:$0xff]
  %v3526 = vld [vmem:[%s3512 + $0x68] sm:$0xff]
  %v3527 = vld [vmem:[%s3512 + $0x70] sm:$0xff]
  %v3528 = vld [vmem:[%s3512 + $0x78] sm:$0xff]
  %3529 = vmatpush.msra.mxu0 %v3528
  %3530 = vmatpush.msra.mxu0 %v3527
  %3531 = vmatpush.msra.mxu0 %v3526
  %3532 = vmatpush.msra.mxu0 %v3525
  %3533 = vmatpush.msra.mxu0 %v3524
  %3534 = vmatpush.msra.mxu0 %v3523
  %3535 = vmatpush.msra.mxu0 %v3522
  %3536 = vmatpush.msra.mxu0 %v3521
  %3537 = vmatpush.msra.mxu0 %v3520
  %3538 = vmatpush.msra.mxu0 %v3519
  %3539 = vmatpush.msra.mxu0 %v3518
  %3540 = vmatpush.msra.mxu0 %v3517
  %3541 = vmatpush.msra.mxu0 %v3516
  %3542 = vmatpush.msra.mxu0 %v3515
  %3543 = vmatpush.msra.mxu0 %v3514
  %3544 = vmatpush.msra.mxu0 %v3513
  %3545 = vmatmul.f32.gmra.mxu0 %v3290
  %v3546 = vpop.f32.mrf.mxu0
  %v3547 = vadd.f32 0.0, %v3546
  %3548 = vmatmul.f32.gmra.mxu0 %v3292
  %v3549 = vpop.f32.mrf.mxu0
  %v3550 = vadd.f32 0.0, %v3549
  %3551 = vmatmul.f32.gmra.mxu0 %v3295
  %v3552 = vpop.f32.mrf.mxu0
  %v3553 = vadd.f32 0.0, %v3552
  %3554 = vmatmul.f32.gmra.mxu0 %v3297
  %v3555 = vpop.f32.mrf.mxu0
  %v3556 = vadd.f32 0.0, %v3555
  %3557 = vmatmul.f32.gmra.mxu0 %v3300
  %v3558 = vpop.f32.mrf.mxu0
  %v3559 = vadd.f32 0.0, %v3558
  %3560 = vmatmul.f32.gmra.mxu0 %v3302
  %v3561 = vpop.f32.mrf.mxu0
  %v3562 = vadd.f32 0.0, %v3561
  %3563 = vmatmul.f32.gmra.mxu0 %v3305
  %v3564 = vpop.f32.mrf.mxu0
  %v3565 = vadd.f32 0.0, %v3564
  %3566 = vmatmul.f32.gmra.mxu0 %v3307
  %v3567 = vpop.f32.mrf.mxu0
  %v3568 = vadd.f32 0.0, %v3567
  %3569 = vmatmul.f32.gmra.mxu0 %v3310
  %v3570 = vpop.f32.mrf.mxu0
  %v3571 = vadd.f32 0.0, %v3570
  %3572 = vmatmul.f32.gmra.mxu0 %v3312
  %v3573 = vpop.f32.mrf.mxu0
  %v3574 = vadd.f32 0.0, %v3573
  %3575 = vmatmul.f32.gmra.mxu0 %v3315
  %v3576 = vpop.f32.mrf.mxu0
  %v3577 = vadd.f32 0.0, %v3576
  %3578 = vmatmul.f32.gmra.mxu0 %v3317
  %v3579 = vpop.f32.mrf.mxu0
  %v3580 = vadd.f32 0.0, %v3579
  %3581 = vmatmul.f32.gmra.mxu0 %v3320
  %v3582 = vpop.f32.mrf.mxu0
  %v3583 = vadd.f32 0.0, %v3582
  %3584 = vmatmul.f32.gmra.mxu0 %v3322
  %v3585 = vpop.f32.mrf.mxu0
  %v3586 = vadd.f32 0.0, %v3585
  %3587 = vmatmul.f32.gmra.mxu0 %v3325
  %v3588 = vpop.f32.mrf.mxu0
  %v3589 = vadd.f32 0.0, %v3588
  %3590 = vmatmul.f32.gmra.mxu0 %v3327
  %v3591 = vpop.f32.mrf.mxu0
  %v3592 = vadd.f32 0.0, %v3591
  %3593 = vmatmul.f32.gmra.mxu0 %v3330
  %v3594 = vpop.f32.mrf.mxu0
  %v3595 = vadd.f32 0.0, %v3594
  %3596 = vmatmul.f32.gmra.mxu0 %v3332
  %v3597 = vpop.f32.mrf.mxu0
  %v3598 = vadd.f32 0.0, %v3597
  %3599 = vmatmul.f32.gmra.mxu0 %v3335
  %v3600 = vpop.f32.mrf.mxu0
  %v3601 = vadd.f32 0.0, %v3600
  %3602 = vmatmul.f32.gmra.mxu0 %v3337
  %v3603 = vpop.f32.mrf.mxu0
  %v3604 = vadd.f32 0.0, %v3603
  %3605 = vmatmul.f32.gmra.mxu0 %v3340
  %v3606 = vpop.f32.mrf.mxu0
  %v3607 = vadd.f32 0.0, %v3606
  %3608 = vmatmul.f32.gmra.mxu0 %v3342
  %v3609 = vpop.f32.mrf.mxu0
  %v3610 = vadd.f32 0.0, %v3609
  %3611 = vmatmul.f32.gmra.mxu0 %v3345
  %v3612 = vpop.f32.mrf.mxu0
  %v3613 = vadd.f32 0.0, %v3612
  %3614 = vmatmul.f32.gmra.mxu0 %v3347
  %v3615 = vpop.f32.mrf.mxu0
  %v3616 = vadd.f32 0.0, %v3615
  %3617 = vmatmul.f32.gmra.mxu0 %v3350
  %v3618 = vpop.f32.mrf.mxu0
  %v3619 = vadd.f32 0.0, %v3618
  %3620 = vmatmul.f32.gmra.mxu0 %v3352
  %v3621 = vpop.f32.mrf.mxu0
  %v3622 = vadd.f32 0.0, %v3621
  %3623 = vmatmul.f32.gmra.mxu0 %v3355
  %v3624 = vpop.f32.mrf.mxu0
  %v3625 = vadd.f32 0.0, %v3624
  %3626 = vmatmul.f32.gmra.mxu0 %v3357
  %v3627 = vpop.f32.mrf.mxu0
  %v3628 = vadd.f32 0.0, %v3627
  %3629 = vmatmul.f32.gmra.mxu0 %v3360
  %v3630 = vpop.f32.mrf.mxu0
  %v3631 = vadd.f32 0.0, %v3630
  %3632 = vmatmul.f32.gmra.mxu0 %v3362
  %v3633 = vpop.f32.mrf.mxu0
  %v3634 = vadd.f32 0.0, %v3633
  %3635 = vmatmul.f32.gmra.mxu0 %v3365
  %v3636 = vpop.f32.mrf.mxu0
  %v3637 = vadd.f32 0.0, %v3636
  %3638 = vmatmul.f32.gmra.mxu0 %v3367
  %v3639 = vpop.f32.mrf.mxu0
  %v3640 = vadd.f32 0.0, %v3639
  %3641 = vmatmul.f32.gmra.mxu0 %v3370
  %v3642 = vpop.f32.mrf.mxu0
  %v3643 = vadd.f32 0.0, %v3642
  %3644 = vmatmul.f32.gmra.mxu0 %v3372
  %v3645 = vpop.f32.mrf.mxu0
  %v3646 = vadd.f32 0.0, %v3645
  %3647 = vmatmul.f32.gmra.mxu0 %v3375
  %v3648 = vpop.f32.mrf.mxu0
  %v3649 = vadd.f32 0.0, %v3648
  %3650 = vmatmul.f32.gmra.mxu0 %v3377
  %v3651 = vpop.f32.mrf.mxu0
  %v3652 = vadd.f32 0.0, %v3651
  %3653 = vmatmul.f32.gmra.mxu0 %v3380
  %v3654 = vpop.f32.mrf.mxu0
  %v3655 = vadd.f32 0.0, %v3654
  %3656 = vmatmul.f32.gmra.mxu0 %v3382
  %v3657 = vpop.f32.mrf.mxu0
  %v3658 = vadd.f32 0.0, %v3657
  %3659 = vmatmul.f32.gmra.mxu0 %v3385
  %v3660 = vpop.f32.mrf.mxu0
  %v3661 = vadd.f32 0.0, %v3660
  %3662 = vmatmul.f32.gmra.mxu0 %v3387
  %v3663 = vpop.f32.mrf.mxu0
  %v3664 = vadd.f32 0.0, %v3663
  %3665 = vmatmul.f32.gmra.mxu0 %v3390
  %v3666 = vpop.f32.mrf.mxu0
  %v3667 = vadd.f32 0.0, %v3666
  %3668 = vmatmul.f32.gmra.mxu0 %v3392
  %v3669 = vpop.f32.mrf.mxu0
  %v3670 = vadd.f32 0.0, %v3669
  %3671 = vmatmul.f32.gmra.mxu0 %v3395
  %v3672 = vpop.f32.mrf.mxu0
  %v3673 = vadd.f32 0.0, %v3672
  %3674 = vmatmul.f32.gmra.mxu0 %v3397
  %v3675 = vpop.f32.mrf.mxu0
  %v3676 = vadd.f32 0.0, %v3675
  %3677 = vmatmul.f32.gmra.mxu0 %v3400
  %v3678 = vpop.f32.mrf.mxu0
  %v3679 = vadd.f32 0.0, %v3678
  %3680 = vmatmul.f32.gmra.mxu0 %v3402
  %v3681 = vpop.f32.mrf.mxu0
  %v3682 = vadd.f32 0.0, %v3681
  %3683 = vmatmul.f32.gmra.mxu0 %v3405
  %v3684 = vpop.f32.mrf.mxu0
  %v3685 = vadd.f32 0.0, %v3684
  %3686 = vmatmul.f32.gmra.mxu0 %v3407
  %v3687 = vpop.f32.mrf.mxu0
  %v3688 = vadd.f32 0.0, %v3687
  %3689 = vmatmul.f32.gmra.mxu0 %v3410
  %v3690 = vpop.f32.mrf.mxu0
  %v3691 = vadd.f32 0.0, %v3690
  %3692 = vmatmul.f32.gmra.mxu0 %v3412
  %v3693 = vpop.f32.mrf.mxu0
  %v3694 = vadd.f32 0.0, %v3693
  %3695 = vmatmul.f32.gmra.mxu0 %v3415
  %v3696 = vpop.f32.mrf.mxu0
  %v3697 = vadd.f32 0.0, %v3696
  %3698 = vmatmul.f32.gmra.mxu0 %v3417
  %v3699 = vpop.f32.mrf.mxu0
  %v3700 = vadd.f32 0.0, %v3699
  %3701 = vmatmul.f32.gmra.mxu0 %v3420
  %v3702 = vpop.f32.mrf.mxu0
  %v3703 = vadd.f32 0.0, %v3702
  %3704 = vmatmul.f32.gmra.mxu0 %v3422
  %v3705 = vpop.f32.mrf.mxu0
  %v3706 = vadd.f32 0.0, %v3705
  %3707 = vmatmul.f32.gmra.mxu0 %v3425
  %v3708 = vpop.f32.mrf.mxu0
  %v3709 = vadd.f32 0.0, %v3708
  %3710 = vmatmul.f32.gmra.mxu0 %v3427
  %v3711 = vpop.f32.mrf.mxu0
  %v3712 = vadd.f32 0.0, %v3711
  %3713 = vmatmul.f32.gmra.mxu0 %v3430
  %v3714 = vpop.f32.mrf.mxu0
  %v3715 = vadd.f32 0.0, %v3714
  %3716 = vmatmul.f32.gmra.mxu0 %v3432
  %v3717 = vpop.f32.mrf.mxu0
  %v3718 = vadd.f32 0.0, %v3717
  %3719 = vmatmul.f32.gmra.mxu0 %v3435
  %v3720 = vpop.f32.mrf.mxu0
  %v3721 = vadd.f32 0.0, %v3720
  %3722 = vmatmul.f32.gmra.mxu0 %v3437
  %v3723 = vpop.f32.mrf.mxu0
  %v3724 = vadd.f32 0.0, %v3723
  %3725 = vmatmul.f32.gmra.mxu0 %v3440
  %v3726 = vpop.f32.mrf.mxu0
  %v3727 = vadd.f32 0.0, %v3726
  %3728 = vmatmul.f32.gmra.mxu0 %v3442
  %v3729 = vpop.f32.mrf.mxu0
  %v3730 = vadd.f32 0.0, %v3729
  %3731 = vmatmul.f32.gmra.mxu0 %v3445
  %v3732 = vpop.f32.mrf.mxu0
  %v3733 = vadd.f32 0.0, %v3732
  %3734 = vmatmul.f32.gmra.mxu0 %v3447
  %v3735 = vpop.f32.mrf.mxu0
  %v3736 = vadd.f32 0.0, %v3735
  %3737 = vdwg.mxu0
  %v3738 = vadd.f32 %v3128, %v3547
  %v3739 = vadd.f32 %v3129, %v3550
  %v3740 = vadd.f32 %v3130, %v3553
  %v3741 = vadd.f32 %v3131, %v3556
  %v3742 = vadd.f32 %v3132, %v3559
  %v3743 = vadd.f32 %v3133, %v3562
  %v3744 = vadd.f32 %v3134, %v3565
  %v3745 = vadd.f32 %v3135, %v3568
  %v3746 = vadd.f32 %v3136, %v3571
  %v3747 = vadd.f32 %v3137, %v3574
  %v3748 = vadd.f32 %v3138, %v3577
  %v3749 = vadd.f32 %v3139, %v3580
  %v3750 = vadd.f32 %v3140, %v3583
  %v3751 = vadd.f32 %v3141, %v3586
  %v3752 = vadd.f32 %v3142, %v3589
  %v3753 = vadd.f32 %v3143, %v3592
  %v3754 = vadd.f32 %v3144, %v3595
  %v3755 = vadd.f32 %v3145, %v3598
  %v3756 = vadd.f32 %v3146, %v3601
  %v3757 = vadd.f32 %v3147, %v3604
  %v3758 = vadd.f32 %v3148, %v3607
  %v3759 = vadd.f32 %v3149, %v3610
  %v3760 = vadd.f32 %v3150, %v3613
  %v3761 = vadd.f32 %v3151, %v3616
  %v3762 = vadd.f32 %v3152, %v3619
  %v3763 = vadd.f32 %v3153, %v3622
  %v3764 = vadd.f32 %v3154, %v3625
  %v3765 = vadd.f32 %v3155, %v3628
  %v3766 = vadd.f32 %v3156, %v3631
  %v3767 = vadd.f32 %v3157, %v3634
  %v3768 = vadd.f32 %v3158, %v3637
  %v3769 = vadd.f32 %v3159, %v3640
  %v3770 = vadd.f32 %v3160, %v3643
  %v3771 = vadd.f32 %v3161, %v3646
  %v3772 = vadd.f32 %v3162, %v3649
  %v3773 = vadd.f32 %v3163, %v3652
  %v3774 = vadd.f32 %v3164, %v3655
  %v3775 = vadd.f32 %v3165, %v3658
  %v3776 = vadd.f32 %v3166, %v3661
  %v3777 = vadd.f32 %v3167, %v3664
  %v3778 = vadd.f32 %v3168, %v3667
  %v3779 = vadd.f32 %v3169, %v3670
  %v3780 = vadd.f32 %v3170, %v3673
  %v3781 = vadd.f32 %v3171, %v3676
  %v3782 = vadd.f32 %v3172, %v3679
  %v3783 = vadd.f32 %v3173, %v3682
  %v3784 = vadd.f32 %v3174, %v3685
  %v3785 = vadd.f32 %v3175, %v3688
  %v3786 = vadd.f32 %v3176, %v3691
  %v3787 = vadd.f32 %v3177, %v3694
  %v3788 = vadd.f32 %v3178, %v3697
  %v3789 = vadd.f32 %v3179, %v3700
  %v3790 = vadd.f32 %v3180, %v3703
  %v3791 = vadd.f32 %v3181, %v3706
  %v3792 = vadd.f32 %v3182, %v3709
  %v3793 = vadd.f32 %v3183, %v3712
  %v3794 = vadd.f32 %v3184, %v3715
  %v3795 = vadd.f32 %v3185, %v3718
  %v3796 = vadd.f32 %v3186, %v3721
  %v3797 = vadd.f32 %v3187, %v3724
  %v3798 = vadd.f32 %v3188, %v3727
  %v3799 = vadd.f32 %v3189, %v3730
  %v3800 = vadd.f32 %v3190, %v3733
  %v3801 = vadd.f32 %v3191, %v3736
  %s3802 = scalar_lea.vmem %s1, 768
  %v3803 = vld [vmem:[%s3802] sm:$0xff]
  %v3804 = vld [vmem:[%s3802 + $0x8] sm:$0xff]
  %v3805 = vld [vmem:[%s3802 + $0x10] sm:$0xff]
  %v3806 = vld [vmem:[%s3802 + $0x18] sm:$0xff]
  %v3807 = vld [vmem:[%s3802 + $0x20] sm:$0xff]
  %v3808 = vld [vmem:[%s3802 + $0x28] sm:$0xff]
  %v3809 = vld [vmem:[%s3802 + $0x30] sm:$0xff]
  %v3810 = vld [vmem:[%s3802 + $0x38] sm:$0xff]
  %v3811 = vld [vmem:[%s3802 + $0x40] sm:$0xff]
  %v3812 = vld [vmem:[%s3802 + $0x48] sm:$0xff]
  %v3813 = vld [vmem:[%s3802 + $0x50] sm:$0xff]
  %v3814 = vld [vmem:[%s3802 + $0x58] sm:$0xff]
  %v3815 = vld [vmem:[%s3802 + $0x60] sm:$0xff]
  %v3816 = vld [vmem:[%s3802 + $0x68] sm:$0xff]
  %v3817 = vld [vmem:[%s3802 + $0x70] sm:$0xff]
  %v3818 = vld [vmem:[%s3802 + $0x78] sm:$0xff]
  %3819 = vmatpush.msra.mxu0 %v3818
  %3820 = vmatpush.msra.mxu0 %v3817
  %3821 = vmatpush.msra.mxu0 %v3816
  %3822 = vmatpush.msra.mxu0 %v3815
  %3823 = vmatpush.msra.mxu0 %v3814
  %3824 = vmatpush.msra.mxu0 %v3813
  %3825 = vmatpush.msra.mxu0 %v3812
  %3826 = vmatpush.msra.mxu0 %v3811
  %3827 = vmatpush.msra.mxu0 %v3810
  %3828 = vmatpush.msra.mxu0 %v3809
  %3829 = vmatpush.msra.mxu0 %v3808
  %3830 = vmatpush.msra.mxu0 %v3807
  %3831 = vmatpush.msra.mxu0 %v3806
  %3832 = vmatpush.msra.mxu0 %v3805
  %3833 = vmatpush.msra.mxu0 %v3804
  %3834 = vmatpush.msra.mxu0 %v3803
  %3835 = vmatmul.f32.gmra.mxu0 %v903
  %v3836 = vpop.f32.mrf.mxu0
  %v3837 = vadd.f32 0.0, %v3836
  %3838 = vmatmul.f32.gmra.mxu0 %v905
  %v3839 = vpop.f32.mrf.mxu0
  %v3840 = vadd.f32 0.0, %v3839
  %3841 = vmatmul.f32.gmra.mxu0 %v915
  %v3842 = vpop.f32.mrf.mxu0
  %v3843 = vadd.f32 0.0, %v3842
  %3844 = vmatmul.f32.gmra.mxu0 %v917
  %v3845 = vpop.f32.mrf.mxu0
  %v3846 = vadd.f32 0.0, %v3845
  %3847 = vmatmul.f32.gmra.mxu0 %v927
  %v3848 = vpop.f32.mrf.mxu0
  %v3849 = vadd.f32 0.0, %v3848
  %3850 = vmatmul.f32.gmra.mxu0 %v929
  %v3851 = vpop.f32.mrf.mxu0
  %v3852 = vadd.f32 0.0, %v3851
  %3853 = vmatmul.f32.gmra.mxu0 %v939
  %v3854 = vpop.f32.mrf.mxu0
  %v3855 = vadd.f32 0.0, %v3854
  %3856 = vmatmul.f32.gmra.mxu0 %v941
  %v3857 = vpop.f32.mrf.mxu0
  %v3858 = vadd.f32 0.0, %v3857
  %3859 = vmatmul.f32.gmra.mxu0 %v951
  %v3860 = vpop.f32.mrf.mxu0
  %v3861 = vadd.f32 0.0, %v3860
  %3862 = vmatmul.f32.gmra.mxu0 %v953
  %v3863 = vpop.f32.mrf.mxu0
  %v3864 = vadd.f32 0.0, %v3863
  %3865 = vmatmul.f32.gmra.mxu0 %v963
  %v3866 = vpop.f32.mrf.mxu0
  %v3867 = vadd.f32 0.0, %v3866
  %3868 = vmatmul.f32.gmra.mxu0 %v965
  %v3869 = vpop.f32.mrf.mxu0
  %v3870 = vadd.f32 0.0, %v3869
  %3871 = vmatmul.f32.gmra.mxu0 %v975
  %v3872 = vpop.f32.mrf.mxu0
  %v3873 = vadd.f32 0.0, %v3872
  %3874 = vmatmul.f32.gmra.mxu0 %v977
  %v3875 = vpop.f32.mrf.mxu0
  %v3876 = vadd.f32 0.0, %v3875
  %3877 = vmatmul.f32.gmra.mxu0 %v987
  %v3878 = vpop.f32.mrf.mxu0
  %v3879 = vadd.f32 0.0, %v3878
  %3880 = vmatmul.f32.gmra.mxu0 %v989
  %v3881 = vpop.f32.mrf.mxu0
  %v3882 = vadd.f32 0.0, %v3881
  %3883 = vmatmul.f32.gmra.mxu0 %v999
  %v3884 = vpop.f32.mrf.mxu0
  %v3885 = vadd.f32 0.0, %v3884
  %3886 = vmatmul.f32.gmra.mxu0 %v1001
  %v3887 = vpop.f32.mrf.mxu0
  %v3888 = vadd.f32 0.0, %v3887
  %3889 = vmatmul.f32.gmra.mxu0 %v1011
  %v3890 = vpop.f32.mrf.mxu0
  %v3891 = vadd.f32 0.0, %v3890
  %3892 = vmatmul.f32.gmra.mxu0 %v1013
  %v3893 = vpop.f32.mrf.mxu0
  %v3894 = vadd.f32 0.0, %v3893
  %3895 = vmatmul.f32.gmra.mxu0 %v1023
  %v3896 = vpop.f32.mrf.mxu0
  %v3897 = vadd.f32 0.0, %v3896
  %3898 = vmatmul.f32.gmra.mxu0 %v1025
  %v3899 = vpop.f32.mrf.mxu0
  %v3900 = vadd.f32 0.0, %v3899
  %3901 = vmatmul.f32.gmra.mxu0 %v1035
  %v3902 = vpop.f32.mrf.mxu0
  %v3903 = vadd.f32 0.0, %v3902
  %3904 = vmatmul.f32.gmra.mxu0 %v1037
  %v3905 = vpop.f32.mrf.mxu0
  %v3906 = vadd.f32 0.0, %v3905
  %3907 = vmatmul.f32.gmra.mxu0 %v1047
  %v3908 = vpop.f32.mrf.mxu0
  %v3909 = vadd.f32 0.0, %v3908
  %3910 = vmatmul.f32.gmra.mxu0 %v1049
  %v3911 = vpop.f32.mrf.mxu0
  %v3912 = vadd.f32 0.0, %v3911
  %3913 = vmatmul.f32.gmra.mxu0 %v1059
  %v3914 = vpop.f32.mrf.mxu0
  %v3915 = vadd.f32 0.0, %v3914
  %3916 = vmatmul.f32.gmra.mxu0 %v1061
  %v3917 = vpop.f32.mrf.mxu0
  %v3918 = vadd.f32 0.0, %v3917
  %3919 = vmatmul.f32.gmra.mxu0 %v1071
  %v3920 = vpop.f32.mrf.mxu0
  %v3921 = vadd.f32 0.0, %v3920
  %3922 = vmatmul.f32.gmra.mxu0 %v1073
  %v3923 = vpop.f32.mrf.mxu0
  %v3924 = vadd.f32 0.0, %v3923
  %3925 = vmatmul.f32.gmra.mxu0 %v1083
  %v3926 = vpop.f32.mrf.mxu0
  %v3927 = vadd.f32 0.0, %v3926
  %3928 = vmatmul.f32.gmra.mxu0 %v1085
  %v3929 = vpop.f32.mrf.mxu0
  %v3930 = vadd.f32 0.0, %v3929
  %3931 = vmatmul.f32.gmra.mxu0 %v1101
  %v3932 = vpop.f32.mrf.mxu0
  %v3933 = vadd.f32 0.0, %v3932
  %3934 = vmatmul.f32.gmra.mxu0 %v1103
  %v3935 = vpop.f32.mrf.mxu0
  %v3936 = vadd.f32 0.0, %v3935
  %3937 = vmatmul.f32.gmra.mxu0 %v1113
  %v3938 = vpop.f32.mrf.mxu0
  %v3939 = vadd.f32 0.0, %v3938
  %3940 = vmatmul.f32.gmra.mxu0 %v1115
  %v3941 = vpop.f32.mrf.mxu0
  %v3942 = vadd.f32 0.0, %v3941
  %3943 = vmatmul.f32.gmra.mxu0 %v1125
  %v3944 = vpop.f32.mrf.mxu0
  %v3945 = vadd.f32 0.0, %v3944
  %3946 = vmatmul.f32.gmra.mxu0 %v1127
  %v3947 = vpop.f32.mrf.mxu0
  %v3948 = vadd.f32 0.0, %v3947
  %3949 = vmatmul.f32.gmra.mxu0 %v1137
  %v3950 = vpop.f32.mrf.mxu0
  %v3951 = vadd.f32 0.0, %v3950
  %3952 = vmatmul.f32.gmra.mxu0 %v1139
  %v3953 = vpop.f32.mrf.mxu0
  %v3954 = vadd.f32 0.0, %v3953
  %3955 = vmatmul.f32.gmra.mxu0 %v1149
  %v3956 = vpop.f32.mrf.mxu0
  %v3957 = vadd.f32 0.0, %v3956
  %3958 = vmatmul.f32.gmra.mxu0 %v1151
  %v3959 = vpop.f32.mrf.mxu0
  %v3960 = vadd.f32 0.0, %v3959
  %3961 = vmatmul.f32.gmra.mxu0 %v1161
  %v3962 = vpop.f32.mrf.mxu0
  %v3963 = vadd.f32 0.0, %v3962
  %3964 = vmatmul.f32.gmra.mxu0 %v1163
  %v3965 = vpop.f32.mrf.mxu0
  %v3966 = vadd.f32 0.0, %v3965
  %3967 = vmatmul.f32.gmra.mxu0 %v1173
  %v3968 = vpop.f32.mrf.mxu0
  %v3969 = vadd.f32 0.0, %v3968
  %3970 = vmatmul.f32.gmra.mxu0 %v1175
  %v3971 = vpop.f32.mrf.mxu0
  %v3972 = vadd.f32 0.0, %v3971
  %3973 = vmatmul.f32.gmra.mxu0 %v1185
  %v3974 = vpop.f32.mrf.mxu0
  %v3975 = vadd.f32 0.0, %v3974
  %3976 = vmatmul.f32.gmra.mxu0 %v1187
  %v3977 = vpop.f32.mrf.mxu0
  %v3978 = vadd.f32 0.0, %v3977
  %3979 = vmatmul.f32.gmra.mxu0 %v1197
  %v3980 = vpop.f32.mrf.mxu0
  %v3981 = vadd.f32 0.0, %v3980
  %3982 = vmatmul.f32.gmra.mxu0 %v1199
  %v3983 = vpop.f32.mrf.mxu0
  %v3984 = vadd.f32 0.0, %v3983
  %3985 = vmatmul.f32.gmra.mxu0 %v1209
  %v3986 = vpop.f32.mrf.mxu0
  %v3987 = vadd.f32 0.0, %v3986
  %3988 = vmatmul.f32.gmra.mxu0 %v1211
  %v3989 = vpop.f32.mrf.mxu0
  %v3990 = vadd.f32 0.0, %v3989
  %3991 = vmatmul.f32.gmra.mxu0 %v1221
  %v3992 = vpop.f32.mrf.mxu0
  %v3993 = vadd.f32 0.0, %v3992
  %3994 = vmatmul.f32.gmra.mxu0 %v1223
  %v3995 = vpop.f32.mrf.mxu0
  %v3996 = vadd.f32 0.0, %v3995
  %3997 = vmatmul.f32.gmra.mxu0 %v1233
  %v3998 = vpop.f32.mrf.mxu0
  %v3999 = vadd.f32 0.0, %v3998
  %4000 = vmatmul.f32.gmra.mxu0 %v1235
  %v4001 = vpop.f32.mrf.mxu0
  %v4002 = vadd.f32 0.0, %v4001
  %4003 = vmatmul.f32.gmra.mxu0 %v1245
  %v4004 = vpop.f32.mrf.mxu0
  %v4005 = vadd.f32 0.0, %v4004
  %4006 = vmatmul.f32.gmra.mxu0 %v1247
  %v4007 = vpop.f32.mrf.mxu0
  %v4008 = vadd.f32 0.0, %v4007
  %4009 = vmatmul.f32.gmra.mxu0 %v1257
  %v4010 = vpop.f32.mrf.mxu0
  %v4011 = vadd.f32 0.0, %v4010
  %4012 = vmatmul.f32.gmra.mxu0 %v1259
  %v4013 = vpop.f32.mrf.mxu0
  %v4014 = vadd.f32 0.0, %v4013
  %4015 = vmatmul.f32.gmra.mxu0 %v1269
  %v4016 = vpop.f32.mrf.mxu0
  %v4017 = vadd.f32 0.0, %v4016
  %4018 = vmatmul.f32.gmra.mxu0 %v1271
  %v4019 = vpop.f32.mrf.mxu0
  %v4020 = vadd.f32 0.0, %v4019
  %4021 = vmatmul.f32.gmra.mxu0 %v1281
  %v4022 = vpop.f32.mrf.mxu0
  %v4023 = vadd.f32 0.0, %v4022
  %4024 = vmatmul.f32.gmra.mxu0 %v1283
  %v4025 = vpop.f32.mrf.mxu0
  %v4026 = vadd.f32 0.0, %v4025
  %4027 = vdwg.mxu0
  %v4028 = vadd.f32 %v3738, %v3837
  %v4029 = vadd.f32 %v3739, %v3840
  %v4030 = vadd.f32 %v3740, %v3843
  %v4031 = vadd.f32 %v3741, %v3846
  %v4032 = vadd.f32 %v3742, %v3849
  %v4033 = vadd.f32 %v3743, %v3852
  %v4034 = vadd.f32 %v3744, %v3855
  %v4035 = vadd.f32 %v3745, %v3858
  %v4036 = vadd.f32 %v3746, %v3861
  %v4037 = vadd.f32 %v3747, %v3864
  %v4038 = vadd.f32 %v3748, %v3867
  %v4039 = vadd.f32 %v3749, %v3870
  %v4040 = vadd.f32 %v3750, %v3873
  %v4041 = vadd.f32 %v3751, %v3876
  %v4042 = vadd.f32 %v3752, %v3879
  %v4043 = vadd.f32 %v3753, %v3882
  %v4044 = vadd.f32 %v3754, %v3885
  %v4045 = vadd.f32 %v3755, %v3888
  %v4046 = vadd.f32 %v3756, %v3891
  %v4047 = vadd.f32 %v3757, %v3894
  %v4048 = vadd.f32 %v3758, %v3897
  %v4049 = vadd.f32 %v3759, %v3900
  %v4050 = vadd.f32 %v3760, %v3903
  %v4051 = vadd.f32 %v3761, %v3906
  %v4052 = vadd.f32 %v3762, %v3909
  %v4053 = vadd.f32 %v3763, %v3912
  %v4054 = vadd.f32 %v3764, %v3915
  %v4055 = vadd.f32 %v3765, %v3918
  %v4056 = vadd.f32 %v3766, %v3921
  %v4057 = vadd.f32 %v3767, %v3924
  %v4058 = vadd.f32 %v3768, %v3927
  %v4059 = vadd.f32 %v3769, %v3930
  %v4060 = vadd.f32 %v3770, %v3933
  %v4061 = vadd.f32 %v3771, %v3936
  %v4062 = vadd.f32 %v3772, %v3939
  %v4063 = vadd.f32 %v3773, %v3942
  %v4064 = vadd.f32 %v3774, %v3945
  %v4065 = vadd.f32 %v3775, %v3948
  %v4066 = vadd.f32 %v3776, %v3951
  %v4067 = vadd.f32 %v3777, %v3954
  %v4068 = vadd.f32 %v3778, %v3957
  %v4069 = vadd.f32 %v3779, %v3960
  %v4070 = vadd.f32 %v3780, %v3963
  %v4071 = vadd.f32 %v3781, %v3966
  %v4072 = vadd.f32 %v3782, %v3969
  %v4073 = vadd.f32 %v3783, %v3972
  %v4074 = vadd.f32 %v3784, %v3975
  %v4075 = vadd.f32 %v3785, %v3978
  %v4076 = vadd.f32 %v3786, %v3981
  %v4077 = vadd.f32 %v3787, %v3984
  %v4078 = vadd.f32 %v3788, %v3987
  %v4079 = vadd.f32 %v3789, %v3990
  %v4080 = vadd.f32 %v3790, %v3993
  %v4081 = vadd.f32 %v3791, %v3996
  %v4082 = vadd.f32 %v3792, %v3999
  %v4083 = vadd.f32 %v3793, %v4002
  %v4084 = vadd.f32 %v3794, %v4005
  %v4085 = vadd.f32 %v3795, %v4008
  %v4086 = vadd.f32 %v3796, %v4011
  %v4087 = vadd.f32 %v3797, %v4014
  %v4088 = vadd.f32 %v3798, %v4017
  %v4089 = vadd.f32 %v3799, %v4020
  %v4090 = vadd.f32 %v3800, %v4023
  %v4091 = vadd.f32 %v3801, %v4026
  %s4092 = scalar_lea.vmem %s1, 896
  %v4093 = vld [vmem:[%s4092] sm:$0xff]
  %v4094 = vld [vmem:[%s4092 + $0x8] sm:$0xff]
  %v4095 = vld [vmem:[%s4092 + $0x10] sm:$0xff]
  %v4096 = vld [vmem:[%s4092 + $0x18] sm:$0xff]
  %v4097 = vld [vmem:[%s4092 + $0x20] sm:$0xff]
  %v4098 = vld [vmem:[%s4092 + $0x28] sm:$0xff]
  %v4099 = vld [vmem:[%s4092 + $0x30] sm:$0xff]
  %v4100 = vld [vmem:[%s4092 + $0x38] sm:$0xff]
  %v4101 = vld [vmem:[%s4092 + $0x40] sm:$0xff]
  %v4102 = vld [vmem:[%s4092 + $0x48] sm:$0xff]
  %v4103 = vld [vmem:[%s4092 + $0x50] sm:$0xff]
  %v4104 = vld [vmem:[%s4092 + $0x58] sm:$0xff]
  %v4105 = vld [vmem:[%s4092 + $0x60] sm:$0xff]
  %v4106 = vld [vmem:[%s4092 + $0x68] sm:$0xff]
  %v4107 = vld [vmem:[%s4092 + $0x70] sm:$0xff]
  %v4108 = vld [vmem:[%s4092 + $0x78] sm:$0xff]
  %4109 = vmatpush.msra.mxu0 %v4108
  %4110 = vmatpush.msra.mxu0 %v4107
  %4111 = vmatpush.msra.mxu0 %v4106
  %4112 = vmatpush.msra.mxu0 %v4105
  %4113 = vmatpush.msra.mxu0 %v4104
  %4114 = vmatpush.msra.mxu0 %v4103
  %4115 = vmatpush.msra.mxu0 %v4102
  %4116 = vmatpush.msra.mxu0 %v4101
  %4117 = vmatpush.msra.mxu0 %v4100
  %4118 = vmatpush.msra.mxu0 %v4099
  %4119 = vmatpush.msra.mxu0 %v4098
  %4120 = vmatpush.msra.mxu0 %v4097
  %4121 = vmatpush.msra.mxu0 %v4096
  %4122 = vmatpush.msra.mxu0 %v4095
  %4123 = vmatpush.msra.mxu0 %v4094
  %4124 = vmatpush.msra.mxu0 %v4093
  %4125 = vmatmul.f32.gmra.mxu0 %v1295
  %v4126 = vpop.f32.mrf.mxu0
  %v4127 = vadd.f32 0.0, %v4126
  %4128 = vmatmul.f32.gmra.mxu0 %v1297
  %v4129 = vpop.f32.mrf.mxu0
  %v4130 = vadd.f32 0.0, %v4129
  %4131 = vmatmul.f32.gmra.mxu0 %v1303
  %v4132 = vpop.f32.mrf.mxu0
  %v4133 = vadd.f32 0.0, %v4132
  %4134 = vmatmul.f32.gmra.mxu0 %v1305
  %v4135 = vpop.f32.mrf.mxu0
  %v4136 = vadd.f32 0.0, %v4135
  %4137 = vmatmul.f32.gmra.mxu0 %v1311
  %v4138 = vpop.f32.mrf.mxu0
  %v4139 = vadd.f32 0.0, %v4138
  %4140 = vmatmul.f32.gmra.mxu0 %v1313
  %v4141 = vpop.f32.mrf.mxu0
  %v4142 = vadd.f32 0.0, %v4141
  %4143 = vmatmul.f32.gmra.mxu0 %v1319
  %v4144 = vpop.f32.mrf.mxu0
  %v4145 = vadd.f32 0.0, %v4144
  %4146 = vmatmul.f32.gmra.mxu0 %v1321
  %v4147 = vpop.f32.mrf.mxu0
  %v4148 = vadd.f32 0.0, %v4147
  %4149 = vmatmul.f32.gmra.mxu0 %v1327
  %v4150 = vpop.f32.mrf.mxu0
  %v4151 = vadd.f32 0.0, %v4150
  %4152 = vmatmul.f32.gmra.mxu0 %v1329
  %v4153 = vpop.f32.mrf.mxu0
  %v4154 = vadd.f32 0.0, %v4153
  %4155 = vmatmul.f32.gmra.mxu0 %v1335
  %v4156 = vpop.f32.mrf.mxu0
  %v4157 = vadd.f32 0.0, %v4156
  %4158 = vmatmul.f32.gmra.mxu0 %v1337
  %v4159 = vpop.f32.mrf.mxu0
  %v4160 = vadd.f32 0.0, %v4159
  %4161 = vmatmul.f32.gmra.mxu0 %v1343
  %v4162 = vpop.f32.mrf.mxu0
  %v4163 = vadd.f32 0.0, %v4162
  %4164 = vmatmul.f32.gmra.mxu0 %v1345
  %v4165 = vpop.f32.mrf.mxu0
  %v4166 = vadd.f32 0.0, %v4165
  %4167 = vmatmul.f32.gmra.mxu0 %v1351
  %v4168 = vpop.f32.mrf.mxu0
  %v4169 = vadd.f32 0.0, %v4168
  %4170 = vmatmul.f32.gmra.mxu0 %v1353
  %v4171 = vpop.f32.mrf.mxu0
  %v4172 = vadd.f32 0.0, %v4171
  %4173 = vmatmul.f32.gmra.mxu0 %v1359
  %v4174 = vpop.f32.mrf.mxu0
  %v4175 = vadd.f32 0.0, %v4174
  %4176 = vmatmul.f32.gmra.mxu0 %v1361
  %v4177 = vpop.f32.mrf.mxu0
  %v4178 = vadd.f32 0.0, %v4177
  %4179 = vmatmul.f32.gmra.mxu0 %v1367
  %v4180 = vpop.f32.mrf.mxu0
  %v4181 = vadd.f32 0.0, %v4180
  %4182 = vmatmul.f32.gmra.mxu0 %v1369
  %v4183 = vpop.f32.mrf.mxu0
  %v4184 = vadd.f32 0.0, %v4183
  %4185 = vmatmul.f32.gmra.mxu0 %v1375
  %v4186 = vpop.f32.mrf.mxu0
  %v4187 = vadd.f32 0.0, %v4186
  %4188 = vmatmul.f32.gmra.mxu0 %v1377
  %v4189 = vpop.f32.mrf.mxu0
  %v4190 = vadd.f32 0.0, %v4189
  %4191 = vmatmul.f32.gmra.mxu0 %v1383
  %v4192 = vpop.f32.mrf.mxu0
  %v4193 = vadd.f32 0.0, %v4192
  %4194 = vmatmul.f32.gmra.mxu0 %v1385
  %v4195 = vpop.f32.mrf.mxu0
  %v4196 = vadd.f32 0.0, %v4195
  %4197 = vmatmul.f32.gmra.mxu0 %v1391
  %v4198 = vpop.f32.mrf.mxu0
  %v4199 = vadd.f32 0.0, %v4198
  %4200 = vmatmul.f32.gmra.mxu0 %v1393
  %v4201 = vpop.f32.mrf.mxu0
  %v4202 = vadd.f32 0.0, %v4201
  %4203 = vmatmul.f32.gmra.mxu0 %v1399
  %v4204 = vpop.f32.mrf.mxu0
  %v4205 = vadd.f32 0.0, %v4204
  %4206 = vmatmul.f32.gmra.mxu0 %v1401
  %v4207 = vpop.f32.mrf.mxu0
  %v4208 = vadd.f32 0.0, %v4207
  %4209 = vmatmul.f32.gmra.mxu0 %v1407
  %v4210 = vpop.f32.mrf.mxu0
  %v4211 = vadd.f32 0.0, %v4210
  %4212 = vmatmul.f32.gmra.mxu0 %v1409
  %v4213 = vpop.f32.mrf.mxu0
  %v4214 = vadd.f32 0.0, %v4213
  %4215 = vmatmul.f32.gmra.mxu0 %v1415
  %v4216 = vpop.f32.mrf.mxu0
  %v4217 = vadd.f32 0.0, %v4216
  %4218 = vmatmul.f32.gmra.mxu0 %v1417
  %v4219 = vpop.f32.mrf.mxu0
  %v4220 = vadd.f32 0.0, %v4219
  %4221 = vmatmul.f32.gmra.mxu0 %v1427
  %v4222 = vpop.f32.mrf.mxu0
  %v4223 = vadd.f32 0.0, %v4222
  %4224 = vmatmul.f32.gmra.mxu0 %v1429
  %v4225 = vpop.f32.mrf.mxu0
  %v4226 = vadd.f32 0.0, %v4225
  %4227 = vmatmul.f32.gmra.mxu0 %v1435
  %v4228 = vpop.f32.mrf.mxu0
  %v4229 = vadd.f32 0.0, %v4228
  %4230 = vmatmul.f32.gmra.mxu0 %v1437
  %v4231 = vpop.f32.mrf.mxu0
  %v4232 = vadd.f32 0.0, %v4231
  %4233 = vmatmul.f32.gmra.mxu0 %v1443
  %v4234 = vpop.f32.mrf.mxu0
  %v4235 = vadd.f32 0.0, %v4234
  %4236 = vmatmul.f32.gmra.mxu0 %v1445
  %v4237 = vpop.f32.mrf.mxu0
  %v4238 = vadd.f32 0.0, %v4237
  %4239 = vmatmul.f32.gmra.mxu0 %v1451
  %v4240 = vpop.f32.mrf.mxu0
  %v4241 = vadd.f32 0.0, %v4240
  %4242 = vmatmul.f32.gmra.mxu0 %v1453
  %v4243 = vpop.f32.mrf.mxu0
  %v4244 = vadd.f32 0.0, %v4243
  %4245 = vmatmul.f32.gmra.mxu0 %v1459
  %v4246 = vpop.f32.mrf.mxu0
  %v4247 = vadd.f32 0.0, %v4246
  %4248 = vmatmul.f32.gmra.mxu0 %v1461
  %v4249 = vpop.f32.mrf.mxu0
  %v4250 = vadd.f32 0.0, %v4249
  %4251 = vmatmul.f32.gmra.mxu0 %v1467
  %v4252 = vpop.f32.mrf.mxu0
  %v4253 = vadd.f32 0.0, %v4252
  %4254 = vmatmul.f32.gmra.mxu0 %v1469
  %v4255 = vpop.f32.mrf.mxu0
  %v4256 = vadd.f32 0.0, %v4255
  %4257 = vmatmul.f32.gmra.mxu0 %v1475
  %v4258 = vpop.f32.mrf.mxu0
  %v4259 = vadd.f32 0.0, %v4258
  %4260 = vmatmul.f32.gmra.mxu0 %v1477
  %v4261 = vpop.f32.mrf.mxu0
  %v4262 = vadd.f32 0.0, %v4261
  %4263 = vmatmul.f32.gmra.mxu0 %v1483
  %v4264 = vpop.f32.mrf.mxu0
  %v4265 = vadd.f32 0.0, %v4264
  %4266 = vmatmul.f32.gmra.mxu0 %v1485
  %v4267 = vpop.f32.mrf.mxu0
  %v4268 = vadd.f32 0.0, %v4267
  %4269 = vmatmul.f32.gmra.mxu0 %v1491
  %v4270 = vpop.f32.mrf.mxu0
  %v4271 = vadd.f32 0.0, %v4270
  %4272 = vmatmul.f32.gmra.mxu0 %v1493
  %v4273 = vpop.f32.mrf.mxu0
  %v4274 = vadd.f32 0.0, %v4273
  %4275 = vmatmul.f32.gmra.mxu0 %v1499
  %v4276 = vpop.f32.mrf.mxu0
  %v4277 = vadd.f32 0.0, %v4276
  %4278 = vmatmul.f32.gmra.mxu0 %v1501
  %v4279 = vpop.f32.mrf.mxu0
  %v4280 = vadd.f32 0.0, %v4279
  %4281 = vmatmul.f32.gmra.mxu0 %v1507
  %v4282 = vpop.f32.mrf.mxu0
  %v4283 = vadd.f32 0.0, %v4282
  %4284 = vmatmul.f32.gmra.mxu0 %v1509
  %v4285 = vpop.f32.mrf.mxu0
  %v4286 = vadd.f32 0.0, %v4285
  %4287 = vmatmul.f32.gmra.mxu0 %v1515
  %v4288 = vpop.f32.mrf.mxu0
  %v4289 = vadd.f32 0.0, %v4288
  %4290 = vmatmul.f32.gmra.mxu0 %v1517
  %v4291 = vpop.f32.mrf.mxu0
  %v4292 = vadd.f32 0.0, %v4291
  %4293 = vmatmul.f32.gmra.mxu0 %v1523
  %v4294 = vpop.f32.mrf.mxu0
  %v4295 = vadd.f32 0.0, %v4294
  %4296 = vmatmul.f32.gmra.mxu0 %v1525
  %v4297 = vpop.f32.mrf.mxu0
  %v4298 = vadd.f32 0.0, %v4297
  %4299 = vmatmul.f32.gmra.mxu0 %v1531
  %v4300 = vpop.f32.mrf.mxu0
  %v4301 = vadd.f32 0.0, %v4300
  %4302 = vmatmul.f32.gmra.mxu0 %v1533
  %v4303 = vpop.f32.mrf.mxu0
  %v4304 = vadd.f32 0.0, %v4303
  %4305 = vmatmul.f32.gmra.mxu0 %v1539
  %v4306 = vpop.f32.mrf.mxu0
  %v4307 = vadd.f32 0.0, %v4306
  %4308 = vmatmul.f32.gmra.mxu0 %v1541
  %v4309 = vpop.f32.mrf.mxu0
  %v4310 = vadd.f32 0.0, %v4309
  %4311 = vmatmul.f32.gmra.mxu0 %v1547
  %v4312 = vpop.f32.mrf.mxu0
  %v4313 = vadd.f32 0.0, %v4312
  %4314 = vmatmul.f32.gmra.mxu0 %v1549
  %v4315 = vpop.f32.mrf.mxu0
  %v4316 = vadd.f32 0.0, %v4315
  %4317 = vdwg.mxu0
  %v4318 = vadd.f32 %v4028, %v4127
  %v4319 = vadd.f32 %v4029, %v4130
  %v4320 = vadd.f32 %v4030, %v4133
  %v4321 = vadd.f32 %v4031, %v4136
  %v4322 = vadd.f32 %v4032, %v4139
  %v4323 = vadd.f32 %v4033, %v4142
  %v4324 = vadd.f32 %v4034, %v4145
  %v4325 = vadd.f32 %v4035, %v4148
  %v4326 = vadd.f32 %v4036, %v4151
  %v4327 = vadd.f32 %v4037, %v4154
  %v4328 = vadd.f32 %v4038, %v4157
  %v4329 = vadd.f32 %v4039, %v4160
  %v4330 = vadd.f32 %v4040, %v4163
  %v4331 = vadd.f32 %v4041, %v4166
  %v4332 = vadd.f32 %v4042, %v4169
  %v4333 = vadd.f32 %v4043, %v4172
  %v4334 = vadd.f32 %v4044, %v4175
  %v4335 = vadd.f32 %v4045, %v4178
  %v4336 = vadd.f32 %v4046, %v4181
  %v4337 = vadd.f32 %v4047, %v4184
  %v4338 = vadd.f32 %v4048, %v4187
  %v4339 = vadd.f32 %v4049, %v4190
  %v4340 = vadd.f32 %v4050, %v4193
  %v4341 = vadd.f32 %v4051, %v4196
  %v4342 = vadd.f32 %v4052, %v4199
  %v4343 = vadd.f32 %v4053, %v4202
  %v4344 = vadd.f32 %v4054, %v4205
  %v4345 = vadd.f32 %v4055, %v4208
  %v4346 = vadd.f32 %v4056, %v4211
  %v4347 = vadd.f32 %v4057, %v4214
  %v4348 = vadd.f32 %v4058, %v4217
  %v4349 = vadd.f32 %v4059, %v4220
  %v4350 = vadd.f32 %v4060, %v4223
  %v4351 = vadd.f32 %v4061, %v4226
  %v4352 = vadd.f32 %v4062, %v4229
  %v4353 = vadd.f32 %v4063, %v4232
  %v4354 = vadd.f32 %v4064, %v4235
  %v4355 = vadd.f32 %v4065, %v4238
  %v4356 = vadd.f32 %v4066, %v4241
  %v4357 = vadd.f32 %v4067, %v4244
  %v4358 = vadd.f32 %v4068, %v4247
  %v4359 = vadd.f32 %v4069, %v4250
  %v4360 = vadd.f32 %v4070, %v4253
  %v4361 = vadd.f32 %v4071, %v4256
  %v4362 = vadd.f32 %v4072, %v4259
  %v4363 = vadd.f32 %v4073, %v4262
  %v4364 = vadd.f32 %v4074, %v4265
  %v4365 = vadd.f32 %v4075, %v4268
  %v4366 = vadd.f32 %v4076, %v4271
  %v4367 = vadd.f32 %v4077, %v4274
  %v4368 = vadd.f32 %v4078, %v4277
  %v4369 = vadd.f32 %v4079, %v4280
  %v4370 = vadd.f32 %v4080, %v4283
  %v4371 = vadd.f32 %v4081, %v4286
  %v4372 = vadd.f32 %v4082, %v4289
  %v4373 = vadd.f32 %v4083, %v4292
  %v4374 = vadd.f32 %v4084, %v4295
  %v4375 = vadd.f32 %v4085, %v4298
  %v4376 = vadd.f32 %v4086, %v4301
  %v4377 = vadd.f32 %v4087, %v4304
  %v4378 = vadd.f32 %v4088, %v4307
  %v4379 = vadd.f32 %v4089, %v4310
  %v4380 = vadd.f32 %v4090, %v4313
  %v4381 = vadd.f32 %v4091, %v4316
  %v4388 = vrot.slane %v1083, 1
  %v4389 = vrot.slane %v1085, 1
  %v4390 = vsel %vm2097, %v4388, %v4389
  %v4391 = vrot.slane %v1087, 1
  %v4392 = vsel %vm2097, %v4389, %v4391
  %v4393 = vrot.slane %v1281, 1
  %v4394 = vrot.slane %v1283, 1
  %v4395 = vsel %vm2097, %v4393, %v4394
  %v4396 = vrot.slane %v1285, 1
  %v4397 = vsel %vm2097, %v4394, %v4396
  %s4402 = scalar_lea.vmem %s1, 1024
  %v4403 = vld [vmem:[%s4402] sm:$0xff]
  %v4404 = vld [vmem:[%s4402 + $0x8] sm:$0xff]
  %v4405 = vld [vmem:[%s4402 + $0x10] sm:$0xff]
  %v4406 = vld [vmem:[%s4402 + $0x18] sm:$0xff]
  %v4407 = vld [vmem:[%s4402 + $0x20] sm:$0xff]
  %v4408 = vld [vmem:[%s4402 + $0x28] sm:$0xff]
  %v4409 = vld [vmem:[%s4402 + $0x30] sm:$0xff]
  %v4410 = vld [vmem:[%s4402 + $0x38] sm:$0xff]
  %v4411 = vld [vmem:[%s4402 + $0x40] sm:$0xff]
  %v4412 = vld [vmem:[%s4402 + $0x48] sm:$0xff]
  %v4413 = vld [vmem:[%s4402 + $0x50] sm:$0xff]
  %v4414 = vld [vmem:[%s4402 + $0x58] sm:$0xff]
  %v4415 = vld [vmem:[%s4402 + $0x60] sm:$0xff]
  %v4416 = vld [vmem:[%s4402 + $0x68] sm:$0xff]
  %v4417 = vld [vmem:[%s4402 + $0x70] sm:$0xff]
  %v4418 = vld [vmem:[%s4402 + $0x78] sm:$0xff]
  %4419 = vmatpush.msra.mxu0 %v4418
  %4420 = vmatpush.msra.mxu0 %v4417
  %4421 = vmatpush.msra.mxu0 %v4416
  %4422 = vmatpush.msra.mxu0 %v4415
  %4423 = vmatpush.msra.mxu0 %v4414
  %4424 = vmatpush.msra.mxu0 %v4413
  %4425 = vmatpush.msra.mxu0 %v4412
  %4426 = vmatpush.msra.mxu0 %v4411
  %4427 = vmatpush.msra.mxu0 %v4410
  %4428 = vmatpush.msra.mxu0 %v4409
  %4429 = vmatpush.msra.mxu0 %v4408
  %4430 = vmatpush.msra.mxu0 %v4407
  %4431 = vmatpush.msra.mxu0 %v4406
  %4432 = vmatpush.msra.mxu0 %v4405
  %4433 = vmatpush.msra.mxu0 %v4404
  %4434 = vmatpush.msra.mxu0 %v4403
  %4435 = vmatmul.f32.gmra.mxu0 %v2105
  %v4436 = vpop.f32.mrf.mxu0
  %v4437 = vadd.f32 0.0, %v4436
  %4438 = vmatmul.f32.gmra.mxu0 %v2107
  %v4439 = vpop.f32.mrf.mxu0
  %v4440 = vadd.f32 0.0, %v4439
  %4441 = vmatmul.f32.gmra.mxu0 %v2110
  %v4442 = vpop.f32.mrf.mxu0
  %v4443 = vadd.f32 0.0, %v4442
  %4444 = vmatmul.f32.gmra.mxu0 %v2112
  %v4445 = vpop.f32.mrf.mxu0
  %v4446 = vadd.f32 0.0, %v4445
  %4447 = vmatmul.f32.gmra.mxu0 %v2115
  %v4448 = vpop.f32.mrf.mxu0
  %v4449 = vadd.f32 0.0, %v4448
  %4450 = vmatmul.f32.gmra.mxu0 %v2117
  %v4451 = vpop.f32.mrf.mxu0
  %v4452 = vadd.f32 0.0, %v4451
  %4453 = vmatmul.f32.gmra.mxu0 %v2120
  %v4454 = vpop.f32.mrf.mxu0
  %v4455 = vadd.f32 0.0, %v4454
  %4456 = vmatmul.f32.gmra.mxu0 %v2122
  %v4457 = vpop.f32.mrf.mxu0
  %v4458 = vadd.f32 0.0, %v4457
  %4459 = vmatmul.f32.gmra.mxu0 %v2125
  %v4460 = vpop.f32.mrf.mxu0
  %v4461 = vadd.f32 0.0, %v4460
  %4462 = vmatmul.f32.gmra.mxu0 %v2127
  %v4463 = vpop.f32.mrf.mxu0
  %v4464 = vadd.f32 0.0, %v4463
  %4465 = vmatmul.f32.gmra.mxu0 %v2130
  %v4466 = vpop.f32.mrf.mxu0
  %v4467 = vadd.f32 0.0, %v4466
  %4468 = vmatmul.f32.gmra.mxu0 %v2132
  %v4469 = vpop.f32.mrf.mxu0
  %v4470 = vadd.f32 0.0, %v4469
  %4471 = vmatmul.f32.gmra.mxu0 %v2135
  %v4472 = vpop.f32.mrf.mxu0
  %v4473 = vadd.f32 0.0, %v4472
  %4474 = vmatmul.f32.gmra.mxu0 %v2137
  %v4475 = vpop.f32.mrf.mxu0
  %v4476 = vadd.f32 0.0, %v4475
  %4477 = vmatmul.f32.gmra.mxu0 %v2140
  %v4478 = vpop.f32.mrf.mxu0
  %v4479 = vadd.f32 0.0, %v4478
  %4480 = vmatmul.f32.gmra.mxu0 %v2142
  %v4481 = vpop.f32.mrf.mxu0
  %v4482 = vadd.f32 0.0, %v4481
  %4483 = vmatmul.f32.gmra.mxu0 %v2145
  %v4484 = vpop.f32.mrf.mxu0
  %v4485 = vadd.f32 0.0, %v4484
  %4486 = vmatmul.f32.gmra.mxu0 %v2147
  %v4487 = vpop.f32.mrf.mxu0
  %v4488 = vadd.f32 0.0, %v4487
  %4489 = vmatmul.f32.gmra.mxu0 %v2150
  %v4490 = vpop.f32.mrf.mxu0
  %v4491 = vadd.f32 0.0, %v4490
  %4492 = vmatmul.f32.gmra.mxu0 %v2152
  %v4493 = vpop.f32.mrf.mxu0
  %v4494 = vadd.f32 0.0, %v4493
  %4495 = vmatmul.f32.gmra.mxu0 %v2155
  %v4496 = vpop.f32.mrf.mxu0
  %v4497 = vadd.f32 0.0, %v4496
  %4498 = vmatmul.f32.gmra.mxu0 %v2157
  %v4499 = vpop.f32.mrf.mxu0
  %v4500 = vadd.f32 0.0, %v4499
  %4501 = vmatmul.f32.gmra.mxu0 %v2160
  %v4502 = vpop.f32.mrf.mxu0
  %v4503 = vadd.f32 0.0, %v4502
  %4504 = vmatmul.f32.gmra.mxu0 %v2162
  %v4505 = vpop.f32.mrf.mxu0
  %v4506 = vadd.f32 0.0, %v4505
  %4507 = vmatmul.f32.gmra.mxu0 %v2165
  %v4508 = vpop.f32.mrf.mxu0
  %v4509 = vadd.f32 0.0, %v4508
  %4510 = vmatmul.f32.gmra.mxu0 %v2167
  %v4511 = vpop.f32.mrf.mxu0
  %v4512 = vadd.f32 0.0, %v4511
  %4513 = vmatmul.f32.gmra.mxu0 %v2170
  %v4514 = vpop.f32.mrf.mxu0
  %v4515 = vadd.f32 0.0, %v4514
  %4516 = vmatmul.f32.gmra.mxu0 %v2172
  %v4517 = vpop.f32.mrf.mxu0
  %v4518 = vadd.f32 0.0, %v4517
  %4519 = vmatmul.f32.gmra.mxu0 %v2175
  %v4520 = vpop.f32.mrf.mxu0
  %v4521 = vadd.f32 0.0, %v4520
  %4522 = vmatmul.f32.gmra.mxu0 %v2177
  %v4523 = vpop.f32.mrf.mxu0
  %v4524 = vadd.f32 0.0, %v4523
  %4525 = vmatmul.f32.gmra.mxu0 %v4390
  %v4526 = vpop.f32.mrf.mxu0
  %v4527 = vadd.f32 0.0, %v4526
  %4528 = vmatmul.f32.gmra.mxu0 %v4392
  %v4529 = vpop.f32.mrf.mxu0
  %v4530 = vadd.f32 0.0, %v4529
  %4531 = vmatmul.f32.gmra.mxu0 %v2185
  %v4532 = vpop.f32.mrf.mxu0
  %v4533 = vadd.f32 0.0, %v4532
  %4534 = vmatmul.f32.gmra.mxu0 %v2187
  %v4535 = vpop.f32.mrf.mxu0
  %v4536 = vadd.f32 0.0, %v4535
  %4537 = vmatmul.f32.gmra.mxu0 %v2190
  %v4538 = vpop.f32.mrf.mxu0
  %v4539 = vadd.f32 0.0, %v4538
  %4540 = vmatmul.f32.gmra.mxu0 %v2192
  %v4541 = vpop.f32.mrf.mxu0
  %v4542 = vadd.f32 0.0, %v4541
  %4543 = vmatmul.f32.gmra.mxu0 %v2195
  %v4544 = vpop.f32.mrf.mxu0
  %v4545 = vadd.f32 0.0, %v4544
  %4546 = vmatmul.f32.gmra.mxu0 %v2197
  %v4547 = vpop.f32.mrf.mxu0
  %v4548 = vadd.f32 0.0, %v4547
  %4549 = vmatmul.f32.gmra.mxu0 %v2200
  %v4550 = vpop.f32.mrf.mxu0
  %v4551 = vadd.f32 0.0, %v4550
  %4552 = vmatmul.f32.gmra.mxu0 %v2202
  %v4553 = vpop.f32.mrf.mxu0
  %v4554 = vadd.f32 0.0, %v4553
  %4555 = vmatmul.f32.gmra.mxu0 %v2205
  %v4556 = vpop.f32.mrf.mxu0
  %v4557 = vadd.f32 0.0, %v4556
  %4558 = vmatmul.f32.gmra.mxu0 %v2207
  %v4559 = vpop.f32.mrf.mxu0
  %v4560 = vadd.f32 0.0, %v4559
  %4561 = vmatmul.f32.gmra.mxu0 %v2210
  %v4562 = vpop.f32.mrf.mxu0
  %v4563 = vadd.f32 0.0, %v4562
  %4564 = vmatmul.f32.gmra.mxu0 %v2212
  %v4565 = vpop.f32.mrf.mxu0
  %v4566 = vadd.f32 0.0, %v4565
  %4567 = vmatmul.f32.gmra.mxu0 %v2215
  %v4568 = vpop.f32.mrf.mxu0
  %v4569 = vadd.f32 0.0, %v4568
  %4570 = vmatmul.f32.gmra.mxu0 %v2217
  %v4571 = vpop.f32.mrf.mxu0
  %v4572 = vadd.f32 0.0, %v4571
  %4573 = vmatmul.f32.gmra.mxu0 %v2220
  %v4574 = vpop.f32.mrf.mxu0
  %v4575 = vadd.f32 0.0, %v4574
  %4576 = vmatmul.f32.gmra.mxu0 %v2222
  %v4577 = vpop.f32.mrf.mxu0
  %v4578 = vadd.f32 0.0, %v4577
  %4579 = vmatmul.f32.gmra.mxu0 %v2225
  %v4580 = vpop.f32.mrf.mxu0
  %v4581 = vadd.f32 0.0, %v4580
  %4582 = vmatmul.f32.gmra.mxu0 %v2227
  %v4583 = vpop.f32.mrf.mxu0
  %v4584 = vadd.f32 0.0, %v4583
  %4585 = vmatmul.f32.gmra.mxu0 %v2230
  %v4586 = vpop.f32.mrf.mxu0
  %v4587 = vadd.f32 0.0, %v4586
  %4588 = vmatmul.f32.gmra.mxu0 %v2232
  %v4589 = vpop.f32.mrf.mxu0
  %v4590 = vadd.f32 0.0, %v4589
  %4591 = vmatmul.f32.gmra.mxu0 %v2235
  %v4592 = vpop.f32.mrf.mxu0
  %v4593 = vadd.f32 0.0, %v4592
  %4594 = vmatmul.f32.gmra.mxu0 %v2237
  %v4595 = vpop.f32.mrf.mxu0
  %v4596 = vadd.f32 0.0, %v4595
  %4597 = vmatmul.f32.gmra.mxu0 %v2240
  %v4598 = vpop.f32.mrf.mxu0
  %v4599 = vadd.f32 0.0, %v4598
  %4600 = vmatmul.f32.gmra.mxu0 %v2242
  %v4601 = vpop.f32.mrf.mxu0
  %v4602 = vadd.f32 0.0, %v4601
  %4603 = vmatmul.f32.gmra.mxu0 %v2245
  %v4604 = vpop.f32.mrf.mxu0
  %v4605 = vadd.f32 0.0, %v4604
  %4606 = vmatmul.f32.gmra.mxu0 %v2247
  %v4607 = vpop.f32.mrf.mxu0
  %v4608 = vadd.f32 0.0, %v4607
  %4609 = vmatmul.f32.gmra.mxu0 %v2250
  %v4610 = vpop.f32.mrf.mxu0
  %v4611 = vadd.f32 0.0, %v4610
  %4612 = vmatmul.f32.gmra.mxu0 %v2252
  %v4613 = vpop.f32.mrf.mxu0
  %v4614 = vadd.f32 0.0, %v4613
  %4615 = vmatmul.f32.gmra.mxu0 %v2255
  %v4616 = vpop.f32.mrf.mxu0
  %v4617 = vadd.f32 0.0, %v4616
  %4618 = vmatmul.f32.gmra.mxu0 %v2257
  %v4619 = vpop.f32.mrf.mxu0
  %v4620 = vadd.f32 0.0, %v4619
  %4621 = vmatmul.f32.gmra.mxu0 %v4395
  %v4622 = vpop.f32.mrf.mxu0
  %v4623 = vadd.f32 0.0, %v4622
  %4624 = vmatmul.f32.gmra.mxu0 %v4397
  %v4625 = vpop.f32.mrf.mxu0
  %v4626 = vadd.f32 0.0, %v4625
  %4627 = vdwg.mxu0
  %v4628 = vadd.f32 %v4318, %v4437
  %v4629 = vadd.f32 %v4319, %v4440
  %v4630 = vadd.f32 %v4320, %v4443
  %v4631 = vadd.f32 %v4321, %v4446
  %v4632 = vadd.f32 %v4322, %v4449
  %v4633 = vadd.f32 %v4323, %v4452
  %v4634 = vadd.f32 %v4324, %v4455
  %v4635 = vadd.f32 %v4325, %v4458
  %v4636 = vadd.f32 %v4326, %v4461
  %v4637 = vadd.f32 %v4327, %v4464
  %v4638 = vadd.f32 %v4328, %v4467
  %v4639 = vadd.f32 %v4329, %v4470
  %v4640 = vadd.f32 %v4330, %v4473
  %v4641 = vadd.f32 %v4331, %v4476
  %v4642 = vadd.f32 %v4332, %v4479
  %v4643 = vadd.f32 %v4333, %v4482
  %v4644 = vadd.f32 %v4334, %v4485
  %v4645 = vadd.f32 %v4335, %v4488
  %v4646 = vadd.f32 %v4336, %v4491
  %v4647 = vadd.f32 %v4337, %v4494
  %v4648 = vadd.f32 %v4338, %v4497
  %v4649 = vadd.f32 %v4339, %v4500
  %v4650 = vadd.f32 %v4340, %v4503
  %v4651 = vadd.f32 %v4341, %v4506
  %v4652 = vadd.f32 %v4342, %v4509
  %v4653 = vadd.f32 %v4343, %v4512
  %v4654 = vadd.f32 %v4344, %v4515
  %v4655 = vadd.f32 %v4345, %v4518
  %v4656 = vadd.f32 %v4346, %v4521
  %v4657 = vadd.f32 %v4347, %v4524
  %v4658 = vadd.f32 %v4348, %v4527
  %v4659 = vadd.f32 %v4349, %v4530
  %v4660 = vadd.f32 %v4350, %v4533
  %v4661 = vadd.f32 %v4351, %v4536
  %v4662 = vadd.f32 %v4352, %v4539
  %v4663 = vadd.f32 %v4353, %v4542
  %v4664 = vadd.f32 %v4354, %v4545
  %v4665 = vadd.f32 %v4355, %v4548
  %v4666 = vadd.f32 %v4356, %v4551
  %v4667 = vadd.f32 %v4357, %v4554
  %v4668 = vadd.f32 %v4358, %v4557
  %v4669 = vadd.f32 %v4359, %v4560
  %v4670 = vadd.f32 %v4360, %v4563
  %v4671 = vadd.f32 %v4361, %v4566
  %v4672 = vadd.f32 %v4362, %v4569
  %v4673 = vadd.f32 %v4363, %v4572
  %v4674 = vadd.f32 %v4364, %v4575
  %v4675 = vadd.f32 %v4365, %v4578
  %v4676 = vadd.f32 %v4366, %v4581
  %v4677 = vadd.f32 %v4367, %v4584
  %v4678 = vadd.f32 %v4368, %v4587
  %v4679 = vadd.f32 %v4369, %v4590
  %v4680 = vadd.f32 %v4370, %v4593
  %v4681 = vadd.f32 %v4371, %v4596
  %v4682 = vadd.f32 %v4372, %v4599
  %v4683 = vadd.f32 %v4373, %v4602
  %v4684 = vadd.f32 %v4374, %v4605
  %v4685 = vadd.f32 %v4375, %v4608
  %v4686 = vadd.f32 %v4376, %v4611
  %v4687 = vadd.f32 %v4377, %v4614
  %v4688 = vadd.f32 %v4378, %v4617
  %v4689 = vadd.f32 %v4379, %v4620
  %v4690 = vadd.f32 %v4380, %v4623
  %v4691 = vadd.f32 %v4381, %v4626
  %v4692 = vld [vmem:[%s2] sm:$0x1]
  %v4693 = vld [vmem:[%s2 + $0x1] sm:$0x1]
  %v4694 = vld [vmem:[%s2 + $0x2] sm:$0x1]
  %v4695 = vperm.slane %v4692, 0
  %v4696 = vadd.f32 %v4628, %v4695
  %v4697 = vadd.f32 %v4629, %v4695
  %v4698 = vadd.f32 %v4630, %v4695
  %v4699 = vadd.f32 %v4631, %v4695
  %v4700 = vadd.f32 %v4632, %v4695
  %v4701 = vadd.f32 %v4633, %v4695
  %v4702 = vadd.f32 %v4634, %v4695
  %v4703 = vadd.f32 %v4635, %v4695
  %v4704 = vadd.f32 %v4636, %v4695
  %v4705 = vadd.f32 %v4637, %v4695
  %v4706 = vadd.f32 %v4638, %v4695
  %v4707 = vadd.f32 %v4639, %v4695
  %v4708 = vadd.f32 %v4640, %v4695
  %v4709 = vadd.f32 %v4641, %v4695
  %v4710 = vadd.f32 %v4642, %v4695
  %v4711 = vadd.f32 %v4643, %v4695
  %v4712 = vadd.f32 %v4644, %v4695
  %v4713 = vadd.f32 %v4645, %v4695
  %v4714 = vadd.f32 %v4646, %v4695
  %v4715 = vadd.f32 %v4647, %v4695
  %v4716 = vadd.f32 %v4648, %v4695
  %v4717 = vadd.f32 %v4649, %v4695
  %v4718 = vadd.f32 %v4650, %v4695
  %v4719 = vadd.f32 %v4651, %v4695
  %v4720 = vadd.f32 %v4652, %v4695
  %v4721 = vadd.f32 %v4653, %v4695
  %v4722 = vadd.f32 %v4654, %v4695
  %v4723 = vadd.f32 %v4655, %v4695
  %v4724 = vadd.f32 %v4656, %v4695
  %v4725 = vadd.f32 %v4657, %v4695
  %v4726 = vadd.f32 %v4658, %v4695
  %v4727 = vadd.f32 %v4659, %v4695
  %v4728 = vadd.f32 %v4660, %v4695
  %v4729 = vadd.f32 %v4661, %v4695
  %v4730 = vadd.f32 %v4662, %v4695
  %v4731 = vadd.f32 %v4663, %v4695
  %v4732 = vadd.f32 %v4664, %v4695
  %v4733 = vadd.f32 %v4665, %v4695
  %v4734 = vadd.f32 %v4666, %v4695
  %v4735 = vadd.f32 %v4667, %v4695
  %v4736 = vadd.f32 %v4668, %v4695
  %v4737 = vadd.f32 %v4669, %v4695
  %v4738 = vadd.f32 %v4670, %v4695
  %v4739 = vadd.f32 %v4671, %v4695
  %v4740 = vadd.f32 %v4672, %v4695
  %v4741 = vadd.f32 %v4673, %v4695
  %v4742 = vadd.f32 %v4674, %v4695
  %v4743 = vadd.f32 %v4675, %v4695
  %v4744 = vadd.f32 %v4676, %v4695
  %v4745 = vadd.f32 %v4677, %v4695
  %v4746 = vadd.f32 %v4678, %v4695
  %v4747 = vadd.f32 %v4679, %v4695
  %v4748 = vadd.f32 %v4680, %v4695
  %v4749 = vadd.f32 %v4681, %v4695
  %v4750 = vadd.f32 %v4682, %v4695
  %v4751 = vadd.f32 %v4683, %v4695
  %v4752 = vadd.f32 %v4684, %v4695
  %v4753 = vadd.f32 %v4685, %v4695
  %v4754 = vadd.f32 %v4686, %v4695
  %v4755 = vadd.f32 %v4687, %v4695
  %v4756 = vadd.f32 %v4688, %v4695
  %v4757 = vadd.f32 %v4689, %v4695
  %v4758 = vadd.f32 %v4690, %v4695
  %v4759 = vadd.f32 %v4691, %v4695
  %vm4760 = vcmp.ge.f32.partialorder %v4696, 0.0
  %vm4761 = vcmp.ge.f32.partialorder %v4697, 0.0
  %vm4762 = vcmp.ge.f32.partialorder %v4698, 0.0
  %vm4763 = vcmp.ge.f32.partialorder %v4699, 0.0
  %vm4764 = vcmp.ge.f32.partialorder %v4700, 0.0
  %vm4765 = vcmp.ge.f32.partialorder %v4701, 0.0
  %vm4766 = vcmp.ge.f32.partialorder %v4702, 0.0
  %vm4767 = vcmp.ge.f32.partialorder %v4703, 0.0
  %vm4768 = vcmp.ge.f32.partialorder %v4704, 0.0
  %vm4769 = vcmp.ge.f32.partialorder %v4705, 0.0
  %vm4770 = vcmp.ge.f32.partialorder %v4706, 0.0
  %vm4771 = vcmp.ge.f32.partialorder %v4707, 0.0
  %vm4772 = vcmp.ge.f32.partialorder %v4708, 0.0
  %vm4773 = vcmp.ge.f32.partialorder %v4709, 0.0
  %vm4774 = vcmp.ge.f32.partialorder %v4710, 0.0
  %vm4775 = vcmp.ge.f32.partialorder %v4711, 0.0
  %vm4776 = vcmp.ge.f32.partialorder %v4712, 0.0
  %vm4777 = vcmp.ge.f32.partialorder %v4713, 0.0
  %vm4778 = vcmp.ge.f32.partialorder %v4714, 0.0
  %vm4779 = vcmp.ge.f32.partialorder %v4715, 0.0
  %vm4780 = vcmp.ge.f32.partialorder %v4716, 0.0
  %vm4781 = vcmp.ge.f32.partialorder %v4717, 0.0
  %vm4782 = vcmp.ge.f32.partialorder %v4718, 0.0
  %vm4783 = vcmp.ge.f32.partialorder %v4719, 0.0
  %vm4784 = vcmp.ge.f32.partialorder %v4720, 0.0
  %vm4785 = vcmp.ge.f32.partialorder %v4721, 0.0
  %vm4786 = vcmp.ge.f32.partialorder %v4722, 0.0
  %vm4787 = vcmp.ge.f32.partialorder %v4723, 0.0
  %vm4788 = vcmp.ge.f32.partialorder %v4724, 0.0
  %vm4789 = vcmp.ge.f32.partialorder %v4725, 0.0
  %vm4790 = vcmp.ge.f32.partialorder %v4726, 0.0
  %vm4791 = vcmp.ge.f32.partialorder %v4727, 0.0
  %vm4792 = vcmp.ge.f32.partialorder %v4728, 0.0
  %vm4793 = vcmp.ge.f32.partialorder %v4729, 0.0
  %vm4794 = vcmp.ge.f32.partialorder %v4730, 0.0
  %vm4795 = vcmp.ge.f32.partialorder %v4731, 0.0
  %vm4796 = vcmp.ge.f32.partialorder %v4732, 0.0
  %vm4797 = vcmp.ge.f32.partialorder %v4733, 0.0
  %vm4798 = vcmp.ge.f32.partialorder %v4734, 0.0
  %vm4799 = vcmp.ge.f32.partialorder %v4735, 0.0
  %vm4800 = vcmp.ge.f32.partialorder %v4736, 0.0
  %vm4801 = vcmp.ge.f32.partialorder %v4737, 0.0
  %vm4802 = vcmp.ge.f32.partialorder %v4738, 0.0
  %vm4803 = vcmp.ge.f32.partialorder %v4739, 0.0
  %vm4804 = vcmp.ge.f32.partialorder %v4740, 0.0
  %vm4805 = vcmp.ge.f32.partialorder %v4741, 0.0
  %vm4806 = vcmp.ge.f32.partialorder %v4742, 0.0
  %vm4807 = vcmp.ge.f32.partialorder %v4743, 0.0
  %vm4808 = vcmp.ge.f32.partialorder %v4744, 0.0
  %vm4809 = vcmp.ge.f32.partialorder %v4745, 0.0
  %vm4810 = vcmp.ge.f32.partialorder %v4746, 0.0
  %vm4811 = vcmp.ge.f32.partialorder %v4747, 0.0
  %vm4812 = vcmp.ge.f32.partialorder %v4748, 0.0
  %vm4813 = vcmp.ge.f32.partialorder %v4749, 0.0
  %vm4814 = vcmp.ge.f32.partialorder %v4750, 0.0
  %vm4815 = vcmp.ge.f32.partialorder %v4751, 0.0
  %vm4816 = vcmp.ge.f32.partialorder %v4752, 0.0
  %vm4817 = vcmp.ge.f32.partialorder %v4753, 0.0
  %vm4818 = vcmp.ge.f32.partialorder %v4754, 0.0
  %vm4819 = vcmp.ge.f32.partialorder %v4755, 0.0
  %vm4820 = vcmp.ge.f32.partialorder %v4756, 0.0
  %vm4821 = vcmp.ge.f32.partialorder %v4757, 0.0
  %vm4822 = vcmp.ge.f32.partialorder %v4758, 0.0
  %vm4823 = vcmp.ge.f32.partialorder %v4759, 0.0
  %v4824 = vmul.f32 %v4696, 0.2
  %v4825 = vmul.f32 %v4697, 0.2
  %v4826 = vmul.f32 %v4698, 0.2
  %v4827 = vmul.f32 %v4699, 0.2
  %v4828 = vmul.f32 %v4700, 0.2
  %v4829 = vmul.f32 %v4701, 0.2
  %v4830 = vmul.f32 %v4702, 0.2
  %v4831 = vmul.f32 %v4703, 0.2
  %v4832 = vmul.f32 %v4704, 0.2
  %v4833 = vmul.f32 %v4705, 0.2
  %v4834 = vmul.f32 %v4706, 0.2
  %v4835 = vmul.f32 %v4707, 0.2
  %v4836 = vmul.f32 %v4708, 0.2
  %v4837 = vmul.f32 %v4709, 0.2
  %v4838 = vmul.f32 %v4710, 0.2
  %v4839 = vmul.f32 %v4711, 0.2
  %v4840 = vmul.f32 %v4712, 0.2
  %v4841 = vmul.f32 %v4713, 0.2
  %v4842 = vmul.f32 %v4714, 0.2
  %v4843 = vmul.f32 %v4715, 0.2
  %v4844 = vmul.f32 %v4716, 0.2
  %v4845 = vmul.f32 %v4717, 0.2
  %v4846 = vmul.f32 %v4718, 0.2
  %v4847 = vmul.f32 %v4719, 0.2
  %v4848 = vmul.f32 %v4720, 0.2
  %v4849 = vmul.f32 %v4721, 0.2
  %v4850 = vmul.f32 %v4722, 0.2
  %v4851 = vmul.f32 %v4723, 0.2
  %v4852 = vmul.f32 %v4724, 0.2
  %v4853 = vmul.f32 %v4725, 0.2
  %v4854 = vmul.f32 %v4726, 0.2
  %v4855 = vmul.f32 %v4727, 0.2
  %v4856 = vmul.f32 %v4728, 0.2
  %v4857 = vmul.f32 %v4729, 0.2
  %v4858 = vmul.f32 %v4730, 0.2
  %v4859 = vmul.f32 %v4731, 0.2
  %v4860 = vmul.f32 %v4732, 0.2
  %v4861 = vmul.f32 %v4733, 0.2
  %v4862 = vmul.f32 %v4734, 0.2
  %v4863 = vmul.f32 %v4735, 0.2
  %v4864 = vmul.f32 %v4736, 0.2
  %v4865 = vmul.f32 %v4737, 0.2
  %v4866 = vmul.f32 %v4738, 0.2
  %v4867 = vmul.f32 %v4739, 0.2
  %v4868 = vmul.f32 %v4740, 0.2
  %v4869 = vmul.f32 %v4741, 0.2
  %v4870 = vmul.f32 %v4742, 0.2
  %v4871 = vmul.f32 %v4743, 0.2
  %v4872 = vmul.f32 %v4744, 0.2
  %v4873 = vmul.f32 %v4745, 0.2
  %v4874 = vmul.f32 %v4746, 0.2
  %v4875 = vmul.f32 %v4747, 0.2
  %v4876 = vmul.f32 %v4748, 0.2
  %v4877 = vmul.f32 %v4749, 0.2
  %v4878 = vmul.f32 %v4750, 0.2
  %v4879 = vmul.f32 %v4751, 0.2
  %v4880 = vmul.f32 %v4752, 0.2
  %v4881 = vmul.f32 %v4753, 0.2
  %v4882 = vmul.f32 %v4754, 0.2
  %v4883 = vmul.f32 %v4755, 0.2
  %v4884 = vmul.f32 %v4756, 0.2
  %v4885 = vmul.f32 %v4757, 0.2
  %v4886 = vmul.f32 %v4758, 0.2
  %v4887 = vmul.f32 %v4759, 0.2
  %v4888 = vsel %vm4760, %v4696, %v4824
  %v4889 = vsel %vm4761, %v4697, %v4825
  %v4890 = vsel %vm4762, %v4698, %v4826
  %v4891 = vsel %vm4763, %v4699, %v4827
  %v4892 = vsel %vm4764, %v4700, %v4828
  %v4893 = vsel %vm4765, %v4701, %v4829
  %v4894 = vsel %vm4766, %v4702, %v4830
  %v4895 = vsel %vm4767, %v4703, %v4831
  %v4896 = vsel %vm4768, %v4704, %v4832
  %v4897 = vsel %vm4769, %v4705, %v4833
  %v4898 = vsel %vm4770, %v4706, %v4834
  %v4899 = vsel %vm4771, %v4707, %v4835
  %v4900 = vsel %vm4772, %v4708, %v4836
  %v4901 = vsel %vm4773, %v4709, %v4837
  %v4902 = vsel %vm4774, %v4710, %v4838
  %v4903 = vsel %vm4775, %v4711, %v4839
  %v4904 = vsel %vm4776, %v4712, %v4840
  %v4905 = vsel %vm4777, %v4713, %v4841
  %v4906 = vsel %vm4778, %v4714, %v4842
  %v4907 = vsel %vm4779, %v4715, %v4843
  %v4908 = vsel %vm4780, %v4716, %v4844
  %v4909 = vsel %vm4781, %v4717, %v4845
  %v4910 = vsel %vm4782, %v4718, %v4846
  %v4911 = vsel %vm4783, %v4719, %v4847
  %v4912 = vsel %vm4784, %v4720, %v4848
  %v4913 = vsel %vm4785, %v4721, %v4849
  %v4914 = vsel %vm4786, %v4722, %v4850
  %v4915 = vsel %vm4787, %v4723, %v4851
  %v4916 = vsel %vm4788, %v4724, %v4852
  %v4917 = vsel %vm4789, %v4725, %v4853
  %v4918 = vsel %vm4790, %v4726, %v4854
  %v4919 = vsel %vm4791, %v4727, %v4855
  %v4920 = vsel %vm4792, %v4728, %v4856
  %v4921 = vsel %vm4793, %v4729, %v4857
  %v4922 = vsel %vm4794, %v4730, %v4858
  %v4923 = vsel %vm4795, %v4731, %v4859
  %v4924 = vsel %vm4796, %v4732, %v4860
  %v4925 = vsel %vm4797, %v4733, %v4861
  %v4926 = vsel %vm4798, %v4734, %v4862
  %v4927 = vsel %vm4799, %v4735, %v4863
  %v4928 = vsel %vm4800, %v4736, %v4864
  %v4929 = vsel %vm4801, %v4737, %v4865
  %v4930 = vsel %vm4802, %v4738, %v4866
  %v4931 = vsel %vm4803, %v4739, %v4867
  %v4932 = vsel %vm4804, %v4740, %v4868
  %v4933 = vsel %vm4805, %v4741, %v4869
  %v4934 = vsel %vm4806, %v4742, %v4870
  %v4935 = vsel %vm4807, %v4743, %v4871
  %v4936 = vsel %vm4808, %v4744, %v4872
  %v4937 = vsel %vm4809, %v4745, %v4873
  %v4938 = vsel %vm4810, %v4746, %v4874
  %v4939 = vsel %vm4811, %v4747, %v4875
  %v4940 = vsel %vm4812, %v4748, %v4876
  %v4941 = vsel %vm4813, %v4749, %v4877
  %v4942 = vsel %vm4814, %v4750, %v4878
  %v4943 = vsel %vm4815, %v4751, %v4879
  %v4944 = vsel %vm4816, %v4752, %v4880
  %v4945 = vsel %vm4817, %v4753, %v4881
  %v4946 = vsel %vm4818, %v4754, %v4882
  %v4947 = vsel %vm4819, %v4755, %v4883
  %v4948 = vsel %vm4820, %v4756, %v4884
  %v4949 = vsel %vm4821, %v4757, %v4885
  %v4950 = vsel %vm4822, %v4758, %v4886
  %v4951 = vsel %vm4823, %v4759, %v4887
  %v4952 = vperm.slane %v4693, 0
  %v4953 = vmul.f32 %v4888, %v4952
  %v4954 = vmul.f32 %v4889, %v4952
  %v4955 = vmul.f32 %v4890, %v4952
  %v4956 = vmul.f32 %v4891, %v4952
  %v4957 = vmul.f32 %v4892, %v4952
  %v4958 = vmul.f32 %v4893, %v4952
  %v4959 = vmul.f32 %v4894, %v4952
  %v4960 = vmul.f32 %v4895, %v4952
  %v4961 = vmul.f32 %v4896, %v4952
  %v4962 = vmul.f32 %v4897, %v4952
  %v4963 = vmul.f32 %v4898, %v4952
  %v4964 = vmul.f32 %v4899, %v4952
  %v4965 = vmul.f32 %v4900, %v4952
  %v4966 = vmul.f32 %v4901, %v4952
  %v4967 = vmul.f32 %v4902, %v4952
  %v4968 = vmul.f32 %v4903, %v4952
  %v4969 = vmul.f32 %v4904, %v4952
  %v4970 = vmul.f32 %v4905, %v4952
  %v4971 = vmul.f32 %v4906, %v4952
  %v4972 = vmul.f32 %v4907, %v4952
  %v4973 = vmul.f32 %v4908, %v4952
  %v4974 = vmul.f32 %v4909, %v4952
  %v4975 = vmul.f32 %v4910, %v4952
  %v4976 = vmul.f32 %v4911, %v4952
  %v4977 = vmul.f32 %v4912, %v4952
  %v4978 = vmul.f32 %v4913, %v4952
  %v4979 = vmul.f32 %v4914, %v4952
  %v4980 = vmul.f32 %v4915, %v4952
  %v4981 = vmul.f32 %v4916, %v4952
  %v4982 = vmul.f32 %v4917, %v4952
  %v4983 = vmul.f32 %v4918, %v4952
  %v4984 = vmul.f32 %v4919, %v4952
  %v4985 = vmul.f32 %v4920, %v4952
  %v4986 = vmul.f32 %v4921, %v4952
  %v4987 = vmul.f32 %v4922, %v4952
  %v4988 = vmul.f32 %v4923, %v4952
  %v4989 = vmul.f32 %v4924, %v4952
  %v4990 = vmul.f32 %v4925, %v4952
  %v4991 = vmul.f32 %v4926, %v4952
  %v4992 = vmul.f32 %v4927, %v4952
  %v4993 = vmul.f32 %v4928, %v4952
  %v4994 = vmul.f32 %v4929, %v4952
  %v4995 = vmul.f32 %v4930, %v4952
  %v4996 = vmul.f32 %v4931, %v4952
  %v4997 = vmul.f32 %v4932, %v4952
  %v4998 = vmul.f32 %v4933, %v4952
  %v4999 = vmul.f32 %v4934, %v4952
  %v5000 = vmul.f32 %v4935, %v4952
  %v5001 = vmul.f32 %v4936, %v4952
  %v5002 = vmul.f32 %v4937, %v4952
  %v5003 = vmul.f32 %v4938, %v4952
  %v5004 = vmul.f32 %v4939, %v4952
  %v5005 = vmul.f32 %v4940, %v4952
  %v5006 = vmul.f32 %v4941, %v4952
  %v5007 = vmul.f32 %v4942, %v4952
  %v5008 = vmul.f32 %v4943, %v4952
  %v5009 = vmul.f32 %v4944, %v4952
  %v5010 = vmul.f32 %v4945, %v4952
  %v5011 = vmul.f32 %v4946, %v4952
  %v5012 = vmul.f32 %v4947, %v4952
  %v5013 = vmul.f32 %v4948, %v4952
  %v5014 = vmul.f32 %v4949, %v4952
  %v5015 = vmul.f32 %v4950, %v4952
  %v5016 = vmul.f32 %v4951, %v4952
  %v5017 = vperm.slane %v4694, 0
  %v5018 = vadd.f32 %v4953, %v5017
  %v5019 = vadd.f32 %v4954, %v5017
  %v5020 = vadd.f32 %v4955, %v5017
  %v5021 = vadd.f32 %v4956, %v5017
  %v5022 = vadd.f32 %v4957, %v5017
  %v5023 = vadd.f32 %v4958, %v5017
  %v5024 = vadd.f32 %v4959, %v5017
  %v5025 = vadd.f32 %v4960, %v5017
  %v5026 = vadd.f32 %v4961, %v5017
  %v5027 = vadd.f32 %v4962, %v5017
  %v5028 = vadd.f32 %v4963, %v5017
  %v5029 = vadd.f32 %v4964, %v5017
  %v5030 = vadd.f32 %v4965, %v5017
  %v5031 = vadd.f32 %v4966, %v5017
  %v5032 = vadd.f32 %v4967, %v5017
  %v5033 = vadd.f32 %v4968, %v5017
  %v5034 = vadd.f32 %v4969, %v5017
  %v5035 = vadd.f32 %v4970, %v5017
  %v5036 = vadd.f32 %v4971, %v5017
  %v5037 = vadd.f32 %v4972, %v5017
  %v5038 = vadd.f32 %v4973, %v5017
  %v5039 = vadd.f32 %v4974, %v5017
  %v5040 = vadd.f32 %v4975, %v5017
  %v5041 = vadd.f32 %v4976, %v5017
  %v5042 = vadd.f32 %v4977, %v5017
  %v5043 = vadd.f32 %v4978, %v5017
  %v5044 = vadd.f32 %v4979, %v5017
  %v5045 = vadd.f32 %v4980, %v5017
  %v5046 = vadd.f32 %v4981, %v5017
  %v5047 = vadd.f32 %v4982, %v5017
  %v5048 = vadd.f32 %v4983, %v5017
  %v5049 = vadd.f32 %v4984, %v5017
  %v5050 = vadd.f32 %v4985, %v5017
  %v5051 = vadd.f32 %v4986, %v5017
  %v5052 = vadd.f32 %v4987, %v5017
  %v5053 = vadd.f32 %v4988, %v5017
  %v5054 = vadd.f32 %v4989, %v5017
  %v5055 = vadd.f32 %v4990, %v5017
  %v5056 = vadd.f32 %v4991, %v5017
  %v5057 = vadd.f32 %v4992, %v5017
  %v5058 = vadd.f32 %v4993, %v5017
  %v5059 = vadd.f32 %v4994, %v5017
  %v5060 = vadd.f32 %v4995, %v5017
  %v5061 = vadd.f32 %v4996, %v5017
  %v5062 = vadd.f32 %v4997, %v5017
  %v5063 = vadd.f32 %v4998, %v5017
  %v5064 = vadd.f32 %v4999, %v5017
  %v5065 = vadd.f32 %v5000, %v5017
  %v5066 = vadd.f32 %v5001, %v5017
  %v5067 = vadd.f32 %v5002, %v5017
  %v5068 = vadd.f32 %v5003, %v5017
  %v5069 = vadd.f32 %v5004, %v5017
  %v5070 = vadd.f32 %v5005, %v5017
  %v5071 = vadd.f32 %v5006, %v5017
  %v5072 = vadd.f32 %v5007, %v5017
  %v5073 = vadd.f32 %v5008, %v5017
  %v5074 = vadd.f32 %v5009, %v5017
  %v5075 = vadd.f32 %v5010, %v5017
  %v5076 = vadd.f32 %v5011, %v5017
  %v5077 = vadd.f32 %v5012, %v5017
  %v5078 = vadd.f32 %v5013, %v5017
  %v5079 = vadd.f32 %v5014, %v5017
  %v5080 = vadd.f32 %v5015, %v5017
  %v5081 = vadd.f32 %v5016, %v5017
  %5082 = vst [vmem:[#allocation3] sm:$0xff] 0.0
  %5083 = vst [vmem:[#allocation3 + $0x8] sm:$0xff] 0.0
  %5084 = vst [vmem:[#allocation3 + $0x10] sm:$0x3] 0.0
  %5085 = vst [vmem:[#allocation3 + $0x18] sm:$0xff] 0.0
  %5086 = vst [vmem:[#allocation3 + $0x20] sm:$0xff] 0.0
  %5087 = vst [vmem:[#allocation3 + $0x28] sm:$0x3] 0.0
  %5088 = vst [vmem:[#allocation3 + $0x30] sm:$0xff] 0.0
  %5089 = vst [vmem:[#allocation3 + $0x38] sm:$0xff] 0.0
  %5090 = vst [vmem:[#allocation3 + $0x40] sm:$0x3] 0.0
  %5091 = vst [vmem:[#allocation3 + $0x48] sm:$0xff] 0.0
  %5092 = vst [vmem:[#allocation3 + $0x50] sm:$0xff] 0.0
  %5093 = vst [vmem:[#allocation3 + $0x58] sm:$0x3] 0.0
  %5094 = vst [vmem:[#allocation3 + $0x60] sm:$0xff] 0.0
  %5095 = vst [vmem:[#allocation3 + $0x68] sm:$0xff] 0.0
  %5096 = vst [vmem:[#allocation3 + $0x70] sm:$0x3] 0.0
  %5097 = vst [vmem:[#allocation3 + $0x78] sm:$0xff] 0.0
  %5098 = vst [vmem:[#allocation3 + $0x80] sm:$0xff] 0.0
  %5099 = vst [vmem:[#allocation3 + $0x88] sm:$0x3] 0.0
  %5100 = vst [vmem:[#allocation3 + $0x90] sm:$0xff] 0.0
  %5101 = vst [vmem:[#allocation3 + $0x98] sm:$0xff] 0.0
  %5102 = vst [vmem:[#allocation3 + $0xa0] sm:$0x3] 0.0
  %5103 = vst [vmem:[#allocation3 + $0xa8] sm:$0xff] 0.0
  %5104 = vst [vmem:[#allocation3 + $0xb0] sm:$0xff] 0.0
  %5105 = vst [vmem:[#allocation3 + $0xb8] sm:$0x3] 0.0
  %5106 = vst [vmem:[#allocation3 + $0xc0] sm:$0xff] 0.0
  %5107 = vst [vmem:[#allocation3 + $0xc8] sm:$0xff] 0.0
  %5108 = vst [vmem:[#allocation3 + $0xd0] sm:$0x3] 0.0
  %5109 = vst [vmem:[#allocation3 + $0xd8] sm:$0xff] 0.0
  %5110 = vst [vmem:[#allocation3 + $0xe0] sm:$0xff] 0.0
  %5111 = vst [vmem:[#allocation3 + $0xe8] sm:$0x3] 0.0
  %5112 = vst [vmem:[#allocation3 + $0xf0] sm:$0xff] 0.0
  %5113 = vst [vmem:[#allocation3 + $0xf8] sm:$0xff] 0.0
  %5114 = vst [vmem:[#allocation3 + $0x100] sm:$0x3] 0.0
  %5115 = vst [vmem:[#allocation3 + $0x108] sm:$0xff] 0.0
  %5116 = vst [vmem:[#allocation3 + $0x110] sm:$0xff] 0.0
  %5117 = vst [vmem:[#allocation3 + $0x118] sm:$0x3] 0.0
  %5118 = vst [vmem:[#allocation3 + $0x120] sm:$0xff] 0.0
  %5119 = vst [vmem:[#allocation3 + $0x128] sm:$0xff] 0.0
  %5120 = vst [vmem:[#allocation3 + $0x130] sm:$0x3] 0.0
  %5121 = vst [vmem:[#allocation3 + $0x138] sm:$0xff] 0.0
  %5122 = vst [vmem:[#allocation3 + $0x140] sm:$0xff] 0.0
  %5123 = vst [vmem:[#allocation3 + $0x148] sm:$0x3] 0.0
  %5124 = vst [vmem:[#allocation3 + $0x150] sm:$0xff] 0.0
  %5125 = vst [vmem:[#allocation3 + $0x158] sm:$0xff] 0.0
  %5126 = vst [vmem:[#allocation3 + $0x160] sm:$0x3] 0.0
  %5127 = vst [vmem:[#allocation3 + $0x168] sm:$0xff] 0.0
  %5128 = vst [vmem:[#allocation3 + $0x170] sm:$0xff] 0.0
  %5129 = vst [vmem:[#allocation3 + $0x178] sm:$0x3] 0.0
  %5130 = vst [vmem:[#allocation3 + $0x180] sm:$0xff] 0.0
  %5131 = vst [vmem:[#allocation3 + $0x188] sm:$0xff] 0.0
  %5132 = vst [vmem:[#allocation3 + $0x190] sm:$0x3] 0.0
  %5133 = vst [vmem:[#allocation3 + $0x198] sm:$0xff] 0.0
  %5134 = vst [vmem:[#allocation3 + $0x1a0] sm:$0xff] 0.0
  %5135 = vst [vmem:[#allocation3 + $0x1a8] sm:$0x3] 0.0
  %5136 = vst [vmem:[#allocation3 + $0x1b0] sm:$0xff] 0.0
  %5137 = vst [vmem:[#allocation3 + $0x1b8] sm:$0xff] 0.0
  %5138 = vst [vmem:[#allocation3 + $0x1c0] sm:$0x3] 0.0
  %5139 = vst [vmem:[#allocation3 + $0x1c8] sm:$0xff] 0.0
  %5140 = vst [vmem:[#allocation3 + $0x1d0] sm:$0xff] 0.0
  %5141 = vst [vmem:[#allocation3 + $0x1d8] sm:$0x3] 0.0
  %5142 = vst [vmem:[#allocation3 + $0x1e0] sm:$0xff] 0.0
  %5143 = vst [vmem:[#allocation3 + $0x1e8] sm:$0xff] 0.0
  %5144 = vst [vmem:[#allocation3 + $0x1f0] sm:$0x3] 0.0
  %5145 = vst [vmem:[#allocation3 + $0x1f8] sm:$0xff] 0.0
  %5146 = vst [vmem:[#allocation3 + $0x200] sm:$0xff] 0.0
  %5147 = vst [vmem:[#allocation3 + $0x208] sm:$0x3] 0.0
  %5148 = vst [vmem:[#allocation3 + $0x210] sm:$0xff] 0.0
  %5149 = vst [vmem:[#allocation3 + $0x218] sm:$0xff] 0.0
  %5150 = vst [vmem:[#allocation3 + $0x220] sm:$0x3] 0.0
  %5151 = vst [vmem:[#allocation3 + $0x228] sm:$0xff] 0.0
  %5152 = vst [vmem:[#allocation3 + $0x230] sm:$0xff] 0.0
  %5153 = vst [vmem:[#allocation3 + $0x238] sm:$0x3] 0.0
  %5154 = vst [vmem:[#allocation3 + $0x240] sm:$0xff] 0.0
  %5155 = vst [vmem:[#allocation3 + $0x248] sm:$0xff] 0.0
  %5156 = vst [vmem:[#allocation3 + $0x250] sm:$0x3] 0.0
  %5157 = vst [vmem:[#allocation3 + $0x258] sm:$0xff] 0.0
  %5158 = vst [vmem:[#allocation3 + $0x260] sm:$0xff] 0.0
  %5159 = vst [vmem:[#allocation3 + $0x268] sm:$0x3] 0.0
  %5160 = vst [vmem:[#allocation3 + $0x270] sm:$0xff] 0.0
  %5161 = vst [vmem:[#allocation3 + $0x278] sm:$0xff] 0.0
  %5162 = vst [vmem:[#allocation3 + $0x280] sm:$0x3] 0.0
  %5163 = vst [vmem:[#allocation3 + $0x288] sm:$0xff] 0.0
  %5164 = vst [vmem:[#allocation3 + $0x290] sm:$0xff] 0.0
  %5165 = vst [vmem:[#allocation3 + $0x298] sm:$0x3] 0.0
  %5166 = vst [vmem:[#allocation3 + $0x2a0] sm:$0xff] 0.0
  %5167 = vst [vmem:[#allocation3 + $0x2a8] sm:$0xff] 0.0
  %5168 = vst [vmem:[#allocation3 + $0x2b0] sm:$0x3] 0.0
  %5169 = vst [vmem:[#allocation3 + $0x2b8] sm:$0xff] 0.0
  %5170 = vst [vmem:[#allocation3 + $0x2c0] sm:$0xff] 0.0
  %5171 = vst [vmem:[#allocation3 + $0x2c8] sm:$0x3] 0.0
  %5172 = vst [vmem:[#allocation3 + $0x2d0] sm:$0xff] 0.0
  %5173 = vst [vmem:[#allocation3 + $0x2d8] sm:$0xff] 0.0
  %5174 = vst [vmem:[#allocation3 + $0x2e0] sm:$0x3] 0.0
  %5175 = vst [vmem:[#allocation3 + $0x2e8] sm:$0xff] 0.0
  %5176 = vst [vmem:[#allocation3 + $0x2f0] sm:$0xff] 0.0
  %5177 = vst [vmem:[#allocation3 + $0x2f8] sm:$0x3] 0.0
  %5178 = vst [vmem:[#allocation3 + $0x300] sm:$0xff] 0.0
  %5179 = vst [vmem:[#allocation3 + $0x308] sm:$0xff] 0.0
  %5180 = vst [vmem:[#allocation3 + $0x310] sm:$0x3] 0.0
  %5181 = vst [vmem:[#allocation3 + $0x318] sm:$0xff] 0.0
  %5182 = vst [vmem:[#allocation3 + $0x320] sm:$0xff] 0.0
  %5183 = vst [vmem:[#allocation3 + $0x328] sm:$0x3] 0.0
  %5184 = vst [vmem:[#allocation3 + $0x330] sm:$0xff] 0.0
  %5185 = vst [vmem:[#allocation3 + $0x338] sm:$0xff] 0.0
  %5186 = vst [vmem:[#allocation3 + $0x340] sm:$0x3] 0.0
  %5187 = vst [vmem:[#allocation3 + $0x348] sm:$0xff] 0.0
  %5188 = vst [vmem:[#allocation3 + $0x350] sm:$0xff] 0.0
  %5189 = vst [vmem:[#allocation3 + $0x358] sm:$0x3] 0.0
  %s5190 = scalar_lea.vmem [#allocation3], 24
  %5191 = vst [vmem:[%s5190 + $0x1] sm:$0xff] %v5018
  %5192 = vst [vmem:[%s5190 + $0x9] sm:$0xff] %v5019
  %5193 = vst [vmem:[%s5190 + $0x19] sm:$0xff] %v5020
  %5194 = vst [vmem:[%s5190 + $0x21] sm:$0xff] %v5021
  %5195 = vst [vmem:[%s5190 + $0x31] sm:$0xff] %v5022
  %5196 = vst [vmem:[%s5190 + $0x39] sm:$0xff] %v5023
  %5197 = vst [vmem:[%s5190 + $0x49] sm:$0xff] %v5024
  %5198 = vst [vmem:[%s5190 + $0x51] sm:$0xff] %v5025
  %5199 = vst [vmem:[%s5190 + $0x61] sm:$0xff] %v5026
  %5200 = vst [vmem:[%s5190 + $0x69] sm:$0xff] %v5027
  %5201 = vst [vmem:[%s5190 + $0x79] sm:$0xff] %v5028
  %5202 = vst [vmem:[%s5190 + $0x81] sm:$0xff] %v5029
  %5203 = vst [vmem:[%s5190 + $0x91] sm:$0xff] %v5030
  %5204 = vst [vmem:[%s5190 + $0x99] sm:$0xff] %v5031
  %5205 = vst [vmem:[%s5190 + $0xa9] sm:$0xff] %v5032
  %5206 = vst [vmem:[%s5190 + $0xb1] sm:$0xff] %v5033
  %5207 = vst [vmem:[%s5190 + $0xc1] sm:$0xff] %v5034
  %5208 = vst [vmem:[%s5190 + $0xc9] sm:$0xff] %v5035
  %5209 = vst [vmem:[%s5190 + $0xd9] sm:$0xff] %v5036
  %5210 = vst [vmem:[%s5190 + $0xe1] sm:$0xff] %v5037
  %5211 = vst [vmem:[%s5190 + $0xf1] sm:$0xff] %v5038
  %5212 = vst [vmem:[%s5190 + $0xf9] sm:$0xff] %v5039
  %5213 = vst [vmem:[%s5190 + $0x109] sm:$0xff] %v5040
  %5214 = vst [vmem:[%s5190 + $0x111] sm:$0xff] %v5041
  %5215 = vst [vmem:[%s5190 + $0x121] sm:$0xff] %v5042
  %5216 = vst [vmem:[%s5190 + $0x129] sm:$0xff] %v5043
  %5217 = vst [vmem:[%s5190 + $0x139] sm:$0xff] %v5044
  %5218 = vst [vmem:[%s5190 + $0x141] sm:$0xff] %v5045
  %5219 = vst [vmem:[%s5190 + $0x151] sm:$0xff] %v5046
  %5220 = vst [vmem:[%s5190 + $0x159] sm:$0xff] %v5047
  %5221 = vst [vmem:[%s5190 + $0x169] sm:$0xff] %v5048
  %5222 = vst [vmem:[%s5190 + $0x171] sm:$0xff] %v5049
  %5223 = vst [vmem:[%s5190 + $0x1b1] sm:$0xff] %v5050
  %5224 = vst [vmem:[%s5190 + $0x1b9] sm:$0xff] %v5051
  %5225 = vst [vmem:[%s5190 + $0x1c9] sm:$0xff] %v5052
  %5226 = vst [vmem:[%s5190 + $0x1d1] sm:$0xff] %v5053
  %5227 = vst [vmem:[%s5190 + $0x1e1] sm:$0xff] %v5054
  %5228 = vst [vmem:[%s5190 + $0x1e9] sm:$0xff] %v5055
  %5229 = vst [vmem:[%s5190 + $0x1f9] sm:$0xff] %v5056
  %5230 = vst [vmem:[%s5190 + $0x201] sm:$0xff] %v5057
  %5231 = vst [vmem:[%s5190 + $0x211] sm:$0xff] %v5058
  %5232 = vst [vmem:[%s5190 + $0x219] sm:$0xff] %v5059
  %5233 = vst [vmem:[%s5190 + $0x229] sm:$0xff] %v5060
  %5234 = vst [vmem:[%s5190 + $0x231] sm:$0xff] %v5061
  %5235 = vst [vmem:[%s5190 + $0x241] sm:$0xff] %v5062
  %5236 = vst [vmem:[%s5190 + $0x249] sm:$0xff] %v5063
  %5237 = vst [vmem:[%s5190 + $0x259] sm:$0xff] %v5064
  %5238 = vst [vmem:[%s5190 + $0x261] sm:$0xff] %v5065
  %5239 = vst [vmem:[%s5190 + $0x271] sm:$0xff] %v5066
  %5240 = vst [vmem:[%s5190 + $0x279] sm:$0xff] %v5067
  %5241 = vst [vmem:[%s5190 + $0x289] sm:$0xff] %v5068
  %5242 = vst [vmem:[%s5190 + $0x291] sm:$0xff] %v5069
  %5243 = vst [vmem:[%s5190 + $0x2a1] sm:$0xff] %v5070
  %5244 = vst [vmem:[%s5190 + $0x2a9] sm:$0xff] %v5071
  %5245 = vst [vmem:[%s5190 + $0x2b9] sm:$0xff] %v5072
  %5246 = vst [vmem:[%s5190 + $0x2c1] sm:$0xff] %v5073
  %5247 = vst [vmem:[%s5190 + $0x2d1] sm:$0xff] %v5074
  %5248 = vst [vmem:[%s5190 + $0x2d9] sm:$0xff] %v5075
  %5249 = vst [vmem:[%s5190 + $0x2e9] sm:$0xff] %v5076
  %5250 = vst [vmem:[%s5190 + $0x2f1] sm:$0xff] %v5077
  %5251 = vst [vmem:[%s5190 + $0x301] sm:$0xff] %v5078
  %5252 = vst [vmem:[%s5190 + $0x309] sm:$0xff] %v5079
  %5253 = vst [vmem:[%s5190 + $0x319] sm:$0xff] %v5080
  %5254 = vst [vmem:[%s5190 + $0x321] sm:$0xff] %v5081
  %v5255 = vld [vmem:[#allocation3] ss:$2 sm:$0xff]
  %s5256 = scalar_lea.vmem [#allocation3], 16
  %v5257 = vld [vmem:[%s5256] ss:$2 sm:$0x1]
  %s5258 = scalar_lea.vmem [#allocation3], 24
  %v5259 = vld [vmem:[%s5258] ss:$2 sm:$0xff]
  %s5260 = scalar_lea.vmem [#allocation3], 40
  %v5261 = vld [vmem:[%s5260] ss:$2 sm:$0x1]
  %s5262 = scalar_lea.vmem [#allocation3], 48
  %v5263 = vld [vmem:[%s5262] ss:$2 sm:$0xff]
  %s5264 = scalar_lea.vmem [#allocation3], 64
  %v5265 = vld [vmem:[%s5264] ss:$2 sm:$0x1]
  %s5266 = scalar_lea.vmem [#allocation3], 72
  %v5267 = vld [vmem:[%s5266] ss:$2 sm:$0xff]
  %s5268 = scalar_lea.vmem [#allocation3], 88
  %v5269 = vld [vmem:[%s5268] ss:$2 sm:$0x1]
  %s5270 = scalar_lea.vmem [#allocation3], 96
  %v5271 = vld [vmem:[%s5270] ss:$2 sm:$0xff]
  %s5272 = scalar_lea.vmem [#allocation3], 112
  %v5273 = vld [vmem:[%s5272] ss:$2 sm:$0x1]
  %s5274 = scalar_lea.vmem [#allocation3], 120
  %v5275 = vld [vmem:[%s5274] ss:$2 sm:$0xff]
  %s5276 = scalar_lea.vmem [#allocation3], 136
  %v5277 = vld [vmem:[%s5276] ss:$2 sm:$0x1]
  %s5278 = scalar_lea.vmem [#allocation3], 144
  %v5279 = vld [vmem:[%s5278] ss:$2 sm:$0xff]
  %s5280 = scalar_lea.vmem [#allocation3], 160
  %v5281 = vld [vmem:[%s5280] ss:$2 sm:$0x1]
  %s5282 = scalar_lea.vmem [#allocation3], 168
  %v5283 = vld [vmem:[%s5282] ss:$2 sm:$0xff]
  %s5284 = scalar_lea.vmem [#allocation3], 184
  %v5285 = vld [vmem:[%s5284] ss:$2 sm:$0x1]
  %s5286 = scalar_lea.vmem [#allocation3], 192
  %v5287 = vld [vmem:[%s5286] ss:$2 sm:$0xff]
  %s5288 = scalar_lea.vmem [#allocation3], 208
  %v5289 = vld [vmem:[%s5288] ss:$2 sm:$0x1]
  %s5290 = scalar_lea.vmem [#allocation3], 216
  %v5291 = vld [vmem:[%s5290] ss:$2 sm:$0xff]
  %s5292 = scalar_lea.vmem [#allocation3], 232
  %v5293 = vld [vmem:[%s5292] ss:$2 sm:$0x1]
  %s5294 = scalar_lea.vmem [#allocation3], 240
  %v5295 = vld [vmem:[%s5294] ss:$2 sm:$0xff]
  %s5296 = scalar_lea.vmem [#allocation3], 256
  %v5297 = vld [vmem:[%s5296] ss:$2 sm:$0x1]
  %s5298 = scalar_lea.vmem [#allocation3], 264
  %v5299 = vld [vmem:[%s5298] ss:$2 sm:$0xff]
  %s5300 = scalar_lea.vmem [#allocation3], 280
  %v5301 = vld [vmem:[%s5300] ss:$2 sm:$0x1]
  %s5302 = scalar_lea.vmem [#allocation3], 288
  %v5303 = vld [vmem:[%s5302] ss:$2 sm:$0xff]
  %s5304 = scalar_lea.vmem [#allocation3], 304
  %v5305 = vld [vmem:[%s5304] ss:$2 sm:$0x1]
  %s5306 = scalar_lea.vmem [#allocation3], 312
  %v5307 = vld [vmem:[%s5306] ss:$2 sm:$0xff]
  %s5308 = scalar_lea.vmem [#allocation3], 328
  %v5309 = vld [vmem:[%s5308] ss:$2 sm:$0x1]
  %s5310 = scalar_lea.vmem [#allocation3], 336
  %v5311 = vld [vmem:[%s5310] ss:$2 sm:$0xff]
  %s5312 = scalar_lea.vmem [#allocation3], 352
  %v5313 = vld [vmem:[%s5312] ss:$2 sm:$0x1]
  %s5314 = scalar_lea.vmem [#allocation3], 360
  %v5315 = vld [vmem:[%s5314] ss:$2 sm:$0xff]
  %s5316 = scalar_lea.vmem [#allocation3], 376
  %v5317 = vld [vmem:[%s5316] ss:$2 sm:$0x1]
  %s5318 = scalar_lea.vmem [#allocation3], 384
  %v5319 = vld [vmem:[%s5318] ss:$2 sm:$0xff]
  %s5320 = scalar_lea.vmem [#allocation3], 400
  %v5321 = vld [vmem:[%s5320] ss:$2 sm:$0x1]
  %s5322 = scalar_lea.vmem [#allocation3], 432
  %v5323 = vld [vmem:[%s5322] ss:$2 sm:$0xff]
  %s5324 = scalar_lea.vmem [#allocation3], 448
  %v5325 = vld [vmem:[%s5324] ss:$2 sm:$0x1]
  %s5326 = scalar_lea.vmem [#allocation3], 456
  %v5327 = vld [vmem:[%s5326] ss:$2 sm:$0xff]
  %s5328 = scalar_lea.vmem [#allocation3], 472
  %v5329 = vld [vmem:[%s5328] ss:$2 sm:$0x1]
  %s5330 = scalar_lea.vmem [#allocation3], 480
  %v5331 = vld [vmem:[%s5330] ss:$2 sm:$0xff]
  %s5332 = scalar_lea.vmem [#allocation3], 496
  %v5333 = vld [vmem:[%s5332] ss:$2 sm:$0x1]
  %s5334 = scalar_lea.vmem [#allocation3], 504
  %v5335 = vld [vmem:[%s5334] ss:$2 sm:$0xff]
  %s5336 = scalar_lea.vmem [#allocation3], 520
  %v5337 = vld [vmem:[%s5336] ss:$2 sm:$0x1]
  %s5338 = scalar_lea.vmem [#allocation3], 528
  %v5339 = vld [vmem:[%s5338] ss:$2 sm:$0xff]
  %s5340 = scalar_lea.vmem [#allocation3], 544
  %v5341 = vld [vmem:[%s5340] ss:$2 sm:$0x1]
  %s5342 = scalar_lea.vmem [#allocation3], 552
  %v5343 = vld [vmem:[%s5342] ss:$2 sm:$0xff]
  %s5344 = scalar_lea.vmem [#allocation3], 568
  %v5345 = vld [vmem:[%s5344] ss:$2 sm:$0x1]
  %s5346 = scalar_lea.vmem [#allocation3], 576
  %v5347 = vld [vmem:[%s5346] ss:$2 sm:$0xff]
  %s5348 = scalar_lea.vmem [#allocation3], 592
  %v5349 = vld [vmem:[%s5348] ss:$2 sm:$0x1]
  %s5350 = scalar_lea.vmem [#allocation3], 600
  %v5351 = vld [vmem:[%s5350] ss:$2 sm:$0xff]
  %s5352 = scalar_lea.vmem [#allocation3], 616
  %v5353 = vld [vmem:[%s5352] ss:$2 sm:$0x1]
  %s5354 = scalar_lea.vmem [#allocation3], 624
  %v5355 = vld [vmem:[%s5354] ss:$2 sm:$0xff]
  %s5356 = scalar_lea.vmem [#allocation3], 640
  %v5357 = vld [vmem:[%s5356] ss:$2 sm:$0x1]
  %s5358 = scalar_lea.vmem [#allocation3], 648
  %v5359 = vld [vmem:[%s5358] ss:$2 sm:$0xff]
  %s5360 = scalar_lea.vmem [#allocation3], 664
  %v5361 = vld [vmem:[%s5360] ss:$2 sm:$0x1]
  %s5362 = scalar_lea.vmem [#allocation3], 672
  %v5363 = vld [vmem:[%s5362] ss:$2 sm:$0xff]
  %s5364 = scalar_lea.vmem [#allocation3], 688
  %v5365 = vld [vmem:[%s5364] ss:$2 sm:$0x1]
  %s5366 = scalar_lea.vmem [#allocation3], 696
  %v5367 = vld [vmem:[%s5366] ss:$2 sm:$0xff]
  %s5368 = scalar_lea.vmem [#allocation3], 712
  %v5369 = vld [vmem:[%s5368] ss:$2 sm:$0x1]
  %s5370 = scalar_lea.vmem [#allocation3], 720
  %v5371 = vld [vmem:[%s5370] ss:$2 sm:$0xff]
  %s5372 = scalar_lea.vmem [#allocation3], 736
  %v5373 = vld [vmem:[%s5372] ss:$2 sm:$0x1]
  %s5374 = scalar_lea.vmem [#allocation3], 744
  %v5375 = vld [vmem:[%s5374] ss:$2 sm:$0xff]
  %s5376 = scalar_lea.vmem [#allocation3], 760
  %v5377 = vld [vmem:[%s5376] ss:$2 sm:$0x1]
  %s5378 = scalar_lea.vmem [#allocation3], 768
  %v5379 = vld [vmem:[%s5378] ss:$2 sm:$0xff]
  %s5380 = scalar_lea.vmem [#allocation3], 784
  %v5381 = vld [vmem:[%s5380] ss:$2 sm:$0x1]
  %s5382 = scalar_lea.vmem [#allocation3], 792
  %v5383 = vld [vmem:[%s5382] ss:$2 sm:$0xff]
  %s5384 = scalar_lea.vmem [#allocation3], 808
  %v5385 = vld [vmem:[%s5384] ss:$2 sm:$0x1]
  %s5386 = scalar_lea.vmem [#allocation3], 816
  %v5387 = vld [vmem:[%s5386] ss:$2 sm:$0xff]
  %s5388 = scalar_lea.vmem [#allocation3], 832
  %v5389 = vld [vmem:[%s5388] ss:$2 sm:$0x1]
  %s5390 = scalar_lea.vmem [#allocation3], 1
  %v5391 = vld [vmem:[%s5390] ss:$2 sm:$0xff]
  %s5392 = scalar_lea.vmem [#allocation3], 25
  %v5393 = vld [vmem:[%s5392] ss:$2 sm:$0xff]
  %s5394 = scalar_lea.vmem [#allocation3], 49
  %v5395 = vld [vmem:[%s5394] ss:$2 sm:$0xff]
  %s5396 = scalar_lea.vmem [#allocation3], 73
  %v5397 = vld [vmem:[%s5396] ss:$2 sm:$0xff]
  %s5398 = scalar_lea.vmem [#allocation3], 97
  %v5399 = vld [vmem:[%s5398] ss:$2 sm:$0xff]
  %s5400 = scalar_lea.vmem [#allocation3], 121
  %v5401 = vld [vmem:[%s5400] ss:$2 sm:$0xff]
  %s5402 = scalar_lea.vmem [#allocation3], 145
  %v5403 = vld [vmem:[%s5402] ss:$2 sm:$0xff]
  %s5404 = scalar_lea.vmem [#allocation3], 169
  %v5405 = vld [vmem:[%s5404] ss:$2 sm:$0xff]
  %s5406 = scalar_lea.vmem [#allocation3], 193
  %v5407 = vld [vmem:[%s5406] ss:$2 sm:$0xff]
  %s5408 = scalar_lea.vmem [#allocation3], 217
  %v5409 = vld [vmem:[%s5408] ss:$2 sm:$0xff]
  %s5410 = scalar_lea.vmem [#allocation3], 241
  %v5411 = vld [vmem:[%s5410] ss:$2 sm:$0xff]
  %s5412 = scalar_lea.vmem [#allocation3], 265
  %v5413 = vld [vmem:[%s5412] ss:$2 sm:$0xff]
  %s5414 = scalar_lea.vmem [#allocation3], 289
  %v5415 = vld [vmem:[%s5414] ss:$2 sm:$0xff]
  %s5416 = scalar_lea.vmem [#allocation3], 313
  %v5417 = vld [vmem:[%s5416] ss:$2 sm:$0xff]
  %s5418 = scalar_lea.vmem [#allocation3], 337
  %v5419 = vld [vmem:[%s5418] ss:$2 sm:$0xff]
  %s5420 = scalar_lea.vmem [#allocation3], 361
  %v5421 = vld [vmem:[%s5420] ss:$2 sm:$0xff]
  %s5422 = scalar_lea.vmem [#allocation3], 385
  %v5423 = vld [vmem:[%s5422] ss:$2 sm:$0xff]
  %s5424 = scalar_lea.vmem [#allocation3], 433
  %v5425 = vld [vmem:[%s5424] ss:$2 sm:$0xff]
  %s5426 = scalar_lea.vmem [#allocation3], 457
  %v5427 = vld [vmem:[%s5426] ss:$2 sm:$0xff]
  %s5428 = scalar_lea.vmem [#allocation3], 481
  %v5429 = vld [vmem:[%s5428] ss:$2 sm:$0xff]
  %s5430 = scalar_lea.vmem [#allocation3], 505
  %v5431 = vld [vmem:[%s5430] ss:$2 sm:$0xff]
  %s5432 = scalar_lea.vmem [#allocation3], 529
  %v5433 = vld [vmem:[%s5432] ss:$2 sm:$0xff]
  %s5434 = scalar_lea.vmem [#allocation3], 553
  %v5435 = vld [vmem:[%s5434] ss:$2 sm:$0xff]
  %s5436 = scalar_lea.vmem [#allocation3], 577
  %v5437 = vld [vmem:[%s5436] ss:$2 sm:$0xff]
  %s5438 = scalar_lea.vmem [#allocation3], 601
  %v5439 = vld [vmem:[%s5438] ss:$2 sm:$0xff]
  %s5440 = scalar_lea.vmem [#allocation3], 625
  %v5441 = vld [vmem:[%s5440] ss:$2 sm:$0xff]
  %s5442 = scalar_lea.vmem [#allocation3], 649
  %v5443 = vld [vmem:[%s5442] ss:$2 sm:$0xff]
  %s5444 = scalar_lea.vmem [#allocation3], 673
  %v5445 = vld [vmem:[%s5444] ss:$2 sm:$0xff]
  %s5446 = scalar_lea.vmem [#allocation3], 697
  %v5447 = vld [vmem:[%s5446] ss:$2 sm:$0xff]
  %s5448 = scalar_lea.vmem [#allocation3], 721
  %v5449 = vld [vmem:[%s5448] ss:$2 sm:$0xff]
  %s5450 = scalar_lea.vmem [#allocation3], 745
  %v5451 = vld [vmem:[%s5450] ss:$2 sm:$0xff]
  %s5452 = scalar_lea.vmem [#allocation3], 769
  %v5453 = vld [vmem:[%s5452] ss:$2 sm:$0xff]
  %s5454 = scalar_lea.vmem [#allocation3], 793
  %v5455 = vld [vmem:[%s5454] ss:$2 sm:$0xff]
  %s5456 = scalar_lea.vmem [#allocation3], 817
  %v5457 = vld [vmem:[%s5456] ss:$2 sm:$0xff]
  %v5458 = vld [vmem:[%s3] sm:$0xff]
  %v5459 = vld [vmem:[%s3 + $0x8] sm:$0xff]
  %v5460 = vld [vmem:[%s3 + $0x10] sm:$0xff]
  %v5461 = vld [vmem:[%s3 + $0x18] sm:$0xff]
  %v5462 = vld [vmem:[%s3 + $0x20] sm:$0xff]
  %v5463 = vld [vmem:[%s3 + $0x28] sm:$0xff]
  %v5464 = vld [vmem:[%s3 + $0x30] sm:$0xff]
  %v5465 = vld [vmem:[%s3 + $0x38] sm:$0xff]
  %v5466 = vld [vmem:[%s3 + $0x40] sm:$0xff]
  %v5467 = vld [vmem:[%s3 + $0x48] sm:$0xff]
  %v5468 = vld [vmem:[%s3 + $0x50] sm:$0xff]
  %v5469 = vld [vmem:[%s3 + $0x58] sm:$0xff]
  %v5470 = vld [vmem:[%s3 + $0x60] sm:$0xff]
  %v5471 = vld [vmem:[%s3 + $0x68] sm:$0xff]
  %v5472 = vld [vmem:[%s3 + $0x70] sm:$0xff]
  %v5473 = vld [vmem:[%s3 + $0x78] sm:$0xff]
  %s5474 = scalar_lea.vmem %s3, 128
  %v5475 = vld [vmem:[%s5474] sm:$0xff]
  %v5476 = vld [vmem:[%s5474 + $0x8] sm:$0xff]
  %v5477 = vld [vmem:[%s5474 + $0x10] sm:$0xff]
  %v5478 = vld [vmem:[%s5474 + $0x18] sm:$0xff]
  %v5479 = vld [vmem:[%s5474 + $0x20] sm:$0xff]
  %v5480 = vld [vmem:[%s5474 + $0x28] sm:$0xff]
  %v5481 = vld [vmem:[%s5474 + $0x30] sm:$0xff]
  %v5482 = vld [vmem:[%s5474 + $0x38] sm:$0xff]
  %v5483 = vld [vmem:[%s5474 + $0x40] sm:$0xff]
  %v5484 = vld [vmem:[%s5474 + $0x48] sm:$0xff]
  %v5485 = vld [vmem:[%s5474 + $0x50] sm:$0xff]
  %v5486 = vld [vmem:[%s5474 + $0x58] sm:$0xff]
  %v5487 = vld [vmem:[%s5474 + $0x60] sm:$0xff]
  %v5488 = vld [vmem:[%s5474 + $0x68] sm:$0xff]
  %v5489 = vld [vmem:[%s5474 + $0x70] sm:$0xff]
  %v5490 = vld [vmem:[%s5474 + $0x78] sm:$0xff]
  %5491 = vmatpush.msra.mxu0 %v5490
  %5492 = vmatpush.msra.mxu0 %v5489
  %5493 = vmatpush.msra.mxu0 %v5488
  %5494 = vmatpush.msra.mxu0 %v5487
  %5495 = vmatpush.msra.mxu0 %v5486
  %5496 = vmatpush.msra.mxu0 %v5485
  %5497 = vmatpush.msra.mxu0 %v5484
  %5498 = vmatpush.msra.mxu0 %v5483
  %5499 = vmatpush.msra.mxu0 %v5482
  %5500 = vmatpush.msra.mxu0 %v5481
  %5501 = vmatpush.msra.mxu0 %v5480
  %5502 = vmatpush.msra.mxu0 %v5479
  %5503 = vmatpush.msra.mxu0 %v5478
  %5504 = vmatpush.msra.mxu0 %v5477
  %5505 = vmatpush.msra.mxu0 %v5476
  %5506 = vmatpush.msra.mxu0 %v5475
  %5507 = vmatmul.f32.gmra.mxu0 %v5391
  %v5508 = vpop.f32.mrf.mxu0
  %v5509 = vadd.f32 0.0, %v5508
  %5510 = vmatmul.f32.gmra.mxu0 %v5395
  %v5511 = vpop.f32.mrf.mxu0
  %v5512 = vadd.f32 0.0, %v5511
  %5513 = vmatmul.f32.gmra.mxu0 %v5399
  %v5514 = vpop.f32.mrf.mxu0
  %v5515 = vadd.f32 0.0, %v5514
  %5516 = vmatmul.f32.gmra.mxu0 %v5403
  %v5517 = vpop.f32.mrf.mxu0
  %v5518 = vadd.f32 0.0, %v5517
  %5519 = vmatmul.f32.gmra.mxu0 %v5407
  %v5520 = vpop.f32.mrf.mxu0
  %v5521 = vadd.f32 0.0, %v5520
  %5522 = vmatmul.f32.gmra.mxu0 %v5411
  %v5523 = vpop.f32.mrf.mxu0
  %v5524 = vadd.f32 0.0, %v5523
  %5525 = vmatmul.f32.gmra.mxu0 %v5415
  %v5526 = vpop.f32.mrf.mxu0
  %v5527 = vadd.f32 0.0, %v5526
  %5528 = vmatmul.f32.gmra.mxu0 %v5419
  %v5529 = vpop.f32.mrf.mxu0
  %v5530 = vadd.f32 0.0, %v5529
  %5531 = vmatmul.f32.gmra.mxu0 %v5425
  %v5532 = vpop.f32.mrf.mxu0
  %v5533 = vadd.f32 0.0, %v5532
  %5534 = vmatmul.f32.gmra.mxu0 %v5429
  %v5535 = vpop.f32.mrf.mxu0
  %v5536 = vadd.f32 0.0, %v5535
  %5537 = vmatmul.f32.gmra.mxu0 %v5433
  %v5538 = vpop.f32.mrf.mxu0
  %v5539 = vadd.f32 0.0, %v5538
  %5540 = vmatmul.f32.gmra.mxu0 %v5437
  %v5541 = vpop.f32.mrf.mxu0
  %v5542 = vadd.f32 0.0, %v5541
  %5543 = vmatmul.f32.gmra.mxu0 %v5441
  %v5544 = vpop.f32.mrf.mxu0
  %v5545 = vadd.f32 0.0, %v5544
  %5546 = vmatmul.f32.gmra.mxu0 %v5445
  %v5547 = vpop.f32.mrf.mxu0
  %v5548 = vadd.f32 0.0, %v5547
  %5549 = vmatmul.f32.gmra.mxu0 %v5449
  %v5550 = vpop.f32.mrf.mxu0
  %v5551 = vadd.f32 0.0, %v5550
  %5552 = vmatmul.f32.gmra.mxu0 %v5453
  %v5553 = vpop.f32.mrf.mxu0
  %v5554 = vadd.f32 0.0, %v5553
  %5555 = vdwg.mxu0
  %5556 = vmatpush.msra.mxu0 %v5473
  %5557 = vmatpush.msra.mxu0 %v5472
  %5558 = vmatpush.msra.mxu0 %v5471
  %5559 = vmatpush.msra.mxu0 %v5470
  %5560 = vmatpush.msra.mxu0 %v5469
  %5561 = vmatpush.msra.mxu0 %v5468
  %5562 = vmatpush.msra.mxu0 %v5467
  %5563 = vmatpush.msra.mxu0 %v5466
  %5564 = vmatpush.msra.mxu0 %v5465
  %5565 = vmatpush.msra.mxu0 %v5464
  %5566 = vmatpush.msra.mxu0 %v5463
  %5567 = vmatpush.msra.mxu0 %v5462
  %5568 = vmatpush.msra.mxu0 %v5461
  %5569 = vmatpush.msra.mxu0 %v5460
  %5570 = vmatpush.msra.mxu0 %v5459
  %5571 = vmatpush.msra.mxu0 %v5458
  %5572 = vmatmul.f32.gmra.mxu0 %v5255
  %v5573 = vpop.f32.mrf.mxu0
  %v5574 = vadd.f32 %v5509, %v5573
  %5575 = vmatmul.f32.gmra.mxu0 %v5263
  %v5576 = vpop.f32.mrf.mxu0
  %v5577 = vadd.f32 %v5512, %v5576
  %5578 = vmatmul.f32.gmra.mxu0 %v5271
  %v5579 = vpop.f32.mrf.mxu0
  %v5580 = vadd.f32 %v5515, %v5579
  %5581 = vmatmul.f32.gmra.mxu0 %v5279
  %v5582 = vpop.f32.mrf.mxu0
  %v5583 = vadd.f32 %v5518, %v5582
  %5584 = vmatmul.f32.gmra.mxu0 %v5287
  %v5585 = vpop.f32.mrf.mxu0
  %v5586 = vadd.f32 %v5521, %v5585
  %5587 = vmatmul.f32.gmra.mxu0 %v5295
  %v5588 = vpop.f32.mrf.mxu0
  %v5589 = vadd.f32 %v5524, %v5588
  %5590 = vmatmul.f32.gmra.mxu0 %v5303
  %v5591 = vpop.f32.mrf.mxu0
  %v5592 = vadd.f32 %v5527, %v5591
  %5593 = vmatmul.f32.gmra.mxu0 %v5311
  %v5594 = vpop.f32.mrf.mxu0
  %v5595 = vadd.f32 %v5530, %v5594
  %5596 = vmatmul.f32.gmra.mxu0 %v5323
  %v5597 = vpop.f32.mrf.mxu0
  %v5598 = vadd.f32 %v5533, %v5597
  %5599 = vmatmul.f32.gmra.mxu0 %v5331
  %v5600 = vpop.f32.mrf.mxu0
  %v5601 = vadd.f32 %v5536, %v5600
  %5602 = vmatmul.f32.gmra.mxu0 %v5339
  %v5603 = vpop.f32.mrf.mxu0
  %v5604 = vadd.f32 %v5539, %v5603
  %5605 = vmatmul.f32.gmra.mxu0 %v5347
  %v5606 = vpop.f32.mrf.mxu0
  %v5607 = vadd.f32 %v5542, %v5606
  %5608 = vmatmul.f32.gmra.mxu0 %v5355
  %v5609 = vpop.f32.mrf.mxu0
  %v5610 = vadd.f32 %v5545, %v5609
  %5611 = vmatmul.f32.gmra.mxu0 %v5363
  %v5612 = vpop.f32.mrf.mxu0
  %v5613 = vadd.f32 %v5548, %v5612
  %5614 = vmatmul.f32.gmra.mxu0 %v5371
  %v5615 = vpop.f32.mrf.mxu0
  %v5616 = vadd.f32 %v5551, %v5615
  %5617 = vmatmul.f32.gmra.mxu0 %v5379
  %v5618 = vpop.f32.mrf.mxu0
  %v5619 = vadd.f32 %v5554, %v5618
  %5620 = vdwg.mxu0
  %v5653 = vrot.slane %v5255, 1
  %v5654 = vrot.slane %v5257, 1
  %v5655 = vsel %vm2097, %v5653, %v5654
  %v5656 = vrot.slane %v5263, 1
  %v5657 = vrot.slane %v5265, 1
  %v5658 = vsel %vm2097, %v5656, %v5657
  %v5659 = vrot.slane %v5271, 1
  %v5660 = vrot.slane %v5273, 1
  %v5661 = vsel %vm2097, %v5659, %v5660
  %v5662 = vrot.slane %v5279, 1
  %v5663 = vrot.slane %v5281, 1
  %v5664 = vsel %vm2097, %v5662, %v5663
  %v5665 = vrot.slane %v5287, 1
  %v5666 = vrot.slane %v5289, 1
  %v5667 = vsel %vm2097, %v5665, %v5666
  %v5668 = vrot.slane %v5295, 1
  %v5669 = vrot.slane %v5297, 1
  %v5670 = vsel %vm2097, %v5668, %v5669
  %v5671 = vrot.slane %v5303, 1
  %v5672 = vrot.slane %v5305, 1
  %v5673 = vsel %vm2097, %v5671, %v5672
  %v5674 = vrot.slane %v5311, 1
  %v5675 = vrot.slane %v5313, 1
  %v5676 = vsel %vm2097, %v5674, %v5675
  %v5677 = vrot.slane %v5323, 1
  %v5678 = vrot.slane %v5325, 1
  %v5679 = vsel %vm2097, %v5677, %v5678
  %v5680 = vrot.slane %v5331, 1
  %v5681 = vrot.slane %v5333, 1
  %v5682 = vsel %vm2097, %v5680, %v5681
  %v5683 = vrot.slane %v5339, 1
  %v5684 = vrot.slane %v5341, 1
  %v5685 = vsel %vm2097, %v5683, %v5684
  %v5686 = vrot.slane %v5347, 1
  %v5687 = vrot.slane %v5349, 1
  %v5688 = vsel %vm2097, %v5686, %v5687
  %v5689 = vrot.slane %v5355, 1
  %v5690 = vrot.slane %v5357, 1
  %v5691 = vsel %vm2097, %v5689, %v5690
  %v5692 = vrot.slane %v5363, 1
  %v5693 = vrot.slane %v5365, 1
  %v5694 = vsel %vm2097, %v5692, %v5693
  %v5695 = vrot.slane %v5371, 1
  %v5696 = vrot.slane %v5373, 1
  %v5697 = vsel %vm2097, %v5695, %v5696
  %v5698 = vrot.slane %v5379, 1
  %v5699 = vrot.slane %v5381, 1
  %v5700 = vsel %vm2097, %v5698, %v5699
  %s5717 = scalar_lea.vmem %s3, 256
  %v5718 = vld [vmem:[%s5717] sm:$0xff]
  %v5719 = vld [vmem:[%s5717 + $0x8] sm:$0xff]
  %v5720 = vld [vmem:[%s5717 + $0x10] sm:$0xff]
  %v5721 = vld [vmem:[%s5717 + $0x18] sm:$0xff]
  %v5722 = vld [vmem:[%s5717 + $0x20] sm:$0xff]
  %v5723 = vld [vmem:[%s5717 + $0x28] sm:$0xff]
  %v5724 = vld [vmem:[%s5717 + $0x30] sm:$0xff]
  %v5725 = vld [vmem:[%s5717 + $0x38] sm:$0xff]
  %v5726 = vld [vmem:[%s5717 + $0x40] sm:$0xff]
  %v5727 = vld [vmem:[%s5717 + $0x48] sm:$0xff]
  %v5728 = vld [vmem:[%s5717 + $0x50] sm:$0xff]
  %v5729 = vld [vmem:[%s5717 + $0x58] sm:$0xff]
  %v5730 = vld [vmem:[%s5717 + $0x60] sm:$0xff]
  %v5731 = vld [vmem:[%s5717 + $0x68] sm:$0xff]
  %v5732 = vld [vmem:[%s5717 + $0x70] sm:$0xff]
  %v5733 = vld [vmem:[%s5717 + $0x78] sm:$0xff]
  %5734 = vmatpush.msra.mxu0 %v5733
  %5735 = vmatpush.msra.mxu0 %v5732
  %5736 = vmatpush.msra.mxu0 %v5731
  %5737 = vmatpush.msra.mxu0 %v5730
  %5738 = vmatpush.msra.mxu0 %v5729
  %5739 = vmatpush.msra.mxu0 %v5728
  %5740 = vmatpush.msra.mxu0 %v5727
  %5741 = vmatpush.msra.mxu0 %v5726
  %5742 = vmatpush.msra.mxu0 %v5725
  %5743 = vmatpush.msra.mxu0 %v5724
  %5744 = vmatpush.msra.mxu0 %v5723
  %5745 = vmatpush.msra.mxu0 %v5722
  %5746 = vmatpush.msra.mxu0 %v5721
  %5747 = vmatpush.msra.mxu0 %v5720
  %5748 = vmatpush.msra.mxu0 %v5719
  %5749 = vmatpush.msra.mxu0 %v5718
  %5750 = vmatmul.f32.gmra.mxu0 %v5655
  %v5751 = vpop.f32.mrf.mxu0
  %v5752 = vadd.f32 0.0, %v5751
  %5753 = vmatmul.f32.gmra.mxu0 %v5658
  %v5754 = vpop.f32.mrf.mxu0
  %v5755 = vadd.f32 0.0, %v5754
  %5756 = vmatmul.f32.gmra.mxu0 %v5661
  %v5757 = vpop.f32.mrf.mxu0
  %v5758 = vadd.f32 0.0, %v5757
  %5759 = vmatmul.f32.gmra.mxu0 %v5664
  %v5760 = vpop.f32.mrf.mxu0
  %v5761 = vadd.f32 0.0, %v5760
  %5762 = vmatmul.f32.gmra.mxu0 %v5667
  %v5763 = vpop.f32.mrf.mxu0
  %v5764 = vadd.f32 0.0, %v5763
  %5765 = vmatmul.f32.gmra.mxu0 %v5670
  %v5766 = vpop.f32.mrf.mxu0
  %v5767 = vadd.f32 0.0, %v5766
  %5768 = vmatmul.f32.gmra.mxu0 %v5673
  %v5769 = vpop.f32.mrf.mxu0
  %v5770 = vadd.f32 0.0, %v5769
  %5771 = vmatmul.f32.gmra.mxu0 %v5676
  %v5772 = vpop.f32.mrf.mxu0
  %v5773 = vadd.f32 0.0, %v5772
  %5774 = vmatmul.f32.gmra.mxu0 %v5679
  %v5775 = vpop.f32.mrf.mxu0
  %v5776 = vadd.f32 0.0, %v5775
  %5777 = vmatmul.f32.gmra.mxu0 %v5682
  %v5778 = vpop.f32.mrf.mxu0
  %v5779 = vadd.f32 0.0, %v5778
  %5780 = vmatmul.f32.gmra.mxu0 %v5685
  %v5781 = vpop.f32.mrf.mxu0
  %v5782 = vadd.f32 0.0, %v5781
  %5783 = vmatmul.f32.gmra.mxu0 %v5688
  %v5784 = vpop.f32.mrf.mxu0
  %v5785 = vadd.f32 0.0, %v5784
  %5786 = vmatmul.f32.gmra.mxu0 %v5691
  %v5787 = vpop.f32.mrf.mxu0
  %v5788 = vadd.f32 0.0, %v5787
  %5789 = vmatmul.f32.gmra.mxu0 %v5694
  %v5790 = vpop.f32.mrf.mxu0
  %v5791 = vadd.f32 0.0, %v5790
  %5792 = vmatmul.f32.gmra.mxu0 %v5697
  %v5793 = vpop.f32.mrf.mxu0
  %v5794 = vadd.f32 0.0, %v5793
  %5795 = vmatmul.f32.gmra.mxu0 %v5700
  %v5796 = vpop.f32.mrf.mxu0
  %v5797 = vadd.f32 0.0, %v5796
  %5798 = vdwg.mxu0
  %v5799 = vadd.f32 %v5574, %v5752
  %v5800 = vadd.f32 %v5577, %v5755
  %v5801 = vadd.f32 %v5580, %v5758
  %v5802 = vadd.f32 %v5583, %v5761
  %v5803 = vadd.f32 %v5586, %v5764
  %v5804 = vadd.f32 %v5589, %v5767
  %v5805 = vadd.f32 %v5592, %v5770
  %v5806 = vadd.f32 %v5595, %v5773
  %v5807 = vadd.f32 %v5598, %v5776
  %v5808 = vadd.f32 %v5601, %v5779
  %v5809 = vadd.f32 %v5604, %v5782
  %v5810 = vadd.f32 %v5607, %v5785
  %v5811 = vadd.f32 %v5610, %v5788
  %v5812 = vadd.f32 %v5613, %v5791
  %v5813 = vadd.f32 %v5616, %v5794
  %v5814 = vadd.f32 %v5619, %v5797
  %s5815 = scalar_lea.vmem %s3, 384
  %v5816 = vld [vmem:[%s5815] sm:$0xff]
  %v5817 = vld [vmem:[%s5815 + $0x8] sm:$0xff]
  %v5818 = vld [vmem:[%s5815 + $0x10] sm:$0xff]
  %v5819 = vld [vmem:[%s5815 + $0x18] sm:$0xff]
  %v5820 = vld [vmem:[%s5815 + $0x20] sm:$0xff]
  %v5821 = vld [vmem:[%s5815 + $0x28] sm:$0xff]
  %v5822 = vld [vmem:[%s5815 + $0x30] sm:$0xff]
  %v5823 = vld [vmem:[%s5815 + $0x38] sm:$0xff]
  %v5824 = vld [vmem:[%s5815 + $0x40] sm:$0xff]
  %v5825 = vld [vmem:[%s5815 + $0x48] sm:$0xff]
  %v5826 = vld [vmem:[%s5815 + $0x50] sm:$0xff]
  %v5827 = vld [vmem:[%s5815 + $0x58] sm:$0xff]
  %v5828 = vld [vmem:[%s5815 + $0x60] sm:$0xff]
  %v5829 = vld [vmem:[%s5815 + $0x68] sm:$0xff]
  %v5830 = vld [vmem:[%s5815 + $0x70] sm:$0xff]
  %v5831 = vld [vmem:[%s5815 + $0x78] sm:$0xff]
  %5832 = vmatpush.msra.mxu0 %v5831
  %5833 = vmatpush.msra.mxu0 %v5830
  %5834 = vmatpush.msra.mxu0 %v5829
  %5835 = vmatpush.msra.mxu0 %v5828
  %5836 = vmatpush.msra.mxu0 %v5827
  %5837 = vmatpush.msra.mxu0 %v5826
  %5838 = vmatpush.msra.mxu0 %v5825
  %5839 = vmatpush.msra.mxu0 %v5824
  %5840 = vmatpush.msra.mxu0 %v5823
  %5841 = vmatpush.msra.mxu0 %v5822
  %5842 = vmatpush.msra.mxu0 %v5821
  %5843 = vmatpush.msra.mxu0 %v5820
  %5844 = vmatpush.msra.mxu0 %v5819
  %5845 = vmatpush.msra.mxu0 %v5818
  %5846 = vmatpush.msra.mxu0 %v5817
  %5847 = vmatpush.msra.mxu0 %v5816
  %5848 = vmatmul.f32.gmra.mxu0 %v5259
  %v5849 = vpop.f32.mrf.mxu0
  %v5850 = vadd.f32 0.0, %v5849
  %5851 = vmatmul.f32.gmra.mxu0 %v5267
  %v5852 = vpop.f32.mrf.mxu0
  %v5853 = vadd.f32 0.0, %v5852
  %5854 = vmatmul.f32.gmra.mxu0 %v5275
  %v5855 = vpop.f32.mrf.mxu0
  %v5856 = vadd.f32 0.0, %v5855
  %5857 = vmatmul.f32.gmra.mxu0 %v5283
  %v5858 = vpop.f32.mrf.mxu0
  %v5859 = vadd.f32 0.0, %v5858
  %5860 = vmatmul.f32.gmra.mxu0 %v5291
  %v5861 = vpop.f32.mrf.mxu0
  %v5862 = vadd.f32 0.0, %v5861
  %5863 = vmatmul.f32.gmra.mxu0 %v5299
  %v5864 = vpop.f32.mrf.mxu0
  %v5865 = vadd.f32 0.0, %v5864
  %5866 = vmatmul.f32.gmra.mxu0 %v5307
  %v5867 = vpop.f32.mrf.mxu0
  %v5868 = vadd.f32 0.0, %v5867
  %5869 = vmatmul.f32.gmra.mxu0 %v5315
  %v5870 = vpop.f32.mrf.mxu0
  %v5871 = vadd.f32 0.0, %v5870
  %5872 = vmatmul.f32.gmra.mxu0 %v5327
  %v5873 = vpop.f32.mrf.mxu0
  %v5874 = vadd.f32 0.0, %v5873
  %5875 = vmatmul.f32.gmra.mxu0 %v5335
  %v5876 = vpop.f32.mrf.mxu0
  %v5877 = vadd.f32 0.0, %v5876
  %5878 = vmatmul.f32.gmra.mxu0 %v5343
  %v5879 = vpop.f32.mrf.mxu0
  %v5880 = vadd.f32 0.0, %v5879
  %5881 = vmatmul.f32.gmra.mxu0 %v5351
  %v5882 = vpop.f32.mrf.mxu0
  %v5883 = vadd.f32 0.0, %v5882
  %5884 = vmatmul.f32.gmra.mxu0 %v5359
  %v5885 = vpop.f32.mrf.mxu0
  %v5886 = vadd.f32 0.0, %v5885
  %5887 = vmatmul.f32.gmra.mxu0 %v5367
  %v5888 = vpop.f32.mrf.mxu0
  %v5889 = vadd.f32 0.0, %v5888
  %5890 = vmatmul.f32.gmra.mxu0 %v5375
  %v5891 = vpop.f32.mrf.mxu0
  %v5892 = vadd.f32 0.0, %v5891
  %5893 = vmatmul.f32.gmra.mxu0 %v5383
  %v5894 = vpop.f32.mrf.mxu0
  %v5895 = vadd.f32 0.0, %v5894
  %5896 = vdwg.mxu0
  %v5897 = vadd.f32 %v5799, %v5850
  %v5898 = vadd.f32 %v5800, %v5853
  %v5899 = vadd.f32 %v5801, %v5856
  %v5900 = vadd.f32 %v5802, %v5859
  %v5901 = vadd.f32 %v5803, %v5862
  %v5902 = vadd.f32 %v5804, %v5865
  %v5903 = vadd.f32 %v5805, %v5868
  %v5904 = vadd.f32 %v5806, %v5871
  %v5905 = vadd.f32 %v5807, %v5874
  %v5906 = vadd.f32 %v5808, %v5877
  %v5907 = vadd.f32 %v5809, %v5880
  %v5908 = vadd.f32 %v5810, %v5883
  %v5909 = vadd.f32 %v5811, %v5886
  %v5910 = vadd.f32 %v5812, %v5889
  %v5911 = vadd.f32 %v5813, %v5892
  %v5912 = vadd.f32 %v5814, %v5895
  %s5913 = scalar_lea.vmem %s3, 512
  %v5914 = vld [vmem:[%s5913] sm:$0xff]
  %v5915 = vld [vmem:[%s5913 + $0x8] sm:$0xff]
  %v5916 = vld [vmem:[%s5913 + $0x10] sm:$0xff]
  %v5917 = vld [vmem:[%s5913 + $0x18] sm:$0xff]
  %v5918 = vld [vmem:[%s5913 + $0x20] sm:$0xff]
  %v5919 = vld [vmem:[%s5913 + $0x28] sm:$0xff]
  %v5920 = vld [vmem:[%s5913 + $0x30] sm:$0xff]
  %v5921 = vld [vmem:[%s5913 + $0x38] sm:$0xff]
  %v5922 = vld [vmem:[%s5913 + $0x40] sm:$0xff]
  %v5923 = vld [vmem:[%s5913 + $0x48] sm:$0xff]
  %v5924 = vld [vmem:[%s5913 + $0x50] sm:$0xff]
  %v5925 = vld [vmem:[%s5913 + $0x58] sm:$0xff]
  %v5926 = vld [vmem:[%s5913 + $0x60] sm:$0xff]
  %v5927 = vld [vmem:[%s5913 + $0x68] sm:$0xff]
  %v5928 = vld [vmem:[%s5913 + $0x70] sm:$0xff]
  %v5929 = vld [vmem:[%s5913 + $0x78] sm:$0xff]
  %5930 = vmatpush.msra.mxu0 %v5929
  %5931 = vmatpush.msra.mxu0 %v5928
  %5932 = vmatpush.msra.mxu0 %v5927
  %5933 = vmatpush.msra.mxu0 %v5926
  %5934 = vmatpush.msra.mxu0 %v5925
  %5935 = vmatpush.msra.mxu0 %v5924
  %5936 = vmatpush.msra.mxu0 %v5923
  %5937 = vmatpush.msra.mxu0 %v5922
  %5938 = vmatpush.msra.mxu0 %v5921
  %5939 = vmatpush.msra.mxu0 %v5920
  %5940 = vmatpush.msra.mxu0 %v5919
  %5941 = vmatpush.msra.mxu0 %v5918
  %5942 = vmatpush.msra.mxu0 %v5917
  %5943 = vmatpush.msra.mxu0 %v5916
  %5944 = vmatpush.msra.mxu0 %v5915
  %5945 = vmatpush.msra.mxu0 %v5914
  %5946 = vmatmul.f32.gmra.mxu0 %v5393
  %v5947 = vpop.f32.mrf.mxu0
  %v5948 = vadd.f32 0.0, %v5947
  %5949 = vmatmul.f32.gmra.mxu0 %v5397
  %v5950 = vpop.f32.mrf.mxu0
  %v5951 = vadd.f32 0.0, %v5950
  %5952 = vmatmul.f32.gmra.mxu0 %v5401
  %v5953 = vpop.f32.mrf.mxu0
  %v5954 = vadd.f32 0.0, %v5953
  %5955 = vmatmul.f32.gmra.mxu0 %v5405
  %v5956 = vpop.f32.mrf.mxu0
  %v5957 = vadd.f32 0.0, %v5956
  %5958 = vmatmul.f32.gmra.mxu0 %v5409
  %v5959 = vpop.f32.mrf.mxu0
  %v5960 = vadd.f32 0.0, %v5959
  %5961 = vmatmul.f32.gmra.mxu0 %v5413
  %v5962 = vpop.f32.mrf.mxu0
  %v5963 = vadd.f32 0.0, %v5962
  %5964 = vmatmul.f32.gmra.mxu0 %v5417
  %v5965 = vpop.f32.mrf.mxu0
  %v5966 = vadd.f32 0.0, %v5965
  %5967 = vmatmul.f32.gmra.mxu0 %v5421
  %v5968 = vpop.f32.mrf.mxu0
  %v5969 = vadd.f32 0.0, %v5968
  %5970 = vmatmul.f32.gmra.mxu0 %v5427
  %v5971 = vpop.f32.mrf.mxu0
  %v5972 = vadd.f32 0.0, %v5971
  %5973 = vmatmul.f32.gmra.mxu0 %v5431
  %v5974 = vpop.f32.mrf.mxu0
  %v5975 = vadd.f32 0.0, %v5974
  %5976 = vmatmul.f32.gmra.mxu0 %v5435
  %v5977 = vpop.f32.mrf.mxu0
  %v5978 = vadd.f32 0.0, %v5977
  %5979 = vmatmul.f32.gmra.mxu0 %v5439
  %v5980 = vpop.f32.mrf.mxu0
  %v5981 = vadd.f32 0.0, %v5980
  %5982 = vmatmul.f32.gmra.mxu0 %v5443
  %v5983 = vpop.f32.mrf.mxu0
  %v5984 = vadd.f32 0.0, %v5983
  %5985 = vmatmul.f32.gmra.mxu0 %v5447
  %v5986 = vpop.f32.mrf.mxu0
  %v5987 = vadd.f32 0.0, %v5986
  %5988 = vmatmul.f32.gmra.mxu0 %v5451
  %v5989 = vpop.f32.mrf.mxu0
  %v5990 = vadd.f32 0.0, %v5989
  %5991 = vmatmul.f32.gmra.mxu0 %v5455
  %v5992 = vpop.f32.mrf.mxu0
  %v5993 = vadd.f32 0.0, %v5992
  %5994 = vdwg.mxu0
  %v5995 = vadd.f32 %v5897, %v5948
  %v5996 = vadd.f32 %v5898, %v5951
  %v5997 = vadd.f32 %v5899, %v5954
  %v5998 = vadd.f32 %v5900, %v5957
  %v5999 = vadd.f32 %v5901, %v5960
  %v6000 = vadd.f32 %v5902, %v5963
  %v6001 = vadd.f32 %v5903, %v5966
  %v6002 = vadd.f32 %v5904, %v5969
  %v6003 = vadd.f32 %v5905, %v5972
  %v6004 = vadd.f32 %v5906, %v5975
  %v6005 = vadd.f32 %v5907, %v5978
  %v6006 = vadd.f32 %v5908, %v5981
  %v6007 = vadd.f32 %v5909, %v5984
  %v6008 = vadd.f32 %v5910, %v5987
  %v6009 = vadd.f32 %v5911, %v5990
  %v6010 = vadd.f32 %v5912, %v5993
  %v6043 = vrot.slane %v5259, 1
  %v6044 = vrot.slane %v5261, 1
  %v6045 = vsel %vm2097, %v6043, %v6044
  %v6046 = vrot.slane %v5267, 1
  %v6047 = vrot.slane %v5269, 1
  %v6048 = vsel %vm2097, %v6046, %v6047
  %v6049 = vrot.slane %v5275, 1
  %v6050 = vrot.slane %v5277, 1
  %v6051 = vsel %vm2097, %v6049, %v6050
  %v6052 = vrot.slane %v5283, 1
  %v6053 = vrot.slane %v5285, 1
  %v6054 = vsel %vm2097, %v6052, %v6053
  %v6055 = vrot.slane %v5291, 1
  %v6056 = vrot.slane %v5293, 1
  %v6057 = vsel %vm2097, %v6055, %v6056
  %v6058 = vrot.slane %v5299, 1
  %v6059 = vrot.slane %v5301, 1
  %v6060 = vsel %vm2097, %v6058, %v6059
  %v6061 = vrot.slane %v5307, 1
  %v6062 = vrot.slane %v5309, 1
  %v6063 = vsel %vm2097, %v6061, %v6062
  %v6064 = vrot.slane %v5315, 1
  %v6065 = vrot.slane %v5317, 1
  %v6066 = vsel %vm2097, %v6064, %v6065
  %v6067 = vrot.slane %v5327, 1
  %v6068 = vrot.slane %v5329, 1
  %v6069 = vsel %vm2097, %v6067, %v6068
  %v6070 = vrot.slane %v5335, 1
  %v6071 = vrot.slane %v5337, 1
  %v6072 = vsel %vm2097, %v6070, %v6071
  %v6073 = vrot.slane %v5343, 1
  %v6074 = vrot.slane %v5345, 1
  %v6075 = vsel %vm2097, %v6073, %v6074
  %v6076 = vrot.slane %v5351, 1
  %v6077 = vrot.slane %v5353, 1
  %v6078 = vsel %vm2097, %v6076, %v6077
  %v6079 = vrot.slane %v5359, 1
  %v6080 = vrot.slane %v5361, 1
  %v6081 = vsel %vm2097, %v6079, %v6080
  %v6082 = vrot.slane %v5367, 1
  %v6083 = vrot.slane %v5369, 1
  %v6084 = vsel %vm2097, %v6082, %v6083
  %v6085 = vrot.slane %v5375, 1
  %v6086 = vrot.slane %v5377, 1
  %v6087 = vsel %vm2097, %v6085, %v6086
  %v6088 = vrot.slane %v5383, 1
  %v6089 = vrot.slane %v5385, 1
  %v6090 = vsel %vm2097, %v6088, %v6089
  %s6107 = scalar_lea.vmem %s3, 640
  %v6108 = vld [vmem:[%s6107] sm:$0xff]
  %v6109 = vld [vmem:[%s6107 + $0x8] sm:$0xff]
  %v6110 = vld [vmem:[%s6107 + $0x10] sm:$0xff]
  %v6111 = vld [vmem:[%s6107 + $0x18] sm:$0xff]
  %v6112 = vld [vmem:[%s6107 + $0x20] sm:$0xff]
  %v6113 = vld [vmem:[%s6107 + $0x28] sm:$0xff]
  %v6114 = vld [vmem:[%s6107 + $0x30] sm:$0xff]
  %v6115 = vld [vmem:[%s6107 + $0x38] sm:$0xff]
  %v6116 = vld [vmem:[%s6107 + $0x40] sm:$0xff]
  %v6117 = vld [vmem:[%s6107 + $0x48] sm:$0xff]
  %v6118 = vld [vmem:[%s6107 + $0x50] sm:$0xff]
  %v6119 = vld [vmem:[%s6107 + $0x58] sm:$0xff]
  %v6120 = vld [vmem:[%s6107 + $0x60] sm:$0xff]
  %v6121 = vld [vmem:[%s6107 + $0x68] sm:$0xff]
  %v6122 = vld [vmem:[%s6107 + $0x70] sm:$0xff]
  %v6123 = vld [vmem:[%s6107 + $0x78] sm:$0xff]
  %6124 = vmatpush.msra.mxu0 %v6123
  %6125 = vmatpush.msra.mxu0 %v6122
  %6126 = vmatpush.msra.mxu0 %v6121
  %6127 = vmatpush.msra.mxu0 %v6120
  %6128 = vmatpush.msra.mxu0 %v6119
  %6129 = vmatpush.msra.mxu0 %v6118
  %6130 = vmatpush.msra.mxu0 %v6117
  %6131 = vmatpush.msra.mxu0 %v6116
  %6132 = vmatpush.msra.mxu0 %v6115
  %6133 = vmatpush.msra.mxu0 %v6114
  %6134 = vmatpush.msra.mxu0 %v6113
  %6135 = vmatpush.msra.mxu0 %v6112
  %6136 = vmatpush.msra.mxu0 %v6111
  %6137 = vmatpush.msra.mxu0 %v6110
  %6138 = vmatpush.msra.mxu0 %v6109
  %6139 = vmatpush.msra.mxu0 %v6108
  %6140 = vmatmul.f32.gmra.mxu0 %v6045
  %v6141 = vpop.f32.mrf.mxu0
  %v6142 = vadd.f32 0.0, %v6141
  %6143 = vmatmul.f32.gmra.mxu0 %v6048
  %v6144 = vpop.f32.mrf.mxu0
  %v6145 = vadd.f32 0.0, %v6144
  %6146 = vmatmul.f32.gmra.mxu0 %v6051
  %v6147 = vpop.f32.mrf.mxu0
  %v6148 = vadd.f32 0.0, %v6147
  %6149 = vmatmul.f32.gmra.mxu0 %v6054
  %v6150 = vpop.f32.mrf.mxu0
  %v6151 = vadd.f32 0.0, %v6150
  %6152 = vmatmul.f32.gmra.mxu0 %v6057
  %v6153 = vpop.f32.mrf.mxu0
  %v6154 = vadd.f32 0.0, %v6153
  %6155 = vmatmul.f32.gmra.mxu0 %v6060
  %v6156 = vpop.f32.mrf.mxu0
  %v6157 = vadd.f32 0.0, %v6156
  %6158 = vmatmul.f32.gmra.mxu0 %v6063
  %v6159 = vpop.f32.mrf.mxu0
  %v6160 = vadd.f32 0.0, %v6159
  %6161 = vmatmul.f32.gmra.mxu0 %v6066
  %v6162 = vpop.f32.mrf.mxu0
  %v6163 = vadd.f32 0.0, %v6162
  %6164 = vmatmul.f32.gmra.mxu0 %v6069
  %v6165 = vpop.f32.mrf.mxu0
  %v6166 = vadd.f32 0.0, %v6165
  %6167 = vmatmul.f32.gmra.mxu0 %v6072
  %v6168 = vpop.f32.mrf.mxu0
  %v6169 = vadd.f32 0.0, %v6168
  %6170 = vmatmul.f32.gmra.mxu0 %v6075
  %v6171 = vpop.f32.mrf.mxu0
  %v6172 = vadd.f32 0.0, %v6171
  %6173 = vmatmul.f32.gmra.mxu0 %v6078
  %v6174 = vpop.f32.mrf.mxu0
  %v6175 = vadd.f32 0.0, %v6174
  %6176 = vmatmul.f32.gmra.mxu0 %v6081
  %v6177 = vpop.f32.mrf.mxu0
  %v6178 = vadd.f32 0.0, %v6177
  %6179 = vmatmul.f32.gmra.mxu0 %v6084
  %v6180 = vpop.f32.mrf.mxu0
  %v6181 = vadd.f32 0.0, %v6180
  %6182 = vmatmul.f32.gmra.mxu0 %v6087
  %v6183 = vpop.f32.mrf.mxu0
  %v6184 = vadd.f32 0.0, %v6183
  %6185 = vmatmul.f32.gmra.mxu0 %v6090
  %v6186 = vpop.f32.mrf.mxu0
  %v6187 = vadd.f32 0.0, %v6186
  %6188 = vdwg.mxu0
  %v6189 = vadd.f32 %v5995, %v6142
  %v6190 = vadd.f32 %v5996, %v6145
  %v6191 = vadd.f32 %v5997, %v6148
  %v6192 = vadd.f32 %v5998, %v6151
  %v6193 = vadd.f32 %v5999, %v6154
  %v6194 = vadd.f32 %v6000, %v6157
  %v6195 = vadd.f32 %v6001, %v6160
  %v6196 = vadd.f32 %v6002, %v6163
  %v6197 = vadd.f32 %v6003, %v6166
  %v6198 = vadd.f32 %v6004, %v6169
  %v6199 = vadd.f32 %v6005, %v6172
  %v6200 = vadd.f32 %v6006, %v6175
  %v6201 = vadd.f32 %v6007, %v6178
  %v6202 = vadd.f32 %v6008, %v6181
  %v6203 = vadd.f32 %v6009, %v6184
  %v6204 = vadd.f32 %v6010, %v6187
  %s6205 = scalar_lea.vmem %s3, 768
  %v6206 = vld [vmem:[%s6205] sm:$0xff]
  %v6207 = vld [vmem:[%s6205 + $0x8] sm:$0xff]
  %v6208 = vld [vmem:[%s6205 + $0x10] sm:$0xff]
  %v6209 = vld [vmem:[%s6205 + $0x18] sm:$0xff]
  %v6210 = vld [vmem:[%s6205 + $0x20] sm:$0xff]
  %v6211 = vld [vmem:[%s6205 + $0x28] sm:$0xff]
  %v6212 = vld [vmem:[%s6205 + $0x30] sm:$0xff]
  %v6213 = vld [vmem:[%s6205 + $0x38] sm:$0xff]
  %v6214 = vld [vmem:[%s6205 + $0x40] sm:$0xff]
  %v6215 = vld [vmem:[%s6205 + $0x48] sm:$0xff]
  %v6216 = vld [vmem:[%s6205 + $0x50] sm:$0xff]
  %v6217 = vld [vmem:[%s6205 + $0x58] sm:$0xff]
  %v6218 = vld [vmem:[%s6205 + $0x60] sm:$0xff]
  %v6219 = vld [vmem:[%s6205 + $0x68] sm:$0xff]
  %v6220 = vld [vmem:[%s6205 + $0x70] sm:$0xff]
  %v6221 = vld [vmem:[%s6205 + $0x78] sm:$0xff]
  %6222 = vmatpush.msra.mxu0 %v6221
  %6223 = vmatpush.msra.mxu0 %v6220
  %6224 = vmatpush.msra.mxu0 %v6219
  %6225 = vmatpush.msra.mxu0 %v6218
  %6226 = vmatpush.msra.mxu0 %v6217
  %6227 = vmatpush.msra.mxu0 %v6216
  %6228 = vmatpush.msra.mxu0 %v6215
  %6229 = vmatpush.msra.mxu0 %v6214
  %6230 = vmatpush.msra.mxu0 %v6213
  %6231 = vmatpush.msra.mxu0 %v6212
  %6232 = vmatpush.msra.mxu0 %v6211
  %6233 = vmatpush.msra.mxu0 %v6210
  %6234 = vmatpush.msra.mxu0 %v6209
  %6235 = vmatpush.msra.mxu0 %v6208
  %6236 = vmatpush.msra.mxu0 %v6207
  %6237 = vmatpush.msra.mxu0 %v6206
  %6238 = vmatmul.f32.gmra.mxu0 %v5263
  %v6239 = vpop.f32.mrf.mxu0
  %v6240 = vadd.f32 0.0, %v6239
  %6241 = vmatmul.f32.gmra.mxu0 %v5271
  %v6242 = vpop.f32.mrf.mxu0
  %v6243 = vadd.f32 0.0, %v6242
  %6244 = vmatmul.f32.gmra.mxu0 %v5279
  %v6245 = vpop.f32.mrf.mxu0
  %v6246 = vadd.f32 0.0, %v6245
  %6247 = vmatmul.f32.gmra.mxu0 %v5287
  %v6248 = vpop.f32.mrf.mxu0
  %v6249 = vadd.f32 0.0, %v6248
  %6250 = vmatmul.f32.gmra.mxu0 %v5295
  %v6251 = vpop.f32.mrf.mxu0
  %v6252 = vadd.f32 0.0, %v6251
  %6253 = vmatmul.f32.gmra.mxu0 %v5303
  %v6254 = vpop.f32.mrf.mxu0
  %v6255 = vadd.f32 0.0, %v6254
  %6256 = vmatmul.f32.gmra.mxu0 %v5311
  %v6257 = vpop.f32.mrf.mxu0
  %v6258 = vadd.f32 0.0, %v6257
  %6259 = vmatmul.f32.gmra.mxu0 %v5319
  %v6260 = vpop.f32.mrf.mxu0
  %v6261 = vadd.f32 0.0, %v6260
  %6262 = vmatmul.f32.gmra.mxu0 %v5331
  %v6263 = vpop.f32.mrf.mxu0
  %v6264 = vadd.f32 0.0, %v6263
  %6265 = vmatmul.f32.gmra.mxu0 %v5339
  %v6266 = vpop.f32.mrf.mxu0
  %v6267 = vadd.f32 0.0, %v6266
  %6268 = vmatmul.f32.gmra.mxu0 %v5347
  %v6269 = vpop.f32.mrf.mxu0
  %v6270 = vadd.f32 0.0, %v6269
  %6271 = vmatmul.f32.gmra.mxu0 %v5355
  %v6272 = vpop.f32.mrf.mxu0
  %v6273 = vadd.f32 0.0, %v6272
  %6274 = vmatmul.f32.gmra.mxu0 %v5363
  %v6275 = vpop.f32.mrf.mxu0
  %v6276 = vadd.f32 0.0, %v6275
  %6277 = vmatmul.f32.gmra.mxu0 %v5371
  %v6278 = vpop.f32.mrf.mxu0
  %v6279 = vadd.f32 0.0, %v6278
  %6280 = vmatmul.f32.gmra.mxu0 %v5379
  %v6281 = vpop.f32.mrf.mxu0
  %v6282 = vadd.f32 0.0, %v6281
  %6283 = vmatmul.f32.gmra.mxu0 %v5387
  %v6284 = vpop.f32.mrf.mxu0
  %v6285 = vadd.f32 0.0, %v6284
  %6286 = vdwg.mxu0
  %v6287 = vadd.f32 %v6189, %v6240
  %v6288 = vadd.f32 %v6190, %v6243
  %v6289 = vadd.f32 %v6191, %v6246
  %v6290 = vadd.f32 %v6192, %v6249
  %v6291 = vadd.f32 %v6193, %v6252
  %v6292 = vadd.f32 %v6194, %v6255
  %v6293 = vadd.f32 %v6195, %v6258
  %v6294 = vadd.f32 %v6196, %v6261
  %v6295 = vadd.f32 %v6197, %v6264
  %v6296 = vadd.f32 %v6198, %v6267
  %v6297 = vadd.f32 %v6199, %v6270
  %v6298 = vadd.f32 %v6200, %v6273
  %v6299 = vadd.f32 %v6201, %v6276
  %v6300 = vadd.f32 %v6202, %v6279
  %v6301 = vadd.f32 %v6203, %v6282
  %v6302 = vadd.f32 %v6204, %v6285
  %s6303 = scalar_lea.vmem %s3, 896
  %v6304 = vld [vmem:[%s6303] sm:$0xff]
  %v6305 = vld [vmem:[%s6303 + $0x8] sm:$0xff]
  %v6306 = vld [vmem:[%s6303 + $0x10] sm:$0xff]
  %v6307 = vld [vmem:[%s6303 + $0x18] sm:$0xff]
  %v6308 = vld [vmem:[%s6303 + $0x20] sm:$0xff]
  %v6309 = vld [vmem:[%s6303 + $0x28] sm:$0xff]
  %v6310 = vld [vmem:[%s6303 + $0x30] sm:$0xff]
  %v6311 = vld [vmem:[%s6303 + $0x38] sm:$0xff]
  %v6312 = vld [vmem:[%s6303 + $0x40] sm:$0xff]
  %v6313 = vld [vmem:[%s6303 + $0x48] sm:$0xff]
  %v6314 = vld [vmem:[%s6303 + $0x50] sm:$0xff]
  %v6315 = vld [vmem:[%s6303 + $0x58] sm:$0xff]
  %v6316 = vld [vmem:[%s6303 + $0x60] sm:$0xff]
  %v6317 = vld [vmem:[%s6303 + $0x68] sm:$0xff]
  %v6318 = vld [vmem:[%s6303 + $0x70] sm:$0xff]
  %v6319 = vld [vmem:[%s6303 + $0x78] sm:$0xff]
  %6320 = vmatpush.msra.mxu0 %v6319
  %6321 = vmatpush.msra.mxu0 %v6318
  %6322 = vmatpush.msra.mxu0 %v6317
  %6323 = vmatpush.msra.mxu0 %v6316
  %6324 = vmatpush.msra.mxu0 %v6315
  %6325 = vmatpush.msra.mxu0 %v6314
  %6326 = vmatpush.msra.mxu0 %v6313
  %6327 = vmatpush.msra.mxu0 %v6312
  %6328 = vmatpush.msra.mxu0 %v6311
  %6329 = vmatpush.msra.mxu0 %v6310
  %6330 = vmatpush.msra.mxu0 %v6309
  %6331 = vmatpush.msra.mxu0 %v6308
  %6332 = vmatpush.msra.mxu0 %v6307
  %6333 = vmatpush.msra.mxu0 %v6306
  %6334 = vmatpush.msra.mxu0 %v6305
  %6335 = vmatpush.msra.mxu0 %v6304
  %6336 = vmatmul.f32.gmra.mxu0 %v5395
  %v6337 = vpop.f32.mrf.mxu0
  %v6338 = vadd.f32 0.0, %v6337
  %6339 = vmatmul.f32.gmra.mxu0 %v5399
  %v6340 = vpop.f32.mrf.mxu0
  %v6341 = vadd.f32 0.0, %v6340
  %6342 = vmatmul.f32.gmra.mxu0 %v5403
  %v6343 = vpop.f32.mrf.mxu0
  %v6344 = vadd.f32 0.0, %v6343
  %6345 = vmatmul.f32.gmra.mxu0 %v5407
  %v6346 = vpop.f32.mrf.mxu0
  %v6347 = vadd.f32 0.0, %v6346
  %6348 = vmatmul.f32.gmra.mxu0 %v5411
  %v6349 = vpop.f32.mrf.mxu0
  %v6350 = vadd.f32 0.0, %v6349
  %6351 = vmatmul.f32.gmra.mxu0 %v5415
  %v6352 = vpop.f32.mrf.mxu0
  %v6353 = vadd.f32 0.0, %v6352
  %6354 = vmatmul.f32.gmra.mxu0 %v5419
  %v6355 = vpop.f32.mrf.mxu0
  %v6356 = vadd.f32 0.0, %v6355
  %6357 = vmatmul.f32.gmra.mxu0 %v5423
  %v6358 = vpop.f32.mrf.mxu0
  %v6359 = vadd.f32 0.0, %v6358
  %6360 = vmatmul.f32.gmra.mxu0 %v5429
  %v6361 = vpop.f32.mrf.mxu0
  %v6362 = vadd.f32 0.0, %v6361
  %6363 = vmatmul.f32.gmra.mxu0 %v5433
  %v6364 = vpop.f32.mrf.mxu0
  %v6365 = vadd.f32 0.0, %v6364
  %6366 = vmatmul.f32.gmra.mxu0 %v5437
  %v6367 = vpop.f32.mrf.mxu0
  %v6368 = vadd.f32 0.0, %v6367
  %6369 = vmatmul.f32.gmra.mxu0 %v5441
  %v6370 = vpop.f32.mrf.mxu0
  %v6371 = vadd.f32 0.0, %v6370
  %6372 = vmatmul.f32.gmra.mxu0 %v5445
  %v6373 = vpop.f32.mrf.mxu0
  %v6374 = vadd.f32 0.0, %v6373
  %6375 = vmatmul.f32.gmra.mxu0 %v5449
  %v6376 = vpop.f32.mrf.mxu0
  %v6377 = vadd.f32 0.0, %v6376
  %6378 = vmatmul.f32.gmra.mxu0 %v5453
  %v6379 = vpop.f32.mrf.mxu0
  %v6380 = vadd.f32 0.0, %v6379
  %6381 = vmatmul.f32.gmra.mxu0 %v5457
  %v6382 = vpop.f32.mrf.mxu0
  %v6383 = vadd.f32 0.0, %v6382
  %6384 = vdwg.mxu0
  %v6385 = vadd.f32 %v6287, %v6338
  %v6386 = vadd.f32 %v6288, %v6341
  %v6387 = vadd.f32 %v6289, %v6344
  %v6388 = vadd.f32 %v6290, %v6347
  %v6389 = vadd.f32 %v6291, %v6350
  %v6390 = vadd.f32 %v6292, %v6353
  %v6391 = vadd.f32 %v6293, %v6356
  %v6392 = vadd.f32 %v6294, %v6359
  %v6393 = vadd.f32 %v6295, %v6362
  %v6394 = vadd.f32 %v6296, %v6365
  %v6395 = vadd.f32 %v6297, %v6368
  %v6396 = vadd.f32 %v6298, %v6371
  %v6397 = vadd.f32 %v6299, %v6374
  %v6398 = vadd.f32 %v6300, %v6377
  %v6399 = vadd.f32 %v6301, %v6380
  %v6400 = vadd.f32 %v6302, %v6383
  %v6405 = vrot.slane %v5319, 1
  %v6406 = vrot.slane %v5321, 1
  %v6407 = vsel %vm2097, %v6405, %v6406
  %v6408 = vrot.slane %v5387, 1
  %v6409 = vrot.slane %v5389, 1
  %v6410 = vsel %vm2097, %v6408, %v6409
  %s6413 = scalar_lea.vmem %s3, 1024
  %v6414 = vld [vmem:[%s6413] sm:$0xff]
  %v6415 = vld [vmem:[%s6413 + $0x8] sm:$0xff]
  %v6416 = vld [vmem:[%s6413 + $0x10] sm:$0xff]
  %v6417 = vld [vmem:[%s6413 + $0x18] sm:$0xff]
  %v6418 = vld [vmem:[%s6413 + $0x20] sm:$0xff]
  %v6419 = vld [vmem:[%s6413 + $0x28] sm:$0xff]
  %v6420 = vld [vmem:[%s6413 + $0x30] sm:$0xff]
  %v6421 = vld [vmem:[%s6413 + $0x38] sm:$0xff]
  %v6422 = vld [vmem:[%s6413 + $0x40] sm:$0xff]
  %v6423 = vld [vmem:[%s6413 + $0x48] sm:$0xff]
  %v6424 = vld [vmem:[%s6413 + $0x50] sm:$0xff]
  %v6425 = vld [vmem:[%s6413 + $0x58] sm:$0xff]
  %v6426 = vld [vmem:[%s6413 + $0x60] sm:$0xff]
  %v6427 = vld [vmem:[%s6413 + $0x68] sm:$0xff]
  %v6428 = vld [vmem:[%s6413 + $0x70] sm:$0xff]
  %v6429 = vld [vmem:[%s6413 + $0x78] sm:$0xff]
  %6430 = vmatpush.msra.mxu0 %v6429
  %6431 = vmatpush.msra.mxu0 %v6428
  %6432 = vmatpush.msra.mxu0 %v6427
  %6433 = vmatpush.msra.mxu0 %v6426
  %6434 = vmatpush.msra.mxu0 %v6425
  %6435 = vmatpush.msra.mxu0 %v6424
  %6436 = vmatpush.msra.mxu0 %v6423
  %6437 = vmatpush.msra.mxu0 %v6422
  %6438 = vmatpush.msra.mxu0 %v6421
  %6439 = vmatpush.msra.mxu0 %v6420
  %6440 = vmatpush.msra.mxu0 %v6419
  %6441 = vmatpush.msra.mxu0 %v6418
  %6442 = vmatpush.msra.mxu0 %v6417
  %6443 = vmatpush.msra.mxu0 %v6416
  %6444 = vmatpush.msra.mxu0 %v6415
  %6445 = vmatpush.msra.mxu0 %v6414
  %6446 = vmatmul.f32.gmra.mxu0 %v5658
  %v6447 = vpop.f32.mrf.mxu0
  %v6448 = vadd.f32 0.0, %v6447
  %6449 = vmatmul.f32.gmra.mxu0 %v5661
  %v6450 = vpop.f32.mrf.mxu0
  %v6451 = vadd.f32 0.0, %v6450
  %6452 = vmatmul.f32.gmra.mxu0 %v5664
  %v6453 = vpop.f32.mrf.mxu0
  %v6454 = vadd.f32 0.0, %v6453
  %6455 = vmatmul.f32.gmra.mxu0 %v5667
  %v6456 = vpop.f32.mrf.mxu0
  %v6457 = vadd.f32 0.0, %v6456
  %6458 = vmatmul.f32.gmra.mxu0 %v5670
  %v6459 = vpop.f32.mrf.mxu0
  %v6460 = vadd.f32 0.0, %v6459
  %6461 = vmatmul.f32.gmra.mxu0 %v5673
  %v6462 = vpop.f32.mrf.mxu0
  %v6463 = vadd.f32 0.0, %v6462
  %6464 = vmatmul.f32.gmra.mxu0 %v5676
  %v6465 = vpop.f32.mrf.mxu0
  %v6466 = vadd.f32 0.0, %v6465
  %6467 = vmatmul.f32.gmra.mxu0 %v6407
  %v6468 = vpop.f32.mrf.mxu0
  %v6469 = vadd.f32 0.0, %v6468
  %6470 = vmatmul.f32.gmra.mxu0 %v5682
  %v6471 = vpop.f32.mrf.mxu0
  %v6472 = vadd.f32 0.0, %v6471
  %6473 = vmatmul.f32.gmra.mxu0 %v5685
  %v6474 = vpop.f32.mrf.mxu0
  %v6475 = vadd.f32 0.0, %v6474
  %6476 = vmatmul.f32.gmra.mxu0 %v5688
  %v6477 = vpop.f32.mrf.mxu0
  %v6478 = vadd.f32 0.0, %v6477
  %6479 = vmatmul.f32.gmra.mxu0 %v5691
  %v6480 = vpop.f32.mrf.mxu0
  %v6481 = vadd.f32 0.0, %v6480
  %6482 = vmatmul.f32.gmra.mxu0 %v5694
  %v6483 = vpop.f32.mrf.mxu0
  %v6484 = vadd.f32 0.0, %v6483
  %6485 = vmatmul.f32.gmra.mxu0 %v5697
  %v6486 = vpop.f32.mrf.mxu0
  %v6487 = vadd.f32 0.0, %v6486
  %6488 = vmatmul.f32.gmra.mxu0 %v5700
  %v6489 = vpop.f32.mrf.mxu0
  %v6490 = vadd.f32 0.0, %v6489
  %6491 = vmatmul.f32.gmra.mxu0 %v6410
  %v6492 = vpop.f32.mrf.mxu0
  %v6493 = vadd.f32 0.0, %v6492
  %6494 = vdwg.mxu0
  %v6495 = vadd.f32 %v6385, %v6448
  %v6496 = vadd.f32 %v6386, %v6451
  %v6497 = vadd.f32 %v6387, %v6454
  %v6498 = vadd.f32 %v6388, %v6457
  %v6499 = vadd.f32 %v6389, %v6460
  %v6500 = vadd.f32 %v6390, %v6463
  %v6501 = vadd.f32 %v6391, %v6466
  %v6502 = vadd.f32 %v6392, %v6469
  %v6503 = vadd.f32 %v6393, %v6472
  %v6504 = vadd.f32 %v6394, %v6475
  %v6505 = vadd.f32 %v6395, %v6478
  %v6506 = vadd.f32 %v6396, %v6481
  %v6507 = vadd.f32 %v6397, %v6484
  %v6508 = vadd.f32 %v6398, %v6487
  %v6509 = vadd.f32 %v6399, %v6490
  %v6510 = vadd.f32 %v6400, %v6493
  %v6511 = vld [vmem:[%s4] sm:$0x1]
  %v6512 = vld [vmem:[%s4 + $0x1] sm:$0x1]
  %v6513 = vld [vmem:[%s4 + $0x2] sm:$0x1]
  %v6514 = vperm.slane %v6511, 0
  %v6515 = vadd.f32 %v6495, %v6514
  %v6516 = vadd.f32 %v6496, %v6514
  %v6517 = vadd.f32 %v6497, %v6514
  %v6518 = vadd.f32 %v6498, %v6514
  %v6519 = vadd.f32 %v6499, %v6514
  %v6520 = vadd.f32 %v6500, %v6514
  %v6521 = vadd.f32 %v6501, %v6514
  %v6522 = vadd.f32 %v6502, %v6514
  %v6523 = vadd.f32 %v6503, %v6514
  %v6524 = vadd.f32 %v6504, %v6514
  %v6525 = vadd.f32 %v6505, %v6514
  %v6526 = vadd.f32 %v6506, %v6514
  %v6527 = vadd.f32 %v6507, %v6514
  %v6528 = vadd.f32 %v6508, %v6514
  %v6529 = vadd.f32 %v6509, %v6514
  %v6530 = vadd.f32 %v6510, %v6514
  %vm6531 = vcmp.ge.f32.partialorder %v6515, 0.0
  %vm6532 = vcmp.ge.f32.partialorder %v6516, 0.0
  %vm6533 = vcmp.ge.f32.partialorder %v6517, 0.0
  %vm6534 = vcmp.ge.f32.partialorder %v6518, 0.0
  %vm6535 = vcmp.ge.f32.partialorder %v6519, 0.0
  %vm6536 = vcmp.ge.f32.partialorder %v6520, 0.0
  %vm6537 = vcmp.ge.f32.partialorder %v6521, 0.0
  %vm6538 = vcmp.ge.f32.partialorder %v6522, 0.0
  %vm6539 = vcmp.ge.f32.partialorder %v6523, 0.0
  %vm6540 = vcmp.ge.f32.partialorder %v6524, 0.0
  %vm6541 = vcmp.ge.f32.partialorder %v6525, 0.0
  %vm6542 = vcmp.ge.f32.partialorder %v6526, 0.0
  %vm6543 = vcmp.ge.f32.partialorder %v6527, 0.0
  %vm6544 = vcmp.ge.f32.partialorder %v6528, 0.0
  %vm6545 = vcmp.ge.f32.partialorder %v6529, 0.0
  %vm6546 = vcmp.ge.f32.partialorder %v6530, 0.0
  %v6547 = vmul.f32 %v6515, 0.2
  %v6548 = vmul.f32 %v6516, 0.2
  %v6549 = vmul.f32 %v6517, 0.2
  %v6550 = vmul.f32 %v6518, 0.2
  %v6551 = vmul.f32 %v6519, 0.2
  %v6552 = vmul.f32 %v6520, 0.2
  %v6553 = vmul.f32 %v6521, 0.2
  %v6554 = vmul.f32 %v6522, 0.2
  %v6555 = vmul.f32 %v6523, 0.2
  %v6556 = vmul.f32 %v6524, 0.2
  %v6557 = vmul.f32 %v6525, 0.2
  %v6558 = vmul.f32 %v6526, 0.2
  %v6559 = vmul.f32 %v6527, 0.2
  %v6560 = vmul.f32 %v6528, 0.2
  %v6561 = vmul.f32 %v6529, 0.2
  %v6562 = vmul.f32 %v6530, 0.2
  %v6563 = vsel %vm6531, %v6515, %v6547
  %v6564 = vsel %vm6532, %v6516, %v6548
  %v6565 = vsel %vm6533, %v6517, %v6549
  %v6566 = vsel %vm6534, %v6518, %v6550
  %v6567 = vsel %vm6535, %v6519, %v6551
  %v6568 = vsel %vm6536, %v6520, %v6552
  %v6569 = vsel %vm6537, %v6521, %v6553
  %v6570 = vsel %vm6538, %v6522, %v6554
  %v6571 = vsel %vm6539, %v6523, %v6555
  %v6572 = vsel %vm6540, %v6524, %v6556
  %v6573 = vsel %vm6541, %v6525, %v6557
  %v6574 = vsel %vm6542, %v6526, %v6558
  %v6575 = vsel %vm6543, %v6527, %v6559
  %v6576 = vsel %vm6544, %v6528, %v6560
  %v6577 = vsel %vm6545, %v6529, %v6561
  %v6578 = vsel %vm6546, %v6530, %v6562
  %v6579 = vperm.slane %v6512, 0
  %v6580 = vmul.f32 %v6563, %v6579
  %v6581 = vmul.f32 %v6564, %v6579
  %v6582 = vmul.f32 %v6565, %v6579
  %v6583 = vmul.f32 %v6566, %v6579
  %v6584 = vmul.f32 %v6567, %v6579
  %v6585 = vmul.f32 %v6568, %v6579
  %v6586 = vmul.f32 %v6569, %v6579
  %v6587 = vmul.f32 %v6570, %v6579
  %v6588 = vmul.f32 %v6571, %v6579
  %v6589 = vmul.f32 %v6572, %v6579
  %v6590 = vmul.f32 %v6573, %v6579
  %v6591 = vmul.f32 %v6574, %v6579
  %v6592 = vmul.f32 %v6575, %v6579
  %v6593 = vmul.f32 %v6576, %v6579
  %v6594 = vmul.f32 %v6577, %v6579
  %v6595 = vmul.f32 %v6578, %v6579
  %v6596 = vperm.slane %v6513, 0
  %v6597 = vadd.f32 %v6580, %v6596
  %v6598 = vadd.f32 %v6581, %v6596
  %v6599 = vadd.f32 %v6582, %v6596
  %v6600 = vadd.f32 %v6583, %v6596
  %v6601 = vadd.f32 %v6584, %v6596
  %v6602 = vadd.f32 %v6585, %v6596
  %v6603 = vadd.f32 %v6586, %v6596
  %v6604 = vadd.f32 %v6587, %v6596
  %v6605 = vadd.f32 %v6588, %v6596
  %v6606 = vadd.f32 %v6589, %v6596
  %v6607 = vadd.f32 %v6590, %v6596
  %v6608 = vadd.f32 %v6591, %v6596
  %v6609 = vadd.f32 %v6592, %v6596
  %v6610 = vadd.f32 %v6593, %v6596
  %v6611 = vadd.f32 %v6594, %v6596
  %v6612 = vadd.f32 %v6595, %v6596
  %6613 = vst [vmem:[#allocation4] sm:$0xff] 0.0
  %6614 = vst [vmem:[#allocation4 + $0x8] sm:$0x3] 0.0
  %6615 = vst [vmem:[#allocation4 + $0x10] sm:$0xff] 0.0
  %6616 = vst [vmem:[#allocation4 + $0x18] sm:$0x3] 0.0
  %6617 = vst [vmem:[#allocation4 + $0x20] sm:$0xff] 0.0
  %6618 = vst [vmem:[#allocation4 + $0x28] sm:$0x3] 0.0
  %6619 = vst [vmem:[#allocation4 + $0x30] sm:$0xff] 0.0
  %6620 = vst [vmem:[#allocation4 + $0x38] sm:$0x3] 0.0
  %6621 = vst [vmem:[#allocation4 + $0x40] sm:$0xff] 0.0
  %6622 = vst [vmem:[#allocation4 + $0x48] sm:$0x3] 0.0
  %6623 = vst [vmem:[#allocation4 + $0x50] sm:$0xff] 0.0
  %6624 = vst [vmem:[#allocation4 + $0x58] sm:$0x3] 0.0
  %6625 = vst [vmem:[#allocation4 + $0x60] sm:$0xff] 0.0
  %6626 = vst [vmem:[#allocation4 + $0x68] sm:$0x3] 0.0
  %6627 = vst [vmem:[#allocation4 + $0x70] sm:$0xff] 0.0
  %6628 = vst [vmem:[#allocation4 + $0x78] sm:$0x3] 0.0
  %6629 = vst [vmem:[#allocation4 + $0x80] sm:$0xff] 0.0
  %6630 = vst [vmem:[#allocation4 + $0x88] sm:$0x3] 0.0
  %6631 = vst [vmem:[#allocation4 + $0x90] sm:$0xff] 0.0
  %6632 = vst [vmem:[#allocation4 + $0x98] sm:$0x3] 0.0
  %6633 = vst [vmem:[#allocation4 + $0xa0] sm:$0xff] 0.0
  %6634 = vst [vmem:[#allocation4 + $0xa8] sm:$0x3] 0.0
  %6635 = vst [vmem:[#allocation4 + $0xb0] sm:$0xff] 0.0
  %6636 = vst [vmem:[#allocation4 + $0xb8] sm:$0x3] 0.0
  %6637 = vst [vmem:[#allocation4 + $0xc0] sm:$0xff] 0.0
  %6638 = vst [vmem:[#allocation4 + $0xc8] sm:$0x3] 0.0
  %6639 = vst [vmem:[#allocation4 + $0xd0] sm:$0xff] 0.0
  %6640 = vst [vmem:[#allocation4 + $0xd8] sm:$0x3] 0.0
  %6641 = vst [vmem:[#allocation4 + $0xe0] sm:$0xff] 0.0
  %6642 = vst [vmem:[#allocation4 + $0xe8] sm:$0x3] 0.0
  %6643 = vst [vmem:[#allocation4 + $0xf0] sm:$0xff] 0.0
  %6644 = vst [vmem:[#allocation4 + $0xf8] sm:$0x3] 0.0
  %6645 = vst [vmem:[#allocation4 + $0x100] sm:$0xff] 0.0
  %6646 = vst [vmem:[#allocation4 + $0x108] sm:$0x3] 0.0
  %6647 = vst [vmem:[#allocation4 + $0x110] sm:$0xff] 0.0
  %6648 = vst [vmem:[#allocation4 + $0x118] sm:$0x3] 0.0
  %6649 = vst [vmem:[#allocation4 + $0x120] sm:$0xff] 0.0
  %6650 = vst [vmem:[#allocation4 + $0x128] sm:$0x3] 0.0
  %6651 = vst [vmem:[#allocation4 + $0x130] sm:$0xff] 0.0
  %6652 = vst [vmem:[#allocation4 + $0x138] sm:$0x3] 0.0
  %s6653 = scalar_lea.vmem [#allocation4], 16
  %6654 = vst [vmem:[%s6653 + $0x1] sm:$0xff] %v6597
  %6655 = vst [vmem:[%s6653 + $0x11] sm:$0xff] %v6598
  %6656 = vst [vmem:[%s6653 + $0x21] sm:$0xff] %v6599
  %6657 = vst [vmem:[%s6653 + $0x31] sm:$0xff] %v6600
  %6658 = vst [vmem:[%s6653 + $0x41] sm:$0xff] %v6601
  %6659 = vst [vmem:[%s6653 + $0x51] sm:$0xff] %v6602
  %6660 = vst [vmem:[%s6653 + $0x61] sm:$0xff] %v6603
  %6661 = vst [vmem:[%s6653 + $0x71] sm:$0xff] %v6604
  %6662 = vst [vmem:[%s6653 + $0xa1] sm:$0xff] %v6605
  %6663 = vst [vmem:[%s6653 + $0xb1] sm:$0xff] %v6606
  %6664 = vst [vmem:[%s6653 + $0xc1] sm:$0xff] %v6607
  %6665 = vst [vmem:[%s6653 + $0xd1] sm:$0xff] %v6608
  %6666 = vst [vmem:[%s6653 + $0xe1] sm:$0xff] %v6609
  %6667 = vst [vmem:[%s6653 + $0xf1] sm:$0xff] %v6610
  %6668 = vst [vmem:[%s6653 + $0x101] sm:$0xff] %v6611
  %6669 = vst [vmem:[%s6653 + $0x111] sm:$0xff] %v6612
  %v6670 = vld [vmem:[#allocation4] ss:$2 sm:$0x1f]
  %s6671 = scalar_lea.vmem [#allocation4], 16
  %v6672 = vld [vmem:[%s6671] ss:$2 sm:$0x1f]
  %s6673 = scalar_lea.vmem [#allocation4], 32
  %v6674 = vld [vmem:[%s6673] ss:$2 sm:$0x1f]
  %s6675 = scalar_lea.vmem [#allocation4], 48
  %v6676 = vld [vmem:[%s6675] ss:$2 sm:$0x1f]
  %s6677 = scalar_lea.vmem [#allocation4], 64
  %v6678 = vld [vmem:[%s6677] ss:$2 sm:$0x1f]
  %s6679 = scalar_lea.vmem [#allocation4], 80
  %v6680 = vld [vmem:[%s6679] ss:$2 sm:$0x1f]
  %s6681 = scalar_lea.vmem [#allocation4], 96
  %v6682 = vld [vmem:[%s6681] ss:$2 sm:$0x1f]
  %s6683 = scalar_lea.vmem [#allocation4], 112
  %v6684 = vld [vmem:[%s6683] ss:$2 sm:$0x1f]
  %s6685 = scalar_lea.vmem [#allocation4], 128
  %v6686 = vld [vmem:[%s6685] ss:$2 sm:$0x1f]
  %s6687 = scalar_lea.vmem [#allocation4], 160
  %v6688 = vld [vmem:[%s6687] ss:$2 sm:$0x1f]
  %s6689 = scalar_lea.vmem [#allocation4], 176
  %v6690 = vld [vmem:[%s6689] ss:$2 sm:$0x1f]
  %s6691 = scalar_lea.vmem [#allocation4], 192
  %v6692 = vld [vmem:[%s6691] ss:$2 sm:$0x1f]
  %s6693 = scalar_lea.vmem [#allocation4], 208
  %v6694 = vld [vmem:[%s6693] ss:$2 sm:$0x1f]
  %s6695 = scalar_lea.vmem [#allocation4], 224
  %v6696 = vld [vmem:[%s6695] ss:$2 sm:$0x1f]
  %s6697 = scalar_lea.vmem [#allocation4], 240
  %v6698 = vld [vmem:[%s6697] ss:$2 sm:$0x1f]
  %s6699 = scalar_lea.vmem [#allocation4], 256
  %v6700 = vld [vmem:[%s6699] ss:$2 sm:$0x1f]
  %s6701 = scalar_lea.vmem [#allocation4], 272
  %v6702 = vld [vmem:[%s6701] ss:$2 sm:$0x1f]
  %s6703 = scalar_lea.vmem [#allocation4], 288
  %v6704 = vld [vmem:[%s6703] ss:$2 sm:$0x1f]
  %s6705 = scalar_lea.vmem [#allocation4], 1
  %v6706 = vld [vmem:[%s6705] ss:$2 sm:$0x1f]
  %s6707 = scalar_lea.vmem [#allocation4], 17
  %v6708 = vld [vmem:[%s6707] ss:$2 sm:$0x1f]
  %s6709 = scalar_lea.vmem [#allocation4], 33
  %v6710 = vld [vmem:[%s6709] ss:$2 sm:$0x1f]
  %s6711 = scalar_lea.vmem [#allocation4], 49
  %v6712 = vld [vmem:[%s6711] ss:$2 sm:$0x1f]
  %s6713 = scalar_lea.vmem [#allocation4], 65
  %v6714 = vld [vmem:[%s6713] ss:$2 sm:$0x1f]
  %s6715 = scalar_lea.vmem [#allocation4], 81
  %v6716 = vld [vmem:[%s6715] ss:$2 sm:$0x1f]
  %s6717 = scalar_lea.vmem [#allocation4], 97
  %v6718 = vld [vmem:[%s6717] ss:$2 sm:$0x1f]
  %s6719 = scalar_lea.vmem [#allocation4], 113
  %v6720 = vld [vmem:[%s6719] ss:$2 sm:$0x1f]
  %s6721 = scalar_lea.vmem [#allocation4], 129
  %v6722 = vld [vmem:[%s6721] ss:$2 sm:$0x1f]
  %s6723 = scalar_lea.vmem [#allocation4], 161
  %v6724 = vld [vmem:[%s6723] ss:$2 sm:$0x1f]
  %s6725 = scalar_lea.vmem [#allocation4], 177
  %v6726 = vld [vmem:[%s6725] ss:$2 sm:$0x1f]
  %s6727 = scalar_lea.vmem [#allocation4], 193
  %v6728 = vld [vmem:[%s6727] ss:$2 sm:$0x1f]
  %s6729 = scalar_lea.vmem [#allocation4], 209
  %v6730 = vld [vmem:[%s6729] ss:$2 sm:$0x1f]
  %s6731 = scalar_lea.vmem [#allocation4], 225
  %v6732 = vld [vmem:[%s6731] ss:$2 sm:$0x1f]
  %s6733 = scalar_lea.vmem [#allocation4], 241
  %v6734 = vld [vmem:[%s6733] ss:$2 sm:$0x1f]
  %s6735 = scalar_lea.vmem [#allocation4], 257
  %v6736 = vld [vmem:[%s6735] ss:$2 sm:$0x1f]
  %s6737 = scalar_lea.vmem [#allocation4], 273
  %v6738 = vld [vmem:[%s6737] ss:$2 sm:$0x1f]
  %s6739 = scalar_lea.vmem [#allocation4], 289
  %v6740 = vld [vmem:[%s6739] ss:$2 sm:$0x1f]
  %v6741 = vld [vmem:[%s5] sm:$0xff]
  %v6742 = vld [vmem:[%s5 + $0x8] sm:$0xff]
  %v6743 = vld [vmem:[%s5 + $0x10] sm:$0xff]
  %v6744 = vld [vmem:[%s5 + $0x18] sm:$0xff]
  %v6745 = vld [vmem:[%s5 + $0x20] sm:$0xff]
  %v6746 = vld [vmem:[%s5 + $0x28] sm:$0xff]
  %v6747 = vld [vmem:[%s5 + $0x30] sm:$0xff]
  %v6748 = vld [vmem:[%s5 + $0x38] sm:$0xff]
  %v6749 = vld [vmem:[%s5 + $0x40] sm:$0xff]
  %v6750 = vld [vmem:[%s5 + $0x48] sm:$0xff]
  %v6751 = vld [vmem:[%s5 + $0x50] sm:$0xff]
  %v6752 = vld [vmem:[%s5 + $0x58] sm:$0xff]
  %v6753 = vld [vmem:[%s5 + $0x60] sm:$0xff]
  %v6754 = vld [vmem:[%s5 + $0x68] sm:$0xff]
  %v6755 = vld [vmem:[%s5 + $0x70] sm:$0xff]
  %v6756 = vld [vmem:[%s5 + $0x78] sm:$0xff]
  %s6757 = scalar_lea.vmem %s5, 128
  %v6758 = vld [vmem:[%s6757] sm:$0xff]
  %v6759 = vld [vmem:[%s6757 + $0x8] sm:$0xff]
  %v6760 = vld [vmem:[%s6757 + $0x10] sm:$0xff]
  %v6761 = vld [vmem:[%s6757 + $0x18] sm:$0xff]
  %v6762 = vld [vmem:[%s6757 + $0x20] sm:$0xff]
  %v6763 = vld [vmem:[%s6757 + $0x28] sm:$0xff]
  %v6764 = vld [vmem:[%s6757 + $0x30] sm:$0xff]
  %v6765 = vld [vmem:[%s6757 + $0x38] sm:$0xff]
  %v6766 = vld [vmem:[%s6757 + $0x40] sm:$0xff]
  %v6767 = vld [vmem:[%s6757 + $0x48] sm:$0xff]
  %v6768 = vld [vmem:[%s6757 + $0x50] sm:$0xff]
  %v6769 = vld [vmem:[%s6757 + $0x58] sm:$0xff]
  %v6770 = vld [vmem:[%s6757 + $0x60] sm:$0xff]
  %v6771 = vld [vmem:[%s6757 + $0x68] sm:$0xff]
  %v6772 = vld [vmem:[%s6757 + $0x70] sm:$0xff]
  %v6773 = vld [vmem:[%s6757 + $0x78] sm:$0xff]
  %6782 = vst [vmem:[#allocation1] ss:$2 sm:$0xff] %v6706
  %s6783 = scalar_lea.vmem [#allocation1], 1
  %6784 = vst [vmem:[%s6783] ss:$2 sm:$0xff] %v6710
  %s6785 = scalar_lea.vmem [#allocation1], 16
  %6786 = vst [vmem:[%s6785] ss:$2 sm:$0xff] %v6714
  %s6787 = scalar_lea.vmem [#allocation1], 17
  %6788 = vst [vmem:[%s6787] ss:$2 sm:$0xff] %v6718
  %s6789 = scalar_lea.vmem [#allocation1], 32
  %6790 = vst [vmem:[%s6789] ss:$2 sm:$0xff] %v6724
  %s6791 = scalar_lea.vmem [#allocation1], 33
  %6792 = vst [vmem:[%s6791] ss:$2 sm:$0xff] %v6728
  %s6793 = scalar_lea.vmem [#allocation1], 48
  %6794 = vst [vmem:[%s6793] ss:$2 sm:$0xff] %v6732
  %s6795 = scalar_lea.vmem [#allocation1], 49
  %6796 = vst [vmem:[%s6795] ss:$2 sm:$0xff] %v6736
  %v6797 = vld.sshfl [vmem:[#allocation1] sm:$0xff pattern:$0x75316420]
  %v6798 = vld.sshfl [vmem:[#allocation1 + $0x10] sm:$0xff pattern:$0x75316420]
  %v6799 = vld.sshfl [vmem:[#allocation1 + $0x20] sm:$0xff pattern:$0x75316420]
  %v6800 = vld.sshfl [vmem:[#allocation1 + $0x30] sm:$0xff pattern:$0x75316420]
  %6805 = vmatpush.msra.mxu0 %v6773
  %6806 = vmatpush.msra.mxu0 %v6772
  %6807 = vmatpush.msra.mxu0 %v6771
  %6808 = vmatpush.msra.mxu0 %v6770
  %6809 = vmatpush.msra.mxu0 %v6769
  %6810 = vmatpush.msra.mxu0 %v6768
  %6811 = vmatpush.msra.mxu0 %v6767
  %6812 = vmatpush.msra.mxu0 %v6766
  %6813 = vmatpush.msra.mxu0 %v6765
  %6814 = vmatpush.msra.mxu0 %v6764
  %6815 = vmatpush.msra.mxu0 %v6763
  %6816 = vmatpush.msra.mxu0 %v6762
  %6817 = vmatpush.msra.mxu0 %v6761
  %6818 = vmatpush.msra.mxu0 %v6760
  %6819 = vmatpush.msra.mxu0 %v6759
  %6820 = vmatpush.msra.mxu0 %v6758
  %6821 = vmatmul.f32.gmra.mxu0 %v6797
  %v6822 = vpop.f32.mrf.mxu0
  %v6823 = vadd.f32 0.0, %v6822
  %6824 = vmatmul.f32.gmra.mxu0 %v6798
  %v6825 = vpop.f32.mrf.mxu0
  %v6826 = vadd.f32 0.0, %v6825
  %6827 = vmatmul.f32.gmra.mxu0 %v6799
  %v6828 = vpop.f32.mrf.mxu0
  %v6829 = vadd.f32 0.0, %v6828
  %6830 = vmatmul.f32.gmra.mxu0 %v6800
  %v6831 = vpop.f32.mrf.mxu0
  %v6832 = vadd.f32 0.0, %v6831
  %6833 = vdwg.mxu0
  %6842 = vst [vmem:[#allocation1] ss:$2 sm:$0xff] %v6670
  %s6843 = scalar_lea.vmem [#allocation1], 1
  %6844 = vst [vmem:[%s6843] ss:$2 sm:$0xff] %v6674
  %s6845 = scalar_lea.vmem [#allocation1], 16
  %6846 = vst [vmem:[%s6845] ss:$2 sm:$0xff] %v6678
  %s6847 = scalar_lea.vmem [#allocation1], 17
  %6848 = vst [vmem:[%s6847] ss:$2 sm:$0xff] %v6682
  %s6849 = scalar_lea.vmem [#allocation1], 32
  %6850 = vst [vmem:[%s6849] ss:$2 sm:$0xff] %v6688
  %s6851 = scalar_lea.vmem [#allocation1], 33
  %6852 = vst [vmem:[%s6851] ss:$2 sm:$0xff] %v6692
  %s6853 = scalar_lea.vmem [#allocation1], 48
  %6854 = vst [vmem:[%s6853] ss:$2 sm:$0xff] %v6696
  %s6855 = scalar_lea.vmem [#allocation1], 49
  %6856 = vst [vmem:[%s6855] ss:$2 sm:$0xff] %v6700
  %v6857 = vld.sshfl [vmem:[#allocation1] sm:$0xff pattern:$0x75316420]
  %v6858 = vld.sshfl [vmem:[#allocation1 + $0x10] sm:$0xff pattern:$0x75316420]
  %v6859 = vld.sshfl [vmem:[#allocation1 + $0x20] sm:$0xff pattern:$0x75316420]
  %v6860 = vld.sshfl [vmem:[#allocation1 + $0x30] sm:$0xff pattern:$0x75316420]
  %6865 = vmatpush.msra.mxu0 %v6756
  %6866 = vmatpush.msra.mxu0 %v6755
  %6867 = vmatpush.msra.mxu0 %v6754
  %6868 = vmatpush.msra.mxu0 %v6753
  %6869 = vmatpush.msra.mxu0 %v6752
  %6870 = vmatpush.msra.mxu0 %v6751
  %6871 = vmatpush.msra.mxu0 %v6750
  %6872 = vmatpush.msra.mxu0 %v6749
  %6873 = vmatpush.msra.mxu0 %v6748
  %6874 = vmatpush.msra.mxu0 %v6747
  %6875 = vmatpush.msra.mxu0 %v6746
  %6876 = vmatpush.msra.mxu0 %v6745
  %6877 = vmatpush.msra.mxu0 %v6744
  %6878 = vmatpush.msra.mxu0 %v6743
  %6879 = vmatpush.msra.mxu0 %v6742
  %6880 = vmatpush.msra.mxu0 %v6741
  %6881 = vmatmul.f32.gmra.mxu0 %v6857
  %v6882 = vpop.f32.mrf.mxu0
  %v6883 = vadd.f32 %v6823, %v6882
  %6884 = vmatmul.f32.gmra.mxu0 %v6858
  %v6885 = vpop.f32.mrf.mxu0
  %v6886 = vadd.f32 %v6826, %v6885
  %6887 = vmatmul.f32.gmra.mxu0 %v6859
  %v6888 = vpop.f32.mrf.mxu0
  %v6889 = vadd.f32 %v6829, %v6888
  %6890 = vmatmul.f32.gmra.mxu0 %v6860
  %v6891 = vpop.f32.mrf.mxu0
  %v6892 = vadd.f32 %v6832, %v6891
  %6893 = vdwg.mxu0
  %v6894 = vrot.slane %v6670, 4
  %v6895 = vrot.slane %v6674, 4
  %v6896 = vrot.slane %v6678, 4
  %v6897 = vrot.slane %v6682, 4
  %v6898 = vrot.slane %v6688, 4
  %v6899 = vrot.slane %v6692, 4
  %v6900 = vrot.slane %v6696, 4
  %v6901 = vrot.slane %v6700, 4
  %vm6902 = vcmask 1042432
  %vm6903 = vcmask 1046532
  %vm6904 = vmor %vm6902, %vm6903
  %v6905 = vrot.slane %v6670, 5
  %v6906 = vrot.slane %v6905, 4
  %v6907 = vrot.slane %v6894, 5
  %v6908 = vsel %vm6904, %v6906, %v6907
  %v6909 = vrot.slane %v6674, 5
  %v6910 = vrot.slane %v6909, 4
  %v6911 = vrot.slane %v6895, 5
  %v6912 = vsel %vm6904, %v6910, %v6911
  %v6913 = vrot.slane %v6678, 5
  %v6914 = vrot.slane %v6913, 4
  %v6915 = vrot.slane %v6896, 5
  %v6916 = vsel %vm6904, %v6914, %v6915
  %v6917 = vrot.slane %v6682, 5
  %v6918 = vrot.slane %v6917, 4
  %v6919 = vrot.slane %v6897, 5
  %v6920 = vsel %vm6904, %v6918, %v6919
  %v6921 = vrot.slane %v6688, 5
  %v6922 = vrot.slane %v6921, 4
  %v6923 = vrot.slane %v6898, 5
  %v6924 = vsel %vm6904, %v6922, %v6923
  %v6925 = vrot.slane %v6692, 5
  %v6926 = vrot.slane %v6925, 4
  %v6927 = vrot.slane %v6899, 5
  %v6928 = vsel %vm6904, %v6926, %v6927
  %v6929 = vrot.slane %v6696, 5
  %v6930 = vrot.slane %v6929, 4
  %v6931 = vrot.slane %v6900, 5
  %v6932 = vsel %vm6904, %v6930, %v6931
  %v6933 = vrot.slane %v6700, 5
  %v6934 = vrot.slane %v6933, 4
  %v6935 = vrot.slane %v6901, 5
  %v6936 = vsel %vm6904, %v6934, %v6935
  %s6937 = scalar_lea.vmem %s5, 256
  %v6938 = vld [vmem:[%s6937] sm:$0xff]
  %v6939 = vld [vmem:[%s6937 + $0x8] sm:$0xff]
  %v6940 = vld [vmem:[%s6937 + $0x10] sm:$0xff]
  %v6941 = vld [vmem:[%s6937 + $0x18] sm:$0xff]
  %v6942 = vld [vmem:[%s6937 + $0x20] sm:$0xff]
  %v6943 = vld [vmem:[%s6937 + $0x28] sm:$0xff]
  %v6944 = vld [vmem:[%s6937 + $0x30] sm:$0xff]
  %v6945 = vld [vmem:[%s6937 + $0x38] sm:$0xff]
  %v6946 = vld [vmem:[%s6937 + $0x40] sm:$0xff]
  %v6947 = vld [vmem:[%s6937 + $0x48] sm:$0xff]
  %v6948 = vld [vmem:[%s6937 + $0x50] sm:$0xff]
  %v6949 = vld [vmem:[%s6937 + $0x58] sm:$0xff]
  %v6950 = vld [vmem:[%s6937 + $0x60] sm:$0xff]
  %v6951 = vld [vmem:[%s6937 + $0x68] sm:$0xff]
  %v6952 = vld [vmem:[%s6937 + $0x70] sm:$0xff]
  %v6953 = vld [vmem:[%s6937 + $0x78] sm:$0xff]
  %6954 = vst [vmem:[#allocation1] ss:$2 sm:$0xff] %v6908
  %s6955 = scalar_lea.vmem [#allocation1], 1
  %6956 = vst [vmem:[%s6955] ss:$2 sm:$0xff] %v6912
  %s6957 = scalar_lea.vmem [#allocation1], 16
  %6958 = vst [vmem:[%s6957] ss:$2 sm:$0xff] %v6916
  %s6959 = scalar_lea.vmem [#allocation1], 17
  %6960 = vst [vmem:[%s6959] ss:$2 sm:$0xff] %v6920
  %s6961 = scalar_lea.vmem [#allocation1], 32
  %6962 = vst [vmem:[%s6961] ss:$2 sm:$0xff] %v6924
  %s6963 = scalar_lea.vmem [#allocation1], 33
  %6964 = vst [vmem:[%s6963] ss:$2 sm:$0xff] %v6928
  %s6965 = scalar_lea.vmem [#allocation1], 48
  %6966 = vst [vmem:[%s6965] ss:$2 sm:$0xff] %v6932
  %s6967 = scalar_lea.vmem [#allocation1], 49
  %6968 = vst [vmem:[%s6967] ss:$2 sm:$0xff] %v6936
  %v6969 = vld.sshfl [vmem:[#allocation1] sm:$0xff pattern:$0x75316420]
  %v6970 = vld.sshfl [vmem:[#allocation1 + $0x10] sm:$0xff pattern:$0x75316420]
  %v6971 = vld.sshfl [vmem:[#allocation1 + $0x20] sm:$0xff pattern:$0x75316420]
  %v6972 = vld.sshfl [vmem:[#allocation1 + $0x30] sm:$0xff pattern:$0x75316420]
  %6977 = vmatpush.msra.mxu0 %v6953
  %6978 = vmatpush.msra.mxu0 %v6952
  %6979 = vmatpush.msra.mxu0 %v6951
  %6980 = vmatpush.msra.mxu0 %v6950
  %6981 = vmatpush.msra.mxu0 %v6949
  %6982 = vmatpush.msra.mxu0 %v6948
  %6983 = vmatpush.msra.mxu0 %v6947
  %6984 = vmatpush.msra.mxu0 %v6946
  %6985 = vmatpush.msra.mxu0 %v6945
  %6986 = vmatpush.msra.mxu0 %v6944
  %6987 = vmatpush.msra.mxu0 %v6943
  %6988 = vmatpush.msra.mxu0 %v6942
  %6989 = vmatpush.msra.mxu0 %v6941
  %6990 = vmatpush.msra.mxu0 %v6940
  %6991 = vmatpush.msra.mxu0 %v6939
  %6992 = vmatpush.msra.mxu0 %v6938
  %6993 = vmatmul.f32.gmra.mxu0 %v6969
  %v6994 = vpop.f32.mrf.mxu0
  %v6995 = vadd.f32 0.0, %v6994
  %6996 = vmatmul.f32.gmra.mxu0 %v6970
  %v6997 = vpop.f32.mrf.mxu0
  %v6998 = vadd.f32 0.0, %v6997
  %6999 = vmatmul.f32.gmra.mxu0 %v6971
  %v7000 = vpop.f32.mrf.mxu0
  %v7001 = vadd.f32 0.0, %v7000
  %7002 = vmatmul.f32.gmra.mxu0 %v6972
  %v7003 = vpop.f32.mrf.mxu0
  %v7004 = vadd.f32 0.0, %v7003
  %7005 = vdwg.mxu0
  %v7006 = vadd.f32 %v6883, %v6995
  %v7007 = vadd.f32 %v6886, %v6998
  %v7008 = vadd.f32 %v6889, %v7001
  %v7009 = vadd.f32 %v6892, %v7004
  %s7010 = scalar_lea.vmem %s5, 384
  %v7011 = vld [vmem:[%s7010] sm:$0xff]
  %v7012 = vld [vmem:[%s7010 + $0x8] sm:$0xff]
  %v7013 = vld [vmem:[%s7010 + $0x10] sm:$0xff]
  %v7014 = vld [vmem:[%s7010 + $0x18] sm:$0xff]
  %v7015 = vld [vmem:[%s7010 + $0x20] sm:$0xff]
  %v7016 = vld [vmem:[%s7010 + $0x28] sm:$0xff]
  %v7017 = vld [vmem:[%s7010 + $0x30] sm:$0xff]
  %v7018 = vld [vmem:[%s7010 + $0x38] sm:$0xff]
  %v7019 = vld [vmem:[%s7010 + $0x40] sm:$0xff]
  %v7020 = vld [vmem:[%s7010 + $0x48] sm:$0xff]
  %v7021 = vld [vmem:[%s7010 + $0x50] sm:$0xff]
  %v7022 = vld [vmem:[%s7010 + $0x58] sm:$0xff]
  %v7023 = vld [vmem:[%s7010 + $0x60] sm:$0xff]
  %v7024 = vld [vmem:[%s7010 + $0x68] sm:$0xff]
  %v7025 = vld [vmem:[%s7010 + $0x70] sm:$0xff]
  %v7026 = vld [vmem:[%s7010 + $0x78] sm:$0xff]
  %7035 = vst [vmem:[#allocation1] ss:$2 sm:$0xff] %v6672
  %s7036 = scalar_lea.vmem [#allocation1], 1
  %7037 = vst [vmem:[%s7036] ss:$2 sm:$0xff] %v6676
  %s7038 = scalar_lea.vmem [#allocation1], 16
  %7039 = vst [vmem:[%s7038] ss:$2 sm:$0xff] %v6680
  %s7040 = scalar_lea.vmem [#allocation1], 17
  %7041 = vst [vmem:[%s7040] ss:$2 sm:$0xff] %v6684
  %s7042 = scalar_lea.vmem [#allocation1], 32
  %7043 = vst [vmem:[%s7042] ss:$2 sm:$0xff] %v6690
  %s7044 = scalar_lea.vmem [#allocation1], 33
  %7045 = vst [vmem:[%s7044] ss:$2 sm:$0xff] %v6694
  %s7046 = scalar_lea.vmem [#allocation1], 48
  %7047 = vst [vmem:[%s7046] ss:$2 sm:$0xff] %v6698
  %s7048 = scalar_lea.vmem [#allocation1], 49
  %7049 = vst [vmem:[%s7048] ss:$2 sm:$0xff] %v6702
  %v7050 = vld.sshfl [vmem:[#allocation1] sm:$0xff pattern:$0x75316420]
  %v7051 = vld.sshfl [vmem:[#allocation1 + $0x10] sm:$0xff pattern:$0x75316420]
  %v7052 = vld.sshfl [vmem:[#allocation1 + $0x20] sm:$0xff pattern:$0x75316420]
  %v7053 = vld.sshfl [vmem:[#allocation1 + $0x30] sm:$0xff pattern:$0x75316420]
  %7058 = vmatpush.msra.mxu0 %v7026
  %7059 = vmatpush.msra.mxu0 %v7025
  %7060 = vmatpush.msra.mxu0 %v7024
  %7061 = vmatpush.msra.mxu0 %v7023
  %7062 = vmatpush.msra.mxu0 %v7022
  %7063 = vmatpush.msra.mxu0 %v7021
  %7064 = vmatpush.msra.mxu0 %v7020
  %7065 = vmatpush.msra.mxu0 %v7019
  %7066 = vmatpush.msra.mxu0 %v7018
  %7067 = vmatpush.msra.mxu0 %v7017
  %7068 = vmatpush.msra.mxu0 %v7016
  %7069 = vmatpush.msra.mxu0 %v7015
  %7070 = vmatpush.msra.mxu0 %v7014
  %7071 = vmatpush.msra.mxu0 %v7013
  %7072 = vmatpush.msra.mxu0 %v7012
  %7073 = vmatpush.msra.mxu0 %v7011
  %7074 = vmatmul.f32.gmra.mxu0 %v7050
  %v7075 = vpop.f32.mrf.mxu0
  %v7076 = vadd.f32 0.0, %v7075
  %7077 = vmatmul.f32.gmra.mxu0 %v7051
  %v7078 = vpop.f32.mrf.mxu0
  %v7079 = vadd.f32 0.0, %v7078
  %7080 = vmatmul.f32.gmra.mxu0 %v7052
  %v7081 = vpop.f32.mrf.mxu0
  %v7082 = vadd.f32 0.0, %v7081
  %7083 = vmatmul.f32.gmra.mxu0 %v7053
  %v7084 = vpop.f32.mrf.mxu0
  %v7085 = vadd.f32 0.0, %v7084
  %7086 = vdwg.mxu0
  %v7087 = vadd.f32 %v7006, %v7076
  %v7088 = vadd.f32 %v7007, %v7079
  %v7089 = vadd.f32 %v7008, %v7082
  %v7090 = vadd.f32 %v7009, %v7085
  %s7091 = scalar_lea.vmem %s5, 512
  %v7092 = vld [vmem:[%s7091] sm:$0xff]
  %v7093 = vld [vmem:[%s7091 + $0x8] sm:$0xff]
  %v7094 = vld [vmem:[%s7091 + $0x10] sm:$0xff]
  %v7095 = vld [vmem:[%s7091 + $0x18] sm:$0xff]
  %v7096 = vld [vmem:[%s7091 + $0x20] sm:$0xff]
  %v7097 = vld [vmem:[%s7091 + $0x28] sm:$0xff]
  %v7098 = vld [vmem:[%s7091 + $0x30] sm:$0xff]
  %v7099 = vld [vmem:[%s7091 + $0x38] sm:$0xff]
  %v7100 = vld [vmem:[%s7091 + $0x40] sm:$0xff]
  %v7101 = vld [vmem:[%s7091 + $0x48] sm:$0xff]
  %v7102 = vld [vmem:[%s7091 + $0x50] sm:$0xff]
  %v7103 = vld [vmem:[%s7091 + $0x58] sm:$0xff]
  %v7104 = vld [vmem:[%s7091 + $0x60] sm:$0xff]
  %v7105 = vld [vmem:[%s7091 + $0x68] sm:$0xff]
  %v7106 = vld [vmem:[%s7091 + $0x70] sm:$0xff]
  %v7107 = vld [vmem:[%s7091 + $0x78] sm:$0xff]
  %7116 = vst [vmem:[#allocation1] ss:$2 sm:$0xff] %v6708
  %s7117 = scalar_lea.vmem [#allocation1], 1
  %7118 = vst [vmem:[%s7117] ss:$2 sm:$0xff] %v6712
  %s7119 = scalar_lea.vmem [#allocation1], 16
  %7120 = vst [vmem:[%s7119] ss:$2 sm:$0xff] %v6716
  %s7121 = scalar_lea.vmem [#allocation1], 17
  %7122 = vst [vmem:[%s7121] ss:$2 sm:$0xff] %v6720
  %s7123 = scalar_lea.vmem [#allocation1], 32
  %7124 = vst [vmem:[%s7123] ss:$2 sm:$0xff] %v6726
  %s7125 = scalar_lea.vmem [#allocation1], 33
  %7126 = vst [vmem:[%s7125] ss:$2 sm:$0xff] %v6730
  %s7127 = scalar_lea.vmem [#allocation1], 48
  %7128 = vst [vmem:[%s7127] ss:$2 sm:$0xff] %v6734
  %s7129 = scalar_lea.vmem [#allocation1], 49
  %7130 = vst [vmem:[%s7129] ss:$2 sm:$0xff] %v6738
  %v7131 = vld.sshfl [vmem:[#allocation1] sm:$0xff pattern:$0x75316420]
  %v7132 = vld.sshfl [vmem:[#allocation1 + $0x10] sm:$0xff pattern:$0x75316420]
  %v7133 = vld.sshfl [vmem:[#allocation1 + $0x20] sm:$0xff pattern:$0x75316420]
  %v7134 = vld.sshfl [vmem:[#allocation1 + $0x30] sm:$0xff pattern:$0x75316420]
  %7139 = vmatpush.msra.mxu0 %v7107
  %7140 = vmatpush.msra.mxu0 %v7106
  %7141 = vmatpush.msra.mxu0 %v7105
  %7142 = vmatpush.msra.mxu0 %v7104
  %7143 = vmatpush.msra.mxu0 %v7103
  %7144 = vmatpush.msra.mxu0 %v7102
  %7145 = vmatpush.msra.mxu0 %v7101
  %7146 = vmatpush.msra.mxu0 %v7100
  %7147 = vmatpush.msra.mxu0 %v7099
  %7148 = vmatpush.msra.mxu0 %v7098
  %7149 = vmatpush.msra.mxu0 %v7097
  %7150 = vmatpush.msra.mxu0 %v7096
  %7151 = vmatpush.msra.mxu0 %v7095
  %7152 = vmatpush.msra.mxu0 %v7094
  %7153 = vmatpush.msra.mxu0 %v7093
  %7154 = vmatpush.msra.mxu0 %v7092
  %7155 = vmatmul.f32.gmra.mxu0 %v7131
  %v7156 = vpop.f32.mrf.mxu0
  %v7157 = vadd.f32 0.0, %v7156
  %7158 = vmatmul.f32.gmra.mxu0 %v7132
  %v7159 = vpop.f32.mrf.mxu0
  %v7160 = vadd.f32 0.0, %v7159
  %7161 = vmatmul.f32.gmra.mxu0 %v7133
  %v7162 = vpop.f32.mrf.mxu0
  %v7163 = vadd.f32 0.0, %v7162
  %7164 = vmatmul.f32.gmra.mxu0 %v7134
  %v7165 = vpop.f32.mrf.mxu0
  %v7166 = vadd.f32 0.0, %v7165
  %7167 = vdwg.mxu0
  %v7168 = vadd.f32 %v7087, %v7157
  %v7169 = vadd.f32 %v7088, %v7160
  %v7170 = vadd.f32 %v7089, %v7163
  %v7171 = vadd.f32 %v7090, %v7166
  %v7172 = vrot.slane %v6672, 4
  %v7173 = vrot.slane %v6676, 4
  %v7174 = vrot.slane %v6680, 4
  %v7175 = vrot.slane %v6684, 4
  %v7176 = vrot.slane %v6690, 4
  %v7177 = vrot.slane %v6694, 4
  %v7178 = vrot.slane %v6698, 4
  %v7179 = vrot.slane %v6702, 4
  %v7180 = vrot.slane %v6672, 5
  %v7181 = vrot.slane %v7180, 4
  %v7182 = vrot.slane %v7172, 5
  %v7183 = vsel %vm6904, %v7181, %v7182
  %v7184 = vrot.slane %v6676, 5
  %v7185 = vrot.slane %v7184, 4
  %v7186 = vrot.slane %v7173, 5
  %v7187 = vsel %vm6904, %v7185, %v7186
  %v7188 = vrot.slane %v6680, 5
  %v7189 = vrot.slane %v7188, 4
  %v7190 = vrot.slane %v7174, 5
  %v7191 = vsel %vm6904, %v7189, %v7190
  %v7192 = vrot.slane %v6684, 5
  %v7193 = vrot.slane %v7192, 4
  %v7194 = vrot.slane %v7175, 5
  %v7195 = vsel %vm6904, %v7193, %v7194
  %v7196 = vrot.slane %v6690, 5
  %v7197 = vrot.slane %v7196, 4
  %v7198 = vrot.slane %v7176, 5
  %v7199 = vsel %vm6904, %v7197, %v7198
  %v7200 = vrot.slane %v6694, 5
  %v7201 = vrot.slane %v7200, 4
  %v7202 = vrot.slane %v7177, 5
  %v7203 = vsel %vm6904, %v7201, %v7202
  %v7204 = vrot.slane %v6698, 5
  %v7205 = vrot.slane %v7204, 4
  %v7206 = vrot.slane %v7178, 5
  %v7207 = vsel %vm6904, %v7205, %v7206
  %v7208 = vrot.slane %v6702, 5
  %v7209 = vrot.slane %v7208, 4
  %v7210 = vrot.slane %v7179, 5
  %v7211 = vsel %vm6904, %v7209, %v7210
  %s7212 = scalar_lea.vmem %s5, 640
  %v7213 = vld [vmem:[%s7212] sm:$0xff]
  %v7214 = vld [vmem:[%s7212 + $0x8] sm:$0xff]
  %v7215 = vld [vmem:[%s7212 + $0x10] sm:$0xff]
  %v7216 = vld [vmem:[%s7212 + $0x18] sm:$0xff]
  %v7217 = vld [vmem:[%s7212 + $0x20] sm:$0xff]
  %v7218 = vld [vmem:[%s7212 + $0x28] sm:$0xff]
  %v7219 = vld [vmem:[%s7212 + $0x30] sm:$0xff]
  %v7220 = vld [vmem:[%s7212 + $0x38] sm:$0xff]
  %v7221 = vld [vmem:[%s7212 + $0x40] sm:$0xff]
  %v7222 = vld [vmem:[%s7212 + $0x48] sm:$0xff]
  %v7223 = vld [vmem:[%s7212 + $0x50] sm:$0xff]
  %v7224 = vld [vmem:[%s7212 + $0x58] sm:$0xff]
  %v7225 = vld [vmem:[%s7212 + $0x60] sm:$0xff]
  %v7226 = vld [vmem:[%s7212 + $0x68] sm:$0xff]
  %v7227 = vld [vmem:[%s7212 + $0x70] sm:$0xff]
  %v7228 = vld [vmem:[%s7212 + $0x78] sm:$0xff]
  %7229 = vst [vmem:[#allocation1] ss:$2 sm:$0xff] %v7183
  %s7230 = scalar_lea.vmem [#allocation1], 1
  %7231 = vst [vmem:[%s7230] ss:$2 sm:$0xff] %v7187
  %s7232 = scalar_lea.vmem [#allocation1], 16
  %7233 = vst [vmem:[%s7232] ss:$2 sm:$0xff] %v7191
  %s7234 = scalar_lea.vmem [#allocation1], 17
  %7235 = vst [vmem:[%s7234] ss:$2 sm:$0xff] %v7195
  %s7236 = scalar_lea.vmem [#allocation1], 32
  %7237 = vst [vmem:[%s7236] ss:$2 sm:$0xff] %v7199
  %s7238 = scalar_lea.vmem [#allocation1], 33
  %7239 = vst [vmem:[%s7238] ss:$2 sm:$0xff] %v7203
  %s7240 = scalar_lea.vmem [#allocation1], 48
  %7241 = vst [vmem:[%s7240] ss:$2 sm:$0xff] %v7207
  %s7242 = scalar_lea.vmem [#allocation1], 49
  %7243 = vst [vmem:[%s7242] ss:$2 sm:$0xff] %v7211
  %v7244 = vld.sshfl [vmem:[#allocation1] sm:$0xff pattern:$0x75316420]
  %v7245 = vld.sshfl [vmem:[#allocation1 + $0x10] sm:$0xff pattern:$0x75316420]
  %v7246 = vld.sshfl [vmem:[#allocation1 + $0x20] sm:$0xff pattern:$0x75316420]
  %v7247 = vld.sshfl [vmem:[#allocation1 + $0x30] sm:$0xff pattern:$0x75316420]
  %7252 = vmatpush.msra.mxu0 %v7228
  %7253 = vmatpush.msra.mxu0 %v7227
  %7254 = vmatpush.msra.mxu0 %v7226
  %7255 = vmatpush.msra.mxu0 %v7225
  %7256 = vmatpush.msra.mxu0 %v7224
  %7257 = vmatpush.msra.mxu0 %v7223
  %7258 = vmatpush.msra.mxu0 %v7222
  %7259 = vmatpush.msra.mxu0 %v7221
  %7260 = vmatpush.msra.mxu0 %v7220
  %7261 = vmatpush.msra.mxu0 %v7219
  %7262 = vmatpush.msra.mxu0 %v7218
  %7263 = vmatpush.msra.mxu0 %v7217
  %7264 = vmatpush.msra.mxu0 %v7216
  %7265 = vmatpush.msra.mxu0 %v7215
  %7266 = vmatpush.msra.mxu0 %v7214
  %7267 = vmatpush.msra.mxu0 %v7213
  %7268 = vmatmul.f32.gmra.mxu0 %v7244
  %v7269 = vpop.f32.mrf.mxu0
  %v7270 = vadd.f32 0.0, %v7269
  %7271 = vmatmul.f32.gmra.mxu0 %v7245
  %v7272 = vpop.f32.mrf.mxu0
  %v7273 = vadd.f32 0.0, %v7272
  %7274 = vmatmul.f32.gmra.mxu0 %v7246
  %v7275 = vpop.f32.mrf.mxu0
  %v7276 = vadd.f32 0.0, %v7275
  %7277 = vmatmul.f32.gmra.mxu0 %v7247
  %v7278 = vpop.f32.mrf.mxu0
  %v7279 = vadd.f32 0.0, %v7278
  %7280 = vdwg.mxu0
  %v7281 = vadd.f32 %v7168, %v7270
  %v7282 = vadd.f32 %v7169, %v7273
  %v7283 = vadd.f32 %v7170, %v7276
  %v7284 = vadd.f32 %v7171, %v7279
  %s7285 = scalar_lea.vmem %s5, 768
  %v7286 = vld [vmem:[%s7285] sm:$0xff]
  %v7287 = vld [vmem:[%s7285 + $0x8] sm:$0xff]
  %v7288 = vld [vmem:[%s7285 + $0x10] sm:$0xff]
  %v7289 = vld [vmem:[%s7285 + $0x18] sm:$0xff]
  %v7290 = vld [vmem:[%s7285 + $0x20] sm:$0xff]
  %v7291 = vld [vmem:[%s7285 + $0x28] sm:$0xff]
  %v7292 = vld [vmem:[%s7285 + $0x30] sm:$0xff]
  %v7293 = vld [vmem:[%s7285 + $0x38] sm:$0xff]
  %v7294 = vld [vmem:[%s7285 + $0x40] sm:$0xff]
  %v7295 = vld [vmem:[%s7285 + $0x48] sm:$0xff]
  %v7296 = vld [vmem:[%s7285 + $0x50] sm:$0xff]
  %v7297 = vld [vmem:[%s7285 + $0x58] sm:$0xff]
  %v7298 = vld [vmem:[%s7285 + $0x60] sm:$0xff]
  %v7299 = vld [vmem:[%s7285 + $0x68] sm:$0xff]
  %v7300 = vld [vmem:[%s7285 + $0x70] sm:$0xff]
  %v7301 = vld [vmem:[%s7285 + $0x78] sm:$0xff]
  %7304 = vst [vmem:[#allocation1] ss:$2 sm:$0xff] %v6674
  %s7305 = scalar_lea.vmem [#allocation1], 1
  %7306 = vst [vmem:[%s7305] ss:$2 sm:$0xff] %v6678
  %s7307 = scalar_lea.vmem [#allocation1], 16
  %7308 = vst [vmem:[%s7307] ss:$2 sm:$0xff] %v6682
  %s7309 = scalar_lea.vmem [#allocation1], 17
  %7310 = vst [vmem:[%s7309] ss:$2 sm:$0xff] %v6686
  %s7311 = scalar_lea.vmem [#allocation1], 32
  %7312 = vst [vmem:[%s7311] ss:$2 sm:$0xff] %v6692
  %s7313 = scalar_lea.vmem [#allocation1], 33
  %7314 = vst [vmem:[%s7313] ss:$2 sm:$0xff] %v6696
  %s7315 = scalar_lea.vmem [#allocation1], 48
  %7316 = vst [vmem:[%s7315] ss:$2 sm:$0xff] %v6700
  %s7317 = scalar_lea.vmem [#allocation1], 49
  %7318 = vst [vmem:[%s7317] ss:$2 sm:$0xff] %v6704
  %v7319 = vld.sshfl [vmem:[#allocation1] sm:$0xff pattern:$0x75316420]
  %v7320 = vld.sshfl [vmem:[#allocation1 + $0x10] sm:$0xff pattern:$0x75316420]
  %v7321 = vld.sshfl [vmem:[#allocation1 + $0x20] sm:$0xff pattern:$0x75316420]
  %v7322 = vld.sshfl [vmem:[#allocation1 + $0x30] sm:$0xff pattern:$0x75316420]
  %7327 = vmatpush.msra.mxu0 %v7301
  %7328 = vmatpush.msra.mxu0 %v7300
  %7329 = vmatpush.msra.mxu0 %v7299
  %7330 = vmatpush.msra.mxu0 %v7298
  %7331 = vmatpush.msra.mxu0 %v7297
  %7332 = vmatpush.msra.mxu0 %v7296
  %7333 = vmatpush.msra.mxu0 %v7295
  %7334 = vmatpush.msra.mxu0 %v7294
  %7335 = vmatpush.msra.mxu0 %v7293
  %7336 = vmatpush.msra.mxu0 %v7292
  %7337 = vmatpush.msra.mxu0 %v7291
  %7338 = vmatpush.msra.mxu0 %v7290
  %7339 = vmatpush.msra.mxu0 %v7289
  %7340 = vmatpush.msra.mxu0 %v7288
  %7341 = vmatpush.msra.mxu0 %v7287
  %7342 = vmatpush.msra.mxu0 %v7286
  %7343 = vmatmul.f32.gmra.mxu0 %v7319
  %v7344 = vpop.f32.mrf.mxu0
  %v7345 = vadd.f32 0.0, %v7344
  %7346 = vmatmul.f32.gmra.mxu0 %v7320
  %v7347 = vpop.f32.mrf.mxu0
  %v7348 = vadd.f32 0.0, %v7347
  %7349 = vmatmul.f32.gmra.mxu0 %v7321
  %v7350 = vpop.f32.mrf.mxu0
  %v7351 = vadd.f32 0.0, %v7350
  %7352 = vmatmul.f32.gmra.mxu0 %v7322
  %v7353 = vpop.f32.mrf.mxu0
  %v7354 = vadd.f32 0.0, %v7353
  %7355 = vdwg.mxu0
  %v7356 = vadd.f32 %v7281, %v7345
  %v7357 = vadd.f32 %v7282, %v7348
  %v7358 = vadd.f32 %v7283, %v7351
  %v7359 = vadd.f32 %v7284, %v7354
  %s7360 = scalar_lea.vmem %s5, 896
  %v7361 = vld [vmem:[%s7360] sm:$0xff]
  %v7362 = vld [vmem:[%s7360 + $0x8] sm:$0xff]
  %v7363 = vld [vmem:[%s7360 + $0x10] sm:$0xff]
  %v7364 = vld [vmem:[%s7360 + $0x18] sm:$0xff]
  %v7365 = vld [vmem:[%s7360 + $0x20] sm:$0xff]
  %v7366 = vld [vmem:[%s7360 + $0x28] sm:$0xff]
  %v7367 = vld [vmem:[%s7360 + $0x30] sm:$0xff]
  %v7368 = vld [vmem:[%s7360 + $0x38] sm:$0xff]
  %v7369 = vld [vmem:[%s7360 + $0x40] sm:$0xff]
  %v7370 = vld [vmem:[%s7360 + $0x48] sm:$0xff]
  %v7371 = vld [vmem:[%s7360 + $0x50] sm:$0xff]
  %v7372 = vld [vmem:[%s7360 + $0x58] sm:$0xff]
  %v7373 = vld [vmem:[%s7360 + $0x60] sm:$0xff]
  %v7374 = vld [vmem:[%s7360 + $0x68] sm:$0xff]
  %v7375 = vld [vmem:[%s7360 + $0x70] sm:$0xff]
  %v7376 = vld [vmem:[%s7360 + $0x78] sm:$0xff]
  %7379 = vst [vmem:[#allocation1] ss:$2 sm:$0xff] %v6710
  %s7380 = scalar_lea.vmem [#allocation1], 1
  %7381 = vst [vmem:[%s7380] ss:$2 sm:$0xff] %v6714
  %s7382 = scalar_lea.vmem [#allocation1], 16
  %7383 = vst [vmem:[%s7382] ss:$2 sm:$0xff] %v6718
  %s7384 = scalar_lea.vmem [#allocation1], 17
  %7385 = vst [vmem:[%s7384] ss:$2 sm:$0xff] %v6722
  %s7386 = scalar_lea.vmem [#allocation1], 32
  %7387 = vst [vmem:[%s7386] ss:$2 sm:$0xff] %v6728
  %s7388 = scalar_lea.vmem [#allocation1], 33
  %7389 = vst [vmem:[%s7388] ss:$2 sm:$0xff] %v6732
  %s7390 = scalar_lea.vmem [#allocation1], 48
  %7391 = vst [vmem:[%s7390] ss:$2 sm:$0xff] %v6736
  %s7392 = scalar_lea.vmem [#allocation1], 49
  %7393 = vst [vmem:[%s7392] ss:$2 sm:$0xff] %v6740
  %v7394 = vld.sshfl [vmem:[#allocation1] sm:$0xff pattern:$0x75316420]
  %v7395 = vld.sshfl [vmem:[#allocation1 + $0x10] sm:$0xff pattern:$0x75316420]
  %v7396 = vld.sshfl [vmem:[#allocation1 + $0x20] sm:$0xff pattern:$0x75316420]
  %v7397 = vld.sshfl [vmem:[#allocation1 + $0x30] sm:$0xff pattern:$0x75316420]
  %7402 = vmatpush.msra.mxu0 %v7376
  %7403 = vmatpush.msra.mxu0 %v7375
  %7404 = vmatpush.msra.mxu0 %v7374
  %7405 = vmatpush.msra.mxu0 %v7373
  %7406 = vmatpush.msra.mxu0 %v7372
  %7407 = vmatpush.msra.mxu0 %v7371
  %7408 = vmatpush.msra.mxu0 %v7370
  %7409 = vmatpush.msra.mxu0 %v7369
  %7410 = vmatpush.msra.mxu0 %v7368
  %7411 = vmatpush.msra.mxu0 %v7367
  %7412 = vmatpush.msra.mxu0 %v7366
  %7413 = vmatpush.msra.mxu0 %v7365
  %7414 = vmatpush.msra.mxu0 %v7364
  %7415 = vmatpush.msra.mxu0 %v7363
  %7416 = vmatpush.msra.mxu0 %v7362
  %7417 = vmatpush.msra.mxu0 %v7361
  %7418 = vmatmul.f32.gmra.mxu0 %v7394
  %v7419 = vpop.f32.mrf.mxu0
  %v7420 = vadd.f32 0.0, %v7419
  %7421 = vmatmul.f32.gmra.mxu0 %v7395
  %v7422 = vpop.f32.mrf.mxu0
  %v7423 = vadd.f32 0.0, %v7422
  %7424 = vmatmul.f32.gmra.mxu0 %v7396
  %v7425 = vpop.f32.mrf.mxu0
  %v7426 = vadd.f32 0.0, %v7425
  %7427 = vmatmul.f32.gmra.mxu0 %v7397
  %v7428 = vpop.f32.mrf.mxu0
  %v7429 = vadd.f32 0.0, %v7428
  %7430 = vdwg.mxu0
  %v7431 = vadd.f32 %v7356, %v7420
  %v7432 = vadd.f32 %v7357, %v7423
  %v7433 = vadd.f32 %v7358, %v7426
  %v7434 = vadd.f32 %v7359, %v7429
  %v7435 = vrot.slane %v6686, 4
  %v7436 = vrot.slane %v6704, 4
  %v7437 = vrot.slane %v6686, 5
  %v7438 = vrot.slane %v7437, 4
  %v7439 = vrot.slane %v7435, 5
  %v7440 = vsel %vm6904, %v7438, %v7439
  %v7441 = vrot.slane %v6704, 5
  %v7442 = vrot.slane %v7441, 4
  %v7443 = vrot.slane %v7436, 5
  %v7444 = vsel %vm6904, %v7442, %v7443
  %s7445 = scalar_lea.vmem %s5, 1024
  %v7446 = vld [vmem:[%s7445] sm:$0xff]
  %v7447 = vld [vmem:[%s7445 + $0x8] sm:$0xff]
  %v7448 = vld [vmem:[%s7445 + $0x10] sm:$0xff]
  %v7449 = vld [vmem:[%s7445 + $0x18] sm:$0xff]
  %v7450 = vld [vmem:[%s7445 + $0x20] sm:$0xff]
  %v7451 = vld [vmem:[%s7445 + $0x28] sm:$0xff]
  %v7452 = vld [vmem:[%s7445 + $0x30] sm:$0xff]
  %v7453 = vld [vmem:[%s7445 + $0x38] sm:$0xff]
  %v7454 = vld [vmem:[%s7445 + $0x40] sm:$0xff]
  %v7455 = vld [vmem:[%s7445 + $0x48] sm:$0xff]
  %v7456 = vld [vmem:[%s7445 + $0x50] sm:$0xff]
  %v7457 = vld [vmem:[%s7445 + $0x58] sm:$0xff]
  %v7458 = vld [vmem:[%s7445 + $0x60] sm:$0xff]
  %v7459 = vld [vmem:[%s7445 + $0x68] sm:$0xff]
  %v7460 = vld [vmem:[%s7445 + $0x70] sm:$0xff]
  %v7461 = vld [vmem:[%s7445 + $0x78] sm:$0xff]
  %7462 = vst [vmem:[#allocation1] ss:$2 sm:$0xff] %v6912
  %s7463 = scalar_lea.vmem [#allocation1], 1
  %7464 = vst [vmem:[%s7463] ss:$2 sm:$0xff] %v6916
  %s7465 = scalar_lea.vmem [#allocation1], 16
  %7466 = vst [vmem:[%s7465] ss:$2 sm:$0xff] %v6920
  %s7467 = scalar_lea.vmem [#allocation1], 17
  %7468 = vst [vmem:[%s7467] ss:$2 sm:$0xff] %v7440
  %s7469 = scalar_lea.vmem [#allocation1], 32
  %7470 = vst [vmem:[%s7469] ss:$2 sm:$0xff] %v6928
  %s7471 = scalar_lea.vmem [#allocation1], 33
  %7472 = vst [vmem:[%s7471] ss:$2 sm:$0xff] %v6932
  %s7473 = scalar_lea.vmem [#allocation1], 48
  %7474 = vst [vmem:[%s7473] ss:$2 sm:$0xff] %v6936
  %s7475 = scalar_lea.vmem [#allocation1], 49
  %7476 = vst [vmem:[%s7475] ss:$2 sm:$0xff] %v7444
  %v7477 = vld.sshfl [vmem:[#allocation1] sm:$0xff pattern:$0x75316420]
  %v7478 = vld.sshfl [vmem:[#allocation1 + $0x10] sm:$0xff pattern:$0x75316420]
  %v7479 = vld.sshfl [vmem:[#allocation1 + $0x20] sm:$0xff pattern:$0x75316420]
  %v7480 = vld.sshfl [vmem:[#allocation1 + $0x30] sm:$0xff pattern:$0x75316420]
  %7485 = vmatpush.msra.mxu0 %v7461
  %7486 = vmatpush.msra.mxu0 %v7460
  %7487 = vmatpush.msra.mxu0 %v7459
  %7488 = vmatpush.msra.mxu0 %v7458
  %7489 = vmatpush.msra.mxu0 %v7457
  %7490 = vmatpush.msra.mxu0 %v7456
  %7491 = vmatpush.msra.mxu0 %v7455
  %7492 = vmatpush.msra.mxu0 %v7454
  %7493 = vmatpush.msra.mxu0 %v7453
  %7494 = vmatpush.msra.mxu0 %v7452
  %7495 = vmatpush.msra.mxu0 %v7451
  %7496 = vmatpush.msra.mxu0 %v7450
  %7497 = vmatpush.msra.mxu0 %v7449
  %7498 = vmatpush.msra.mxu0 %v7448
  %7499 = vmatpush.msra.mxu0 %v7447
  %7500 = vmatpush.msra.mxu0 %v7446
  %7501 = vmatmul.f32.gmra.mxu0 %v7477
  %v7502 = vpop.f32.mrf.mxu0
  %v7503 = vadd.f32 0.0, %v7502
  %7504 = vmatmul.f32.gmra.mxu0 %v7478
  %v7505 = vpop.f32.mrf.mxu0
  %v7506 = vadd.f32 0.0, %v7505
  %7507 = vmatmul.f32.gmra.mxu0 %v7479
  %v7508 = vpop.f32.mrf.mxu0
  %v7509 = vadd.f32 0.0, %v7508
  %7510 = vmatmul.f32.gmra.mxu0 %v7480
  %v7511 = vpop.f32.mrf.mxu0
  %v7512 = vadd.f32 0.0, %v7511
  %7513 = vdwg.mxu0
  %v7514 = vadd.f32 %v7431, %v7503
  %v7515 = vadd.f32 %v7432, %v7506
  %v7516 = vadd.f32 %v7433, %v7509
  %v7517 = vadd.f32 %v7434, %v7512
  %v7518 = vld [vmem:[%s6] sm:$0x1]
  %v7519 = vld [vmem:[%s6 + $0x1] sm:$0x1]
  %v7520 = vld [vmem:[%s6 + $0x2] sm:$0x1]
  %v7521 = vperm.slane %v7518, 0
  %v7522 = vadd.f32 %v7514, %v7521
  %v7523 = vadd.f32 %v7515, %v7521
  %v7524 = vadd.f32 %v7516, %v7521
  %v7525 = vadd.f32 %v7517, %v7521
  %vm7526 = vcmp.ge.f32.partialorder %v7522, 0.0
  %vm7527 = vcmp.ge.f32.partialorder %v7523, 0.0
  %vm7528 = vcmp.ge.f32.partialorder %v7524, 0.0
  %vm7529 = vcmp.ge.f32.partialorder %v7525, 0.0
  %v7530 = vmul.f32 %v7522, 0.2
  %v7531 = vmul.f32 %v7523, 0.2
  %v7532 = vmul.f32 %v7524, 0.2
  %v7533 = vmul.f32 %v7525, 0.2
  %v7534 = vsel %vm7526, %v7522, %v7530
  %v7535 = vsel %vm7527, %v7523, %v7531
  %v7536 = vsel %vm7528, %v7524, %v7532
  %v7537 = vsel %vm7529, %v7525, %v7533
  %v7538 = vperm.slane %v7519, 0
  %v7539 = vmul.f32 %v7534, %v7538
  %v7540 = vmul.f32 %v7535, %v7538
  %v7541 = vmul.f32 %v7536, %v7538
  %v7542 = vmul.f32 %v7537, %v7538
  %v7543 = vperm.slane %v7520, 0
  %v7544 = vadd.f32 %v7539, %v7543
  %v7545 = vadd.f32 %v7540, %v7543
  %v7546 = vadd.f32 %v7541, %v7543
  %v7547 = vadd.f32 %v7542, %v7543
  %v7552 = vrot.slane %v7544, 4
  %v7553 = vrot.slane %v7545, 4
  %v7554 = vrot.slane %v7546, 4
  %v7555 = vrot.slane %v7547, 4
  %7560 = vst [vmem:[#allocation5] sm:$0x3f] 0.0
  %7561 = vst [vmem:[#allocation5 + $0x8] sm:$0x3f] 0.0
  %7562 = vst [vmem:[#allocation5 + $0x10] sm:$0x3f] 0.0
  %7563 = vst [vmem:[#allocation5 + $0x18] sm:$0x3f] 0.0
  %7564 = vst [vmem:[#allocation5 + $0x20] sm:$0x3f] 0.0
  %7565 = vst [vmem:[#allocation5 + $0x28] sm:$0x3f] 0.0
  %7566 = vst [vmem:[#allocation5 + $0x30] sm:$0x3f] 0.0
  %7567 = vst [vmem:[#allocation5 + $0x38] sm:$0x3f] 0.0
  %7568 = vst [vmem:[#allocation5 + $0x40] sm:$0x3f] 0.0
  %7569 = vst [vmem:[#allocation5 + $0x48] sm:$0x3f] 0.0
  %7570 = vst [vmem:[#allocation5 + $0x50] sm:$0x3f] 0.0
  %7571 = vst [vmem:[#allocation5 + $0x58] sm:$0x3f] 0.0
  %s7572 = scalar_lea.vmem [#allocation5], 8
  %7573 = vst [vmem:[%s7572 + $0x1] sm:$0xf] %v7544
  %7574 = vst [vmem:[%s7572 + $0x9] sm:$0xf] %v7552
  %7575 = vst [vmem:[%s7572 + $0x11] sm:$0xf] %v7545
  %7576 = vst [vmem:[%s7572 + $0x19] sm:$0xf] %v7553
  %7577 = vst [vmem:[%s7572 + $0x31] sm:$0xf] %v7546
  %7578 = vst [vmem:[%s7572 + $0x39] sm:$0xf] %v7554
  %7579 = vst [vmem:[%s7572 + $0x41] sm:$0xf] %v7547
  %7580 = vst [vmem:[%s7572 + $0x49] sm:$0xf] %v7555
  %v7581 = vld [vmem:[#allocation5] ss:$2 sm:$0x7]
  %s7582 = scalar_lea.vmem [#allocation5], 8
  %v7583 = vld [vmem:[%s7582] ss:$2 sm:$0x7]
  %s7584 = scalar_lea.vmem [#allocation5], 16
  %v7585 = vld [vmem:[%s7584] ss:$2 sm:$0x7]
  %s7586 = scalar_lea.vmem [#allocation5], 24
  %v7587 = vld [vmem:[%s7586] ss:$2 sm:$0x7]
  %s7588 = scalar_lea.vmem [#allocation5], 32
  %v7589 = vld [vmem:[%s7588] ss:$2 sm:$0x7]
  %s7590 = scalar_lea.vmem [#allocation5], 48
  %v7591 = vld [vmem:[%s7590] ss:$2 sm:$0x7]
  %s7592 = scalar_lea.vmem [#allocation5], 56
  %v7593 = vld [vmem:[%s7592] ss:$2 sm:$0x7]
  %s7594 = scalar_lea.vmem [#allocation5], 64
  %v7595 = vld [vmem:[%s7594] ss:$2 sm:$0x7]
  %s7596 = scalar_lea.vmem [#allocation5], 72
  %v7597 = vld [vmem:[%s7596] ss:$2 sm:$0x7]
  %s7598 = scalar_lea.vmem [#allocation5], 80
  %v7599 = vld [vmem:[%s7598] ss:$2 sm:$0x7]
  %s7600 = scalar_lea.vmem [#allocation5], 1
  %v7601 = vld [vmem:[%s7600] ss:$2 sm:$0x7]
  %s7602 = scalar_lea.vmem [#allocation5], 9
  %v7603 = vld [vmem:[%s7602] ss:$2 sm:$0x7]
  %s7604 = scalar_lea.vmem [#allocation5], 17
  %v7605 = vld [vmem:[%s7604] ss:$2 sm:$0x7]
  %s7606 = scalar_lea.vmem [#allocation5], 25
  %v7607 = vld [vmem:[%s7606] ss:$2 sm:$0x7]
  %s7608 = scalar_lea.vmem [#allocation5], 33
  %v7609 = vld [vmem:[%s7608] ss:$2 sm:$0x7]
  %s7610 = scalar_lea.vmem [#allocation5], 49
  %v7611 = vld [vmem:[%s7610] ss:$2 sm:$0x7]
  %s7612 = scalar_lea.vmem [#allocation5], 57
  %v7613 = vld [vmem:[%s7612] ss:$2 sm:$0x7]
  %s7614 = scalar_lea.vmem [#allocation5], 65
  %v7615 = vld [vmem:[%s7614] ss:$2 sm:$0x7]
  %s7616 = scalar_lea.vmem [#allocation5], 73
  %v7617 = vld [vmem:[%s7616] ss:$2 sm:$0x7]
  %s7618 = scalar_lea.vmem [#allocation5], 81
  %v7619 = vld [vmem:[%s7618] ss:$2 sm:$0x7]
  %v7620 = vld [vmem:[%s7] sm:$0xff]
  %v7621 = vld [vmem:[%s7 + $0x8] sm:$0xff]
  %v7622 = vld [vmem:[%s7 + $0x10] sm:$0xff]
  %v7623 = vld [vmem:[%s7 + $0x18] sm:$0xff]
  %v7624 = vld [vmem:[%s7 + $0x20] sm:$0xff]
  %v7625 = vld [vmem:[%s7 + $0x28] sm:$0xff]
  %v7626 = vld [vmem:[%s7 + $0x30] sm:$0xff]
  %v7627 = vld [vmem:[%s7 + $0x38] sm:$0xff]
  %v7628 = vld [vmem:[%s7 + $0x40] sm:$0xff]
  %v7629 = vld [vmem:[%s7 + $0x48] sm:$0xff]
  %v7630 = vld [vmem:[%s7 + $0x50] sm:$0xff]
  %v7631 = vld [vmem:[%s7 + $0x58] sm:$0xff]
  %v7632 = vld [vmem:[%s7 + $0x60] sm:$0xff]
  %v7633 = vld [vmem:[%s7 + $0x68] sm:$0xff]
  %v7634 = vld [vmem:[%s7 + $0x70] sm:$0xff]
  %v7635 = vld [vmem:[%s7 + $0x78] sm:$0xff]
  %s7636 = scalar_lea.vmem %s7, 128
  %v7637 = vld [vmem:[%s7636] sm:$0xff]
  %v7638 = vld [vmem:[%s7636 + $0x8] sm:$0xff]
  %v7639 = vld [vmem:[%s7636 + $0x10] sm:$0xff]
  %v7640 = vld [vmem:[%s7636 + $0x18] sm:$0xff]
  %v7641 = vld [vmem:[%s7636 + $0x20] sm:$0xff]
  %v7642 = vld [vmem:[%s7636 + $0x28] sm:$0xff]
  %v7643 = vld [vmem:[%s7636 + $0x30] sm:$0xff]
  %v7644 = vld [vmem:[%s7636 + $0x38] sm:$0xff]
  %v7645 = vld [vmem:[%s7636 + $0x40] sm:$0xff]
  %v7646 = vld [vmem:[%s7636 + $0x48] sm:$0xff]
  %v7647 = vld [vmem:[%s7636 + $0x50] sm:$0xff]
  %v7648 = vld [vmem:[%s7636 + $0x58] sm:$0xff]
  %v7649 = vld [vmem:[%s7636 + $0x60] sm:$0xff]
  %v7650 = vld [vmem:[%s7636 + $0x68] sm:$0xff]
  %v7651 = vld [vmem:[%s7636 + $0x70] sm:$0xff]
  %v7652 = vld [vmem:[%s7636 + $0x78] sm:$0xff]
  %7657 = vst [vmem:[#allocation1] ss:$4 sm:$0xff] %v7601
  %s7658 = scalar_lea.vmem [#allocation1], 1
  %7659 = vst [vmem:[%s7658] ss:$4 sm:$0xff] %v7605
  %s7660 = scalar_lea.vmem [#allocation1], 2
  %7661 = vst [vmem:[%s7660] ss:$4 sm:$0xff] %v7611
  %s7662 = scalar_lea.vmem [#allocation1], 3
  %7663 = vst [vmem:[%s7662] ss:$4 sm:$0xff] %v7615
  %v7664 = vld.sshfl [vmem:[#allocation1] sm:$0xff pattern:$0x73625140]
  %7666 = vmatpush.msra.mxu0 %v7652
  %7667 = vmatpush.msra.mxu0 %v7651
  %7668 = vmatpush.msra.mxu0 %v7650
  %7669 = vmatpush.msra.mxu0 %v7649
  %7670 = vmatpush.msra.mxu0 %v7648
  %7671 = vmatpush.msra.mxu0 %v7647
  %7672 = vmatpush.msra.mxu0 %v7646
  %7673 = vmatpush.msra.mxu0 %v7645
  %7674 = vmatpush.msra.mxu0 %v7644
  %7675 = vmatpush.msra.mxu0 %v7643
  %7676 = vmatpush.msra.mxu0 %v7642
  %7677 = vmatpush.msra.mxu0 %v7641
  %7678 = vmatpush.msra.mxu0 %v7640
  %7679 = vmatpush.msra.mxu0 %v7639
  %7680 = vmatpush.msra.mxu0 %v7638
  %7681 = vmatpush.msra.mxu0 %v7637
  %7682 = vmatmul.f32.gmra.mxu0 %v7664
  %v7683 = vpop.f32.mrf.mxu0
  %v7684 = vadd.f32 0.0, %v7683
  %7685 = vdwg.mxu0
  %7690 = vst [vmem:[#allocation1] ss:$4 sm:$0xff] %v7581
  %s7691 = scalar_lea.vmem [#allocation1], 1
  %7692 = vst [vmem:[%s7691] ss:$4 sm:$0xff] %v7585
  %s7693 = scalar_lea.vmem [#allocation1], 2
  %7694 = vst [vmem:[%s7693] ss:$4 sm:$0xff] %v7591
  %s7695 = scalar_lea.vmem [#allocation1], 3
  %7696 = vst [vmem:[%s7695] ss:$4 sm:$0xff] %v7595
  %v7697 = vld.sshfl [vmem:[#allocation1] sm:$0xff pattern:$0x73625140]
  %7699 = vmatpush.msra.mxu0 %v7635
  %7700 = vmatpush.msra.mxu0 %v7634
  %7701 = vmatpush.msra.mxu0 %v7633
  %7702 = vmatpush.msra.mxu0 %v7632
  %7703 = vmatpush.msra.mxu0 %v7631
  %7704 = vmatpush.msra.mxu0 %v7630
  %7705 = vmatpush.msra.mxu0 %v7629
  %7706 = vmatpush.msra.mxu0 %v7628
  %7707 = vmatpush.msra.mxu0 %v7627
  %7708 = vmatpush.msra.mxu0 %v7626
  %7709 = vmatpush.msra.mxu0 %v7625
  %7710 = vmatpush.msra.mxu0 %v7624
  %7711 = vmatpush.msra.mxu0 %v7623
  %7712 = vmatpush.msra.mxu0 %v7622
  %7713 = vmatpush.msra.mxu0 %v7621
  %7714 = vmatpush.msra.mxu0 %v7620
  %7715 = vmatmul.f32.gmra.mxu0 %v7697
  %v7716 = vpop.f32.mrf.mxu0
  %v7717 = vadd.f32 %v7684, %v7716
  %7718 = vdwg.mxu0
  %v7719 = vrot.slane %v7581, 2
  %v7720 = vrot.slane %v7585, 2
  %v7721 = vrot.slane %v7591, 2
  %v7722 = vrot.slane %v7595, 2
  %vm7723 = vcmask 1040384
  %vm7724 = vcmask 1042434
  %vm7725 = vmor %vm7723, %vm7724
  %vm7726 = vcmask 1044484
  %vm7727 = vmor %vm7725, %vm7726
  %vm7728 = vcmask 1046534
  %vm7729 = vmor %vm7727, %vm7728
  %v7730 = vrot.slane %v7581, 7
  %v7731 = vrot.slane %v7730, 2
  %v7732 = vrot.slane %v7719, 7
  %v7733 = vsel %vm7729, %v7731, %v7732
  %v7734 = vrot.slane %v7585, 7
  %v7735 = vrot.slane %v7734, 2
  %v7736 = vrot.slane %v7720, 7
  %v7737 = vsel %vm7729, %v7735, %v7736
  %v7738 = vrot.slane %v7591, 7
  %v7739 = vrot.slane %v7738, 2
  %v7740 = vrot.slane %v7721, 7
  %v7741 = vsel %vm7729, %v7739, %v7740
  %v7742 = vrot.slane %v7595, 7
  %v7743 = vrot.slane %v7742, 2
  %v7744 = vrot.slane %v7722, 7
  %v7745 = vsel %vm7729, %v7743, %v7744
  %s7746 = scalar_lea.vmem %s7, 256
  %v7747 = vld [vmem:[%s7746] sm:$0xff]
  %v7748 = vld [vmem:[%s7746 + $0x8] sm:$0xff]
  %v7749 = vld [vmem:[%s7746 + $0x10] sm:$0xff]
  %v7750 = vld [vmem:[%s7746 + $0x18] sm:$0xff]
  %v7751 = vld [vmem:[%s7746 + $0x20] sm:$0xff]
  %v7752 = vld [vmem:[%s7746 + $0x28] sm:$0xff]
  %v7753 = vld [vmem:[%s7746 + $0x30] sm:$0xff]
  %v7754 = vld [vmem:[%s7746 + $0x38] sm:$0xff]
  %v7755 = vld [vmem:[%s7746 + $0x40] sm:$0xff]
  %v7756 = vld [vmem:[%s7746 + $0x48] sm:$0xff]
  %v7757 = vld [vmem:[%s7746 + $0x50] sm:$0xff]
  %v7758 = vld [vmem:[%s7746 + $0x58] sm:$0xff]
  %v7759 = vld [vmem:[%s7746 + $0x60] sm:$0xff]
  %v7760 = vld [vmem:[%s7746 + $0x68] sm:$0xff]
  %v7761 = vld [vmem:[%s7746 + $0x70] sm:$0xff]
  %v7762 = vld [vmem:[%s7746 + $0x78] sm:$0xff]
  %7763 = vst [vmem:[#allocation1] ss:$4 sm:$0xff] %v7733
  %s7764 = scalar_lea.vmem [#allocation1], 1
  %7765 = vst [vmem:[%s7764] ss:$4 sm:$0xff] %v7737
  %s7766 = scalar_lea.vmem [#allocation1], 2
  %7767 = vst [vmem:[%s7766] ss:$4 sm:$0xff] %v7741
  %s7768 = scalar_lea.vmem [#allocation1], 3
  %7769 = vst [vmem:[%s7768] ss:$4 sm:$0xff] %v7745
  %v7770 = vld.sshfl [vmem:[#allocation1] sm:$0xff pattern:$0x73625140]
  %7772 = vmatpush.msra.mxu0 %v7762
  %7773 = vmatpush.msra.mxu0 %v7761
  %7774 = vmatpush.msra.mxu0 %v7760
  %7775 = vmatpush.msra.mxu0 %v7759
  %7776 = vmatpush.msra.mxu0 %v7758
  %7777 = vmatpush.msra.mxu0 %v7757
  %7778 = vmatpush.msra.mxu0 %v7756
  %7779 = vmatpush.msra.mxu0 %v7755
  %7780 = vmatpush.msra.mxu0 %v7754
  %7781 = vmatpush.msra.mxu0 %v7753
  %7782 = vmatpush.msra.mxu0 %v7752
  %7783 = vmatpush.msra.mxu0 %v7751
  %7784 = vmatpush.msra.mxu0 %v7750
  %7785 = vmatpush.msra.mxu0 %v7749
  %7786 = vmatpush.msra.mxu0 %v7748
  %7787 = vmatpush.msra.mxu0 %v7747
  %7788 = vmatmul.f32.gmra.mxu0 %v7770
  %v7789 = vpop.f32.mrf.mxu0
  %v7790 = vadd.f32 0.0, %v7789
  %7791 = vdwg.mxu0
  %v7792 = vadd.f32 %v7717, %v7790
  %s7793 = scalar_lea.vmem %s7, 384
  %v7794 = vld [vmem:[%s7793] sm:$0xff]
  %v7795 = vld [vmem:[%s7793 + $0x8] sm:$0xff]
  %v7796 = vld [vmem:[%s7793 + $0x10] sm:$0xff]
  %v7797 = vld [vmem:[%s7793 + $0x18] sm:$0xff]
  %v7798 = vld [vmem:[%s7793 + $0x20] sm:$0xff]
  %v7799 = vld [vmem:[%s7793 + $0x28] sm:$0xff]
  %v7800 = vld [vmem:[%s7793 + $0x30] sm:$0xff]
  %v7801 = vld [vmem:[%s7793 + $0x38] sm:$0xff]
  %v7802 = vld [vmem:[%s7793 + $0x40] sm:$0xff]
  %v7803 = vld [vmem:[%s7793 + $0x48] sm:$0xff]
  %v7804 = vld [vmem:[%s7793 + $0x50] sm:$0xff]
  %v7805 = vld [vmem:[%s7793 + $0x58] sm:$0xff]
  %v7806 = vld [vmem:[%s7793 + $0x60] sm:$0xff]
  %v7807 = vld [vmem:[%s7793 + $0x68] sm:$0xff]
  %v7808 = vld [vmem:[%s7793 + $0x70] sm:$0xff]
  %v7809 = vld [vmem:[%s7793 + $0x78] sm:$0xff]
  %7814 = vst [vmem:[#allocation1] ss:$4 sm:$0xff] %v7583
  %s7815 = scalar_lea.vmem [#allocation1], 1
  %7816 = vst [vmem:[%s7815] ss:$4 sm:$0xff] %v7587
  %s7817 = scalar_lea.vmem [#allocation1], 2
  %7818 = vst [vmem:[%s7817] ss:$4 sm:$0xff] %v7593
  %s7819 = scalar_lea.vmem [#allocation1], 3
  %7820 = vst [vmem:[%s7819] ss:$4 sm:$0xff] %v7597
  %v7821 = vld.sshfl [vmem:[#allocation1] sm:$0xff pattern:$0x73625140]
  %7823 = vmatpush.msra.mxu0 %v7809
  %7824 = vmatpush.msra.mxu0 %v7808
  %7825 = vmatpush.msra.mxu0 %v7807
  %7826 = vmatpush.msra.mxu0 %v7806
  %7827 = vmatpush.msra.mxu0 %v7805
  %7828 = vmatpush.msra.mxu0 %v7804
  %7829 = vmatpush.msra.mxu0 %v7803
  %7830 = vmatpush.msra.mxu0 %v7802
  %7831 = vmatpush.msra.mxu0 %v7801
  %7832 = vmatpush.msra.mxu0 %v7800
  %7833 = vmatpush.msra.mxu0 %v7799
  %7834 = vmatpush.msra.mxu0 %v7798
  %7835 = vmatpush.msra.mxu0 %v7797
  %7836 = vmatpush.msra.mxu0 %v7796
  %7837 = vmatpush.msra.mxu0 %v7795
  %7838 = vmatpush.msra.mxu0 %v7794
  %7839 = vmatmul.f32.gmra.mxu0 %v7821
  %v7840 = vpop.f32.mrf.mxu0
  %v7841 = vadd.f32 0.0, %v7840
  %7842 = vdwg.mxu0
  %v7843 = vadd.f32 %v7792, %v7841
  %s7844 = scalar_lea.vmem %s7, 512
  %v7845 = vld [vmem:[%s7844] sm:$0xff]
  %v7846 = vld [vmem:[%s7844 + $0x8] sm:$0xff]
  %v7847 = vld [vmem:[%s7844 + $0x10] sm:$0xff]
  %v7848 = vld [vmem:[%s7844 + $0x18] sm:$0xff]
  %v7849 = vld [vmem:[%s7844 + $0x20] sm:$0xff]
  %v7850 = vld [vmem:[%s7844 + $0x28] sm:$0xff]
  %v7851 = vld [vmem:[%s7844 + $0x30] sm:$0xff]
  %v7852 = vld [vmem:[%s7844 + $0x38] sm:$0xff]
  %v7853 = vld [vmem:[%s7844 + $0x40] sm:$0xff]
  %v7854 = vld [vmem:[%s7844 + $0x48] sm:$0xff]
  %v7855 = vld [vmem:[%s7844 + $0x50] sm:$0xff]
  %v7856 = vld [vmem:[%s7844 + $0x58] sm:$0xff]
  %v7857 = vld [vmem:[%s7844 + $0x60] sm:$0xff]
  %v7858 = vld [vmem:[%s7844 + $0x68] sm:$0xff]
  %v7859 = vld [vmem:[%s7844 + $0x70] sm:$0xff]
  %v7860 = vld [vmem:[%s7844 + $0x78] sm:$0xff]
  %7865 = vst [vmem:[#allocation1] ss:$4 sm:$0xff] %v7603
  %s7866 = scalar_lea.vmem [#allocation1], 1
  %7867 = vst [vmem:[%s7866] ss:$4 sm:$0xff] %v7607
  %s7868 = scalar_lea.vmem [#allocation1], 2
  %7869 = vst [vmem:[%s7868] ss:$4 sm:$0xff] %v7613
  %s7870 = scalar_lea.vmem [#allocation1], 3
  %7871 = vst [vmem:[%s7870] ss:$4 sm:$0xff] %v7617
  %v7872 = vld.sshfl [vmem:[#allocation1] sm:$0xff pattern:$0x73625140]
  %7874 = vmatpush.msra.mxu0 %v7860
  %7875 = vmatpush.msra.mxu0 %v7859
  %7876 = vmatpush.msra.mxu0 %v7858
  %7877 = vmatpush.msra.mxu0 %v7857
  %7878 = vmatpush.msra.mxu0 %v7856
  %7879 = vmatpush.msra.mxu0 %v7855
  %7880 = vmatpush.msra.mxu0 %v7854
  %7881 = vmatpush.msra.mxu0 %v7853
  %7882 = vmatpush.msra.mxu0 %v7852
  %7883 = vmatpush.msra.mxu0 %v7851
  %7884 = vmatpush.msra.mxu0 %v7850
  %7885 = vmatpush.msra.mxu0 %v7849
  %7886 = vmatpush.msra.mxu0 %v7848
  %7887 = vmatpush.msra.mxu0 %v7847
  %7888 = vmatpush.msra.mxu0 %v7846
  %7889 = vmatpush.msra.mxu0 %v7845
  %7890 = vmatmul.f32.gmra.mxu0 %v7872
  %v7891 = vpop.f32.mrf.mxu0
  %v7892 = vadd.f32 0.0, %v7891
  %7893 = vdwg.mxu0
  %v7894 = vadd.f32 %v7843, %v7892
  %v7895 = vrot.slane %v7583, 2
  %v7896 = vrot.slane %v7587, 2
  %v7897 = vrot.slane %v7593, 2
  %v7898 = vrot.slane %v7597, 2
  %v7899 = vrot.slane %v7583, 7
  %v7900 = vrot.slane %v7899, 2
  %v7901 = vrot.slane %v7895, 7
  %v7902 = vsel %vm7729, %v7900, %v7901
  %v7903 = vrot.slane %v7587, 7
  %v7904 = vrot.slane %v7903, 2
  %v7905 = vrot.slane %v7896, 7
  %v7906 = vsel %vm7729, %v7904, %v7905
  %v7907 = vrot.slane %v7593, 7
  %v7908 = vrot.slane %v7907, 2
  %v7909 = vrot.slane %v7897, 7
  %v7910 = vsel %vm7729, %v7908, %v7909
  %v7911 = vrot.slane %v7597, 7
  %v7912 = vrot.slane %v7911, 2
  %v7913 = vrot.slane %v7898, 7
  %v7914 = vsel %vm7729, %v7912, %v7913
  %s7915 = scalar_lea.vmem %s7, 640
  %v7916 = vld [vmem:[%s7915] sm:$0xff]
  %v7917 = vld [vmem:[%s7915 + $0x8] sm:$0xff]
  %v7918 = vld [vmem:[%s7915 + $0x10] sm:$0xff]
  %v7919 = vld [vmem:[%s7915 + $0x18] sm:$0xff]
  %v7920 = vld [vmem:[%s7915 + $0x20] sm:$0xff]
  %v7921 = vld [vmem:[%s7915 + $0x28] sm:$0xff]
  %v7922 = vld [vmem:[%s7915 + $0x30] sm:$0xff]
  %v7923 = vld [vmem:[%s7915 + $0x38] sm:$0xff]
  %v7924 = vld [vmem:[%s7915 + $0x40] sm:$0xff]
  %v7925 = vld [vmem:[%s7915 + $0x48] sm:$0xff]
  %v7926 = vld [vmem:[%s7915 + $0x50] sm:$0xff]
  %v7927 = vld [vmem:[%s7915 + $0x58] sm:$0xff]
  %v7928 = vld [vmem:[%s7915 + $0x60] sm:$0xff]
  %v7929 = vld [vmem:[%s7915 + $0x68] sm:$0xff]
  %v7930 = vld [vmem:[%s7915 + $0x70] sm:$0xff]
  %v7931 = vld [vmem:[%s7915 + $0x78] sm:$0xff]
  %7932 = vst [vmem:[#allocation1] ss:$4 sm:$0xff] %v7902
  %s7933 = scalar_lea.vmem [#allocation1], 1
  %7934 = vst [vmem:[%s7933] ss:$4 sm:$0xff] %v7906
  %s7935 = scalar_lea.vmem [#allocation1], 2
  %7936 = vst [vmem:[%s7935] ss:$4 sm:$0xff] %v7910
  %s7937 = scalar_lea.vmem [#allocation1], 3
  %7938 = vst [vmem:[%s7937] ss:$4 sm:$0xff] %v7914
  %v7939 = vld.sshfl [vmem:[#allocation1] sm:$0xff pattern:$0x73625140]
  %7941 = vmatpush.msra.mxu0 %v7931
  %7942 = vmatpush.msra.mxu0 %v7930
  %7943 = vmatpush.msra.mxu0 %v7929
  %7944 = vmatpush.msra.mxu0 %v7928
  %7945 = vmatpush.msra.mxu0 %v7927
  %7946 = vmatpush.msra.mxu0 %v7926
  %7947 = vmatpush.msra.mxu0 %v7925
  %7948 = vmatpush.msra.mxu0 %v7924
  %7949 = vmatpush.msra.mxu0 %v7923
  %7950 = vmatpush.msra.mxu0 %v7922
  %7951 = vmatpush.msra.mxu0 %v7921
  %7952 = vmatpush.msra.mxu0 %v7920
  %7953 = vmatpush.msra.mxu0 %v7919
  %7954 = vmatpush.msra.mxu0 %v7918
  %7955 = vmatpush.msra.mxu0 %v7917
  %7956 = vmatpush.msra.mxu0 %v7916
  %7957 = vmatmul.f32.gmra.mxu0 %v7939
  %v7958 = vpop.f32.mrf.mxu0
  %v7959 = vadd.f32 0.0, %v7958
  %7960 = vdwg.mxu0
  %v7961 = vadd.f32 %v7894, %v7959
  %s7962 = scalar_lea.vmem %s7, 768
  %v7963 = vld [vmem:[%s7962] sm:$0xff]
  %v7964 = vld [vmem:[%s7962 + $0x8] sm:$0xff]
  %v7965 = vld [vmem:[%s7962 + $0x10] sm:$0xff]
  %v7966 = vld [vmem:[%s7962 + $0x18] sm:$0xff]
  %v7967 = vld [vmem:[%s7962 + $0x20] sm:$0xff]
  %v7968 = vld [vmem:[%s7962 + $0x28] sm:$0xff]
  %v7969 = vld [vmem:[%s7962 + $0x30] sm:$0xff]
  %v7970 = vld [vmem:[%s7962 + $0x38] sm:$0xff]
  %v7971 = vld [vmem:[%s7962 + $0x40] sm:$0xff]
  %v7972 = vld [vmem:[%s7962 + $0x48] sm:$0xff]
  %v7973 = vld [vmem:[%s7962 + $0x50] sm:$0xff]
  %v7974 = vld [vmem:[%s7962 + $0x58] sm:$0xff]
  %v7975 = vld [vmem:[%s7962 + $0x60] sm:$0xff]
  %v7976 = vld [vmem:[%s7962 + $0x68] sm:$0xff]
  %v7977 = vld [vmem:[%s7962 + $0x70] sm:$0xff]
  %v7978 = vld [vmem:[%s7962 + $0x78] sm:$0xff]
  %7981 = vst [vmem:[#allocation1] ss:$4 sm:$0xff] %v7585
  %s7982 = scalar_lea.vmem [#allocation1], 1
  %7983 = vst [vmem:[%s7982] ss:$4 sm:$0xff] %v7589
  %s7984 = scalar_lea.vmem [#allocation1], 2
  %7985 = vst [vmem:[%s7984] ss:$4 sm:$0xff] %v7595
  %s7986 = scalar_lea.vmem [#allocation1], 3
  %7987 = vst [vmem:[%s7986] ss:$4 sm:$0xff] %v7599
  %v7988 = vld.sshfl [vmem:[#allocation1] sm:$0xff pattern:$0x73625140]
  %7990 = vmatpush.msra.mxu0 %v7978
  %7991 = vmatpush.msra.mxu0 %v7977
  %7992 = vmatpush.msra.mxu0 %v7976
  %7993 = vmatpush.msra.mxu0 %v7975
  %7994 = vmatpush.msra.mxu0 %v7974
  %7995 = vmatpush.msra.mxu0 %v7973
  %7996 = vmatpush.msra.mxu0 %v7972
  %7997 = vmatpush.msra.mxu0 %v7971
  %7998 = vmatpush.msra.mxu0 %v7970
  %7999 = vmatpush.msra.mxu0 %v7969
  %8000 = vmatpush.msra.mxu0 %v7968
  %8001 = vmatpush.msra.mxu0 %v7967
  %8002 = vmatpush.msra.mxu0 %v7966
  %8003 = vmatpush.msra.mxu0 %v7965
  %8004 = vmatpush.msra.mxu0 %v7964
  %8005 = vmatpush.msra.mxu0 %v7963
  %8006 = vmatmul.f32.gmra.mxu0 %v7988
  %v8007 = vpop.f32.mrf.mxu0
  %v8008 = vadd.f32 0.0, %v8007
  %8009 = vdwg.mxu0
  %v8010 = vadd.f32 %v7961, %v8008
  %s8011 = scalar_lea.vmem %s7, 896
  %v8012 = vld [vmem:[%s8011] sm:$0xff]
  %v8013 = vld [vmem:[%s8011 + $0x8] sm:$0xff]
  %v8014 = vld [vmem:[%s8011 + $0x10] sm:$0xff]
  %v8015 = vld [vmem:[%s8011 + $0x18] sm:$0xff]
  %v8016 = vld [vmem:[%s8011 + $0x20] sm:$0xff]
  %v8017 = vld [vmem:[%s8011 + $0x28] sm:$0xff]
  %v8018 = vld [vmem:[%s8011 + $0x30] sm:$0xff]
  %v8019 = vld [vmem:[%s8011 + $0x38] sm:$0xff]
  %v8020 = vld [vmem:[%s8011 + $0x40] sm:$0xff]
  %v8021 = vld [vmem:[%s8011 + $0x48] sm:$0xff]
  %v8022 = vld [vmem:[%s8011 + $0x50] sm:$0xff]
  %v8023 = vld [vmem:[%s8011 + $0x58] sm:$0xff]
  %v8024 = vld [vmem:[%s8011 + $0x60] sm:$0xff]
  %v8025 = vld [vmem:[%s8011 + $0x68] sm:$0xff]
  %v8026 = vld [vmem:[%s8011 + $0x70] sm:$0xff]
  %v8027 = vld [vmem:[%s8011 + $0x78] sm:$0xff]
  %8030 = vst [vmem:[#allocation1] ss:$4 sm:$0xff] %v7605
  %s8031 = scalar_lea.vmem [#allocation1], 1
  %8032 = vst [vmem:[%s8031] ss:$4 sm:$0xff] %v7609
  %s8033 = scalar_lea.vmem [#allocation1], 2
  %8034 = vst [vmem:[%s8033] ss:$4 sm:$0xff] %v7615
  %s8035 = scalar_lea.vmem [#allocation1], 3
  %8036 = vst [vmem:[%s8035] ss:$4 sm:$0xff] %v7619
  %v8037 = vld.sshfl [vmem:[#allocation1] sm:$0xff pattern:$0x73625140]
  %8039 = vmatpush.msra.mxu0 %v8027
  %8040 = vmatpush.msra.mxu0 %v8026
  %8041 = vmatpush.msra.mxu0 %v8025
  %8042 = vmatpush.msra.mxu0 %v8024
  %8043 = vmatpush.msra.mxu0 %v8023
  %8044 = vmatpush.msra.mxu0 %v8022
  %8045 = vmatpush.msra.mxu0 %v8021
  %8046 = vmatpush.msra.mxu0 %v8020
  %8047 = vmatpush.msra.mxu0 %v8019
  %8048 = vmatpush.msra.mxu0 %v8018
  %8049 = vmatpush.msra.mxu0 %v8017
  %8050 = vmatpush.msra.mxu0 %v8016
  %8051 = vmatpush.msra.mxu0 %v8015
  %8052 = vmatpush.msra.mxu0 %v8014
  %8053 = vmatpush.msra.mxu0 %v8013
  %8054 = vmatpush.msra.mxu0 %v8012
  %8055 = vmatmul.f32.gmra.mxu0 %v8037
  %v8056 = vpop.f32.mrf.mxu0
  %v8057 = vadd.f32 0.0, %v8056
  %8058 = vdwg.mxu0
  %v8059 = vadd.f32 %v8010, %v8057
  %v8060 = vrot.slane %v7589, 2
  %v8061 = vrot.slane %v7599, 2
  %v8062 = vrot.slane %v7589, 7
  %v8063 = vrot.slane %v8062, 2
  %v8064 = vrot.slane %v8060, 7
  %v8065 = vsel %vm7729, %v8063, %v8064
  %v8066 = vrot.slane %v7599, 7
  %v8067 = vrot.slane %v8066, 2
  %v8068 = vrot.slane %v8061, 7
  %v8069 = vsel %vm7729, %v8067, %v8068
  %s8070 = scalar_lea.vmem %s7, 1024
  %v8071 = vld [vmem:[%s8070] sm:$0xff]
  %v8072 = vld [vmem:[%s8070 + $0x8] sm:$0xff]
  %v8073 = vld [vmem:[%s8070 + $0x10] sm:$0xff]
  %v8074 = vld [vmem:[%s8070 + $0x18] sm:$0xff]
  %v8075 = vld [vmem:[%s8070 + $0x20] sm:$0xff]
  %v8076 = vld [vmem:[%s8070 + $0x28] sm:$0xff]
  %v8077 = vld [vmem:[%s8070 + $0x30] sm:$0xff]
  %v8078 = vld [vmem:[%s8070 + $0x38] sm:$0xff]
  %v8079 = vld [vmem:[%s8070 + $0x40] sm:$0xff]
  %v8080 = vld [vmem:[%s8070 + $0x48] sm:$0xff]
  %v8081 = vld [vmem:[%s8070 + $0x50] sm:$0xff]
  %v8082 = vld [vmem:[%s8070 + $0x58] sm:$0xff]
  %v8083 = vld [vmem:[%s8070 + $0x60] sm:$0xff]
  %v8084 = vld [vmem:[%s8070 + $0x68] sm:$0xff]
  %v8085 = vld [vmem:[%s8070 + $0x70] sm:$0xff]
  %v8086 = vld [vmem:[%s8070 + $0x78] sm:$0xff]
  %8087 = vst [vmem:[#allocation1] ss:$4 sm:$0xff] %v7737
  %s8088 = scalar_lea.vmem [#allocation1], 1
  %8089 = vst [vmem:[%s8088] ss:$4 sm:$0xff] %v8065
  %s8090 = scalar_lea.vmem [#allocation1], 2
  %8091 = vst [vmem:[%s8090] ss:$4 sm:$0xff] %v7745
  %s8092 = scalar_lea.vmem [#allocation1], 3
  %8093 = vst [vmem:[%s8092] ss:$4 sm:$0xff] %v8069
  %v8094 = vld.sshfl [vmem:[#allocation1] sm:$0xff pattern:$0x73625140]
  %8096 = vmatpush.msra.mxu0 %v8086
  %8097 = vmatpush.msra.mxu0 %v8085
  %8098 = vmatpush.msra.mxu0 %v8084
  %8099 = vmatpush.msra.mxu0 %v8083
  %8100 = vmatpush.msra.mxu0 %v8082
  %8101 = vmatpush.msra.mxu0 %v8081
  %8102 = vmatpush.msra.mxu0 %v8080
  %8103 = vmatpush.msra.mxu0 %v8079
  %8104 = vmatpush.msra.mxu0 %v8078
  %8105 = vmatpush.msra.mxu0 %v8077
  %8106 = vmatpush.msra.mxu0 %v8076
  %8107 = vmatpush.msra.mxu0 %v8075
  %8108 = vmatpush.msra.mxu0 %v8074
  %8109 = vmatpush.msra.mxu0 %v8073
  %8110 = vmatpush.msra.mxu0 %v8072
  %8111 = vmatpush.msra.mxu0 %v8071
  %8112 = vmatmul.f32.gmra.mxu0 %v8094
  %v8113 = vpop.f32.mrf.mxu0
  %v8114 = vadd.f32 0.0, %v8113
  %8115 = vdwg.mxu0
  %v8116 = vadd.f32 %v8059, %v8114
  %v8117 = vld [vmem:[%s8] sm:$0x1]
  %v8118 = vld [vmem:[%s8 + $0x1] sm:$0x1]
  %v8119 = vld [vmem:[%s8 + $0x2] sm:$0x1]
  %v8120 = vperm.slane %v8117, 0
  %v8121 = vadd.f32 %v8116, %v8120
  %vm8122 = vcmp.ge.f32.partialorder %v8121, 0.0
  %v8123 = vmul.f32 %v8121, 0.2
  %v8124 = vsel %vm8122, %v8121, %v8123
  %v8125 = vperm.slane %v8118, 0
  %v8126 = vmul.f32 %v8124, %v8125
  %v8127 = vperm.slane %v8119, 0
  %v8128 = vadd.f32 %v8126, %v8127
  %v8129 = vld [vmem:[%s9] sm:$0xff]
  %v8130 = vld [vmem:[%s9 + $0x8] sm:$0xff]
  %v8131 = vld [vmem:[%s9 + $0x10] sm:$0xff]
  %v8132 = vld [vmem:[%s9 + $0x18] sm:$0xff]
  %v8133 = vld [vmem:[%s9 + $0x20] sm:$0xff]
  %v8134 = vld [vmem:[%s9 + $0x28] sm:$0xff]
  %v8135 = vld [vmem:[%s9 + $0x30] sm:$0xff]
  %v8136 = vld [vmem:[%s9 + $0x38] sm:$0xff]
  %v8137 = vld [vmem:[%s9 + $0x40] sm:$0xff]
  %v8138 = vld [vmem:[%s9 + $0x48] sm:$0xff]
  %v8139 = vld [vmem:[%s9 + $0x50] sm:$0xff]
  %v8140 = vld [vmem:[%s9 + $0x58] sm:$0xff]
  %v8141 = vld [vmem:[%s9 + $0x60] sm:$0xff]
  %v8142 = vld [vmem:[%s9 + $0x68] sm:$0xff]
  %v8143 = vld [vmem:[%s9 + $0x70] sm:$0xff]
  %v8144 = vld [vmem:[%s9 + $0x78] sm:$0xff]
  %s8145 = scalar_lea.vmem %s9, 128
  %v8146 = vld [vmem:[%s8145] sm:$0xff]
  %v8147 = vld [vmem:[%s8145 + $0x8] sm:$0xff]
  %v8148 = vld [vmem:[%s8145 + $0x10] sm:$0xff]
  %v8149 = vld [vmem:[%s8145 + $0x18] sm:$0xff]
  %v8150 = vld [vmem:[%s8145 + $0x20] sm:$0xff]
  %v8151 = vld [vmem:[%s8145 + $0x28] sm:$0xff]
  %v8152 = vld [vmem:[%s8145 + $0x30] sm:$0xff]
  %v8153 = vld [vmem:[%s8145 + $0x38] sm:$0xff]
  %v8154 = vld [vmem:[%s8145 + $0x40] sm:$0xff]
  %v8155 = vld [vmem:[%s8145 + $0x48] sm:$0xff]
  %v8156 = vld [vmem:[%s8145 + $0x50] sm:$0xff]
  %v8157 = vld [vmem:[%s8145 + $0x58] sm:$0xff]
  %v8158 = vld [vmem:[%s8145 + $0x60] sm:$0xff]
  %v8159 = vld [vmem:[%s8145 + $0x68] sm:$0xff]
  %v8160 = vld [vmem:[%s8145 + $0x70] sm:$0xff]
  %v8161 = vld [vmem:[%s8145 + $0x78] sm:$0xff]
  %v8163 = vrot.slane %v8128, 1
  %8165 = vmatpush.msra.mxu0 %v8161
  %8166 = vmatpush.msra.mxu0 %v8160
  %8167 = vmatpush.msra.mxu0 %v8159
  %8168 = vmatpush.msra.mxu0 %v8158
  %8169 = vmatpush.msra.mxu0 %v8157
  %8170 = vmatpush.msra.mxu0 %v8156
  %8171 = vmatpush.msra.mxu0 %v8155
  %8172 = vmatpush.msra.mxu0 %v8154
  %8173 = vmatpush.msra.mxu0 %v8153
  %8174 = vmatpush.msra.mxu0 %v8152
  %8175 = vmatpush.msra.mxu0 %v8151
  %8176 = vmatpush.msra.mxu0 %v8150
  %8177 = vmatpush.msra.mxu0 %v8149
  %8178 = vmatpush.msra.mxu0 %v8148
  %8179 = vmatpush.msra.mxu0 %v8147
  %8180 = vmatpush.msra.mxu0 %v8146
  %8181 = vmatmul.f32.gmra.mxu0 %v8163
  %v8182 = vpop.f32.mrf.mxu0
  %v8183 = vadd.f32 0.0, %v8182
  %8184 = vdwg.mxu0
  %8185 = vmatpush.msra.mxu0 %v8144
  %8186 = vmatpush.msra.mxu0 %v8143
  %8187 = vmatpush.msra.mxu0 %v8142
  %8188 = vmatpush.msra.mxu0 %v8141
  %8189 = vmatpush.msra.mxu0 %v8140
  %8190 = vmatpush.msra.mxu0 %v8139
  %8191 = vmatpush.msra.mxu0 %v8138
  %8192 = vmatpush.msra.mxu0 %v8137
  %8193 = vmatpush.msra.mxu0 %v8136
  %8194 = vmatpush.msra.mxu0 %v8135
  %8195 = vmatpush.msra.mxu0 %v8134
  %8196 = vmatpush.msra.mxu0 %v8133
  %8197 = vmatpush.msra.mxu0 %v8132
  %8198 = vmatpush.msra.mxu0 %v8131
  %8199 = vmatpush.msra.mxu0 %v8130
  %8200 = vmatpush.msra.mxu0 %v8129
  %8201 = vmatmul.f32.gmra.mxu0 %v8128
  %v8202 = vpop.f32.mrf.mxu0
  %v8203 = vadd.f32 %v8183, %v8202
  %8204 = vdwg.mxu0
  %s8205 = scalar_lea.vmem %s9, 256
  %v8206 = vld [vmem:[%s8205] sm:$0xff]
  %v8207 = vld [vmem:[%s8205 + $0x8] sm:$0xff]
  %v8208 = vld [vmem:[%s8205 + $0x10] sm:$0xff]
  %v8209 = vld [vmem:[%s8205 + $0x18] sm:$0xff]
  %v8210 = vld [vmem:[%s8205 + $0x20] sm:$0xff]
  %v8211 = vld [vmem:[%s8205 + $0x28] sm:$0xff]
  %v8212 = vld [vmem:[%s8205 + $0x30] sm:$0xff]
  %v8213 = vld [vmem:[%s8205 + $0x38] sm:$0xff]
  %v8214 = vld [vmem:[%s8205 + $0x40] sm:$0xff]
  %v8215 = vld [vmem:[%s8205 + $0x48] sm:$0xff]
  %v8216 = vld [vmem:[%s8205 + $0x50] sm:$0xff]
  %v8217 = vld [vmem:[%s8205 + $0x58] sm:$0xff]
  %v8218 = vld [vmem:[%s8205 + $0x60] sm:$0xff]
  %v8219 = vld [vmem:[%s8205 + $0x68] sm:$0xff]
  %v8220 = vld [vmem:[%s8205 + $0x70] sm:$0xff]
  %v8221 = vld [vmem:[%s8205 + $0x78] sm:$0xff]
  %v8222 = vrot.slane %v8128, 2
  %8224 = vmatpush.msra.mxu0 %v8221
  %8225 = vmatpush.msra.mxu0 %v8220
  %8226 = vmatpush.msra.mxu0 %v8219
  %8227 = vmatpush.msra.mxu0 %v8218
  %8228 = vmatpush.msra.mxu0 %v8217
  %8229 = vmatpush.msra.mxu0 %v8216
  %8230 = vmatpush.msra.mxu0 %v8215
  %8231 = vmatpush.msra.mxu0 %v8214
  %8232 = vmatpush.msra.mxu0 %v8213
  %8233 = vmatpush.msra.mxu0 %v8212
  %8234 = vmatpush.msra.mxu0 %v8211
  %8235 = vmatpush.msra.mxu0 %v8210
  %8236 = vmatpush.msra.mxu0 %v8209
  %8237 = vmatpush.msra.mxu0 %v8208
  %8238 = vmatpush.msra.mxu0 %v8207
  %8239 = vmatpush.msra.mxu0 %v8206
  %8240 = vmatmul.f32.gmra.mxu0 %v8222
  %v8241 = vpop.f32.mrf.mxu0
  %v8242 = vadd.f32 0.0, %v8241
  %8243 = vdwg.mxu0
  %v8244 = vadd.f32 %v8203, %v8242
  %s8245 = scalar_lea.vmem %s9, 384
  %v8246 = vld [vmem:[%s8245] sm:$0xff]
  %v8247 = vld [vmem:[%s8245 + $0x8] sm:$0xff]
  %v8248 = vld [vmem:[%s8245 + $0x10] sm:$0xff]
  %v8249 = vld [vmem:[%s8245 + $0x18] sm:$0xff]
  %v8250 = vld [vmem:[%s8245 + $0x20] sm:$0xff]
  %v8251 = vld [vmem:[%s8245 + $0x28] sm:$0xff]
  %v8252 = vld [vmem:[%s8245 + $0x30] sm:$0xff]
  %v8253 = vld [vmem:[%s8245 + $0x38] sm:$0xff]
  %v8254 = vld [vmem:[%s8245 + $0x40] sm:$0xff]
  %v8255 = vld [vmem:[%s8245 + $0x48] sm:$0xff]
  %v8256 = vld [vmem:[%s8245 + $0x50] sm:$0xff]
  %v8257 = vld [vmem:[%s8245 + $0x58] sm:$0xff]
  %v8258 = vld [vmem:[%s8245 + $0x60] sm:$0xff]
  %v8259 = vld [vmem:[%s8245 + $0x68] sm:$0xff]
  %v8260 = vld [vmem:[%s8245 + $0x70] sm:$0xff]
  %v8261 = vld [vmem:[%s8245 + $0x78] sm:$0xff]
  %v8262 = vrot.slane %v8128, 3
  %8264 = vmatpush.msra.mxu0 %v8261
  %8265 = vmatpush.msra.mxu0 %v8260
  %8266 = vmatpush.msra.mxu0 %v8259
  %8267 = vmatpush.msra.mxu0 %v8258
  %8268 = vmatpush.msra.mxu0 %v8257
  %8269 = vmatpush.msra.mxu0 %v8256
  %8270 = vmatpush.msra.mxu0 %v8255
  %8271 = vmatpush.msra.mxu0 %v8254
  %8272 = vmatpush.msra.mxu0 %v8253
  %8273 = vmatpush.msra.mxu0 %v8252
  %8274 = vmatpush.msra.mxu0 %v8251
  %8275 = vmatpush.msra.mxu0 %v8250
  %8276 = vmatpush.msra.mxu0 %v8249
  %8277 = vmatpush.msra.mxu0 %v8248
  %8278 = vmatpush.msra.mxu0 %v8247
  %8279 = vmatpush.msra.mxu0 %v8246
  %8280 = vmatmul.f32.gmra.mxu0 %v8262
  %v8281 = vpop.f32.mrf.mxu0
  %v8282 = vadd.f32 0.0, %v8281
  %8283 = vdwg.mxu0
  %v8284 = vadd.f32 %v8244, %v8282
  %v8285 = vrot.slane %v8128, 5
  %8287 = vmatpush.msra.mxu0 %v8161
  %8288 = vmatpush.msra.mxu0 %v8160
  %8289 = vmatpush.msra.mxu0 %v8159
  %8290 = vmatpush.msra.mxu0 %v8158
  %8291 = vmatpush.msra.mxu0 %v8157
  %8292 = vmatpush.msra.mxu0 %v8156
  %8293 = vmatpush.msra.mxu0 %v8155
  %8294 = vmatpush.msra.mxu0 %v8154
  %8295 = vmatpush.msra.mxu0 %v8153
  %8296 = vmatpush.msra.mxu0 %v8152
  %8297 = vmatpush.msra.mxu0 %v8151
  %8298 = vmatpush.msra.mxu0 %v8150
  %8299 = vmatpush.msra.mxu0 %v8149
  %8300 = vmatpush.msra.mxu0 %v8148
  %8301 = vmatpush.msra.mxu0 %v8147
  %8302 = vmatpush.msra.mxu0 %v8146
  %8303 = vmatmul.f32.gmra.mxu0 %v8285
  %v8304 = vpop.f32.mrf.mxu0
  %v8305 = vadd.f32 0.0, %v8304
  %8306 = vdwg.mxu0
  %v8307 = vrot.slane %v8128, 4
  %8309 = vmatpush.msra.mxu0 %v8144
  %8310 = vmatpush.msra.mxu0 %v8143
  %8311 = vmatpush.msra.mxu0 %v8142
  %8312 = vmatpush.msra.mxu0 %v8141
  %8313 = vmatpush.msra.mxu0 %v8140
  %8314 = vmatpush.msra.mxu0 %v8139
  %8315 = vmatpush.msra.mxu0 %v8138
  %8316 = vmatpush.msra.mxu0 %v8137
  %8317 = vmatpush.msra.mxu0 %v8136
  %8318 = vmatpush.msra.mxu0 %v8135
  %8319 = vmatpush.msra.mxu0 %v8134
  %8320 = vmatpush.msra.mxu0 %v8133
  %8321 = vmatpush.msra.mxu0 %v8132
  %8322 = vmatpush.msra.mxu0 %v8131
  %8323 = vmatpush.msra.mxu0 %v8130
  %8324 = vmatpush.msra.mxu0 %v8129
  %8325 = vmatmul.f32.gmra.mxu0 %v8307
  %v8326 = vpop.f32.mrf.mxu0
  %v8327 = vadd.f32 %v8305, %v8326
  %8328 = vdwg.mxu0
  %v8329 = vrot.slane %v8128, 6
  %8331 = vmatpush.msra.mxu0 %v8221
  %8332 = vmatpush.msra.mxu0 %v8220
  %8333 = vmatpush.msra.mxu0 %v8219
  %8334 = vmatpush.msra.mxu0 %v8218
  %8335 = vmatpush.msra.mxu0 %v8217
  %8336 = vmatpush.msra.mxu0 %v8216
  %8337 = vmatpush.msra.mxu0 %v8215
  %8338 = vmatpush.msra.mxu0 %v8214
  %8339 = vmatpush.msra.mxu0 %v8213
  %8340 = vmatpush.msra.mxu0 %v8212
  %8341 = vmatpush.msra.mxu0 %v8211
  %8342 = vmatpush.msra.mxu0 %v8210
  %8343 = vmatpush.msra.mxu0 %v8209
  %8344 = vmatpush.msra.mxu0 %v8208
  %8345 = vmatpush.msra.mxu0 %v8207
  %8346 = vmatpush.msra.mxu0 %v8206
  %8347 = vmatmul.f32.gmra.mxu0 %v8329
  %v8348 = vpop.f32.mrf.mxu0
  %v8349 = vadd.f32 0.0, %v8348
  %8350 = vdwg.mxu0
  %v8351 = vadd.f32 %v8327, %v8349
  %v8352 = vrot.slane %v8128, 7
  %8354 = vmatpush.msra.mxu0 %v8261
  %8355 = vmatpush.msra.mxu0 %v8260
  %8356 = vmatpush.msra.mxu0 %v8259
  %8357 = vmatpush.msra.mxu0 %v8258
  %8358 = vmatpush.msra.mxu0 %v8257
  %8359 = vmatpush.msra.mxu0 %v8256
  %8360 = vmatpush.msra.mxu0 %v8255
  %8361 = vmatpush.msra.mxu0 %v8254
  %8362 = vmatpush.msra.mxu0 %v8253
  %8363 = vmatpush.msra.mxu0 %v8252
  %8364 = vmatpush.msra.mxu0 %v8251
  %8365 = vmatpush.msra.mxu0 %v8250
  %8366 = vmatpush.msra.mxu0 %v8249
  %8367 = vmatpush.msra.mxu0 %v8248
  %8368 = vmatpush.msra.mxu0 %v8247
  %8369 = vmatpush.msra.mxu0 %v8246
  %8370 = vmatmul.f32.gmra.mxu0 %v8352
  %v8371 = vpop.f32.mrf.mxu0
  %v8372 = vadd.f32 0.0, %v8371
  %8373 = vdwg.mxu0
  %v8374 = vadd.f32 %v8351, %v8372
  %v8376 = vrot.slane %v8374, 7
  %v8378 = vsel %vm7723, %v8284, %v8376
  %v8379 = vld [vmem:[%s10] sm:$0x1]
  %v8381 = vperm.slane %v8379, 0
  %v8383 = vadd.f32 %v8378, %v8381
  %v8384 = vlaneseq
  %v8385 = vand.u32 %v8384, 127
  %vm8386 = vcmp.eq.s32.totalorder %v8385, 0
  %vm8387 = vcmp.ge.s32.totalorder %v8385, 1
  %vm8388 = vcmp.le.s32.totalorder %v8385, 10
  %vm8389 = vmand %vm8387, %vm8388
  %v8390 = vsel %vm8389, 1, 0
  %v8391 = vcvt.s32.f32 %v8390
  %v8392 = vsub.f32 0.0, %v8383
  %v8393 = vmul.f32 %v8392, 1.442695
  %v8394 = vpow.pop %v8393
  %v8395 = vadd.f32 %v8394, 1.0
  %v8396 = vrcp.pop %v8395
  %vm8397 = vcmp.eq.s32.totalorder %v8390, 1
  %v8398 = vsel %vm8397, %v8383, -1e+30
  %vm8399 = vcmask 1041408
  %v8400 = vsel %vm8399, %v8398, -inf
  %8401 = vmax.xlane.f32.xlu0 %v8400
  %v8402 = vpop.xlane.xlu0 %8401
  %v8403 = vsub.f32 %v8398, %v8402
  %v8404 = vmul.f32 %v8403, 1.442695
  %v8405 = vpow.pop %v8404
  %v8406 = vmul.f32 %v8405, %v8391
  %v8407 = vsel %vm8399, %v8406, 0.0
  %8408 = vadd.xlane.f32.xlu0 %v8407
  %v8409 = vpop.xlane.xlu0 %8408
  %v8410 = vrcp.pop %v8409
  %v8411 = vmul.f32 %v8406, %v8410
  %v8412 = vsel %vm8386, 1, 0
  %vm8413 = vcmp.eq.s32.totalorder %v8412, 1
  %v8414 = vsel %vm8413, %v8396, %v8411
  %8415 = vst [vmem:[%s11] sm:$0x3] %v8414
  // Predicated region
  $region46: #{discriminator_forward.1} parent=0 // pred_check
    _
  $region47: #{discriminator_forward.1} parent=0 // pred_check_branch
    %8417 = sbr.rel (0) target = $region49
  $region48: #{discriminator_forward.1} parent=0 // pred_region
    _
  $region49: #{discriminator_forward.1} parent=0 // pred_fallthru
    _
  // Predicated region
  $region50: #{discriminator_forward.1} parent=0 // pred_check
    _
  $region51: #{discriminator_forward.1} parent=0 // pred_check_branch
    %8419 = sbr.rel (0) target = $region53
  $region52: #{discriminator_forward.1} parent=0 // pred_region
    _
  $region53: #{discriminator_forward.1} parent=0 // pred_fallthru
    _

</llo_original>
